<compile_context>
chip_gen: v7x
topology: tpu7x:2x2x1
jax: 0.10.0
libtpu: 0.0.40
codegen_flags: <defaults>
</compile_context>

<pallas_src>
import numpy as np
import jax
import jax.numpy as jnp
from jax.experimental import pallas as pl
from jax.experimental.pallas import tpu as pltpu


# --------------------------------------------------------------------------------------
# cg_change_mat(2): change of basis from (0e + 1o + 2e) irreps to the flattened 3x3 tensor.
# stress = decomposed @ CG_CHANGE_MAT  (einsum('ba,cb->ca', change_mat, decomposed))
# --------------------------------------------------------------------------------------
_SQ2 = 2.0 ** -0.5
_SQ3 = 3.0 ** -0.5
_SQ6 = 6.0 ** -0.5
CG_CHANGE_MAT = jnp.asarray(
    [
        [_SQ3, 0, 0, 0, _SQ3, 0, 0, 0, _SQ3],
        [0, 0, 0, 0, 0, _SQ2, 0, -_SQ2, 0],
        [0, 0, -_SQ2, 0, 0, 0, _SQ2, 0, 0],
        [0, _SQ2, 0, -_SQ2, 0, 0, 0, 0, 0],
        [0, 0, _SQ2, 0, 0, 0, _SQ2, 0, 0],
        [0, _SQ2, 0, _SQ2, 0, 0, 0, 0, 0],
        [-_SQ6, 0, 0, 0, 2.0 * _SQ6, 0, 0, 0, -_SQ6],
        [0, 0, 0, 0, 0, _SQ2, 0, _SQ2, 0],
        [-_SQ2, 0, 0, 0, 0, 0, 0, 0, _SQ2],
    ],
    dtype=jnp.float32,
)


# --------------------------------------------------------------------------------------
# fused stress-head kernel
# --------------------------------------------------------------------------------------
def _stress_head_kernel(x_ref, segT_ref, w1_ref, b1_ref, w2_ref, b2_ref,
                        w3_ref, b3_ref, wl2_ref, cg_ref, out_ref, acc_ref):
    # zero the per-system accumulator on the first node tile
    @pl.when(pl.program_id(0) == 0)
    def _init():
        acc_ref[...] = jnp.zeros_like(acc_ref)

    x = x_ref[...]                                                    # (bn, 9, C)

    # ---- scalar_block MLP on the l=0 coefficient, batched over the node tile ----
    h = jnp.dot(x[:, 0, :], w1_ref[...], preferred_element_type=jnp.float32) + b1_ref[...]
    h = h * jax.nn.sigmoid(h)                                         # SiLU
    h = jnp.dot(h, w2_ref[...], preferred_element_type=jnp.float32) + b2_ref[...]
    h = h * jax.nn.sigmoid(h)
    node_scalar = jnp.dot(h, w3_ref[...], preferred_element_type=jnp.float32) + b3_ref[...]  # (bn, 1)

    # ---- SO3_Linear(sphere_channels -> 1, lmax=2), keeping only the l=2 block (m = 4..8) ----
    # (the l=0 bias of SO3_Linear is discarded by narrow(1, 4, 5), so it is not needed here)
    node_l2 = jnp.sum(x[:, 4:9, :] * wl2_ref[...][None, :, :], axis=-1)                      # (bn, 5)

    # ---- per-system reduction (index_add + optional mean) as a small matmul ----
    segT = segT_ref[...]                                              # (n_sys, bn); 0 cols for padding
    acc_ref[:, 0:1] += jnp.dot(segT, node_scalar, preferred_element_type=jnp.float32)
    acc_ref[:, 4:9] += jnp.dot(segT, node_l2, preferred_element_type=jnp.float32)

    # ---- compose_tensor: rank-2 Cartesian stress from the decomposed (iso | 0 | l2) vector ----
    out_ref[...] = jnp.dot(acc_ref[...], cg_ref[...],
                           preferred_element_type=jnp.float32).astype(out_ref.dtype)


def mlp_stress_head(params, node_embedding, batch, natoms, *, reduce="mean", block_n=128):
    """Pallas implementation of MLP_Stress_Head.forward.

    node_embedding : (n_nodes, >=9, sphere_channels) f32   (emb['node_embedding'])
    batch          : (n_nodes,) int32 system index per node
    natoms         : (n_sys,)   int32 atoms per system
    returns        : {'stress': (n_sys, 9) f32}
    """
    assert reduce in ("sum", "mean")
    assert block_n % 128 == 0, "block_n must be a multiple of 128 (lane-dense selector tile)"
    # TODO(synk): gp_utils graph-parallel branch raises NotImplementedError in the reference; not implemented.

    x = node_embedding[:, :9, :].astype(jnp.float32)                  # narrow(1, 0, 9)
    n_nodes, _, c = x.shape
    n_sys = int(natoms.shape[0])
    h_dim = params["scalar_w1"].shape[1]

    # transposed one-hot selector; 'mean' (divide by natoms) folded in so the kernel only accumulates
    segT = (batch[None, :] == jnp.arange(n_sys, dtype=batch.dtype)[:, None]).astype(jnp.float32)
    if reduce == "mean":
        segT = segT / natoms.astype(jnp.float32)[:, None]

    n_pad = block_n * pl.cdiv(n_nodes, block_n)
    if n_pad != n_nodes:
        # padded nodes carry zero selector weight -> contribute nothing to the reduction
        x = jnp.pad(x, ((0, n_pad - n_nodes), (0, 0), (0, 0)))
        segT = jnp.pad(segT, ((0, 0), (0, n_pad - n_nodes)))

    stress = pl.pallas_call(
        _stress_head_kernel,
        out_shape=jax.ShapeDtypeStruct((n_sys, 9), jnp.float32),
        grid_spec=pltpu.PrefetchScalarGridSpec(
            num_scalar_prefetch=0,
            grid=(n_pad // block_n,),
            in_specs=[
                pl.BlockSpec((block_n, 9, c), lambda i: (i, 0, 0)),   # streamed node tile
                pl.BlockSpec((n_sys, block_n), lambda i: (0, i)),     # selector columns for this tile
                pl.BlockSpec((c, h_dim), lambda i: (0, 0)),           # resident weights
                pl.BlockSpec((1, h_dim), lambda i: (0, 0)),
                pl.BlockSpec((h_dim, h_dim), lambda i: (0, 0)),
                pl.BlockSpec((1, h_dim), lambda i: (0, 0)),
                pl.BlockSpec((h_dim, 1), lambda i: (0, 0)),
                pl.BlockSpec((1, 1), lambda i: (0, 0)),
                pl.BlockSpec((1, c), lambda i: (0, 0)),
                pl.BlockSpec((9, 9), lambda i: (0, 0)),
            ],
            out_specs=pl.BlockSpec((n_sys, 9), lambda i: (0, 0)),
            scratch_shapes=[pltpu.VMEM((n_sys, 9), jnp.float32)],     # decomposed-preds accumulator
        ),
        # the single grid axis is a reduction (accumulator carried across tiles) -> "arbitrary"
        compiler_params=pltpu.CompilerParams(dimension_semantics=("arbitrary",)),
    )(
        x, segT,
        params["scalar_w1"], params["scalar_b1"].reshape(1, h_dim),
        params["scalar_w2"], params["scalar_b2"].reshape(1, h_dim),
        params["scalar_w3"], params["scalar_b3"].reshape(1, 1),
        params["l2_w"].reshape(1, c),
        CG_CHANGE_MAT,
    )
    return {"stress": stress}


# --------------------------------------------------------------------------------------
# parameters (matching nn.Linear / SO3_Linear shapes; only the l=2 row of SO3_Linear matters)
# --------------------------------------------------------------------------------------
def init_params(key, sphere_channels, hidden_channels):
    ks = jax.random.split(key, 7)

    def lin(k, fan_in, shape):
        bound = 1.0 / np.sqrt(fan_in)
        return jax.random.uniform(k, shape, jnp.float32, -bound, bound)

    return {
        "scalar_w1": lin(ks[0], sphere_channels, (sphere_channels, hidden_channels)),
        "scalar_b1": lin(ks[1], sphere_channels, (hidden_channels,)),
        "scalar_w2": lin(ks[2], hidden_channels, (hidden_channels, hidden_channels)),
        "scalar_b2": lin(ks[3], hidden_channels, (hidden_channels,)),
        "scalar_w3": lin(ks[4], hidden_channels, (hidden_channels, 1)),
        "scalar_b3": lin(ks[5], hidden_channels, (1,)),
        # SO3_Linear(sphere_channels, 1, lmax=2): only weight[l=2, 0, :] survives narrow(1, 4, 5);
        # its (l=0) bias is discarded by the head, hence omitted.
        "l2_w": lin(ks[6], sphere_channels, (sphere_channels,)),
    }


# --------------------------------------------------------------------------------------
# pure-JAX reference of MLP_Stress_Head.forward
# --------------------------------------------------------------------------------------
def reference_forward(params, node_embedding, batch, natoms, reduce="mean"):
    x = node_embedding[:, :9, :].astype(jnp.float32)
    h = jax.nn.silu(x[:, 0, :] @ params["scalar_w1"] + params["scalar_b1"])
    h = jax.nn.silu(h @ params["scalar_w2"] + params["scalar_b2"])
    node_scalar = (h @ params["scalar_w3"] + params["scalar_b3"])[:, 0]
    node_l2 = jnp.einsum("nmc,c->nm", x[:, 4:9, :], params["l2_w"])
    n_sys = natoms.shape[0]
    iso = jnp.zeros((n_sys,), jnp.float32).at[batch].add(node_scalar)
    aniso = jnp.zeros((n_sys, 5), jnp.float32).at[batch].add(node_l2)
    if reduce == "mean":
        iso = iso / natoms.astype(jnp.float32)
        aniso = aniso / natoms.astype(jnp.float32)[:, None]
    dec = jnp.zeros((n_sys, 9), jnp.float32).at[:, 0].set(iso).at[:, 4:9].set(aniso)
    return dec @ CG_CHANGE_MAT


# --------------------------------------------------------------------------------------
if __name__ == "__main__":
    jax.config.update("jax_default_matmul_precision", "highest")

    key = jax.random.PRNGKey(0)
    k_par, k_emb = jax.random.split(key)

    SPHERE_CHANNELS = 128      # backbone.sphere_channels
    HIDDEN_CHANNELS = 128      # backbone.hidden_channels
    NATOMS_NP = np.array([130, 170], dtype=np.int32)   # 2 systems, 300 nodes -> 3 node tiles of 128
    n_nodes = int(NATOMS_NP.sum())

    params = init_params(k_par, SPHERE_CHANNELS, HIDDEN_CHANNELS)
    node_embedding = 0.5 * jax.random.normal(k_emb, (n_nodes, 9, SPHERE_CHANNELS), jnp.float32)
    batch = jnp.asarray(np.repeat(np.arange(len(NATOMS_NP), dtype=np.int32), NATOMS_NP))
    natoms = jnp.asarray(NATOMS_NP)

    out = mlp_stress_head(params, node_embedding, batch, natoms, reduce="mean")
    stress = jax.block_until_ready(out["stress"])

    ref = reference_forward(params, node_embedding, batch, natoms, reduce="mean")
    assert stress.shape == (len(NATOMS_NP), 9)
    assert bool(jnp.all(jnp.isfinite(stress)))
    max_err = float(jnp.max(jnp.abs(stress - ref)))
    assert bool(jnp.allclose(stress, ref, atol=2e-3, rtol=2e-3)), f"max abs err {max_err}"
    print("KERNEL_OK")
</pallas_src>

<mosaic_0001>
module attributes {stable_mosaic.version = 11 : i64} {
  func.func @_stress_head_kernel(%arg0: i32, %arg1: memref<128x9x128xf32, #tpu.memory_space<vmem>>, %arg2: memref<2x128xf32, #tpu.memory_space<vmem>>, %arg3: memref<128x128xf32, #tpu.memory_space<vmem>>, %arg4: memref<1x128xf32, #tpu.memory_space<vmem>>, %arg5: memref<128x128xf32, #tpu.memory_space<vmem>>, %arg6: memref<1x128xf32, #tpu.memory_space<vmem>>, %arg7: memref<128x1xf32, #tpu.memory_space<vmem>>, %arg8: memref<1x1xf32, #tpu.memory_space<vmem>>, %arg9: memref<1x128xf32, #tpu.memory_space<vmem>>, %arg10: memref<9x9xf32, #tpu.memory_space<vmem>>, %arg11: memref<2x9xf32, #tpu.memory_space<vmem>>, %arg12: memref<2x9xf32, #tpu.memory_space<vmem>>) attributes {dimension_semantics = [#tpu.dimension_semantics<arbitrary>], iteration_bounds = array<i64: 3>, scalar_prefetch = 0 : i64, scratch_operands = 1 : i64, tpu.core_type = #tpu.core_type<tc>, window_params = [{transform_indices = @transform_0, window_bounds = array<i64: 128, 9, 128>}, {transform_indices = @transform_1, window_bounds = array<i64: 2, 128>}, {pipeline_mode = #tpu.pipeline_mode<synchronous>, transform_indices = @transform_2, window_bounds = array<i64: 128, 128>}, {pipeline_mode = #tpu.pipeline_mode<synchronous>, transform_indices = @transform_3, window_bounds = array<i64: 1, 128>}, {pipeline_mode = #tpu.pipeline_mode<synchronous>, transform_indices = @transform_4, window_bounds = array<i64: 128, 128>}, {pipeline_mode = #tpu.pipeline_mode<synchronous>, transform_indices = @transform_5, window_bounds = array<i64: 1, 128>}, {pipeline_mode = #tpu.pipeline_mode<synchronous>, transform_indices = @transform_6, window_bounds = array<i64: 128, 1>}, {pipeline_mode = #tpu.pipeline_mode<synchronous>, transform_indices = @transform_7, window_bounds = array<i64: 1, 1>}, {pipeline_mode = #tpu.pipeline_mode<synchronous>, transform_indices = @transform_8, window_bounds = array<i64: 1, 128>}, {pipeline_mode = #tpu.pipeline_mode<synchronous>, transform_indices = @transform_9, window_bounds = array<i64: 9, 9>}, {pipeline_mode = #tpu.pipeline_mode<synchronous>, transform_indices = @transform_10, window_bounds = array<i64: 2, 9>}]} {
    %c0_i32 = arith.constant 0 : i32
    %0 = arith.cmpi eq, %arg0, %c0_i32 : i32
    %1 = arith.extui %0 : i1 to i32
    %c0_i32_0 = arith.constant 0 : i32
    %2 = arith.cmpi ne, %1, %c0_i32_0 : i32
    scf.if %2 {
      %cst_40 = arith.constant 0.000000e+00 : f32
      %52 = vector.broadcast %cst_40 : f32 to vector<2x9xf32>
      %c0_41 = arith.constant 0 : index
      %c0_42 = arith.constant 0 : index
      %53 = vector.load %arg12[%c0_41, %c0_42] : memref<2x9xf32, #tpu.memory_space<vmem>>, vector<2x9xf32>
      tpu.vector_store %arg12[%c0_41, %c0_42], %52 {strides = array<i32>} : memref<2x9xf32, #tpu.memory_space<vmem>>, vector<2x9xf32>,
    } else {
    }
    %c0 = arith.constant 0 : index
    %c0_1 = arith.constant 0 : index
    %c0_2 = arith.constant 0 : index
    %3 = vector.load %arg1[%c0, %c0_1, %c0_2] : memref<128x9x128xf32, #tpu.memory_space<vmem>>, vector<128x9x128xf32>
    %4 = vector.extract_strided_slice %3 {offsets = [0, 0, 0], sizes = [128, 1, 128], strides = [1, 1, 1]} : vector<128x9x128xf32> to vector<128x1x128xf32>
    %5 = vector.shape_cast %4 : vector<128x1x128xf32> to vector<128x128xf32>
    %c0_3 = arith.constant 0 : index
    %c0_4 = arith.constant 0 : index
    %6 = vector.load %arg3[%c0_3, %c0_4] : memref<128x128xf32, #tpu.memory_space<vmem>>, vector<128x128xf32>
    %cst = arith.constant dense<0.000000e+00> : vector<128x128xf32>
    %7 = tpu.matmul %5, %6, %cst {dimension_numbers = #tpu.dot_dimension_numbers<[1], [0], [0], [1], [0, 0, 1, 1], [], []>, precision = #tpu.contract_precision<fp32>} : vector<128x128xf32>, vector<128x128xf32>, vector<128x128xf32> -> vector<128x128xf32>
    %c0_5 = arith.constant 0 : index
    %c0_6 = arith.constant 0 : index
    %8 = vector.load %arg4[%c0_5, %c0_6] : memref<1x128xf32, #tpu.memory_space<vmem>>, vector<1x128xf32>
    %9 = vector.broadcast %8 : vector<1x128xf32> to vector<128x128xf32>
    %10 = arith.addf %7, %9 : vector<128x128xf32>
    %11 = arith.negf %10 : vector<128x128xf32>
    %12 = math.exp %11 : vector<128x128xf32>
    %cst_7 = arith.constant 1.000000e+00 : f32
    %13 = vector.broadcast %cst_7 : f32 to vector<128x128xf32>
    %14 = arith.addf %13, %12 : vector<128x128xf32>
    %15 = arith.divf %13, %14 : vector<128x128xf32>
    %16 = arith.mulf %10, %15 : vector<128x128xf32>
    %c0_8 = arith.constant 0 : index
    %c0_9 = arith.constant 0 : index
    %17 = vector.load %arg5[%c0_8, %c0_9] : memref<128x128xf32, #tpu.memory_space<vmem>>, vector<128x128xf32>
    %cst_10 = arith.constant dense<0.000000e+00> : vector<128x128xf32>
    %18 = tpu.matmul %16, %17, %cst_10 {dimension_numbers = #tpu.dot_dimension_numbers<[1], [0], [0], [1], [0, 0, 1, 1], [], []>, precision = #tpu.contract_precision<fp32>} : vector<128x128xf32>, vector<128x128xf32>, vector<128x128xf32> -> vector<128x128xf32>
    %c0_11 = arith.constant 0 : index
    %c0_12 = arith.constant 0 : index
    %19 = vector.load %arg6[%c0_11, %c0_12] : memref<1x128xf32, #tpu.memory_space<vmem>>, vector<1x128xf32>
    %20 = vector.broadcast %19 : vector<1x128xf32> to vector<128x128xf32>
    %21 = arith.addf %18, %20 : vector<128x128xf32>
    %22 = arith.negf %21 : vector<128x128xf32>
    %23 = math.exp %22 : vector<128x128xf32>
    %cst_13 = arith.constant 1.000000e+00 : f32
    %24 = vector.broadcast %cst_13 : f32 to vector<128x128xf32>
    %25 = arith.addf %24, %23 : vector<128x128xf32>
    %26 = arith.divf %24, %25 : vector<128x128xf32>
    %27 = arith.mulf %21, %26 : vector<128x128xf32>
    %c0_14 = arith.constant 0 : index
    %c0_15 = arith.constant 0 : index
    %28 = vector.load %arg7[%c0_14, %c0_15] : memref<128x1xf32, #tpu.memory_space<vmem>>, vector<128x1xf32>
    %cst_16 = arith.constant dense<0.000000e+00> : vector<128x1xf32>
    %29 = tpu.matmul %27, %28, %cst_16 {dimension_numbers = #tpu.dot_dimension_numbers<[1], [0], [0], [1], [0, 0, 1, 1], [], []>, precision = #tpu.contract_precision<fp32>} : vector<128x128xf32>, vector<128x1xf32>, vector<128x1xf32> -> vector<128x1xf32>
    %c0_17 = arith.constant 0 : index
    %c0_18 = arith.constant 0 : index
    %30 = vector.load %arg8[%c0_17, %c0_18] : memref<1x1xf32, #tpu.memory_space<vmem>>, vector<1x1xf32>
    %31 = vector.broadcast %30 : vector<1x1xf32> to vector<128x1xf32>
    %32 = arith.addf %29, %31 : vector<128x1xf32>
    %33 = vector.extract_strided_slice %3 {offsets = [0, 4, 0], sizes = [128, 5, 128], strides = [1, 1, 1]} : vector<128x9x128xf32> to vector<128x5x128xf32>
    %c0_19 = arith.constant 0 : index
    %c0_20 = arith.constant 0 : index
    %34 = vector.load %arg9[%c0_19, %c0_20] : memref<1x128xf32, #tpu.memory_space<vmem>>, vector<1x128xf32>
    %35 = vector.shape_cast %34 : vector<1x128xf32> to vector<1x1x128xf32>
    %36 = vector.broadcast %35 : vector<1x1x128xf32> to vector<128x5x128xf32>
    %37 = arith.mulf %33, %36 : vector<128x5x128xf32>
    %cst_21 = arith.constant dense<0.000000e+00> : vector<128x5xf32>
    %38 = vector.multi_reduction <add>, %37, %cst_21 [2] : vector<128x5x128xf32> to vector<128x5xf32>
    %c0_22 = arith.constant 0 : index
    %c0_23 = arith.constant 0 : index
    %39 = vector.load %arg2[%c0_22, %c0_23] : memref<2x128xf32, #tpu.memory_space<vmem>>, vector<2x128xf32>
    %c0_24 = arith.constant 0 : index
    %c0_25 = arith.constant 0 : index
    %40 = vector.load %arg12[%c0_24, %c0_25] : memref<2x9xf32, #tpu.memory_space<vmem>>, vector<2x1xf32>
    %cst_26 = arith.constant dense<0.000000e+00> : vector<2x1xf32>
    %41 = tpu.matmul %39, %32, %cst_26 {dimension_numbers = #tpu.dot_dimension_numbers<[1], [0], [0], [1], [0, 0, 1, 1], [], []>, precision = #tpu.contract_precision<fp32>} : vector<2x128xf32>, vector<128x1xf32>, vector<2x1xf32> -> vector<2x1xf32>
    %42 = arith.addf %40, %41 : vector<2x1xf32>
    %c0_27 = arith.constant 0 : index
    %c0_28 = arith.constant 0 : index
    %43 = vector.load %arg12[%c0_27, %c0_28] : memref<2x9xf32, #tpu.memory_space<vmem>>, vector<2x1xf32>
    tpu.vector_store %arg12[%c0_27, %c0_28], %42 {strides = array<i32>} : memref<2x9xf32, #tpu.memory_space<vmem>>, vector<2x1xf32>,
    %c0_29 = arith.constant 0 : index
    %c4 = arith.constant 4 : index
    %44 = vector.load %arg12[%c0_29, %c4] : memref<2x9xf32, #tpu.memory_space<vmem>>, vector<2x5xf32>
    %cst_30 = arith.constant dense<0.000000e+00> : vector<2x5xf32>
    %45 = tpu.matmul %39, %38, %cst_30 {dimension_numbers = #tpu.dot_dimension_numbers<[1], [0], [0], [1], [0, 0, 1, 1], [], []>, precision = #tpu.contract_precision<fp32>} : vector<2x128xf32>, vector<128x5xf32>, vector<2x5xf32> -> vector<2x5xf32>
    %46 = arith.addf %44, %45 : vector<2x5xf32>
    %c0_31 = arith.constant 0 : index
    %c4_32 = arith.constant 4 : index
    %47 = vector.load %arg12[%c0_31, %c4_32] : memref<2x9xf32, #tpu.memory_space<vmem>>, vector<2x5xf32>
    tpu.vector_store %arg12[%c0_31, %c4_32], %46 {strides = array<i32>} : memref<2x9xf32, #tpu.memory_space<vmem>>, vector<2x5xf32>,
    %c0_33 = arith.constant 0 : index
    %c0_34 = arith.constant 0 : index
    %48 = vector.load %arg12[%c0_33, %c0_34] : memref<2x9xf32, #tpu.memory_space<vmem>>, vector<2x9xf32>
    %c0_35 = arith.constant 0 : index
    %c0_36 = arith.constant 0 : index
    %49 = vector.load %arg10[%c0_35, %c0_36] : memref<9x9xf32, #tpu.memory_space<vmem>>, vector<9x9xf32>
    %cst_37 = arith.constant dense<0.000000e+00> : vector<2x9xf32>
    %50 = tpu.matmul %48, %49, %cst_37 {dimension_numbers = #tpu.dot_dimension_numbers<[1], [0], [0], [1], [0, 0, 1, 1], [], []>, precision = #tpu.contract_precision<fp32>} : vector<2x9xf32>, vector<9x9xf32>, vector<2x9xf32> -> vector<2x9xf32>
    %c0_38 = arith.constant 0 : index
    %c0_39 = arith.constant 0 : index
    %51 = vector.load %arg11[%c0_38, %c0_39] : memref<2x9xf32, #tpu.memory_space<vmem>>, vector<2x9xf32>
    tpu.vector_store %arg11[%c0_38, %c0_39], %50 {strides = array<i32>} : memref<2x9xf32, #tpu.memory_space<vmem>>, vector<2x9xf32>,
    return
  }
  func.func @transform_0(%arg0: i32) -> (i32, i32, i32) {
    %c0_i32 = arith.constant 0 : i32
    %c0_i32_0 = arith.constant 0 : i32
    %c0_i32_1 = arith.constant 0 : i32
    return %arg0, %c0_i32, %c0_i32_0 : i32, i32, i32
  }
  func.func @transform_1(%arg0: i32) -> (i32, i32) {
    %c0_i32 = arith.constant 0 : i32
    %c0_i32_0 = arith.constant 0 : i32
    return %c0_i32, %arg0 : i32, i32
  }
  func.func @transform_2(%arg0: i32) -> (i32, i32) {
    %c0_i32 = arith.constant 0 : i32
    %c0_i32_0 = arith.constant 0 : i32
    %c0_i32_1 = arith.constant 0 : i32
    return %c0_i32, %c0_i32_0 : i32, i32
  }
  func.func @transform_3(%arg0: i32) -> (i32, i32) {
    %c0_i32 = arith.constant 0 : i32
    %c0_i32_0 = arith.constant 0 : i32
    %c0_i32_1 = arith.constant 0 : i32
    return %c0_i32, %c0_i32_0 : i32, i32
  }
  func.func @transform_4(%arg0: i32) -> (i32, i32) {
    %c0_i32 = arith.constant 0 : i32
    %c0_i32_0 = arith.constant 0 : i32
    %c0_i32_1 = arith.constant 0 : i32
    return %c0_i32, %c0_i32_0 : i32, i32
  }
  func.func @transform_5(%arg0: i32) -> (i32, i32) {
    %c0_i32 = arith.constant 0 : i32
    %c0_i32_0 = arith.constant 0 : i32
    %c0_i32_1 = arith.constant 0 : i32
    return %c0_i32, %c0_i32_0 : i32, i32
  }
  func.func @transform_6(%arg0: i32) -> (i32, i32) {
    %c0_i32 = arith.constant 0 : i32
    %c0_i32_0 = arith.constant 0 : i32
    %c0_i32_1 = arith.constant 0 : i32
    return %c0_i32, %c0_i32_0 : i32, i32
  }
  func.func @transform_7(%arg0: i32) -> (i32, i32) {
    %c0_i32 = arith.constant 0 : i32
    %c0_i32_0 = arith.constant 0 : i32
    %c0_i32_1 = arith.constant 0 : i32
    return %c0_i32, %c0_i32_0 : i32, i32
  }
  func.func @transform_8(%arg0: i32) -> (i32, i32) {
    %c0_i32 = arith.constant 0 : i32
    %c0_i32_0 = arith.constant 0 : i32
    %c0_i32_1 = arith.constant 0 : i32
    return %c0_i32, %c0_i32_0 : i32, i32
  }
  func.func @transform_9(%arg0: i32) -> (i32, i32) {
    %c0_i32 = arith.constant 0 : i32
    %c0_i32_0 = arith.constant 0 : i32
    %c0_i32_1 = arith.constant 0 : i32
    return %c0_i32, %c0_i32_0 : i32, i32
  }
  func.func @transform_10(%arg0: i32) -> (i32, i32) {
    %c0_i32 = arith.constant 0 : i32
    %c0_i32_0 = arith.constant 0 : i32
    %c0_i32_1 = arith.constant 0 : i32
    return %c0_i32, %c0_i32_0 : i32, i32
  }
}

</mosaic_0001>

<llo_original>
// kernel: tpu_custom_call.1
$region0: #{tpu_custom_call.1}
  #allocation0 [shape = 'u32[]', space=smem, size = 0x4, offset = 0x4, fixed_abs, tag = 'smem constant byte address 0x4 - core index']
  #allocation1 [shape = 'u32[144,128]{1,0:T(1,128)}', space=vmem, size = 0x12000, scoped, tag = 'internal scratch']
  #allocation2 [shape = 'f32[2,9]{1,0:T(2,128)}', space=vmem, size = 0x400, scoped, tag = 'scratch operand']
  #allocation3 [shape = 'f32[1,1]{1,0:T(1,128)S(1)}', space=vmem, size = 0x200, scoped, tag = 'scoped memory for tpu_custom_call.1']
  %s0 = inlined_call_operand.vmem [shape: f32[384,9,128], index: 0, kind: input, shape index: {}]
  %s1 = inlined_call_operand.vmem [shape: f32[2,384], index: 1, kind: input, shape index: {}]
  %s2 = inlined_call_operand.vmem [shape: f32[128,128], index: 2, kind: input, shape index: {}]
  %s3 = inlined_call_operand.vmem [shape: f32[1,128], index: 3, kind: input, shape index: {}]
  %s4 = inlined_call_operand.vmem [shape: f32[128,128], index: 4, kind: input, shape index: {}]
  %s5 = inlined_call_operand.vmem [shape: f32[1,128], index: 5, kind: input, shape index: {}]
  %s6 = inlined_call_operand.vmem [shape: f32[128,1], index: 6, kind: input, shape index: {}]
  %s7 = inlined_call_operand.<no memory space> [shape: f32[1,1], index: 7, kind: input, shape index: {}]
  %s8 = inlined_call_operand.vmem [shape: f32[1,128], index: 8, kind: input, shape index: {}]
  %s9 = inlined_call_operand.vmem [shape: f32[9,9], index: 9, kind: input, shape index: {}]
  %s10 = inlined_call_operand.hbm [shape: f32[2,9], index: 10, kind: output, shape index: {}]
  %s11 = sld [smem:[#allocation0]]
  $region77: #{tpu_custom_call.1} parent=0
    _
  %s13 = ssub.s32 1, %s11
  %s14 = scalar_select 0, %s13, %s11
  %v15 = vstv %s7
  %16 = vst [vmem:[#allocation3] sm:$0x1] %v15
  $region1: #{tpu_custom_call.1} parent=0
    #allocation4 [shape = 'u8[1024]{0}', space=vmem, size = 0x400, scoped, tag = 'output window, operand 0, single buffered']
    #allocation5 [shape = 's32[2]{0}', space=sflag, size = 0x8, scoped, tag = 'scoped memory for tpu_custom_call.1']
    %17 = vsyncpa [#allocation5], 0
    loop: start=0, step=1, limit=5
    $region2: #{tpu_custom_call.1} parent=1 // loop_pre_header
      _
    $region3: #{tpu_custom_call.1} parent=1 // loop_header
      %s19 = sphi 0, %s23
      %p20 = scmp.ge.s32.totalorder %s19, 5
      %s29 = sphi 0, %s31
      %s32 = sphi 0, %s29
      %s33 = sphi 0, %s32
      %s49 = sphi 0, %s33
      %s55 = sphi 0, %s57
      %s58 = sphi 0, %s55
      %s59 = sphi 0, %s58
      %s75 = sphi 0, %s59
      %s79 = sphi 0, %s79
      %s81 = sphi 0, %s79
      %s82 = sphi 0, %s81
      %s96 = sphi 0, %s82
      %s100 = sphi 0, %s100
      %s102 = sphi 0, %s100
      %s103 = sphi 0, %s102
      %s117 = sphi 0, %s103
      %s121 = sphi 0, %s121
      %s123 = sphi 0, %s121
      %s124 = sphi 0, %s123
      %s138 = sphi 0, %s124
      %s142 = sphi 0, %s142
      %s144 = sphi 0, %s142
      %s145 = sphi 0, %s144
      %s159 = sphi 0, %s145
      %s163 = sphi 0, %s163
      %s165 = sphi 0, %s163
      %s166 = sphi 0, %s165
      %s180 = sphi 0, %s166
      %s184 = sphi 0, %s184
      %s186 = sphi 0, %s184
      %s187 = sphi 0, %s186
      %s201 = sphi 0, %s187
      %s205 = sphi 0, %s205
      %s207 = sphi 0, %s205
      %s208 = sphi 0, %s207
      %s222 = sphi 0, %s208
      %s226 = sphi 0, %s226
      %s228 = sphi 0, %s226
      %s229 = sphi 0, %s228
      %s243 = sphi 0, %s229
      %s247 = sphi 0, %s247
      %s249 = sphi 0, %s247
      %s250 = sphi 0, %s249
      %s264 = sphi 0, %s250
    $region4: #{tpu_custom_call.1} parent=1 // loop_header_branch
      %22 = sbr.rel (%p20) target = $region8
    $region5: #{tpu_custom_call.1} parent=1 // loop_body
      %s24 = ssub.s32 %s19, 1
      %s25 = ssub.s32 %s19, 2
      %s26 = sadd.s32 %s19, 1
      %s27 = ssub.s32 %s19, %s26
      %p28 = scmp.eq.s32.totalorder %s27, 0
      %s30 = sadd.s32 %s29, 1
      %s31 = scalar_select %p28, %s29, %s30
      %p34 = pneg %p28
      %p35 = scmp.eq.s32.totalorder %s19, 2
      %p36 = por %p34, %p35
      %p37 = scmp.ne.s32.totalorder %s29, %s32
      %p38 = scmp.eq.s32.totalorder %s19, 0
      %p39 = por %p37, %p38
      %p40 = scmp.ne.s32.totalorder %s29, %s32
      %p41 = scmp.eq.s32.totalorder %s24, 2
      %p42 = por %p40, %p41
      %p43 = scmp.ne.s32.totalorder %s32, %s33
      %p44 = scmp.eq.s32.totalorder %s24, 0
      %p45 = por %p43, %p44
      %p46 = scmp.ne.s32.totalorder %s32, %s33
      %p47 = scmp.eq.s32.totalorder %s25, 2
      %p48 = por %p46, %p47
      %p50 = scmp.ne.s32.totalorder %s33, %s49
      %p51 = scmp.eq.s32.totalorder %s25, 0
      %p52 = por %p50, %p51
      %s53 = ssub.s32 %s19, %s26
      %p54 = scmp.eq.s32.totalorder %s53, 0
      %s56 = sadd.s32 %s55, 1
      %s57 = scalar_select %p54, %s55, %s56
      %p60 = pneg %p54
      %p61 = scmp.eq.s32.totalorder %s19, 2
      %p62 = por %p60, %p61
      %p63 = scmp.ne.s32.totalorder %s55, %s58
      %p64 = scmp.eq.s32.totalorder %s19, 0
      %p65 = por %p63, %p64
      %p66 = scmp.ne.s32.totalorder %s55, %s58
      %p67 = scmp.eq.s32.totalorder %s24, 2
      %p68 = por %p66, %p67
      %p69 = scmp.ne.s32.totalorder %s58, %s59
      %p70 = scmp.eq.s32.totalorder %s24, 0
      %p71 = por %p69, %p70
      %p72 = scmp.ne.s32.totalorder %s58, %s59
      %p73 = scmp.eq.s32.totalorder %s25, 2
      %p74 = por %p72, %p73
      %p76 = scmp.ne.s32.totalorder %s59, %s75
      %p77 = scmp.eq.s32.totalorder %s25, 0
      %p78 = por %p76, %p77
      %s80 = sadd.s32 %s79, 1
      %p83 = scmp.eq.s32.totalorder %s19, 2
      %p84 = scmp.ne.s32.totalorder %s79, %s81
      %p85 = scmp.eq.s32.totalorder %s19, 0
      %p86 = por %p84, %p85
      %p87 = scmp.ne.s32.totalorder %s79, %s81
      %p88 = scmp.eq.s32.totalorder %s24, 2
      %p89 = por %p87, %p88
      %p90 = scmp.ne.s32.totalorder %s81, %s82
      %p91 = scmp.eq.s32.totalorder %s24, 0
      %p92 = por %p90, %p91
      %p93 = scmp.ne.s32.totalorder %s81, %s82
      %p94 = scmp.eq.s32.totalorder %s25, 2
      %p95 = por %p93, %p94
      %p97 = scmp.ne.s32.totalorder %s82, %s96
      %p98 = scmp.eq.s32.totalorder %s25, 0
      %p99 = por %p97, %p98
      %s101 = sadd.s32 %s100, 1
      %p104 = scmp.eq.s32.totalorder %s19, 2
      %p105 = scmp.ne.s32.totalorder %s100, %s102
      %p106 = scmp.eq.s32.totalorder %s19, 0
      %p107 = por %p105, %p106
      %p108 = scmp.ne.s32.totalorder %s100, %s102
      %p109 = scmp.eq.s32.totalorder %s24, 2
      %p110 = por %p108, %p109
      %p111 = scmp.ne.s32.totalorder %s102, %s103
      %p112 = scmp.eq.s32.totalorder %s24, 0
      %p113 = por %p111, %p112
      %p114 = scmp.ne.s32.totalorder %s102, %s103
      %p115 = scmp.eq.s32.totalorder %s25, 2
      %p116 = por %p114, %p115
      %p118 = scmp.ne.s32.totalorder %s103, %s117
      %p119 = scmp.eq.s32.totalorder %s25, 0
      %p120 = por %p118, %p119
      %s122 = sadd.s32 %s121, 1
      %p125 = scmp.eq.s32.totalorder %s19, 2
      %p126 = scmp.ne.s32.totalorder %s121, %s123
      %p127 = scmp.eq.s32.totalorder %s19, 0
      %p128 = por %p126, %p127
      %p129 = scmp.ne.s32.totalorder %s121, %s123
      %p130 = scmp.eq.s32.totalorder %s24, 2
      %p131 = por %p129, %p130
      %p132 = scmp.ne.s32.totalorder %s123, %s124
      %p133 = scmp.eq.s32.totalorder %s24, 0
      %p134 = por %p132, %p133
      %p135 = scmp.ne.s32.totalorder %s123, %s124
      %p136 = scmp.eq.s32.totalorder %s25, 2
      %p137 = por %p135, %p136
      %p139 = scmp.ne.s32.totalorder %s124, %s138
      %p140 = scmp.eq.s32.totalorder %s25, 0
      %p141 = por %p139, %p140
      %s143 = sadd.s32 %s142, 1
      %p146 = scmp.eq.s32.totalorder %s19, 2
      %p147 = scmp.ne.s32.totalorder %s142, %s144
      %p148 = scmp.eq.s32.totalorder %s19, 0
      %p149 = por %p147, %p148
      %p150 = scmp.ne.s32.totalorder %s142, %s144
      %p151 = scmp.eq.s32.totalorder %s24, 2
      %p152 = por %p150, %p151
      %p153 = scmp.ne.s32.totalorder %s144, %s145
      %p154 = scmp.eq.s32.totalorder %s24, 0
      %p155 = por %p153, %p154
      %p156 = scmp.ne.s32.totalorder %s144, %s145
      %p157 = scmp.eq.s32.totalorder %s25, 2
      %p158 = por %p156, %p157
      %p160 = scmp.ne.s32.totalorder %s145, %s159
      %p161 = scmp.eq.s32.totalorder %s25, 0
      %p162 = por %p160, %p161
      %s164 = sadd.s32 %s163, 1
      %p167 = scmp.eq.s32.totalorder %s19, 2
      %p168 = scmp.ne.s32.totalorder %s163, %s165
      %p169 = scmp.eq.s32.totalorder %s19, 0
      %p170 = por %p168, %p169
      %p171 = scmp.ne.s32.totalorder %s163, %s165
      %p172 = scmp.eq.s32.totalorder %s24, 2
      %p173 = por %p171, %p172
      %p174 = scmp.ne.s32.totalorder %s165, %s166
      %p175 = scmp.eq.s32.totalorder %s24, 0
      %p176 = por %p174, %p175
      %p177 = scmp.ne.s32.totalorder %s165, %s166
      %p178 = scmp.eq.s32.totalorder %s25, 2
      %p179 = por %p177, %p178
      %p181 = scmp.ne.s32.totalorder %s166, %s180
      %p182 = scmp.eq.s32.totalorder %s25, 0
      %p183 = por %p181, %p182
      %s185 = sadd.s32 %s184, 1
      %p188 = scmp.eq.s32.totalorder %s19, 2
      %p189 = scmp.ne.s32.totalorder %s184, %s186
      %p190 = scmp.eq.s32.totalorder %s19, 0
      %p191 = por %p189, %p190
      %p192 = scmp.ne.s32.totalorder %s184, %s186
      %p193 = scmp.eq.s32.totalorder %s24, 2
      %p194 = por %p192, %p193
      %p195 = scmp.ne.s32.totalorder %s186, %s187
      %p196 = scmp.eq.s32.totalorder %s24, 0
      %p197 = por %p195, %p196
      %p198 = scmp.ne.s32.totalorder %s186, %s187
      %p199 = scmp.eq.s32.totalorder %s25, 2
      %p200 = por %p198, %p199
      %p202 = scmp.ne.s32.totalorder %s187, %s201
      %p203 = scmp.eq.s32.totalorder %s25, 0
      %p204 = por %p202, %p203
      %s206 = sadd.s32 %s205, 1
      %p209 = scmp.eq.s32.totalorder %s19, 2
      %p210 = scmp.ne.s32.totalorder %s205, %s207
      %p211 = scmp.eq.s32.totalorder %s19, 0
      %p212 = por %p210, %p211
      %p213 = scmp.ne.s32.totalorder %s205, %s207
      %p214 = scmp.eq.s32.totalorder %s24, 2
      %p215 = por %p213, %p214
      %p216 = scmp.ne.s32.totalorder %s207, %s208
      %p217 = scmp.eq.s32.totalorder %s24, 0
      %p218 = por %p216, %p217
      %p219 = scmp.ne.s32.totalorder %s207, %s208
      %p220 = scmp.eq.s32.totalorder %s25, 2
      %p221 = por %p219, %p220
      %p223 = scmp.ne.s32.totalorder %s208, %s222
      %p224 = scmp.eq.s32.totalorder %s25, 0
      %p225 = por %p223, %p224
      %s227 = sadd.s32 %s226, 1
      %p230 = scmp.eq.s32.totalorder %s19, 2
      %p231 = scmp.ne.s32.totalorder %s226, %s228
      %p232 = scmp.eq.s32.totalorder %s19, 0
      %p233 = por %p231, %p232
      %p234 = scmp.ne.s32.totalorder %s226, %s228
      %p235 = scmp.eq.s32.totalorder %s24, 2
      %p236 = por %p234, %p235
      %p237 = scmp.ne.s32.totalorder %s228, %s229
      %p238 = scmp.eq.s32.totalorder %s24, 0
      %p239 = por %p237, %p238
      %p240 = scmp.ne.s32.totalorder %s228, %s229
      %p241 = scmp.eq.s32.totalorder %s25, 2
      %p242 = por %p240, %p241
      %p244 = scmp.ne.s32.totalorder %s229, %s243
      %p245 = scmp.eq.s32.totalorder %s25, 0
      %p246 = por %p244, %p245
      %s248 = sadd.s32 %s247, 1
      %p251 = scmp.eq.s32.totalorder %s19, 2
      %p252 = scmp.ne.s32.totalorder %s247, %s249
      %p253 = scmp.eq.s32.totalorder %s19, 0
      %p254 = por %p252, %p253
      %p255 = scmp.ne.s32.totalorder %s247, %s249
      %p256 = scmp.eq.s32.totalorder %s24, 2
      %p257 = por %p255, %p256
      %p258 = scmp.ne.s32.totalorder %s249, %s250
      %p259 = scmp.eq.s32.totalorder %s24, 0
      %p260 = por %p258, %p259
      %p261 = scmp.ne.s32.totalorder %s249, %s250
      %p262 = scmp.eq.s32.totalorder %s25, 2
      %p263 = por %p261, %p262
      %p265 = scmp.ne.s32.totalorder %s250, %s264
      %p266 = scmp.eq.s32.totalorder %s25, 0
      %p267 = por %p265, %p266
      %p268 = scmp.le.s32.totalorder 1, %s19
      %p269 = scmp.lt.s32.totalorder %s19, 4
      %p270 = pnand %p268, %p269
      %p271 = pneg %p270
      // Predicated region
      $region9: #{tpu_custom_call.1} parent=5 // pred_check
        _
      $region10: #{tpu_custom_call.1} parent=5 // pred_check_branch
        %273 = sbr.rel (%p270) target = $region12
      $region11: #{tpu_custom_call.1} parent=5 // pred_region
        %s274 = ssub.s32 %s19, 1
        // Predicated region
        $region13: #{tpu_custom_call.1} parent=11 // pred_check
          %p275 = pneg %p92
        $region14: #{tpu_custom_call.1} parent=11 // pred_check_branch
          %277 = sbr.rel (%p275) target = $region16
        $region15: #{tpu_custom_call.1} parent=11 // pred_region
          _
        $region16: #{tpu_custom_call.1} parent=11 // pred_fallthru
          _
        // Predicated region
        $region17: #{tpu_custom_call.1} parent=11 // pred_check
          %p278 = pneg %p113
        $region18: #{tpu_custom_call.1} parent=11 // pred_check_branch
          %280 = sbr.rel (%p278) target = $region20
        $region19: #{tpu_custom_call.1} parent=11 // pred_region
          _
        $region20: #{tpu_custom_call.1} parent=11 // pred_fallthru
          _
        // Predicated region
        $region21: #{tpu_custom_call.1} parent=11 // pred_check
          %p281 = pneg %p134
        $region22: #{tpu_custom_call.1} parent=11 // pred_check_branch
          %283 = sbr.rel (%p281) target = $region24
        $region23: #{tpu_custom_call.1} parent=11 // pred_region
          _
        $region24: #{tpu_custom_call.1} parent=11 // pred_fallthru
          _
        // Predicated region
        $region25: #{tpu_custom_call.1} parent=11 // pred_check
          %p284 = pneg %p155
        $region26: #{tpu_custom_call.1} parent=11 // pred_check_branch
          %286 = sbr.rel (%p284) target = $region28
        $region27: #{tpu_custom_call.1} parent=11 // pred_region
          _
        $region28: #{tpu_custom_call.1} parent=11 // pred_fallthru
          _
        // Predicated region
        $region29: #{tpu_custom_call.1} parent=11 // pred_check
          %p287 = pneg %p176
        $region30: #{tpu_custom_call.1} parent=11 // pred_check_branch
          %289 = sbr.rel (%p287) target = $region32
        $region31: #{tpu_custom_call.1} parent=11 // pred_region
          _
        $region32: #{tpu_custom_call.1} parent=11 // pred_fallthru
          _
        // Predicated region
        $region33: #{tpu_custom_call.1} parent=11 // pred_check
          %p290 = pneg %p197
        $region34: #{tpu_custom_call.1} parent=11 // pred_check_branch
          %292 = sbr.rel (%p290) target = $region36
        $region35: #{tpu_custom_call.1} parent=11 // pred_region
          _
        $region36: #{tpu_custom_call.1} parent=11 // pred_fallthru
          _
        // Predicated region
        $region37: #{tpu_custom_call.1} parent=11 // pred_check
          %p293 = pneg %p218
        $region38: #{tpu_custom_call.1} parent=11 // pred_check_branch
          %295 = sbr.rel (%p293) target = $region40
        $region39: #{tpu_custom_call.1} parent=11 // pred_region
          _
        $region40: #{tpu_custom_call.1} parent=11 // pred_fallthru
          _
        // Predicated region
        $region41: #{tpu_custom_call.1} parent=11 // pred_check
          %p296 = pneg %p239
        $region42: #{tpu_custom_call.1} parent=11 // pred_check_branch
          %298 = sbr.rel (%p296) target = $region44
        $region43: #{tpu_custom_call.1} parent=11 // pred_region
          _
        $region44: #{tpu_custom_call.1} parent=11 // pred_fallthru
          _
      $region12: #{tpu_custom_call.1} parent=5 // pred_fallthru
        _
      %p299 = scmp.lt.s32.totalorder %s19, 3
      // Predicated region
      $region45: #{tpu_custom_call.1} parent=5 // pred_check
        %p300 = pneg %p299
      $region46: #{tpu_custom_call.1} parent=5 // pred_check_branch
        %302 = sbr.rel (%p300) target = $region48
      $region47: #{tpu_custom_call.1} parent=5 // pred_region
        // Predicated region
        $region49: #{tpu_custom_call.1} parent=47 // pred_check
          %p303 = pneg %p39
        $region50: #{tpu_custom_call.1} parent=47 // pred_check_branch
          %305 = sbr.rel (%p303) target = $region52
        $region51: #{tpu_custom_call.1} parent=47 // pred_region
          %s306 = smul.u32 128, %s19
          %p307 = scmp.lt.s32.totalorder %s306, 383
          %s308 = scalar_select %p307, %s306, 383
          %s309 = smul.addr %s308, 2
          %s310 = smul.addr %s309, 8
          %s311 = scalar_lea.vmem %s0, %s310
          %s312 = smul.u32 128, %s19
        $region52: #{tpu_custom_call.1} parent=47 // pred_fallthru
          _
        // Predicated region
        $region53: #{tpu_custom_call.1} parent=47 // pred_check
          %p313 = pneg %p65
        $region54: #{tpu_custom_call.1} parent=47 // pred_check_branch
          %315 = sbr.rel (%p313) target = $region56
        $region55: #{tpu_custom_call.1} parent=47 // pred_region
          %p316 = scmp.lt.s32.totalorder %s19, 2
          %s317 = scalar_select %p316, %s19, 2
          %s318 = smul.addr %s317, 2
          %s319 = scalar_lea.vmem %s1, %s318
        $region56: #{tpu_custom_call.1} parent=47 // pred_fallthru
          _
      $region48: #{tpu_custom_call.1} parent=5 // pred_fallthru
        _
      %p320 = scmp.le.s32.totalorder 1, %s19
      %p321 = scmp.lt.s32.totalorder %s19, 4
      %p322 = pnand %p320, %p321
      %p323 = pneg %p322
      // Predicated region
      $region57: #{tpu_custom_call.1} parent=5 // pred_check
        _
      $region58: #{tpu_custom_call.1} parent=5 // pred_check_branch
        %325 = sbr.rel (%p322) target = $region60
      $region59: #{tpu_custom_call.1} parent=5 // pred_region
        %s326 = ssub.s32 %s19, 1
        %s327 = smul.u32 128, %s24
        %p328 = scmp.lt.s32.totalorder %s327, 383
        %s329 = scalar_select %p328, %s327, 383
        %s330 = smul.addr %s329, 2
        %s331 = smul.addr %s330, 8
        %s332 = scalar_lea.vmem %s0, %s331
        %p333 = pneg %p45
        %p334 = pneg %p42
        %p335 = scmp.lt.s32.totalorder %s24, 2
        %s336 = scalar_select %p335, %s24, 2
        %s337 = smul.addr %s336, 2
        %s338 = scalar_lea.vmem %s1, %s337
        %p339 = pneg %p71
        %p340 = pneg %p68
        %p341 = pneg %p92
        %p342 = pneg %p89
        %p343 = pneg %p113
        %p344 = pneg %p110
        %p345 = pneg %p134
        %p346 = pneg %p131
        %p347 = pneg %p155
        %p348 = pneg %p152
        %p349 = pneg %p176
        %p350 = pneg %p173
        %p351 = pneg %p197
        %p352 = pneg %p194
        %p353 = pneg %p218
        %p354 = pneg %p215
        %p355 = pneg %p239
        %p356 = pneg %p236
        %p357 = pneg %p260
        %p358 = pneg %p257
        %s359 = smul.u32 128, %s24
        %p360 = scmp.lt.s32.totalorder %s359, 383
        %s361 = scalar_select %p360, %s359, 383
        %s362 = smul.addr %s361, 2
        %s363 = smul.addr %s362, 8
        %s364 = scalar_lea.vmem %s0, %s363
        %s365 = smul.u32 128, %s24
        %p366 = scmp.lt.s32.totalorder %s24, 2
        %s367 = scalar_select %p366, %s24, 2
        %s368 = smul.addr %s367, 2
        %s369 = scalar_lea.vmem %s1, %s368
        %p370 = scmp.eq.s32.totalorder %s24, 0
        // Predicated region
        $region61: #{tpu_custom_call.1} parent=59 // pred_check
          %p371 = pneg %p370
        $region62: #{tpu_custom_call.1} parent=59 // pred_check_branch
          %373 = sbr.rel (%p371) target = $region64
        $region63: #{tpu_custom_call.1} parent=59 // pred_region
          %vm374 = vcmask 66560
          %375 = vst.msk [vmem:[#allocation2] sm:$0x3] %vm374, 0.0
        $region64: #{tpu_custom_call.1} parent=59 // pred_fallthru
          _
        %v376 = vld [vmem:[%s364] sm:$0xff]
        %v377 = vld [vmem:[%s364 + $0x8] sm:$0x1]
        %v378 = vld [vmem:[%s364 + $0x10] sm:$0xff]
        %v379 = vld [vmem:[%s364 + $0x18] sm:$0x1]
        %v380 = vld [vmem:[%s364 + $0x20] sm:$0xff]
        %v381 = vld [vmem:[%s364 + $0x28] sm:$0x1]
        %v382 = vld [vmem:[%s364 + $0x30] sm:$0xff]
        %v383 = vld [vmem:[%s364 + $0x38] sm:$0x1]
        %v384 = vld [vmem:[%s364 + $0x40] sm:$0xff]
        %v385 = vld [vmem:[%s364 + $0x48] sm:$0x1]
        %v386 = vld [vmem:[%s364 + $0x50] sm:$0xff]
        %v387 = vld [vmem:[%s364 + $0x58] sm:$0x1]
        %v388 = vld [vmem:[%s364 + $0x60] sm:$0xff]
        %v389 = vld [vmem:[%s364 + $0x68] sm:$0x1]
        %v390 = vld [vmem:[%s364 + $0x70] sm:$0xff]
        %v391 = vld [vmem:[%s364 + $0x78] sm:$0x1]
        %v392 = vld [vmem:[%s364 + $0x80] sm:$0xff]
        %v393 = vld [vmem:[%s364 + $0x88] sm:$0x1]
        %v394 = vld [vmem:[%s364 + $0x90] sm:$0xff]
        %v395 = vld [vmem:[%s364 + $0x98] sm:$0x1]
        %v396 = vld [vmem:[%s364 + $0xa0] sm:$0xff]
        %v397 = vld [vmem:[%s364 + $0xa8] sm:$0x1]
        %v398 = vld [vmem:[%s364 + $0xb0] sm:$0xff]
        %v399 = vld [vmem:[%s364 + $0xb8] sm:$0x1]
        %v400 = vld [vmem:[%s364 + $0xc0] sm:$0xff]
        %v401 = vld [vmem:[%s364 + $0xc8] sm:$0x1]
        %v402 = vld [vmem:[%s364 + $0xd0] sm:$0xff]
        %v403 = vld [vmem:[%s364 + $0xd8] sm:$0x1]
        %v404 = vld [vmem:[%s364 + $0xe0] sm:$0xff]
        %v405 = vld [vmem:[%s364 + $0xe8] sm:$0x1]
        %v406 = vld [vmem:[%s364 + $0xf0] sm:$0xff]
        %v407 = vld [vmem:[%s364 + $0xf8] sm:$0x1]
        %v408 = vld [vmem:[%s364 + $0x100] sm:$0xff]
        %v409 = vld [vmem:[%s364 + $0x108] sm:$0x1]
        %v410 = vld [vmem:[%s364 + $0x110] sm:$0xff]
        %v411 = vld [vmem:[%s364 + $0x118] sm:$0x1]
        %v412 = vld [vmem:[%s364 + $0x120] sm:$0xff]
        %v413 = vld [vmem:[%s364 + $0x128] sm:$0x1]
        %v414 = vld [vmem:[%s364 + $0x130] sm:$0xff]
        %v415 = vld [vmem:[%s364 + $0x138] sm:$0x1]
        %v416 = vld [vmem:[%s364 + $0x140] sm:$0xff]
        %v417 = vld [vmem:[%s364 + $0x148] sm:$0x1]
        %v418 = vld [vmem:[%s364 + $0x150] sm:$0xff]
        %v419 = vld [vmem:[%s364 + $0x158] sm:$0x1]
        %v420 = vld [vmem:[%s364 + $0x160] sm:$0xff]
        %v421 = vld [vmem:[%s364 + $0x168] sm:$0x1]
        %v422 = vld [vmem:[%s364 + $0x170] sm:$0xff]
        %v423 = vld [vmem:[%s364 + $0x178] sm:$0x1]
        %v424 = vld [vmem:[%s364 + $0x180] sm:$0xff]
        %v425 = vld [vmem:[%s364 + $0x188] sm:$0x1]
        %v426 = vld [vmem:[%s364 + $0x190] sm:$0xff]
        %v427 = vld [vmem:[%s364 + $0x198] sm:$0x1]
        %v428 = vld [vmem:[%s364 + $0x1a0] sm:$0xff]
        %v429 = vld [vmem:[%s364 + $0x1a8] sm:$0x1]
        %v430 = vld [vmem:[%s364 + $0x1b0] sm:$0xff]
        %v431 = vld [vmem:[%s364 + $0x1b8] sm:$0x1]
        %v432 = vld [vmem:[%s364 + $0x1c0] sm:$0xff]
        %v433 = vld [vmem:[%s364 + $0x1c8] sm:$0x1]
        %v434 = vld [vmem:[%s364 + $0x1d0] sm:$0xff]
        %v435 = vld [vmem:[%s364 + $0x1d8] sm:$0x1]
        %v436 = vld [vmem:[%s364 + $0x1e0] sm:$0xff]
        %v437 = vld [vmem:[%s364 + $0x1e8] sm:$0x1]
        %v438 = vld [vmem:[%s364 + $0x1f0] sm:$0xff]
        %v439 = vld [vmem:[%s364 + $0x1f8] sm:$0x1]
        %v440 = vld [vmem:[%s364 + $0x200] sm:$0xff]
        %v441 = vld [vmem:[%s364 + $0x208] sm:$0x1]
        %v442 = vld [vmem:[%s364 + $0x210] sm:$0xff]
        %v443 = vld [vmem:[%s364 + $0x218] sm:$0x1]
        %v444 = vld [vmem:[%s364 + $0x220] sm:$0xff]
        %v445 = vld [vmem:[%s364 + $0x228] sm:$0x1]
        %v446 = vld [vmem:[%s364 + $0x230] sm:$0xff]
        %v447 = vld [vmem:[%s364 + $0x238] sm:$0x1]
        %v448 = vld [vmem:[%s364 + $0x240] sm:$0xff]
        %v449 = vld [vmem:[%s364 + $0x248] sm:$0x1]
        %v450 = vld [vmem:[%s364 + $0x250] sm:$0xff]
        %v451 = vld [vmem:[%s364 + $0x258] sm:$0x1]
        %v452 = vld [vmem:[%s364 + $0x260] sm:$0xff]
        %v453 = vld [vmem:[%s364 + $0x268] sm:$0x1]
        %v454 = vld [vmem:[%s364 + $0x270] sm:$0xff]
        %v455 = vld [vmem:[%s364 + $0x278] sm:$0x1]
        %v456 = vld [vmem:[%s364 + $0x280] sm:$0xff]
        %v457 = vld [vmem:[%s364 + $0x288] sm:$0x1]
        %v458 = vld [vmem:[%s364 + $0x290] sm:$0xff]
        %v459 = vld [vmem:[%s364 + $0x298] sm:$0x1]
        %v460 = vld [vmem:[%s364 + $0x2a0] sm:$0xff]
        %v461 = vld [vmem:[%s364 + $0x2a8] sm:$0x1]
        %v462 = vld [vmem:[%s364 + $0x2b0] sm:$0xff]
        %v463 = vld [vmem:[%s364 + $0x2b8] sm:$0x1]
        %v464 = vld [vmem:[%s364 + $0x2c0] sm:$0xff]
        %v465 = vld [vmem:[%s364 + $0x2c8] sm:$0x1]
        %v466 = vld [vmem:[%s364 + $0x2d0] sm:$0xff]
        %v467 = vld [vmem:[%s364 + $0x2d8] sm:$0x1]
        %v468 = vld [vmem:[%s364 + $0x2e0] sm:$0xff]
        %v469 = vld [vmem:[%s364 + $0x2e8] sm:$0x1]
        %v470 = vld [vmem:[%s364 + $0x2f0] sm:$0xff]
        %v471 = vld [vmem:[%s364 + $0x2f8] sm:$0x1]
        %v472 = vld [vmem:[%s364 + $0x300] sm:$0xff]
        %v473 = vld [vmem:[%s364 + $0x308] sm:$0x1]
        %v474 = vld [vmem:[%s364 + $0x310] sm:$0xff]
        %v475 = vld [vmem:[%s364 + $0x318] sm:$0x1]
        %v476 = vld [vmem:[%s364 + $0x320] sm:$0xff]
        %v477 = vld [vmem:[%s364 + $0x328] sm:$0x1]
        %v478 = vld [vmem:[%s364 + $0x330] sm:$0xff]
        %v479 = vld [vmem:[%s364 + $0x338] sm:$0x1]
        %v480 = vld [vmem:[%s364 + $0x340] sm:$0xff]
        %v481 = vld [vmem:[%s364 + $0x348] sm:$0x1]
        %v482 = vld [vmem:[%s364 + $0x350] sm:$0xff]
        %v483 = vld [vmem:[%s364 + $0x358] sm:$0x1]
        %v484 = vld [vmem:[%s364 + $0x360] sm:$0xff]
        %v485 = vld [vmem:[%s364 + $0x368] sm:$0x1]
        %v486 = vld [vmem:[%s364 + $0x370] sm:$0xff]
        %v487 = vld [vmem:[%s364 + $0x378] sm:$0x1]
        %v488 = vld [vmem:[%s364 + $0x380] sm:$0xff]
        %v489 = vld [vmem:[%s364 + $0x388] sm:$0x1]
        %v490 = vld [vmem:[%s364 + $0x390] sm:$0xff]
        %v491 = vld [vmem:[%s364 + $0x398] sm:$0x1]
        %v492 = vld [vmem:[%s364 + $0x3a0] sm:$0xff]
        %v493 = vld [vmem:[%s364 + $0x3a8] sm:$0x1]
        %v494 = vld [vmem:[%s364 + $0x3b0] sm:$0xff]
        %v495 = vld [vmem:[%s364 + $0x3b8] sm:$0x1]
        %v496 = vld [vmem:[%s364 + $0x3c0] sm:$0xff]
        %v497 = vld [vmem:[%s364 + $0x3c8] sm:$0x1]
        %v498 = vld [vmem:[%s364 + $0x3d0] sm:$0xff]
        %v499 = vld [vmem:[%s364 + $0x3d8] sm:$0x1]
        %v500 = vld [vmem:[%s364 + $0x3e0] sm:$0xff]
        %v501 = vld [vmem:[%s364 + $0x3e8] sm:$0x1]
        %v502 = vld [vmem:[%s364 + $0x3f0] sm:$0xff]
        %v503 = vld [vmem:[%s364 + $0x3f8] sm:$0x1]
        %v504 = vld [vmem:[%s364 + $0x400] sm:$0xff]
        %v505 = vld [vmem:[%s364 + $0x408] sm:$0x1]
        %v506 = vld [vmem:[%s364 + $0x410] sm:$0xff]
        %v507 = vld [vmem:[%s364 + $0x418] sm:$0x1]
        %v508 = vld [vmem:[%s364 + $0x420] sm:$0xff]
        %v509 = vld [vmem:[%s364 + $0x428] sm:$0x1]
        %v510 = vld [vmem:[%s364 + $0x430] sm:$0xff]
        %v511 = vld [vmem:[%s364 + $0x438] sm:$0x1]
        %v512 = vld [vmem:[%s364 + $0x440] sm:$0xff]
        %v513 = vld [vmem:[%s364 + $0x448] sm:$0x1]
        %v514 = vld [vmem:[%s364 + $0x450] sm:$0xff]
        %v515 = vld [vmem:[%s364 + $0x458] sm:$0x1]
        %v516 = vld [vmem:[%s364 + $0x460] sm:$0xff]
        %v517 = vld [vmem:[%s364 + $0x468] sm:$0x1]
        %v518 = vld [vmem:[%s364 + $0x470] sm:$0xff]
        %v519 = vld [vmem:[%s364 + $0x478] sm:$0x1]
        %v520 = vld [vmem:[%s364 + $0x480] sm:$0xff]
        %v521 = vld [vmem:[%s364 + $0x488] sm:$0x1]
        %v522 = vld [vmem:[%s364 + $0x490] sm:$0xff]
        %v523 = vld [vmem:[%s364 + $0x498] sm:$0x1]
        %v524 = vld [vmem:[%s364 + $0x4a0] sm:$0xff]
        %v525 = vld [vmem:[%s364 + $0x4a8] sm:$0x1]
        %v526 = vld [vmem:[%s364 + $0x4b0] sm:$0xff]
        %v527 = vld [vmem:[%s364 + $0x4b8] sm:$0x1]
        %v528 = vld [vmem:[%s364 + $0x4c0] sm:$0xff]
        %v529 = vld [vmem:[%s364 + $0x4c8] sm:$0x1]
        %v530 = vld [vmem:[%s364 + $0x4d0] sm:$0xff]
        %v531 = vld [vmem:[%s364 + $0x4d8] sm:$0x1]
        %v532 = vld [vmem:[%s364 + $0x4e0] sm:$0xff]
        %v533 = vld [vmem:[%s364 + $0x4e8] sm:$0x1]
        %v534 = vld [vmem:[%s364 + $0x4f0] sm:$0xff]
        %v535 = vld [vmem:[%s364 + $0x4f8] sm:$0x1]
        %v536 = vld [vmem:[%s364 + $0x500] sm:$0xff]
        %v537 = vld [vmem:[%s364 + $0x508] sm:$0x1]
        %v538 = vld [vmem:[%s364 + $0x510] sm:$0xff]
        %v539 = vld [vmem:[%s364 + $0x518] sm:$0x1]
        %v540 = vld [vmem:[%s364 + $0x520] sm:$0xff]
        %v541 = vld [vmem:[%s364 + $0x528] sm:$0x1]
        %v542 = vld [vmem:[%s364 + $0x530] sm:$0xff]
        %v543 = vld [vmem:[%s364 + $0x538] sm:$0x1]
        %v544 = vld [vmem:[%s364 + $0x540] sm:$0xff]
        %v545 = vld [vmem:[%s364 + $0x548] sm:$0x1]
        %v546 = vld [vmem:[%s364 + $0x550] sm:$0xff]
        %v547 = vld [vmem:[%s364 + $0x558] sm:$0x1]
        %v548 = vld [vmem:[%s364 + $0x560] sm:$0xff]
        %v549 = vld [vmem:[%s364 + $0x568] sm:$0x1]
        %v550 = vld [vmem:[%s364 + $0x570] sm:$0xff]
        %v551 = vld [vmem:[%s364 + $0x578] sm:$0x1]
        %v552 = vld [vmem:[%s364 + $0x580] sm:$0xff]
        %v553 = vld [vmem:[%s364 + $0x588] sm:$0x1]
        %v554 = vld [vmem:[%s364 + $0x590] sm:$0xff]
        %v555 = vld [vmem:[%s364 + $0x598] sm:$0x1]
        %v556 = vld [vmem:[%s364 + $0x5a0] sm:$0xff]
        %v557 = vld [vmem:[%s364 + $0x5a8] sm:$0x1]
        %v558 = vld [vmem:[%s364 + $0x5b0] sm:$0xff]
        %v559 = vld [vmem:[%s364 + $0x5b8] sm:$0x1]
        %v560 = vld [vmem:[%s364 + $0x5c0] sm:$0xff]
        %v561 = vld [vmem:[%s364 + $0x5c8] sm:$0x1]
        %v562 = vld [vmem:[%s364 + $0x5d0] sm:$0xff]
        %v563 = vld [vmem:[%s364 + $0x5d8] sm:$0x1]
        %v564 = vld [vmem:[%s364 + $0x5e0] sm:$0xff]
        %v565 = vld [vmem:[%s364 + $0x5e8] sm:$0x1]
        %v566 = vld [vmem:[%s364 + $0x5f0] sm:$0xff]
        %v567 = vld [vmem:[%s364 + $0x5f8] sm:$0x1]
        %v568 = vld [vmem:[%s364 + $0x600] sm:$0xff]
        %v569 = vld [vmem:[%s364 + $0x608] sm:$0x1]
        %v570 = vld [vmem:[%s364 + $0x610] sm:$0xff]
        %v571 = vld [vmem:[%s364 + $0x618] sm:$0x1]
        %v572 = vld [vmem:[%s364 + $0x620] sm:$0xff]
        %v573 = vld [vmem:[%s364 + $0x628] sm:$0x1]
        %v574 = vld [vmem:[%s364 + $0x630] sm:$0xff]
        %v575 = vld [vmem:[%s364 + $0x638] sm:$0x1]
        %v576 = vld [vmem:[%s364 + $0x640] sm:$0xff]
        %v577 = vld [vmem:[%s364 + $0x648] sm:$0x1]
        %v578 = vld [vmem:[%s364 + $0x650] sm:$0xff]
        %v579 = vld [vmem:[%s364 + $0x658] sm:$0x1]
        %v580 = vld [vmem:[%s364 + $0x660] sm:$0xff]
        %v581 = vld [vmem:[%s364 + $0x668] sm:$0x1]
        %v582 = vld [vmem:[%s364 + $0x670] sm:$0xff]
        %v583 = vld [vmem:[%s364 + $0x678] sm:$0x1]
        %v584 = vld [vmem:[%s364 + $0x680] sm:$0xff]
        %v585 = vld [vmem:[%s364 + $0x688] sm:$0x1]
        %v586 = vld [vmem:[%s364 + $0x690] sm:$0xff]
        %v587 = vld [vmem:[%s364 + $0x698] sm:$0x1]
        %v588 = vld [vmem:[%s364 + $0x6a0] sm:$0xff]
        %v589 = vld [vmem:[%s364 + $0x6a8] sm:$0x1]
        %v590 = vld [vmem:[%s364 + $0x6b0] sm:$0xff]
        %v591 = vld [vmem:[%s364 + $0x6b8] sm:$0x1]
        %v592 = vld [vmem:[%s364 + $0x6c0] sm:$0xff]
        %v593 = vld [vmem:[%s364 + $0x6c8] sm:$0x1]
        %v594 = vld [vmem:[%s364 + $0x6d0] sm:$0xff]
        %v595 = vld [vmem:[%s364 + $0x6d8] sm:$0x1]
        %v596 = vld [vmem:[%s364 + $0x6e0] sm:$0xff]
        %v597 = vld [vmem:[%s364 + $0x6e8] sm:$0x1]
        %v598 = vld [vmem:[%s364 + $0x6f0] sm:$0xff]
        %v599 = vld [vmem:[%s364 + $0x6f8] sm:$0x1]
        %v600 = vld [vmem:[%s364 + $0x700] sm:$0xff]
        %v601 = vld [vmem:[%s364 + $0x708] sm:$0x1]
        %v602 = vld [vmem:[%s364 + $0x710] sm:$0xff]
        %v603 = vld [vmem:[%s364 + $0x718] sm:$0x1]
        %v604 = vld [vmem:[%s364 + $0x720] sm:$0xff]
        %v605 = vld [vmem:[%s364 + $0x728] sm:$0x1]
        %v606 = vld [vmem:[%s364 + $0x730] sm:$0xff]
        %v607 = vld [vmem:[%s364 + $0x738] sm:$0x1]
        %v608 = vld [vmem:[%s364 + $0x740] sm:$0xff]
        %v609 = vld [vmem:[%s364 + $0x748] sm:$0x1]
        %v610 = vld [vmem:[%s364 + $0x750] sm:$0xff]
        %v611 = vld [vmem:[%s364 + $0x758] sm:$0x1]
        %v612 = vld [vmem:[%s364 + $0x760] sm:$0xff]
        %v613 = vld [vmem:[%s364 + $0x768] sm:$0x1]
        %v614 = vld [vmem:[%s364 + $0x770] sm:$0xff]
        %v615 = vld [vmem:[%s364 + $0x778] sm:$0x1]
        %v616 = vld [vmem:[%s364 + $0x780] sm:$0xff]
        %v617 = vld [vmem:[%s364 + $0x788] sm:$0x1]
        %v618 = vld [vmem:[%s364 + $0x790] sm:$0xff]
        %v619 = vld [vmem:[%s364 + $0x798] sm:$0x1]
        %v620 = vld [vmem:[%s364 + $0x7a0] sm:$0xff]
        %v621 = vld [vmem:[%s364 + $0x7a8] sm:$0x1]
        %v622 = vld [vmem:[%s364 + $0x7b0] sm:$0xff]
        %v623 = vld [vmem:[%s364 + $0x7b8] sm:$0x1]
        %v624 = vld [vmem:[%s364 + $0x7c0] sm:$0xff]
        %v625 = vld [vmem:[%s364 + $0x7c8] sm:$0x1]
        %v626 = vld [vmem:[%s364 + $0x7d0] sm:$0xff]
        %v627 = vld [vmem:[%s364 + $0x7d8] sm:$0x1]
        %v628 = vld [vmem:[%s364 + $0x7e0] sm:$0xff]
        %v629 = vld [vmem:[%s364 + $0x7e8] sm:$0x1]
        %v630 = vld [vmem:[%s364 + $0x7f0] sm:$0xff]
        %v631 = vld [vmem:[%s364 + $0x7f8] sm:$0x1]
        %v632 = vld [vmem:[%s2] sm:$0xff]
        %v633 = vld [vmem:[%s2 + $0x8] sm:$0xff]
        %v634 = vld [vmem:[%s2 + $0x10] sm:$0xff]
        %v635 = vld [vmem:[%s2 + $0x18] sm:$0xff]
        %v636 = vld [vmem:[%s2 + $0x20] sm:$0xff]
        %v637 = vld [vmem:[%s2 + $0x28] sm:$0xff]
        %v638 = vld [vmem:[%s2 + $0x30] sm:$0xff]
        %v639 = vld [vmem:[%s2 + $0x38] sm:$0xff]
        %v640 = vld [vmem:[%s2 + $0x40] sm:$0xff]
        %v641 = vld [vmem:[%s2 + $0x48] sm:$0xff]
        %v642 = vld [vmem:[%s2 + $0x50] sm:$0xff]
        %v643 = vld [vmem:[%s2 + $0x58] sm:$0xff]
        %v644 = vld [vmem:[%s2 + $0x60] sm:$0xff]
        %v645 = vld [vmem:[%s2 + $0x68] sm:$0xff]
        %v646 = vld [vmem:[%s2 + $0x70] sm:$0xff]
        %v647 = vld [vmem:[%s2 + $0x78] sm:$0xff]
        %v648 = vld [vmem:[%s3] sm:$0x1]
        %v650 = vlaneseq
        %v651 = vshrl.u32 %v650, 7
        %v652 = vsub.s32 0, %v651
        %v653 = vrot.slane %v648, %v652
        %v783 = vrot.slane %v378, 7
        %vm784 = vcmask 1041409
        %v785 = vsel %vm784, %v783, %v376
        %v786 = vrot.slane %v380, 6
        %vm787 = vcmask 1042434
        %v788 = vsel %vm787, %v786, %v785
        %v789 = vrot.slane %v382, 5
        %vm790 = vcmask 1043459
        %v791 = vsel %vm790, %v789, %v788
        %v792 = vrot.slane %v384, 4
        %vm793 = vcmask 1044484
        %v794 = vsel %vm793, %v792, %v791
        %v795 = vrot.slane %v386, 3
        %vm796 = vcmask 1045509
        %v797 = vsel %vm796, %v795, %v794
        %v798 = vrot.slane %v388, 2
        %vm799 = vcmask 1046534
        %v800 = vsel %vm799, %v798, %v797
        %v801 = vrot.slane %v390, 1
        %vm802 = vcmask 1047559
        %v803 = vsel %vm802, %v801, %v800
        %v804 = vrot.slane %v394, 7
        %v805 = vsel %vm784, %v804, %v392
        %v806 = vrot.slane %v396, 6
        %v807 = vsel %vm787, %v806, %v805
        %v808 = vrot.slane %v398, 5
        %v809 = vsel %vm790, %v808, %v807
        %v810 = vrot.slane %v400, 4
        %v811 = vsel %vm793, %v810, %v809
        %v812 = vrot.slane %v402, 3
        %v813 = vsel %vm796, %v812, %v811
        %v814 = vrot.slane %v404, 2
        %v815 = vsel %vm799, %v814, %v813
        %v816 = vrot.slane %v406, 1
        %v817 = vsel %vm802, %v816, %v815
        %v818 = vrot.slane %v410, 7
        %v819 = vsel %vm784, %v818, %v408
        %v820 = vrot.slane %v412, 6
        %v821 = vsel %vm787, %v820, %v819
        %v822 = vrot.slane %v414, 5
        %v823 = vsel %vm790, %v822, %v821
        %v824 = vrot.slane %v416, 4
        %v825 = vsel %vm793, %v824, %v823
        %v826 = vrot.slane %v418, 3
        %v827 = vsel %vm796, %v826, %v825
        %v828 = vrot.slane %v420, 2
        %v829 = vsel %vm799, %v828, %v827
        %v830 = vrot.slane %v422, 1
        %v831 = vsel %vm802, %v830, %v829
        %v832 = vrot.slane %v426, 7
        %v833 = vsel %vm784, %v832, %v424
        %v834 = vrot.slane %v428, 6
        %v835 = vsel %vm787, %v834, %v833
        %v836 = vrot.slane %v430, 5
        %v837 = vsel %vm790, %v836, %v835
        %v838 = vrot.slane %v432, 4
        %v839 = vsel %vm793, %v838, %v837
        %v840 = vrot.slane %v434, 3
        %v841 = vsel %vm796, %v840, %v839
        %v842 = vrot.slane %v436, 2
        %v843 = vsel %vm799, %v842, %v841
        %v844 = vrot.slane %v438, 1
        %v845 = vsel %vm802, %v844, %v843
        %v846 = vrot.slane %v442, 7
        %v847 = vsel %vm784, %v846, %v440
        %v848 = vrot.slane %v444, 6
        %v849 = vsel %vm787, %v848, %v847
        %v850 = vrot.slane %v446, 5
        %v851 = vsel %vm790, %v850, %v849
        %v852 = vrot.slane %v448, 4
        %v853 = vsel %vm793, %v852, %v851
        %v854 = vrot.slane %v450, 3
        %v855 = vsel %vm796, %v854, %v853
        %v856 = vrot.slane %v452, 2
        %v857 = vsel %vm799, %v856, %v855
        %v858 = vrot.slane %v454, 1
        %v859 = vsel %vm802, %v858, %v857
        %v860 = vrot.slane %v458, 7
        %v861 = vsel %vm784, %v860, %v456
        %v862 = vrot.slane %v460, 6
        %v863 = vsel %vm787, %v862, %v861
        %v864 = vrot.slane %v462, 5
        %v865 = vsel %vm790, %v864, %v863
        %v866 = vrot.slane %v464, 4
        %v867 = vsel %vm793, %v866, %v865
        %v868 = vrot.slane %v466, 3
        %v869 = vsel %vm796, %v868, %v867
        %v870 = vrot.slane %v468, 2
        %v871 = vsel %vm799, %v870, %v869
        %v872 = vrot.slane %v470, 1
        %v873 = vsel %vm802, %v872, %v871
        %v874 = vrot.slane %v474, 7
        %v875 = vsel %vm784, %v874, %v472
        %v876 = vrot.slane %v476, 6
        %v877 = vsel %vm787, %v876, %v875
        %v878 = vrot.slane %v478, 5
        %v879 = vsel %vm790, %v878, %v877
        %v880 = vrot.slane %v480, 4
        %v881 = vsel %vm793, %v880, %v879
        %v882 = vrot.slane %v482, 3
        %v883 = vsel %vm796, %v882, %v881
        %v884 = vrot.slane %v484, 2
        %v885 = vsel %vm799, %v884, %v883
        %v886 = vrot.slane %v486, 1
        %v887 = vsel %vm802, %v886, %v885
        %v888 = vrot.slane %v490, 7
        %v889 = vsel %vm784, %v888, %v488
        %v890 = vrot.slane %v492, 6
        %v891 = vsel %vm787, %v890, %v889
        %v892 = vrot.slane %v494, 5
        %v893 = vsel %vm790, %v892, %v891
        %v894 = vrot.slane %v496, 4
        %v895 = vsel %vm793, %v894, %v893
        %v896 = vrot.slane %v498, 3
        %v897 = vsel %vm796, %v896, %v895
        %v898 = vrot.slane %v500, 2
        %v899 = vsel %vm799, %v898, %v897
        %v900 = vrot.slane %v502, 1
        %v901 = vsel %vm802, %v900, %v899
        %v902 = vrot.slane %v506, 7
        %v903 = vsel %vm784, %v902, %v504
        %v904 = vrot.slane %v508, 6
        %v905 = vsel %vm787, %v904, %v903
        %v906 = vrot.slane %v510, 5
        %v907 = vsel %vm790, %v906, %v905
        %v908 = vrot.slane %v512, 4
        %v909 = vsel %vm793, %v908, %v907
        %v910 = vrot.slane %v514, 3
        %v911 = vsel %vm796, %v910, %v909
        %v912 = vrot.slane %v516, 2
        %v913 = vsel %vm799, %v912, %v911
        %v914 = vrot.slane %v518, 1
        %v915 = vsel %vm802, %v914, %v913
        %v916 = vrot.slane %v522, 7
        %v917 = vsel %vm784, %v916, %v520
        %v918 = vrot.slane %v524, 6
        %v919 = vsel %vm787, %v918, %v917
        %v920 = vrot.slane %v526, 5
        %v921 = vsel %vm790, %v920, %v919
        %v922 = vrot.slane %v528, 4
        %v923 = vsel %vm793, %v922, %v921
        %v924 = vrot.slane %v530, 3
        %v925 = vsel %vm796, %v924, %v923
        %v926 = vrot.slane %v532, 2
        %v927 = vsel %vm799, %v926, %v925
        %v928 = vrot.slane %v534, 1
        %v929 = vsel %vm802, %v928, %v927
        %v930 = vrot.slane %v538, 7
        %v931 = vsel %vm784, %v930, %v536
        %v932 = vrot.slane %v540, 6
        %v933 = vsel %vm787, %v932, %v931
        %v934 = vrot.slane %v542, 5
        %v935 = vsel %vm790, %v934, %v933
        %v936 = vrot.slane %v544, 4
        %v937 = vsel %vm793, %v936, %v935
        %v938 = vrot.slane %v546, 3
        %v939 = vsel %vm796, %v938, %v937
        %v940 = vrot.slane %v548, 2
        %v941 = vsel %vm799, %v940, %v939
        %v942 = vrot.slane %v550, 1
        %v943 = vsel %vm802, %v942, %v941
        %v944 = vrot.slane %v554, 7
        %v945 = vsel %vm784, %v944, %v552
        %v946 = vrot.slane %v556, 6
        %v947 = vsel %vm787, %v946, %v945
        %v948 = vrot.slane %v558, 5
        %v949 = vsel %vm790, %v948, %v947
        %v950 = vrot.slane %v560, 4
        %v951 = vsel %vm793, %v950, %v949
        %v952 = vrot.slane %v562, 3
        %v953 = vsel %vm796, %v952, %v951
        %v954 = vrot.slane %v564, 2
        %v955 = vsel %vm799, %v954, %v953
        %v956 = vrot.slane %v566, 1
        %v957 = vsel %vm802, %v956, %v955
        %v958 = vrot.slane %v570, 7
        %v959 = vsel %vm784, %v958, %v568
        %v960 = vrot.slane %v572, 6
        %v961 = vsel %vm787, %v960, %v959
        %v962 = vrot.slane %v574, 5
        %v963 = vsel %vm790, %v962, %v961
        %v964 = vrot.slane %v576, 4
        %v965 = vsel %vm793, %v964, %v963
        %v966 = vrot.slane %v578, 3
        %v967 = vsel %vm796, %v966, %v965
        %v968 = vrot.slane %v580, 2
        %v969 = vsel %vm799, %v968, %v967
        %v970 = vrot.slane %v582, 1
        %v971 = vsel %vm802, %v970, %v969
        %v972 = vrot.slane %v586, 7
        %v973 = vsel %vm784, %v972, %v584
        %v974 = vrot.slane %v588, 6
        %v975 = vsel %vm787, %v974, %v973
        %v976 = vrot.slane %v590, 5
        %v977 = vsel %vm790, %v976, %v975
        %v978 = vrot.slane %v592, 4
        %v979 = vsel %vm793, %v978, %v977
        %v980 = vrot.slane %v594, 3
        %v981 = vsel %vm796, %v980, %v979
        %v982 = vrot.slane %v596, 2
        %v983 = vsel %vm799, %v982, %v981
        %v984 = vrot.slane %v598, 1
        %v985 = vsel %vm802, %v984, %v983
        %v986 = vrot.slane %v602, 7
        %v987 = vsel %vm784, %v986, %v600
        %v988 = vrot.slane %v604, 6
        %v989 = vsel %vm787, %v988, %v987
        %v990 = vrot.slane %v606, 5
        %v991 = vsel %vm790, %v990, %v989
        %v992 = vrot.slane %v608, 4
        %v993 = vsel %vm793, %v992, %v991
        %v994 = vrot.slane %v610, 3
        %v995 = vsel %vm796, %v994, %v993
        %v996 = vrot.slane %v612, 2
        %v997 = vsel %vm799, %v996, %v995
        %v998 = vrot.slane %v614, 1
        %v999 = vsel %vm802, %v998, %v997
        %v1000 = vrot.slane %v618, 7
        %v1001 = vsel %vm784, %v1000, %v616
        %v1002 = vrot.slane %v620, 6
        %v1003 = vsel %vm787, %v1002, %v1001
        %v1004 = vrot.slane %v622, 5
        %v1005 = vsel %vm790, %v1004, %v1003
        %v1006 = vrot.slane %v624, 4
        %v1007 = vsel %vm793, %v1006, %v1005
        %v1008 = vrot.slane %v626, 3
        %v1009 = vsel %vm796, %v1008, %v1007
        %v1010 = vrot.slane %v628, 2
        %v1011 = vsel %vm799, %v1010, %v1009
        %v1012 = vrot.slane %v630, 1
        %v1013 = vsel %vm802, %v1012, %v1011
        %1030 = vmatprep.subr.mxu0 0.0
        %v1031 = vand.u32 %v632, 4294901760
        %1032 = vmatpush1.msra.mxu0 %v1031
        %1033 = vmatprep.subr.mxu0 0.0
        %v1034 = vand.u32 %v633, 4294901760
        %1035 = vmatpush1.msra.mxu0 %v1034
        %1036 = vmatprep.subr.mxu0 0.0
        %v1037 = vand.u32 %v634, 4294901760
        %1038 = vmatpush1.msra.mxu0 %v1037
        %1039 = vmatprep.subr.mxu0 0.0
        %v1040 = vand.u32 %v635, 4294901760
        %1041 = vmatpush1.msra.mxu0 %v1040
        %1042 = vmatprep.subr.mxu0 0.0
        %v1043 = vand.u32 %v636, 4294901760
        %1044 = vmatpush1.msra.mxu0 %v1043
        %1045 = vmatprep.subr.mxu0 0.0
        %v1046 = vand.u32 %v637, 4294901760
        %1047 = vmatpush1.msra.mxu0 %v1046
        %1048 = vmatprep.subr.mxu0 0.0
        %v1049 = vand.u32 %v638, 4294901760
        %1050 = vmatpush1.msra.mxu0 %v1049
        %1051 = vmatprep.subr.mxu0 0.0
        %v1052 = vand.u32 %v639, 4294901760
        %1053 = vmatpush1.msra.mxu0 %v1052
        %1054 = vmatprep.subr.mxu0 0.0
        %v1055 = vand.u32 %v640, 4294901760
        %1056 = vmatpush1.msra.mxu0 %v1055
        %1057 = vmatprep.subr.mxu0 0.0
        %v1058 = vand.u32 %v641, 4294901760
        %1059 = vmatpush1.msra.mxu0 %v1058
        %1060 = vmatprep.subr.mxu0 0.0
        %v1061 = vand.u32 %v642, 4294901760
        %1062 = vmatpush1.msra.mxu0 %v1061
        %1063 = vmatprep.subr.mxu0 0.0
        %v1064 = vand.u32 %v643, 4294901760
        %1065 = vmatpush1.msra.mxu0 %v1064
        %1066 = vmatprep.subr.mxu0 0.0
        %v1067 = vand.u32 %v644, 4294901760
        %1068 = vmatpush1.msra.mxu0 %v1067
        %1069 = vmatprep.subr.mxu0 0.0
        %v1070 = vand.u32 %v645, 4294901760
        %1071 = vmatpush1.msra.mxu0 %v1070
        %1072 = vmatprep.subr.mxu0 0.0
        %v1073 = vand.u32 %v646, 4294901760
        %1074 = vmatpush1.msra.mxu0 %v1073
        %1075 = vmatprep.subr.mxu0 0.0
        %v1076 = vand.u32 %v647, 4294901760
        %1077 = vmatpush1.msra.mxu0 %v1076
        %1078 = vmatprep.subr.mxu0 0.0
        %1079 = vmatpush1.msra.mxu0 0.0
        %1080 = vmatprep.subr.mxu0 0.0
        %1081 = vmatpush1.msra.mxu0 0.0
        %1082 = vmatprep.subr.mxu0 0.0
        %1083 = vmatpush1.msra.mxu0 0.0
        %1084 = vmatprep.subr.mxu0 0.0
        %1085 = vmatpush1.msra.mxu0 0.0
        %1086 = vmatprep.subr.mxu0 0.0
        %1087 = vmatpush1.msra.mxu0 0.0
        %1088 = vmatprep.subr.mxu0 0.0
        %1089 = vmatpush1.msra.mxu0 0.0
        %1090 = vmatprep.subr.mxu0 0.0
        %1091 = vmatpush1.msra.mxu0 0.0
        %1092 = vmatprep.subr.mxu0 0.0
        %1093 = vmatpush1.msra.mxu0 0.0
        %1094 = vmatprep.subr.mxu0 0.0
        %1095 = vmatpush1.msra.mxu0 0.0
        %1096 = vmatprep.subr.mxu0 0.0
        %1097 = vmatpush1.msra.mxu0 0.0
        %1098 = vmatprep.subr.mxu0 0.0
        %1099 = vmatpush1.msra.mxu0 0.0
        %1100 = vmatprep.subr.mxu0 0.0
        %1101 = vmatpush1.msra.mxu0 0.0
        %1102 = vmatprep.subr.mxu0 0.0
        %1103 = vmatpush1.msra.mxu0 0.0
        %1104 = vmatprep.subr.mxu0 0.0
        %1105 = vmatpush1.msra.mxu0 0.0
        %1106 = vmatprep.subr.mxu0 0.0
        %1107 = vmatpush1.msra.mxu0 0.0
        %1108 = vmatprep.subr.mxu0 0.0
        %1109 = vmatpush1.msra.mxu0 0.0
        %1110 = vmatprep.mubr.f32.mxu0 0.0
        %v1111 = vand.u32 %v803, 4294901760
        %v1112 = vsub.f32 %v803, %v1111
        %v1113 = vand.u32 %v1112, 4294901760
        %v1114 = vsub.f32 %v1112, %v1113
        %v1115 = vand.u32 %v1114, 4294901760
        %1116 = vmatmul.mubr.f32.gmra.mrb[0].mxu0 %v1115
        %v1117 = vpop.f32.mrb[0].mxu0
        %v1118 = vadd.f32 %v653, %v1117
        %v1119 = vpop.f32.mrb[0].mxu0
        %1120 = vmatprep.mubr.f32.mxu0 0.0
        %v1121 = vand.u32 %v817, 4294901760
        %v1122 = vsub.f32 %v817, %v1121
        %v1123 = vand.u32 %v1122, 4294901760
        %v1124 = vsub.f32 %v1122, %v1123
        %v1125 = vand.u32 %v1124, 4294901760
        %1126 = vmatmul.mubr.f32.gmra.mrb[0].mxu0 %v1125
        %v1127 = vpop.f32.mrb[0].mxu0
        %v1128 = vadd.f32 %v653, %v1127
        %v1129 = vpop.f32.mrb[0].mxu0
        %1130 = vmatprep.mubr.f32.mxu0 0.0
        %v1131 = vand.u32 %v831, 4294901760
        %v1132 = vsub.f32 %v831, %v1131
        %v1133 = vand.u32 %v1132, 4294901760
        %v1134 = vsub.f32 %v1132, %v1133
        %v1135 = vand.u32 %v1134, 4294901760
        %1136 = vmatmul.mubr.f32.gmra.mrb[0].mxu0 %v1135
        %v1137 = vpop.f32.mrb[0].mxu0
        %v1138 = vadd.f32 %v653, %v1137
        %v1139 = vpop.f32.mrb[0].mxu0
        %1140 = vmatprep.mubr.f32.mxu0 0.0
        %v1141 = vand.u32 %v845, 4294901760
        %v1142 = vsub.f32 %v845, %v1141
        %v1143 = vand.u32 %v1142, 4294901760
        %v1144 = vsub.f32 %v1142, %v1143
        %v1145 = vand.u32 %v1144, 4294901760
        %1146 = vmatmul.mubr.f32.gmra.mrb[0].mxu0 %v1145
        %v1147 = vpop.f32.mrb[0].mxu0
        %v1148 = vadd.f32 %v653, %v1147
        %v1149 = vpop.f32.mrb[0].mxu0
        %1150 = vmatprep.mubr.f32.mxu0 0.0
        %v1151 = vand.u32 %v859, 4294901760
        %v1152 = vsub.f32 %v859, %v1151
        %v1153 = vand.u32 %v1152, 4294901760
        %v1154 = vsub.f32 %v1152, %v1153
        %v1155 = vand.u32 %v1154, 4294901760
        %1156 = vmatmul.mubr.f32.gmra.mrb[0].mxu0 %v1155
        %v1157 = vpop.f32.mrb[0].mxu0
        %v1158 = vadd.f32 %v653, %v1157
        %v1159 = vpop.f32.mrb[0].mxu0
        %1160 = vmatprep.mubr.f32.mxu0 0.0
        %v1161 = vand.u32 %v873, 4294901760
        %v1162 = vsub.f32 %v873, %v1161
        %v1163 = vand.u32 %v1162, 4294901760
        %v1164 = vsub.f32 %v1162, %v1163
        %v1165 = vand.u32 %v1164, 4294901760
        %1166 = vmatmul.mubr.f32.gmra.mrb[0].mxu0 %v1165
        %v1167 = vpop.f32.mrb[0].mxu0
        %v1168 = vadd.f32 %v653, %v1167
        %v1169 = vpop.f32.mrb[0].mxu0
        %1170 = vmatprep.mubr.f32.mxu0 0.0
        %v1171 = vand.u32 %v887, 4294901760
        %v1172 = vsub.f32 %v887, %v1171
        %v1173 = vand.u32 %v1172, 4294901760
        %v1174 = vsub.f32 %v1172, %v1173
        %v1175 = vand.u32 %v1174, 4294901760
        %1176 = vmatmul.mubr.f32.gmra.mrb[0].mxu0 %v1175
        %v1177 = vpop.f32.mrb[0].mxu0
        %v1178 = vadd.f32 %v653, %v1177
        %v1179 = vpop.f32.mrb[0].mxu0
        %1180 = vmatprep.mubr.f32.mxu0 0.0
        %v1181 = vand.u32 %v901, 4294901760
        %v1182 = vsub.f32 %v901, %v1181
        %v1183 = vand.u32 %v1182, 4294901760
        %v1184 = vsub.f32 %v1182, %v1183
        %v1185 = vand.u32 %v1184, 4294901760
        %1186 = vmatmul.mubr.f32.gmra.mrb[0].mxu0 %v1185
        %v1187 = vpop.f32.mrb[0].mxu0
        %v1188 = vadd.f32 %v653, %v1187
        %v1189 = vpop.f32.mrb[0].mxu0
        %1190 = vmatprep.mubr.f32.mxu0 0.0
        %v1191 = vand.u32 %v915, 4294901760
        %v1192 = vsub.f32 %v915, %v1191
        %v1193 = vand.u32 %v1192, 4294901760
        %v1194 = vsub.f32 %v1192, %v1193
        %v1195 = vand.u32 %v1194, 4294901760
        %1196 = vmatmul.mubr.f32.gmra.mrb[0].mxu0 %v1195
        %v1197 = vpop.f32.mrb[0].mxu0
        %v1198 = vadd.f32 %v653, %v1197
        %v1199 = vpop.f32.mrb[0].mxu0
        %1200 = vmatprep.mubr.f32.mxu0 0.0
        %v1201 = vand.u32 %v929, 4294901760
        %v1202 = vsub.f32 %v929, %v1201
        %v1203 = vand.u32 %v1202, 4294901760
        %v1204 = vsub.f32 %v1202, %v1203
        %v1205 = vand.u32 %v1204, 4294901760
        %1206 = vmatmul.mubr.f32.gmra.mrb[0].mxu0 %v1205
        %v1207 = vpop.f32.mrb[0].mxu0
        %v1208 = vadd.f32 %v653, %v1207
        %v1209 = vpop.f32.mrb[0].mxu0
        %1210 = vmatprep.mubr.f32.mxu0 0.0
        %v1211 = vand.u32 %v943, 4294901760
        %v1212 = vsub.f32 %v943, %v1211
        %v1213 = vand.u32 %v1212, 4294901760
        %v1214 = vsub.f32 %v1212, %v1213
        %v1215 = vand.u32 %v1214, 4294901760
        %1216 = vmatmul.mubr.f32.gmra.mrb[0].mxu0 %v1215
        %v1217 = vpop.f32.mrb[0].mxu0
        %v1218 = vadd.f32 %v653, %v1217
        %v1219 = vpop.f32.mrb[0].mxu0
        %1220 = vmatprep.mubr.f32.mxu0 0.0
        %v1221 = vand.u32 %v957, 4294901760
        %v1222 = vsub.f32 %v957, %v1221
        %v1223 = vand.u32 %v1222, 4294901760
        %v1224 = vsub.f32 %v1222, %v1223
        %v1225 = vand.u32 %v1224, 4294901760
        %1226 = vmatmul.mubr.f32.gmra.mrb[0].mxu0 %v1225
        %v1227 = vpop.f32.mrb[0].mxu0
        %v1228 = vadd.f32 %v653, %v1227
        %v1229 = vpop.f32.mrb[0].mxu0
        %1230 = vmatprep.mubr.f32.mxu0 0.0
        %v1231 = vand.u32 %v971, 4294901760
        %v1232 = vsub.f32 %v971, %v1231
        %v1233 = vand.u32 %v1232, 4294901760
        %v1234 = vsub.f32 %v1232, %v1233
        %v1235 = vand.u32 %v1234, 4294901760
        %1236 = vmatmul.mubr.f32.gmra.mrb[0].mxu0 %v1235
        %v1237 = vpop.f32.mrb[0].mxu0
        %v1238 = vadd.f32 %v653, %v1237
        %v1239 = vpop.f32.mrb[0].mxu0
        %1240 = vmatprep.mubr.f32.mxu0 0.0
        %v1241 = vand.u32 %v985, 4294901760
        %v1242 = vsub.f32 %v985, %v1241
        %v1243 = vand.u32 %v1242, 4294901760
        %v1244 = vsub.f32 %v1242, %v1243
        %v1245 = vand.u32 %v1244, 4294901760
        %1246 = vmatmul.mubr.f32.gmra.mrb[0].mxu0 %v1245
        %v1247 = vpop.f32.mrb[0].mxu0
        %v1248 = vadd.f32 %v653, %v1247
        %v1249 = vpop.f32.mrb[0].mxu0
        %1250 = vmatprep.mubr.f32.mxu0 0.0
        %v1251 = vand.u32 %v999, 4294901760
        %v1252 = vsub.f32 %v999, %v1251
        %v1253 = vand.u32 %v1252, 4294901760
        %v1254 = vsub.f32 %v1252, %v1253
        %v1255 = vand.u32 %v1254, 4294901760
        %1256 = vmatmul.mubr.f32.gmra.mrb[0].mxu0 %v1255
        %v1257 = vpop.f32.mrb[0].mxu0
        %v1258 = vadd.f32 %v653, %v1257
        %v1259 = vpop.f32.mrb[0].mxu0
        %1260 = vmatprep.mubr.f32.mxu0 0.0
        %v1261 = vand.u32 %v1013, 4294901760
        %v1262 = vsub.f32 %v1013, %v1261
        %v1263 = vand.u32 %v1262, 4294901760
        %v1264 = vsub.f32 %v1262, %v1263
        %v1265 = vand.u32 %v1264, 4294901760
        %1266 = vmatmul.mubr.f32.gmra.mrb[0].mxu0 %v1265
        %v1267 = vpop.f32.mrb[0].mxu0
        %v1268 = vadd.f32 %v653, %v1267
        %v1269 = vpop.f32.mrb[0].mxu0
        %1270 = vdwg.mxu0
        %1271 = vmatprep.subr.mxu0 0.0
        %v1272 = vand.u32 %v632, 4294901760
        %v1273 = vsub.f32 %v632, %v1272
        %v1274 = vand.u32 %v1273, 4294901760
        %v1275 = vsub.f32 %v1273, %v1274
        %v1276 = vand.u32 %v1275, 4294901760
        %1277 = vmatpush1.msra.mxu0 %v1276
        %1278 = vmatprep.subr.mxu0 0.0
        %v1279 = vand.u32 %v633, 4294901760
        %v1280 = vsub.f32 %v633, %v1279
        %v1281 = vand.u32 %v1280, 4294901760
        %v1282 = vsub.f32 %v1280, %v1281
        %v1283 = vand.u32 %v1282, 4294901760
        %1284 = vmatpush1.msra.mxu0 %v1283
        %1285 = vmatprep.subr.mxu0 0.0
        %v1286 = vand.u32 %v634, 4294901760
        %v1287 = vsub.f32 %v634, %v1286
        %v1288 = vand.u32 %v1287, 4294901760
        %v1289 = vsub.f32 %v1287, %v1288
        %v1290 = vand.u32 %v1289, 4294901760
        %1291 = vmatpush1.msra.mxu0 %v1290
        %1292 = vmatprep.subr.mxu0 0.0
        %v1293 = vand.u32 %v635, 4294901760
        %v1294 = vsub.f32 %v635, %v1293
        %v1295 = vand.u32 %v1294, 4294901760
        %v1296 = vsub.f32 %v1294, %v1295
        %v1297 = vand.u32 %v1296, 4294901760
        %1298 = vmatpush1.msra.mxu0 %v1297
        %1299 = vmatprep.subr.mxu0 0.0
        %v1300 = vand.u32 %v636, 4294901760
        %v1301 = vsub.f32 %v636, %v1300
        %v1302 = vand.u32 %v1301, 4294901760
        %v1303 = vsub.f32 %v1301, %v1302
        %v1304 = vand.u32 %v1303, 4294901760
        %1305 = vmatpush1.msra.mxu0 %v1304
        %1306 = vmatprep.subr.mxu0 0.0
        %v1307 = vand.u32 %v637, 4294901760
        %v1308 = vsub.f32 %v637, %v1307
        %v1309 = vand.u32 %v1308, 4294901760
        %v1310 = vsub.f32 %v1308, %v1309
        %v1311 = vand.u32 %v1310, 4294901760
        %1312 = vmatpush1.msra.mxu0 %v1311
        %1313 = vmatprep.subr.mxu0 0.0
        %v1314 = vand.u32 %v638, 4294901760
        %v1315 = vsub.f32 %v638, %v1314
        %v1316 = vand.u32 %v1315, 4294901760
        %v1317 = vsub.f32 %v1315, %v1316
        %v1318 = vand.u32 %v1317, 4294901760
        %1319 = vmatpush1.msra.mxu0 %v1318
        %1320 = vmatprep.subr.mxu0 0.0
        %v1321 = vand.u32 %v639, 4294901760
        %v1322 = vsub.f32 %v639, %v1321
        %v1323 = vand.u32 %v1322, 4294901760
        %v1324 = vsub.f32 %v1322, %v1323
        %v1325 = vand.u32 %v1324, 4294901760
        %1326 = vmatpush1.msra.mxu0 %v1325
        %1327 = vmatprep.subr.mxu0 0.0
        %v1328 = vand.u32 %v640, 4294901760
        %v1329 = vsub.f32 %v640, %v1328
        %v1330 = vand.u32 %v1329, 4294901760
        %v1331 = vsub.f32 %v1329, %v1330
        %v1332 = vand.u32 %v1331, 4294901760
        %1333 = vmatpush1.msra.mxu0 %v1332
        %1334 = vmatprep.subr.mxu0 0.0
        %v1335 = vand.u32 %v641, 4294901760
        %v1336 = vsub.f32 %v641, %v1335
        %v1337 = vand.u32 %v1336, 4294901760
        %v1338 = vsub.f32 %v1336, %v1337
        %v1339 = vand.u32 %v1338, 4294901760
        %1340 = vmatpush1.msra.mxu0 %v1339
        %1341 = vmatprep.subr.mxu0 0.0
        %v1342 = vand.u32 %v642, 4294901760
        %v1343 = vsub.f32 %v642, %v1342
        %v1344 = vand.u32 %v1343, 4294901760
        %v1345 = vsub.f32 %v1343, %v1344
        %v1346 = vand.u32 %v1345, 4294901760
        %1347 = vmatpush1.msra.mxu0 %v1346
        %1348 = vmatprep.subr.mxu0 0.0
        %v1349 = vand.u32 %v643, 4294901760
        %v1350 = vsub.f32 %v643, %v1349
        %v1351 = vand.u32 %v1350, 4294901760
        %v1352 = vsub.f32 %v1350, %v1351
        %v1353 = vand.u32 %v1352, 4294901760
        %1354 = vmatpush1.msra.mxu0 %v1353
        %1355 = vmatprep.subr.mxu0 0.0
        %v1356 = vand.u32 %v644, 4294901760
        %v1357 = vsub.f32 %v644, %v1356
        %v1358 = vand.u32 %v1357, 4294901760
        %v1359 = vsub.f32 %v1357, %v1358
        %v1360 = vand.u32 %v1359, 4294901760
        %1361 = vmatpush1.msra.mxu0 %v1360
        %1362 = vmatprep.subr.mxu0 0.0
        %v1363 = vand.u32 %v645, 4294901760
        %v1364 = vsub.f32 %v645, %v1363
        %v1365 = vand.u32 %v1364, 4294901760
        %v1366 = vsub.f32 %v1364, %v1365
        %v1367 = vand.u32 %v1366, 4294901760
        %1368 = vmatpush1.msra.mxu0 %v1367
        %1369 = vmatprep.subr.mxu0 0.0
        %v1370 = vand.u32 %v646, 4294901760
        %v1371 = vsub.f32 %v646, %v1370
        %v1372 = vand.u32 %v1371, 4294901760
        %v1373 = vsub.f32 %v1371, %v1372
        %v1374 = vand.u32 %v1373, 4294901760
        %1375 = vmatpush1.msra.mxu0 %v1374
        %1376 = vmatprep.subr.mxu0 0.0
        %v1377 = vand.u32 %v647, 4294901760
        %v1378 = vsub.f32 %v647, %v1377
        %v1379 = vand.u32 %v1378, 4294901760
        %v1380 = vsub.f32 %v1378, %v1379
        %v1381 = vand.u32 %v1380, 4294901760
        %1382 = vmatpush1.msra.mxu0 %v1381
        %1383 = vmatprep.subr.mxu0 0.0
        %1384 = vmatpush1.msra.mxu0 0.0
        %1385 = vmatprep.subr.mxu0 0.0
        %1386 = vmatpush1.msra.mxu0 0.0
        %1387 = vmatprep.subr.mxu0 0.0
        %1388 = vmatpush1.msra.mxu0 0.0
        %1389 = vmatprep.subr.mxu0 0.0
        %1390 = vmatpush1.msra.mxu0 0.0
        %1391 = vmatprep.subr.mxu0 0.0
        %1392 = vmatpush1.msra.mxu0 0.0
        %1393 = vmatprep.subr.mxu0 0.0
        %1394 = vmatpush1.msra.mxu0 0.0
        %1395 = vmatprep.subr.mxu0 0.0
        %1396 = vmatpush1.msra.mxu0 0.0
        %1397 = vmatprep.subr.mxu0 0.0
        %1398 = vmatpush1.msra.mxu0 0.0
        %1399 = vmatprep.subr.mxu0 0.0
        %1400 = vmatpush1.msra.mxu0 0.0
        %1401 = vmatprep.subr.mxu0 0.0
        %1402 = vmatpush1.msra.mxu0 0.0
        %1403 = vmatprep.subr.mxu0 0.0
        %1404 = vmatpush1.msra.mxu0 0.0
        %1405 = vmatprep.subr.mxu0 0.0
        %1406 = vmatpush1.msra.mxu0 0.0
        %1407 = vmatprep.subr.mxu0 0.0
        %1408 = vmatpush1.msra.mxu0 0.0
        %1409 = vmatprep.subr.mxu0 0.0
        %1410 = vmatpush1.msra.mxu0 0.0
        %1411 = vmatprep.subr.mxu0 0.0
        %1412 = vmatpush1.msra.mxu0 0.0
        %1413 = vmatprep.subr.mxu0 0.0
        %1414 = vmatpush1.msra.mxu0 0.0
        %1415 = vmatprep.mubr.f32.mxu0 0.0
        %v1416 = vand.u32 %v803, 4294901760
        %1417 = vmatmul.mubr.f32.gmra.mrb[0].mxu0 %v1416
        %v1418 = vpop.f32.mrb[0].mxu0
        %v1419 = vadd.f32 %v1118, %v1418
        %v1420 = vpop.f32.mrb[0].mxu0
        %1421 = vmatprep.mubr.f32.mxu0 0.0
        %v1422 = vand.u32 %v817, 4294901760
        %1423 = vmatmul.mubr.f32.gmra.mrb[0].mxu0 %v1422
        %v1424 = vpop.f32.mrb[0].mxu0
        %v1425 = vadd.f32 %v1128, %v1424
        %v1426 = vpop.f32.mrb[0].mxu0
        %1427 = vmatprep.mubr.f32.mxu0 0.0
        %v1428 = vand.u32 %v831, 4294901760
        %1429 = vmatmul.mubr.f32.gmra.mrb[0].mxu0 %v1428
        %v1430 = vpop.f32.mrb[0].mxu0
        %v1431 = vadd.f32 %v1138, %v1430
        %v1432 = vpop.f32.mrb[0].mxu0
        %1433 = vmatprep.mubr.f32.mxu0 0.0
        %v1434 = vand.u32 %v845, 4294901760
        %1435 = vmatmul.mubr.f32.gmra.mrb[0].mxu0 %v1434
        %v1436 = vpop.f32.mrb[0].mxu0
        %v1437 = vadd.f32 %v1148, %v1436
        %v1438 = vpop.f32.mrb[0].mxu0
        %1439 = vmatprep.mubr.f32.mxu0 0.0
        %v1440 = vand.u32 %v859, 4294901760
        %1441 = vmatmul.mubr.f32.gmra.mrb[0].mxu0 %v1440
        %v1442 = vpop.f32.mrb[0].mxu0
        %v1443 = vadd.f32 %v1158, %v1442
        %v1444 = vpop.f32.mrb[0].mxu0
        %1445 = vmatprep.mubr.f32.mxu0 0.0
        %v1446 = vand.u32 %v873, 4294901760
        %1447 = vmatmul.mubr.f32.gmra.mrb[0].mxu0 %v1446
        %v1448 = vpop.f32.mrb[0].mxu0
        %v1449 = vadd.f32 %v1168, %v1448
        %v1450 = vpop.f32.mrb[0].mxu0
        %1451 = vmatprep.mubr.f32.mxu0 0.0
        %v1452 = vand.u32 %v887, 4294901760
        %1453 = vmatmul.mubr.f32.gmra.mrb[0].mxu0 %v1452
        %v1454 = vpop.f32.mrb[0].mxu0
        %v1455 = vadd.f32 %v1178, %v1454
        %v1456 = vpop.f32.mrb[0].mxu0
        %1457 = vmatprep.mubr.f32.mxu0 0.0
        %v1458 = vand.u32 %v901, 4294901760
        %1459 = vmatmul.mubr.f32.gmra.mrb[0].mxu0 %v1458
        %v1460 = vpop.f32.mrb[0].mxu0
        %v1461 = vadd.f32 %v1188, %v1460
        %v1462 = vpop.f32.mrb[0].mxu0
        %1463 = vmatprep.mubr.f32.mxu0 0.0
        %v1464 = vand.u32 %v915, 4294901760
        %1465 = vmatmul.mubr.f32.gmra.mrb[0].mxu0 %v1464
        %v1466 = vpop.f32.mrb[0].mxu0
        %v1467 = vadd.f32 %v1198, %v1466
        %v1468 = vpop.f32.mrb[0].mxu0
        %1469 = vmatprep.mubr.f32.mxu0 0.0
        %v1470 = vand.u32 %v929, 4294901760
        %1471 = vmatmul.mubr.f32.gmra.mrb[0].mxu0 %v1470
        %v1472 = vpop.f32.mrb[0].mxu0
        %v1473 = vadd.f32 %v1208, %v1472
        %v1474 = vpop.f32.mrb[0].mxu0
        %1475 = vmatprep.mubr.f32.mxu0 0.0
        %v1476 = vand.u32 %v943, 4294901760
        %1477 = vmatmul.mubr.f32.gmra.mrb[0].mxu0 %v1476
        %v1478 = vpop.f32.mrb[0].mxu0
        %v1479 = vadd.f32 %v1218, %v1478
        %v1480 = vpop.f32.mrb[0].mxu0
        %1481 = vmatprep.mubr.f32.mxu0 0.0
        %v1482 = vand.u32 %v957, 4294901760
        %1483 = vmatmul.mubr.f32.gmra.mrb[0].mxu0 %v1482
        %v1484 = vpop.f32.mrb[0].mxu0
        %v1485 = vadd.f32 %v1228, %v1484
        %v1486 = vpop.f32.mrb[0].mxu0
        %1487 = vmatprep.mubr.f32.mxu0 0.0
        %v1488 = vand.u32 %v971, 4294901760
        %1489 = vmatmul.mubr.f32.gmra.mrb[0].mxu0 %v1488
        %v1490 = vpop.f32.mrb[0].mxu0
        %v1491 = vadd.f32 %v1238, %v1490
        %v1492 = vpop.f32.mrb[0].mxu0
        %1493 = vmatprep.mubr.f32.mxu0 0.0
        %v1494 = vand.u32 %v985, 4294901760
        %1495 = vmatmul.mubr.f32.gmra.mrb[0].mxu0 %v1494
        %v1496 = vpop.f32.mrb[0].mxu0
        %v1497 = vadd.f32 %v1248, %v1496
        %v1498 = vpop.f32.mrb[0].mxu0
        %1499 = vmatprep.mubr.f32.mxu0 0.0
        %v1500 = vand.u32 %v999, 4294901760
        %1501 = vmatmul.mubr.f32.gmra.mrb[0].mxu0 %v1500
        %v1502 = vpop.f32.mrb[0].mxu0
        %v1503 = vadd.f32 %v1258, %v1502
        %v1504 = vpop.f32.mrb[0].mxu0
        %1505 = vmatprep.mubr.f32.mxu0 0.0
        %v1506 = vand.u32 %v1013, 4294901760
        %1507 = vmatmul.mubr.f32.gmra.mrb[0].mxu0 %v1506
        %v1508 = vpop.f32.mrb[0].mxu0
        %v1509 = vadd.f32 %v1268, %v1508
        %v1510 = vpop.f32.mrb[0].mxu0
        %1511 = vdwg.mxu0
        %1512 = vmatprep.subr.mxu0 0.0
        %v1513 = vand.u32 %v632, 4294901760
        %v1514 = vsub.f32 %v632, %v1513
        %1515 = vmatpush1.msra.mxu0 %v1514
        %1516 = vmatprep.subr.mxu0 0.0
        %v1517 = vand.u32 %v633, 4294901760
        %v1518 = vsub.f32 %v633, %v1517
        %1519 = vmatpush1.msra.mxu0 %v1518
        %1520 = vmatprep.subr.mxu0 0.0
        %v1521 = vand.u32 %v634, 4294901760
        %v1522 = vsub.f32 %v634, %v1521
        %1523 = vmatpush1.msra.mxu0 %v1522
        %1524 = vmatprep.subr.mxu0 0.0
        %v1525 = vand.u32 %v635, 4294901760
        %v1526 = vsub.f32 %v635, %v1525
        %1527 = vmatpush1.msra.mxu0 %v1526
        %1528 = vmatprep.subr.mxu0 0.0
        %v1529 = vand.u32 %v636, 4294901760
        %v1530 = vsub.f32 %v636, %v1529
        %1531 = vmatpush1.msra.mxu0 %v1530
        %1532 = vmatprep.subr.mxu0 0.0
        %v1533 = vand.u32 %v637, 4294901760
        %v1534 = vsub.f32 %v637, %v1533
        %1535 = vmatpush1.msra.mxu0 %v1534
        %1536 = vmatprep.subr.mxu0 0.0
        %v1537 = vand.u32 %v638, 4294901760
        %v1538 = vsub.f32 %v638, %v1537
        %1539 = vmatpush1.msra.mxu0 %v1538
        %1540 = vmatprep.subr.mxu0 0.0
        %v1541 = vand.u32 %v639, 4294901760
        %v1542 = vsub.f32 %v639, %v1541
        %1543 = vmatpush1.msra.mxu0 %v1542
        %1544 = vmatprep.subr.mxu0 0.0
        %v1545 = vand.u32 %v640, 4294901760
        %v1546 = vsub.f32 %v640, %v1545
        %1547 = vmatpush1.msra.mxu0 %v1546
        %1548 = vmatprep.subr.mxu0 0.0
        %v1549 = vand.u32 %v641, 4294901760
        %v1550 = vsub.f32 %v641, %v1549
        %1551 = vmatpush1.msra.mxu0 %v1550
        %1552 = vmatprep.subr.mxu0 0.0
        %v1553 = vand.u32 %v642, 4294901760
        %v1554 = vsub.f32 %v642, %v1553
        %1555 = vmatpush1.msra.mxu0 %v1554
        %1556 = vmatprep.subr.mxu0 0.0
        %v1557 = vand.u32 %v643, 4294901760
        %v1558 = vsub.f32 %v643, %v1557
        %1559 = vmatpush1.msra.mxu0 %v1558
        %1560 = vmatprep.subr.mxu0 0.0
        %v1561 = vand.u32 %v644, 4294901760
        %v1562 = vsub.f32 %v644, %v1561
        %1563 = vmatpush1.msra.mxu0 %v1562
        %1564 = vmatprep.subr.mxu0 0.0
        %v1565 = vand.u32 %v645, 4294901760
        %v1566 = vsub.f32 %v645, %v1565
        %1567 = vmatpush1.msra.mxu0 %v1566
        %1568 = vmatprep.subr.mxu0 0.0
        %v1569 = vand.u32 %v646, 4294901760
        %v1570 = vsub.f32 %v646, %v1569
        %1571 = vmatpush1.msra.mxu0 %v1570
        %1572 = vmatprep.subr.mxu0 0.0
        %v1573 = vand.u32 %v647, 4294901760
        %v1574 = vsub.f32 %v647, %v1573
        %1575 = vmatpush1.msra.mxu0 %v1574
        %1576 = vmatprep.subr.mxu0 0.0
        %1577 = vmatpush1.msra.mxu0 0.0
        %1578 = vmatprep.subr.mxu0 0.0
        %1579 = vmatpush1.msra.mxu0 0.0
        %1580 = vmatprep.subr.mxu0 0.0
        %1581 = vmatpush1.msra.mxu0 0.0
        %1582 = vmatprep.subr.mxu0 0.0
        %1583 = vmatpush1.msra.mxu0 0.0
        %1584 = vmatprep.subr.mxu0 0.0
        %1585 = vmatpush1.msra.mxu0 0.0
        %1586 = vmatprep.subr.mxu0 0.0
        %1587 = vmatpush1.msra.mxu0 0.0
        %1588 = vmatprep.subr.mxu0 0.0
        %1589 = vmatpush1.msra.mxu0 0.0
        %1590 = vmatprep.subr.mxu0 0.0
        %1591 = vmatpush1.msra.mxu0 0.0
        %1592 = vmatprep.subr.mxu0 0.0
        %1593 = vmatpush1.msra.mxu0 0.0
        %1594 = vmatprep.subr.mxu0 0.0
        %1595 = vmatpush1.msra.mxu0 0.0
        %1596 = vmatprep.subr.mxu0 0.0
        %1597 = vmatpush1.msra.mxu0 0.0
        %1598 = vmatprep.subr.mxu0 0.0
        %1599 = vmatpush1.msra.mxu0 0.0
        %1600 = vmatprep.subr.mxu0 0.0
        %1601 = vmatpush1.msra.mxu0 0.0
        %1602 = vmatprep.subr.mxu0 0.0
        %1603 = vmatpush1.msra.mxu0 0.0
        %1604 = vmatprep.subr.mxu0 0.0
        %1605 = vmatpush1.msra.mxu0 0.0
        %1606 = vmatprep.subr.mxu0 0.0
        %1607 = vmatpush1.msra.mxu0 0.0
        %1608 = vmatprep.mubr.f32.mxu0 0.0
        %v1609 = vand.u32 %v803, 4294901760
        %v1610 = vsub.f32 %v803, %v1609
        %1611 = vmatmul.mubr.f32.gmra.mrb[0].mxu0 %v1610
        %v1612 = vpop.f32.mrb[0].mxu0
        %v1613 = vadd.f32 %v1419, %v1612
        %v1614 = vpop.f32.mrb[0].mxu0
        %1615 = vmatprep.mubr.f32.mxu0 0.0
        %v1616 = vand.u32 %v817, 4294901760
        %v1617 = vsub.f32 %v817, %v1616
        %1618 = vmatmul.mubr.f32.gmra.mrb[0].mxu0 %v1617
        %v1619 = vpop.f32.mrb[0].mxu0
        %v1620 = vadd.f32 %v1425, %v1619
        %v1621 = vpop.f32.mrb[0].mxu0
        %1622 = vmatprep.mubr.f32.mxu0 0.0
        %v1623 = vand.u32 %v831, 4294901760
        %v1624 = vsub.f32 %v831, %v1623
        %1625 = vmatmul.mubr.f32.gmra.mrb[0].mxu0 %v1624
        %v1626 = vpop.f32.mrb[0].mxu0
        %v1627 = vadd.f32 %v1431, %v1626
        %v1628 = vpop.f32.mrb[0].mxu0
        %1629 = vmatprep.mubr.f32.mxu0 0.0
        %v1630 = vand.u32 %v845, 4294901760
        %v1631 = vsub.f32 %v845, %v1630
        %1632 = vmatmul.mubr.f32.gmra.mrb[0].mxu0 %v1631
        %v1633 = vpop.f32.mrb[0].mxu0
        %v1634 = vadd.f32 %v1437, %v1633
        %v1635 = vpop.f32.mrb[0].mxu0
        %1636 = vmatprep.mubr.f32.mxu0 0.0
        %v1637 = vand.u32 %v859, 4294901760
        %v1638 = vsub.f32 %v859, %v1637
        %1639 = vmatmul.mubr.f32.gmra.mrb[0].mxu0 %v1638
        %v1640 = vpop.f32.mrb[0].mxu0
        %v1641 = vadd.f32 %v1443, %v1640
        %v1642 = vpop.f32.mrb[0].mxu0
        %1643 = vmatprep.mubr.f32.mxu0 0.0
        %v1644 = vand.u32 %v873, 4294901760
        %v1645 = vsub.f32 %v873, %v1644
        %1646 = vmatmul.mubr.f32.gmra.mrb[0].mxu0 %v1645
        %v1647 = vpop.f32.mrb[0].mxu0
        %v1648 = vadd.f32 %v1449, %v1647
        %v1649 = vpop.f32.mrb[0].mxu0
        %1650 = vmatprep.mubr.f32.mxu0 0.0
        %v1651 = vand.u32 %v887, 4294901760
        %v1652 = vsub.f32 %v887, %v1651
        %1653 = vmatmul.mubr.f32.gmra.mrb[0].mxu0 %v1652
        %v1654 = vpop.f32.mrb[0].mxu0
        %v1655 = vadd.f32 %v1455, %v1654
        %v1656 = vpop.f32.mrb[0].mxu0
        %1657 = vmatprep.mubr.f32.mxu0 0.0
        %v1658 = vand.u32 %v901, 4294901760
        %v1659 = vsub.f32 %v901, %v1658
        %1660 = vmatmul.mubr.f32.gmra.mrb[0].mxu0 %v1659
        %v1661 = vpop.f32.mrb[0].mxu0
        %v1662 = vadd.f32 %v1461, %v1661
        %v1663 = vpop.f32.mrb[0].mxu0
        %1664 = vmatprep.mubr.f32.mxu0 0.0
        %v1665 = vand.u32 %v915, 4294901760
        %v1666 = vsub.f32 %v915, %v1665
        %1667 = vmatmul.mubr.f32.gmra.mrb[0].mxu0 %v1666
        %v1668 = vpop.f32.mrb[0].mxu0
        %v1669 = vadd.f32 %v1467, %v1668
        %v1670 = vpop.f32.mrb[0].mxu0
        %1671 = vmatprep.mubr.f32.mxu0 0.0
        %v1672 = vand.u32 %v929, 4294901760
        %v1673 = vsub.f32 %v929, %v1672
        %1674 = vmatmul.mubr.f32.gmra.mrb[0].mxu0 %v1673
        %v1675 = vpop.f32.mrb[0].mxu0
        %v1676 = vadd.f32 %v1473, %v1675
        %v1677 = vpop.f32.mrb[0].mxu0
        %1678 = vmatprep.mubr.f32.mxu0 0.0
        %v1679 = vand.u32 %v943, 4294901760
        %v1680 = vsub.f32 %v943, %v1679
        %1681 = vmatmul.mubr.f32.gmra.mrb[0].mxu0 %v1680
        %v1682 = vpop.f32.mrb[0].mxu0
        %v1683 = vadd.f32 %v1479, %v1682
        %v1684 = vpop.f32.mrb[0].mxu0
        %1685 = vmatprep.mubr.f32.mxu0 0.0
        %v1686 = vand.u32 %v957, 4294901760
        %v1687 = vsub.f32 %v957, %v1686
        %1688 = vmatmul.mubr.f32.gmra.mrb[0].mxu0 %v1687
        %v1689 = vpop.f32.mrb[0].mxu0
        %v1690 = vadd.f32 %v1485, %v1689
        %v1691 = vpop.f32.mrb[0].mxu0
        %1692 = vmatprep.mubr.f32.mxu0 0.0
        %v1693 = vand.u32 %v971, 4294901760
        %v1694 = vsub.f32 %v971, %v1693
        %1695 = vmatmul.mubr.f32.gmra.mrb[0].mxu0 %v1694
        %v1696 = vpop.f32.mrb[0].mxu0
        %v1697 = vadd.f32 %v1491, %v1696
        %v1698 = vpop.f32.mrb[0].mxu0
        %1699 = vmatprep.mubr.f32.mxu0 0.0
        %v1700 = vand.u32 %v985, 4294901760
        %v1701 = vsub.f32 %v985, %v1700
        %1702 = vmatmul.mubr.f32.gmra.mrb[0].mxu0 %v1701
        %v1703 = vpop.f32.mrb[0].mxu0
        %v1704 = vadd.f32 %v1497, %v1703
        %v1705 = vpop.f32.mrb[0].mxu0
        %1706 = vmatprep.mubr.f32.mxu0 0.0
        %v1707 = vand.u32 %v999, 4294901760
        %v1708 = vsub.f32 %v999, %v1707
        %1709 = vmatmul.mubr.f32.gmra.mrb[0].mxu0 %v1708
        %v1710 = vpop.f32.mrb[0].mxu0
        %v1711 = vadd.f32 %v1503, %v1710
        %v1712 = vpop.f32.mrb[0].mxu0
        %1713 = vmatprep.mubr.f32.mxu0 0.0
        %v1714 = vand.u32 %v1013, 4294901760
        %v1715 = vsub.f32 %v1013, %v1714
        %1716 = vmatmul.mubr.f32.gmra.mrb[0].mxu0 %v1715
        %v1717 = vpop.f32.mrb[0].mxu0
        %v1718 = vadd.f32 %v1509, %v1717
        %v1719 = vpop.f32.mrb[0].mxu0
        %1720 = vdwg.mxu0
        %1721 = vmatprep.subr.mxu0 0.0
        %v1722 = vand.u32 %v632, 4294901760
        %1723 = vmatpush1.msra.mxu0 %v1722
        %1724 = vmatprep.subr.mxu0 0.0
        %v1725 = vand.u32 %v633, 4294901760
        %1726 = vmatpush1.msra.mxu0 %v1725
        %1727 = vmatprep.subr.mxu0 0.0
        %v1728 = vand.u32 %v634, 4294901760
        %1729 = vmatpush1.msra.mxu0 %v1728
        %1730 = vmatprep.subr.mxu0 0.0
        %v1731 = vand.u32 %v635, 4294901760
        %1732 = vmatpush1.msra.mxu0 %v1731
        %1733 = vmatprep.subr.mxu0 0.0
        %v1734 = vand.u32 %v636, 4294901760
        %1735 = vmatpush1.msra.mxu0 %v1734
        %1736 = vmatprep.subr.mxu0 0.0
        %v1737 = vand.u32 %v637, 4294901760
        %1738 = vmatpush1.msra.mxu0 %v1737
        %1739 = vmatprep.subr.mxu0 0.0
        %v1740 = vand.u32 %v638, 4294901760
        %1741 = vmatpush1.msra.mxu0 %v1740
        %1742 = vmatprep.subr.mxu0 0.0
        %v1743 = vand.u32 %v639, 4294901760
        %1744 = vmatpush1.msra.mxu0 %v1743
        %1745 = vmatprep.subr.mxu0 0.0
        %v1746 = vand.u32 %v640, 4294901760
        %1747 = vmatpush1.msra.mxu0 %v1746
        %1748 = vmatprep.subr.mxu0 0.0
        %v1749 = vand.u32 %v641, 4294901760
        %1750 = vmatpush1.msra.mxu0 %v1749
        %1751 = vmatprep.subr.mxu0 0.0
        %v1752 = vand.u32 %v642, 4294901760
        %1753 = vmatpush1.msra.mxu0 %v1752
        %1754 = vmatprep.subr.mxu0 0.0
        %v1755 = vand.u32 %v643, 4294901760
        %1756 = vmatpush1.msra.mxu0 %v1755
        %1757 = vmatprep.subr.mxu0 0.0
        %v1758 = vand.u32 %v644, 4294901760
        %1759 = vmatpush1.msra.mxu0 %v1758
        %1760 = vmatprep.subr.mxu0 0.0
        %v1761 = vand.u32 %v645, 4294901760
        %1762 = vmatpush1.msra.mxu0 %v1761
        %1763 = vmatprep.subr.mxu0 0.0
        %v1764 = vand.u32 %v646, 4294901760
        %1765 = vmatpush1.msra.mxu0 %v1764
        %1766 = vmatprep.subr.mxu0 0.0
        %v1767 = vand.u32 %v647, 4294901760
        %1768 = vmatpush1.msra.mxu0 %v1767
        %1769 = vmatprep.subr.mxu0 0.0
        %1770 = vmatpush1.msra.mxu0 0.0
        %1771 = vmatprep.subr.mxu0 0.0
        %1772 = vmatpush1.msra.mxu0 0.0
        %1773 = vmatprep.subr.mxu0 0.0
        %1774 = vmatpush1.msra.mxu0 0.0
        %1775 = vmatprep.subr.mxu0 0.0
        %1776 = vmatpush1.msra.mxu0 0.0
        %1777 = vmatprep.subr.mxu0 0.0
        %1778 = vmatpush1.msra.mxu0 0.0
        %1779 = vmatprep.subr.mxu0 0.0
        %1780 = vmatpush1.msra.mxu0 0.0
        %1781 = vmatprep.subr.mxu0 0.0
        %1782 = vmatpush1.msra.mxu0 0.0
        %1783 = vmatprep.subr.mxu0 0.0
        %1784 = vmatpush1.msra.mxu0 0.0
        %1785 = vmatprep.subr.mxu0 0.0
        %1786 = vmatpush1.msra.mxu0 0.0
        %1787 = vmatprep.subr.mxu0 0.0
        %1788 = vmatpush1.msra.mxu0 0.0
        %1789 = vmatprep.subr.mxu0 0.0
        %1790 = vmatpush1.msra.mxu0 0.0
        %1791 = vmatprep.subr.mxu0 0.0
        %1792 = vmatpush1.msra.mxu0 0.0
        %1793 = vmatprep.subr.mxu0 0.0
        %1794 = vmatpush1.msra.mxu0 0.0
        %1795 = vmatprep.subr.mxu0 0.0
        %1796 = vmatpush1.msra.mxu0 0.0
        %1797 = vmatprep.subr.mxu0 0.0
        %1798 = vmatpush1.msra.mxu0 0.0
        %1799 = vmatprep.subr.mxu0 0.0
        %1800 = vmatpush1.msra.mxu0 0.0
        %1801 = vmatprep.mubr.f32.mxu0 0.0
        %v1802 = vand.u32 %v803, 4294901760
        %v1803 = vsub.f32 %v803, %v1802
        %v1804 = vand.u32 %v1803, 4294901760
        %1805 = vmatmul.mubr.f32.gmra.mrb[0].mxu0 %v1804
        %v1806 = vpop.f32.mrb[0].mxu0
        %v1807 = vadd.f32 %v1613, %v1806
        %v1808 = vpop.f32.mrb[0].mxu0
        %1809 = vmatprep.mubr.f32.mxu0 0.0
        %v1810 = vand.u32 %v817, 4294901760
        %v1811 = vsub.f32 %v817, %v1810
        %v1812 = vand.u32 %v1811, 4294901760
        %1813 = vmatmul.mubr.f32.gmra.mrb[0].mxu0 %v1812
        %v1814 = vpop.f32.mrb[0].mxu0
        %v1815 = vadd.f32 %v1620, %v1814
        %v1816 = vpop.f32.mrb[0].mxu0
        %1817 = vmatprep.mubr.f32.mxu0 0.0
        %v1818 = vand.u32 %v831, 4294901760
        %v1819 = vsub.f32 %v831, %v1818
        %v1820 = vand.u32 %v1819, 4294901760
        %1821 = vmatmul.mubr.f32.gmra.mrb[0].mxu0 %v1820
        %v1822 = vpop.f32.mrb[0].mxu0
        %v1823 = vadd.f32 %v1627, %v1822
        %v1824 = vpop.f32.mrb[0].mxu0
        %1825 = vmatprep.mubr.f32.mxu0 0.0
        %v1826 = vand.u32 %v845, 4294901760
        %v1827 = vsub.f32 %v845, %v1826
        %v1828 = vand.u32 %v1827, 4294901760
        %1829 = vmatmul.mubr.f32.gmra.mrb[0].mxu0 %v1828
        %v1830 = vpop.f32.mrb[0].mxu0
        %v1831 = vadd.f32 %v1634, %v1830
        %v1832 = vpop.f32.mrb[0].mxu0
        %1833 = vmatprep.mubr.f32.mxu0 0.0
        %v1834 = vand.u32 %v859, 4294901760
        %v1835 = vsub.f32 %v859, %v1834
        %v1836 = vand.u32 %v1835, 4294901760
        %1837 = vmatmul.mubr.f32.gmra.mrb[0].mxu0 %v1836
        %v1838 = vpop.f32.mrb[0].mxu0
        %v1839 = vadd.f32 %v1641, %v1838
        %v1840 = vpop.f32.mrb[0].mxu0
        %1841 = vmatprep.mubr.f32.mxu0 0.0
        %v1842 = vand.u32 %v873, 4294901760
        %v1843 = vsub.f32 %v873, %v1842
        %v1844 = vand.u32 %v1843, 4294901760
        %1845 = vmatmul.mubr.f32.gmra.mrb[0].mxu0 %v1844
        %v1846 = vpop.f32.mrb[0].mxu0
        %v1847 = vadd.f32 %v1648, %v1846
        %v1848 = vpop.f32.mrb[0].mxu0
        %1849 = vmatprep.mubr.f32.mxu0 0.0
        %v1850 = vand.u32 %v887, 4294901760
        %v1851 = vsub.f32 %v887, %v1850
        %v1852 = vand.u32 %v1851, 4294901760
        %1853 = vmatmul.mubr.f32.gmra.mrb[0].mxu0 %v1852
        %v1854 = vpop.f32.mrb[0].mxu0
        %v1855 = vadd.f32 %v1655, %v1854
        %v1856 = vpop.f32.mrb[0].mxu0
        %1857 = vmatprep.mubr.f32.mxu0 0.0
        %v1858 = vand.u32 %v901, 4294901760
        %v1859 = vsub.f32 %v901, %v1858
        %v1860 = vand.u32 %v1859, 4294901760
        %1861 = vmatmul.mubr.f32.gmra.mrb[0].mxu0 %v1860
        %v1862 = vpop.f32.mrb[0].mxu0
        %v1863 = vadd.f32 %v1662, %v1862
        %v1864 = vpop.f32.mrb[0].mxu0
        %1865 = vmatprep.mubr.f32.mxu0 0.0
        %v1866 = vand.u32 %v915, 4294901760
        %v1867 = vsub.f32 %v915, %v1866
        %v1868 = vand.u32 %v1867, 4294901760
        %1869 = vmatmul.mubr.f32.gmra.mrb[0].mxu0 %v1868
        %v1870 = vpop.f32.mrb[0].mxu0
        %v1871 = vadd.f32 %v1669, %v1870
        %v1872 = vpop.f32.mrb[0].mxu0
        %1873 = vmatprep.mubr.f32.mxu0 0.0
        %v1874 = vand.u32 %v929, 4294901760
        %v1875 = vsub.f32 %v929, %v1874
        %v1876 = vand.u32 %v1875, 4294901760
        %1877 = vmatmul.mubr.f32.gmra.mrb[0].mxu0 %v1876
        %v1878 = vpop.f32.mrb[0].mxu0
        %v1879 = vadd.f32 %v1676, %v1878
        %v1880 = vpop.f32.mrb[0].mxu0
        %1881 = vmatprep.mubr.f32.mxu0 0.0
        %v1882 = vand.u32 %v943, 4294901760
        %v1883 = vsub.f32 %v943, %v1882
        %v1884 = vand.u32 %v1883, 4294901760
        %1885 = vmatmul.mubr.f32.gmra.mrb[0].mxu0 %v1884
        %v1886 = vpop.f32.mrb[0].mxu0
        %v1887 = vadd.f32 %v1683, %v1886
        %v1888 = vpop.f32.mrb[0].mxu0
        %1889 = vmatprep.mubr.f32.mxu0 0.0
        %v1890 = vand.u32 %v957, 4294901760
        %v1891 = vsub.f32 %v957, %v1890
        %v1892 = vand.u32 %v1891, 4294901760
        %1893 = vmatmul.mubr.f32.gmra.mrb[0].mxu0 %v1892
        %v1894 = vpop.f32.mrb[0].mxu0
        %v1895 = vadd.f32 %v1690, %v1894
        %v1896 = vpop.f32.mrb[0].mxu0
        %1897 = vmatprep.mubr.f32.mxu0 0.0
        %v1898 = vand.u32 %v971, 4294901760
        %v1899 = vsub.f32 %v971, %v1898
        %v1900 = vand.u32 %v1899, 4294901760
        %1901 = vmatmul.mubr.f32.gmra.mrb[0].mxu0 %v1900
        %v1902 = vpop.f32.mrb[0].mxu0
        %v1903 = vadd.f32 %v1697, %v1902
        %v1904 = vpop.f32.mrb[0].mxu0
        %1905 = vmatprep.mubr.f32.mxu0 0.0
        %v1906 = vand.u32 %v985, 4294901760
        %v1907 = vsub.f32 %v985, %v1906
        %v1908 = vand.u32 %v1907, 4294901760
        %1909 = vmatmul.mubr.f32.gmra.mrb[0].mxu0 %v1908
        %v1910 = vpop.f32.mrb[0].mxu0
        %v1911 = vadd.f32 %v1704, %v1910
        %v1912 = vpop.f32.mrb[0].mxu0
        %1913 = vmatprep.mubr.f32.mxu0 0.0
        %v1914 = vand.u32 %v999, 4294901760
        %v1915 = vsub.f32 %v999, %v1914
        %v1916 = vand.u32 %v1915, 4294901760
        %1917 = vmatmul.mubr.f32.gmra.mrb[0].mxu0 %v1916
        %v1918 = vpop.f32.mrb[0].mxu0
        %v1919 = vadd.f32 %v1711, %v1918
        %v1920 = vpop.f32.mrb[0].mxu0
        %1921 = vmatprep.mubr.f32.mxu0 0.0
        %v1922 = vand.u32 %v1013, 4294901760
        %v1923 = vsub.f32 %v1013, %v1922
        %v1924 = vand.u32 %v1923, 4294901760
        %1925 = vmatmul.mubr.f32.gmra.mrb[0].mxu0 %v1924
        %v1926 = vpop.f32.mrb[0].mxu0
        %v1927 = vadd.f32 %v1718, %v1926
        %v1928 = vpop.f32.mrb[0].mxu0
        %1929 = vdwg.mxu0
        %1930 = vmatprep.subr.mxu0 0.0
        %v1931 = vand.u32 %v632, 4294901760
        %v1932 = vsub.f32 %v632, %v1931
        %v1933 = vand.u32 %v1932, 4294901760
        %1934 = vmatpush1.msra.mxu0 %v1933
        %1935 = vmatprep.subr.mxu0 0.0
        %v1936 = vand.u32 %v633, 4294901760
        %v1937 = vsub.f32 %v633, %v1936
        %v1938 = vand.u32 %v1937, 4294901760
        %1939 = vmatpush1.msra.mxu0 %v1938
        %1940 = vmatprep.subr.mxu0 0.0
        %v1941 = vand.u32 %v634, 4294901760
        %v1942 = vsub.f32 %v634, %v1941
        %v1943 = vand.u32 %v1942, 4294901760
        %1944 = vmatpush1.msra.mxu0 %v1943
        %1945 = vmatprep.subr.mxu0 0.0
        %v1946 = vand.u32 %v635, 4294901760
        %v1947 = vsub.f32 %v635, %v1946
        %v1948 = vand.u32 %v1947, 4294901760
        %1949 = vmatpush1.msra.mxu0 %v1948
        %1950 = vmatprep.subr.mxu0 0.0
        %v1951 = vand.u32 %v636, 4294901760
        %v1952 = vsub.f32 %v636, %v1951
        %v1953 = vand.u32 %v1952, 4294901760
        %1954 = vmatpush1.msra.mxu0 %v1953
        %1955 = vmatprep.subr.mxu0 0.0
        %v1956 = vand.u32 %v637, 4294901760
        %v1957 = vsub.f32 %v637, %v1956
        %v1958 = vand.u32 %v1957, 4294901760
        %1959 = vmatpush1.msra.mxu0 %v1958
        %1960 = vmatprep.subr.mxu0 0.0
        %v1961 = vand.u32 %v638, 4294901760
        %v1962 = vsub.f32 %v638, %v1961
        %v1963 = vand.u32 %v1962, 4294901760
        %1964 = vmatpush1.msra.mxu0 %v1963
        %1965 = vmatprep.subr.mxu0 0.0
        %v1966 = vand.u32 %v639, 4294901760
        %v1967 = vsub.f32 %v639, %v1966
        %v1968 = vand.u32 %v1967, 4294901760
        %1969 = vmatpush1.msra.mxu0 %v1968
        %1970 = vmatprep.subr.mxu0 0.0
        %v1971 = vand.u32 %v640, 4294901760
        %v1972 = vsub.f32 %v640, %v1971
        %v1973 = vand.u32 %v1972, 4294901760
        %1974 = vmatpush1.msra.mxu0 %v1973
        %1975 = vmatprep.subr.mxu0 0.0
        %v1976 = vand.u32 %v641, 4294901760
        %v1977 = vsub.f32 %v641, %v1976
        %v1978 = vand.u32 %v1977, 4294901760
        %1979 = vmatpush1.msra.mxu0 %v1978
        %1980 = vmatprep.subr.mxu0 0.0
        %v1981 = vand.u32 %v642, 4294901760
        %v1982 = vsub.f32 %v642, %v1981
        %v1983 = vand.u32 %v1982, 4294901760
        %1984 = vmatpush1.msra.mxu0 %v1983
        %1985 = vmatprep.subr.mxu0 0.0
        %v1986 = vand.u32 %v643, 4294901760
        %v1987 = vsub.f32 %v643, %v1986
        %v1988 = vand.u32 %v1987, 4294901760
        %1989 = vmatpush1.msra.mxu0 %v1988
        %1990 = vmatprep.subr.mxu0 0.0
        %v1991 = vand.u32 %v644, 4294901760
        %v1992 = vsub.f32 %v644, %v1991
        %v1993 = vand.u32 %v1992, 4294901760
        %1994 = vmatpush1.msra.mxu0 %v1993
        %1995 = vmatprep.subr.mxu0 0.0
        %v1996 = vand.u32 %v645, 4294901760
        %v1997 = vsub.f32 %v645, %v1996
        %v1998 = vand.u32 %v1997, 4294901760
        %1999 = vmatpush1.msra.mxu0 %v1998
        %2000 = vmatprep.subr.mxu0 0.0
        %v2001 = vand.u32 %v646, 4294901760
        %v2002 = vsub.f32 %v646, %v2001
        %v2003 = vand.u32 %v2002, 4294901760
        %2004 = vmatpush1.msra.mxu0 %v2003
        %2005 = vmatprep.subr.mxu0 0.0
        %v2006 = vand.u32 %v647, 4294901760
        %v2007 = vsub.f32 %v647, %v2006
        %v2008 = vand.u32 %v2007, 4294901760
        %2009 = vmatpush1.msra.mxu0 %v2008
        %2010 = vmatprep.subr.mxu0 0.0
        %2011 = vmatpush1.msra.mxu0 0.0
        %2012 = vmatprep.subr.mxu0 0.0
        %2013 = vmatpush1.msra.mxu0 0.0
        %2014 = vmatprep.subr.mxu0 0.0
        %2015 = vmatpush1.msra.mxu0 0.0
        %2016 = vmatprep.subr.mxu0 0.0
        %2017 = vmatpush1.msra.mxu0 0.0
        %2018 = vmatprep.subr.mxu0 0.0
        %2019 = vmatpush1.msra.mxu0 0.0
        %2020 = vmatprep.subr.mxu0 0.0
        %2021 = vmatpush1.msra.mxu0 0.0
        %2022 = vmatprep.subr.mxu0 0.0
        %2023 = vmatpush1.msra.mxu0 0.0
        %2024 = vmatprep.subr.mxu0 0.0
        %2025 = vmatpush1.msra.mxu0 0.0
        %2026 = vmatprep.subr.mxu0 0.0
        %2027 = vmatpush1.msra.mxu0 0.0
        %2028 = vmatprep.subr.mxu0 0.0
        %2029 = vmatpush1.msra.mxu0 0.0
        %2030 = vmatprep.subr.mxu0 0.0
        %2031 = vmatpush1.msra.mxu0 0.0
        %2032 = vmatprep.subr.mxu0 0.0
        %2033 = vmatpush1.msra.mxu0 0.0
        %2034 = vmatprep.subr.mxu0 0.0
        %2035 = vmatpush1.msra.mxu0 0.0
        %2036 = vmatprep.subr.mxu0 0.0
        %2037 = vmatpush1.msra.mxu0 0.0
        %2038 = vmatprep.subr.mxu0 0.0
        %2039 = vmatpush1.msra.mxu0 0.0
        %2040 = vmatprep.subr.mxu0 0.0
        %2041 = vmatpush1.msra.mxu0 0.0
        %2042 = vmatprep.mubr.f32.mxu0 0.0
        %v2043 = vand.u32 %v803, 4294901760
        %2044 = vmatmul.mubr.f32.gmra.mrb[0].mxu0 %v2043
        %v2045 = vpop.f32.mrb[0].mxu0
        %v2046 = vadd.f32 %v1807, %v2045
        %v2047 = vpop.f32.mrb[0].mxu0
        %2048 = vmatprep.mubr.f32.mxu0 0.0
        %v2049 = vand.u32 %v817, 4294901760
        %2050 = vmatmul.mubr.f32.gmra.mrb[0].mxu0 %v2049
        %v2051 = vpop.f32.mrb[0].mxu0
        %v2052 = vadd.f32 %v1815, %v2051
        %v2053 = vpop.f32.mrb[0].mxu0
        %2054 = vmatprep.mubr.f32.mxu0 0.0
        %v2055 = vand.u32 %v831, 4294901760
        %2056 = vmatmul.mubr.f32.gmra.mrb[0].mxu0 %v2055
        %v2057 = vpop.f32.mrb[0].mxu0
        %v2058 = vadd.f32 %v1823, %v2057
        %v2059 = vpop.f32.mrb[0].mxu0
        %2060 = vmatprep.mubr.f32.mxu0 0.0
        %v2061 = vand.u32 %v845, 4294901760
        %2062 = vmatmul.mubr.f32.gmra.mrb[0].mxu0 %v2061
        %v2063 = vpop.f32.mrb[0].mxu0
        %v2064 = vadd.f32 %v1831, %v2063
        %v2065 = vpop.f32.mrb[0].mxu0
        %2066 = vmatprep.mubr.f32.mxu0 0.0
        %v2067 = vand.u32 %v859, 4294901760
        %2068 = vmatmul.mubr.f32.gmra.mrb[0].mxu0 %v2067
        %v2069 = vpop.f32.mrb[0].mxu0
        %v2070 = vadd.f32 %v1839, %v2069
        %v2071 = vpop.f32.mrb[0].mxu0
        %2072 = vmatprep.mubr.f32.mxu0 0.0
        %v2073 = vand.u32 %v873, 4294901760
        %2074 = vmatmul.mubr.f32.gmra.mrb[0].mxu0 %v2073
        %v2075 = vpop.f32.mrb[0].mxu0
        %v2076 = vadd.f32 %v1847, %v2075
        %v2077 = vpop.f32.mrb[0].mxu0
        %2078 = vmatprep.mubr.f32.mxu0 0.0
        %v2079 = vand.u32 %v887, 4294901760
        %2080 = vmatmul.mubr.f32.gmra.mrb[0].mxu0 %v2079
        %v2081 = vpop.f32.mrb[0].mxu0
        %v2082 = vadd.f32 %v1855, %v2081
        %v2083 = vpop.f32.mrb[0].mxu0
        %2084 = vmatprep.mubr.f32.mxu0 0.0
        %v2085 = vand.u32 %v901, 4294901760
        %2086 = vmatmul.mubr.f32.gmra.mrb[0].mxu0 %v2085
        %v2087 = vpop.f32.mrb[0].mxu0
        %v2088 = vadd.f32 %v1863, %v2087
        %v2089 = vpop.f32.mrb[0].mxu0
        %2090 = vmatprep.mubr.f32.mxu0 0.0
        %v2091 = vand.u32 %v915, 4294901760
        %2092 = vmatmul.mubr.f32.gmra.mrb[0].mxu0 %v2091
        %v2093 = vpop.f32.mrb[0].mxu0
        %v2094 = vadd.f32 %v1871, %v2093
        %v2095 = vpop.f32.mrb[0].mxu0
        %2096 = vmatprep.mubr.f32.mxu0 0.0
        %v2097 = vand.u32 %v929, 4294901760
        %2098 = vmatmul.mubr.f32.gmra.mrb[0].mxu0 %v2097
        %v2099 = vpop.f32.mrb[0].mxu0
        %v2100 = vadd.f32 %v1879, %v2099
        %v2101 = vpop.f32.mrb[0].mxu0
        %2102 = vmatprep.mubr.f32.mxu0 0.0
        %v2103 = vand.u32 %v943, 4294901760
        %2104 = vmatmul.mubr.f32.gmra.mrb[0].mxu0 %v2103
        %v2105 = vpop.f32.mrb[0].mxu0
        %v2106 = vadd.f32 %v1887, %v2105
        %v2107 = vpop.f32.mrb[0].mxu0
        %2108 = vmatprep.mubr.f32.mxu0 0.0
        %v2109 = vand.u32 %v957, 4294901760
        %2110 = vmatmul.mubr.f32.gmra.mrb[0].mxu0 %v2109
        %v2111 = vpop.f32.mrb[0].mxu0
        %v2112 = vadd.f32 %v1895, %v2111
        %v2113 = vpop.f32.mrb[0].mxu0
        %2114 = vmatprep.mubr.f32.mxu0 0.0
        %v2115 = vand.u32 %v971, 4294901760
        %2116 = vmatmul.mubr.f32.gmra.mrb[0].mxu0 %v2115
        %v2117 = vpop.f32.mrb[0].mxu0
        %v2118 = vadd.f32 %v1903, %v2117
        %v2119 = vpop.f32.mrb[0].mxu0
        %2120 = vmatprep.mubr.f32.mxu0 0.0
        %v2121 = vand.u32 %v985, 4294901760
        %2122 = vmatmul.mubr.f32.gmra.mrb[0].mxu0 %v2121
        %v2123 = vpop.f32.mrb[0].mxu0
        %v2124 = vadd.f32 %v1911, %v2123
        %v2125 = vpop.f32.mrb[0].mxu0
        %2126 = vmatprep.mubr.f32.mxu0 0.0
        %v2127 = vand.u32 %v999, 4294901760
        %2128 = vmatmul.mubr.f32.gmra.mrb[0].mxu0 %v2127
        %v2129 = vpop.f32.mrb[0].mxu0
        %v2130 = vadd.f32 %v1919, %v2129
        %v2131 = vpop.f32.mrb[0].mxu0
        %2132 = vmatprep.mubr.f32.mxu0 0.0
        %v2133 = vand.u32 %v1013, 4294901760
        %2134 = vmatmul.mubr.f32.gmra.mrb[0].mxu0 %v2133
        %v2135 = vpop.f32.mrb[0].mxu0
        %v2136 = vadd.f32 %v1927, %v2135
        %v2137 = vpop.f32.mrb[0].mxu0
        %2138 = vdwg.mxu0
        %2139 = vmatprep.subr.mxu0 0.0
        %v2140 = vand.u32 %v632, 4294901760
        %2141 = vmatpush1.msra.mxu0 %v2140
        %2142 = vmatprep.subr.mxu0 0.0
        %v2143 = vand.u32 %v633, 4294901760
        %2144 = vmatpush1.msra.mxu0 %v2143
        %2145 = vmatprep.subr.mxu0 0.0
        %v2146 = vand.u32 %v634, 4294901760
        %2147 = vmatpush1.msra.mxu0 %v2146
        %2148 = vmatprep.subr.mxu0 0.0
        %v2149 = vand.u32 %v635, 4294901760
        %2150 = vmatpush1.msra.mxu0 %v2149
        %2151 = vmatprep.subr.mxu0 0.0
        %v2152 = vand.u32 %v636, 4294901760
        %2153 = vmatpush1.msra.mxu0 %v2152
        %2154 = vmatprep.subr.mxu0 0.0
        %v2155 = vand.u32 %v637, 4294901760
        %2156 = vmatpush1.msra.mxu0 %v2155
        %2157 = vmatprep.subr.mxu0 0.0
        %v2158 = vand.u32 %v638, 4294901760
        %2159 = vmatpush1.msra.mxu0 %v2158
        %2160 = vmatprep.subr.mxu0 0.0
        %v2161 = vand.u32 %v639, 4294901760
        %2162 = vmatpush1.msra.mxu0 %v2161
        %2163 = vmatprep.subr.mxu0 0.0
        %v2164 = vand.u32 %v640, 4294901760
        %2165 = vmatpush1.msra.mxu0 %v2164
        %2166 = vmatprep.subr.mxu0 0.0
        %v2167 = vand.u32 %v641, 4294901760
        %2168 = vmatpush1.msra.mxu0 %v2167
        %2169 = vmatprep.subr.mxu0 0.0
        %v2170 = vand.u32 %v642, 4294901760
        %2171 = vmatpush1.msra.mxu0 %v2170
        %2172 = vmatprep.subr.mxu0 0.0
        %v2173 = vand.u32 %v643, 4294901760
        %2174 = vmatpush1.msra.mxu0 %v2173
        %2175 = vmatprep.subr.mxu0 0.0
        %v2176 = vand.u32 %v644, 4294901760
        %2177 = vmatpush1.msra.mxu0 %v2176
        %2178 = vmatprep.subr.mxu0 0.0
        %v2179 = vand.u32 %v645, 4294901760
        %2180 = vmatpush1.msra.mxu0 %v2179
        %2181 = vmatprep.subr.mxu0 0.0
        %v2182 = vand.u32 %v646, 4294901760
        %2183 = vmatpush1.msra.mxu0 %v2182
        %2184 = vmatprep.subr.mxu0 0.0
        %v2185 = vand.u32 %v647, 4294901760
        %2186 = vmatpush1.msra.mxu0 %v2185
        %2187 = vmatprep.subr.mxu0 0.0
        %2188 = vmatpush1.msra.mxu0 0.0
        %2189 = vmatprep.subr.mxu0 0.0
        %2190 = vmatpush1.msra.mxu0 0.0
        %2191 = vmatprep.subr.mxu0 0.0
        %2192 = vmatpush1.msra.mxu0 0.0
        %2193 = vmatprep.subr.mxu0 0.0
        %2194 = vmatpush1.msra.mxu0 0.0
        %2195 = vmatprep.subr.mxu0 0.0
        %2196 = vmatpush1.msra.mxu0 0.0
        %2197 = vmatprep.subr.mxu0 0.0
        %2198 = vmatpush1.msra.mxu0 0.0
        %2199 = vmatprep.subr.mxu0 0.0
        %2200 = vmatpush1.msra.mxu0 0.0
        %2201 = vmatprep.subr.mxu0 0.0
        %2202 = vmatpush1.msra.mxu0 0.0
        %2203 = vmatprep.subr.mxu0 0.0
        %2204 = vmatpush1.msra.mxu0 0.0
        %2205 = vmatprep.subr.mxu0 0.0
        %2206 = vmatpush1.msra.mxu0 0.0
        %2207 = vmatprep.subr.mxu0 0.0
        %2208 = vmatpush1.msra.mxu0 0.0
        %2209 = vmatprep.subr.mxu0 0.0
        %2210 = vmatpush1.msra.mxu0 0.0
        %2211 = vmatprep.subr.mxu0 0.0
        %2212 = vmatpush1.msra.mxu0 0.0
        %2213 = vmatprep.subr.mxu0 0.0
        %2214 = vmatpush1.msra.mxu0 0.0
        %2215 = vmatprep.subr.mxu0 0.0
        %2216 = vmatpush1.msra.mxu0 0.0
        %2217 = vmatprep.subr.mxu0 0.0
        %2218 = vmatpush1.msra.mxu0 0.0
        %2219 = vmatprep.mubr.f32.mxu0 0.0
        %v2220 = vand.u32 %v803, 4294901760
        %2221 = vmatmul.mubr.f32.gmra.mrb[0].mxu0 %v2220
        %v2222 = vpop.f32.mrb[0].mxu0
        %v2223 = vadd.f32 %v2046, %v2222
        %v2224 = vpop.f32.mrb[0].mxu0
        %2225 = vmatprep.mubr.f32.mxu0 0.0
        %v2226 = vand.u32 %v817, 4294901760
        %2227 = vmatmul.mubr.f32.gmra.mrb[0].mxu0 %v2226
        %v2228 = vpop.f32.mrb[0].mxu0
        %v2229 = vadd.f32 %v2052, %v2228
        %v2230 = vpop.f32.mrb[0].mxu0
        %2231 = vmatprep.mubr.f32.mxu0 0.0
        %v2232 = vand.u32 %v831, 4294901760
        %2233 = vmatmul.mubr.f32.gmra.mrb[0].mxu0 %v2232
        %v2234 = vpop.f32.mrb[0].mxu0
        %v2235 = vadd.f32 %v2058, %v2234
        %v2236 = vpop.f32.mrb[0].mxu0
        %2237 = vmatprep.mubr.f32.mxu0 0.0
        %v2238 = vand.u32 %v845, 4294901760
        %2239 = vmatmul.mubr.f32.gmra.mrb[0].mxu0 %v2238
        %v2240 = vpop.f32.mrb[0].mxu0
        %v2241 = vadd.f32 %v2064, %v2240
        %v2242 = vpop.f32.mrb[0].mxu0
        %2243 = vmatprep.mubr.f32.mxu0 0.0
        %v2244 = vand.u32 %v859, 4294901760
        %2245 = vmatmul.mubr.f32.gmra.mrb[0].mxu0 %v2244
        %v2246 = vpop.f32.mrb[0].mxu0
        %v2247 = vadd.f32 %v2070, %v2246
        %v2248 = vpop.f32.mrb[0].mxu0
        %2249 = vmatprep.mubr.f32.mxu0 0.0
        %v2250 = vand.u32 %v873, 4294901760
        %2251 = vmatmul.mubr.f32.gmra.mrb[0].mxu0 %v2250
        %v2252 = vpop.f32.mrb[0].mxu0
        %v2253 = vadd.f32 %v2076, %v2252
        %v2254 = vpop.f32.mrb[0].mxu0
        %2255 = vmatprep.mubr.f32.mxu0 0.0
        %v2256 = vand.u32 %v887, 4294901760
        %2257 = vmatmul.mubr.f32.gmra.mrb[0].mxu0 %v2256
        %v2258 = vpop.f32.mrb[0].mxu0
        %v2259 = vadd.f32 %v2082, %v2258
        %v2260 = vpop.f32.mrb[0].mxu0
        %2261 = vmatprep.mubr.f32.mxu0 0.0
        %v2262 = vand.u32 %v901, 4294901760
        %2263 = vmatmul.mubr.f32.gmra.mrb[0].mxu0 %v2262
        %v2264 = vpop.f32.mrb[0].mxu0
        %v2265 = vadd.f32 %v2088, %v2264
        %v2266 = vpop.f32.mrb[0].mxu0
        %2267 = vmatprep.mubr.f32.mxu0 0.0
        %v2268 = vand.u32 %v915, 4294901760
        %2269 = vmatmul.mubr.f32.gmra.mrb[0].mxu0 %v2268
        %v2270 = vpop.f32.mrb[0].mxu0
        %v2271 = vadd.f32 %v2094, %v2270
        %v2272 = vpop.f32.mrb[0].mxu0
        %2273 = vmatprep.mubr.f32.mxu0 0.0
        %v2274 = vand.u32 %v929, 4294901760
        %2275 = vmatmul.mubr.f32.gmra.mrb[0].mxu0 %v2274
        %v2276 = vpop.f32.mrb[0].mxu0
        %v2277 = vadd.f32 %v2100, %v2276
        %v2278 = vpop.f32.mrb[0].mxu0
        %2279 = vmatprep.mubr.f32.mxu0 0.0
        %v2280 = vand.u32 %v943, 4294901760
        %2281 = vmatmul.mubr.f32.gmra.mrb[0].mxu0 %v2280
        %v2282 = vpop.f32.mrb[0].mxu0
        %v2283 = vadd.f32 %v2106, %v2282
        %v2284 = vpop.f32.mrb[0].mxu0
        %2285 = vmatprep.mubr.f32.mxu0 0.0
        %v2286 = vand.u32 %v957, 4294901760
        %2287 = vmatmul.mubr.f32.gmra.mrb[0].mxu0 %v2286
        %v2288 = vpop.f32.mrb[0].mxu0
        %v2289 = vadd.f32 %v2112, %v2288
        %v2290 = vpop.f32.mrb[0].mxu0
        %2291 = vmatprep.mubr.f32.mxu0 0.0
        %v2292 = vand.u32 %v971, 4294901760
        %2293 = vmatmul.mubr.f32.gmra.mrb[0].mxu0 %v2292
        %v2294 = vpop.f32.mrb[0].mxu0
        %v2295 = vadd.f32 %v2118, %v2294
        %v2296 = vpop.f32.mrb[0].mxu0
        %2297 = vmatprep.mubr.f32.mxu0 0.0
        %v2298 = vand.u32 %v985, 4294901760
        %2299 = vmatmul.mubr.f32.gmra.mrb[0].mxu0 %v2298
        %v2300 = vpop.f32.mrb[0].mxu0
        %v2301 = vadd.f32 %v2124, %v2300
        %v2302 = vpop.f32.mrb[0].mxu0
        %2303 = vmatprep.mubr.f32.mxu0 0.0
        %v2304 = vand.u32 %v999, 4294901760
        %2305 = vmatmul.mubr.f32.gmra.mrb[0].mxu0 %v2304
        %v2306 = vpop.f32.mrb[0].mxu0
        %v2307 = vadd.f32 %v2130, %v2306
        %v2308 = vpop.f32.mrb[0].mxu0
        %2309 = vmatprep.mubr.f32.mxu0 0.0
        %v2310 = vand.u32 %v1013, 4294901760
        %2311 = vmatmul.mubr.f32.gmra.mrb[0].mxu0 %v2310
        %v2312 = vpop.f32.mrb[0].mxu0
        %v2313 = vadd.f32 %v2136, %v2312
        %v2314 = vpop.f32.mrb[0].mxu0
        %2315 = vdwg.mxu0
        %v2316 = vxor.u32 %v2223, 2147483648
        %v2317 = vxor.u32 %v2229, 2147483648
        %v2318 = vxor.u32 %v2235, 2147483648
        %v2319 = vxor.u32 %v2241, 2147483648
        %v2320 = vxor.u32 %v2247, 2147483648
        %v2321 = vxor.u32 %v2253, 2147483648
        %v2322 = vxor.u32 %v2259, 2147483648
        %v2323 = vxor.u32 %v2265, 2147483648
        %v2324 = vxor.u32 %v2271, 2147483648
        %v2325 = vxor.u32 %v2277, 2147483648
        %v2326 = vxor.u32 %v2283, 2147483648
        %v2327 = vxor.u32 %v2289, 2147483648
        %v2328 = vxor.u32 %v2295, 2147483648
        %v2329 = vxor.u32 %v2301, 2147483648
        %v2330 = vxor.u32 %v2307, 2147483648
        %v2331 = vxor.u32 %v2313, 2147483648
        %v2332 = vmul.f32 %v2316, 1.442695
        %v2333 = vpow.pop %v2332
        %v2334 = vmul.f32 %v2317, 1.442695
        %v2335 = vpow.pop %v2334
        %v2336 = vmul.f32 %v2318, 1.442695
        %v2337 = vpow.pop %v2336
        %v2338 = vmul.f32 %v2319, 1.442695
        %v2339 = vpow.pop %v2338
        %v2340 = vmul.f32 %v2320, 1.442695
        %v2341 = vpow.pop %v2340
        %v2342 = vmul.f32 %v2321, 1.442695
        %v2343 = vpow.pop %v2342
        %v2344 = vmul.f32 %v2322, 1.442695
        %v2345 = vpow.pop %v2344
        %v2346 = vmul.f32 %v2323, 1.442695
        %v2347 = vpow.pop %v2346
        %v2348 = vmul.f32 %v2324, 1.442695
        %v2349 = vpow.pop %v2348
        %v2350 = vmul.f32 %v2325, 1.442695
        %v2351 = vpow.pop %v2350
        %v2352 = vmul.f32 %v2326, 1.442695
        %v2353 = vpow.pop %v2352
        %v2354 = vmul.f32 %v2327, 1.442695
        %v2355 = vpow.pop %v2354
        %v2356 = vmul.f32 %v2328, 1.442695
        %v2357 = vpow.pop %v2356
        %v2358 = vmul.f32 %v2329, 1.442695
        %v2359 = vpow.pop %v2358
        %v2360 = vmul.f32 %v2330, 1.442695
        %v2361 = vpow.pop %v2360
        %v2362 = vmul.f32 %v2331, 1.442695
        %v2363 = vpow.pop %v2362
        %v2364 = vadd.f32 %v2333, 1.0
        %v2365 = vadd.f32 %v2335, 1.0
        %v2366 = vadd.f32 %v2337, 1.0
        %v2367 = vadd.f32 %v2339, 1.0
        %v2368 = vadd.f32 %v2341, 1.0
        %v2369 = vadd.f32 %v2343, 1.0
        %v2370 = vadd.f32 %v2345, 1.0
        %v2371 = vadd.f32 %v2347, 1.0
        %v2372 = vadd.f32 %v2349, 1.0
        %v2373 = vadd.f32 %v2351, 1.0
        %v2374 = vadd.f32 %v2353, 1.0
        %v2375 = vadd.f32 %v2355, 1.0
        %v2376 = vadd.f32 %v2357, 1.0
        %v2377 = vadd.f32 %v2359, 1.0
        %v2378 = vadd.f32 %v2361, 1.0
        %v2379 = vadd.f32 %v2363, 1.0
        %v2380 = vrcp.pop %v2364
        %v2381 = vmul.f32 1.0, %v2380
        %v2382 = vrcp.pop %v2365
        %v2383 = vmul.f32 1.0, %v2382
        %v2384 = vrcp.pop %v2366
        %v2385 = vmul.f32 1.0, %v2384
        %v2386 = vrcp.pop %v2367
        %v2387 = vmul.f32 1.0, %v2386
        %v2388 = vrcp.pop %v2368
        %v2389 = vmul.f32 1.0, %v2388
        %v2390 = vrcp.pop %v2369
        %v2391 = vmul.f32 1.0, %v2390
        %v2392 = vrcp.pop %v2370
        %v2393 = vmul.f32 1.0, %v2392
        %v2394 = vrcp.pop %v2371
        %v2395 = vmul.f32 1.0, %v2394
        %v2396 = vrcp.pop %v2372
        %v2397 = vmul.f32 1.0, %v2396
        %v2398 = vrcp.pop %v2373
        %v2399 = vmul.f32 1.0, %v2398
        %v2400 = vrcp.pop %v2374
        %v2401 = vmul.f32 1.0, %v2400
        %v2402 = vrcp.pop %v2375
        %v2403 = vmul.f32 1.0, %v2402
        %v2404 = vrcp.pop %v2376
        %v2405 = vmul.f32 1.0, %v2404
        %v2406 = vrcp.pop %v2377
        %v2407 = vmul.f32 1.0, %v2406
        %v2408 = vrcp.pop %v2378
        %v2409 = vmul.f32 1.0, %v2408
        %v2410 = vrcp.pop %v2379
        %v2411 = vmul.f32 1.0, %v2410
        %v2412 = vmul.f32 %v2223, %v2381
        %v2413 = vmul.f32 %v2229, %v2383
        %v2414 = vmul.f32 %v2235, %v2385
        %v2415 = vmul.f32 %v2241, %v2387
        %v2416 = vmul.f32 %v2247, %v2389
        %v2417 = vmul.f32 %v2253, %v2391
        %v2418 = vmul.f32 %v2259, %v2393
        %v2419 = vmul.f32 %v2265, %v2395
        %v2420 = vmul.f32 %v2271, %v2397
        %v2421 = vmul.f32 %v2277, %v2399
        %v2422 = vmul.f32 %v2283, %v2401
        %v2423 = vmul.f32 %v2289, %v2403
        %v2424 = vmul.f32 %v2295, %v2405
        %v2425 = vmul.f32 %v2301, %v2407
        %v2426 = vmul.f32 %v2307, %v2409
        %v2427 = vmul.f32 %v2313, %v2411
        %v2428 = vld [vmem:[%s4] sm:$0xff]
        %v2429 = vld [vmem:[%s4 + $0x8] sm:$0xff]
        %v2430 = vld [vmem:[%s4 + $0x10] sm:$0xff]
        %v2431 = vld [vmem:[%s4 + $0x18] sm:$0xff]
        %v2432 = vld [vmem:[%s4 + $0x20] sm:$0xff]
        %v2433 = vld [vmem:[%s4 + $0x28] sm:$0xff]
        %v2434 = vld [vmem:[%s4 + $0x30] sm:$0xff]
        %v2435 = vld [vmem:[%s4 + $0x38] sm:$0xff]
        %v2436 = vld [vmem:[%s4 + $0x40] sm:$0xff]
        %v2437 = vld [vmem:[%s4 + $0x48] sm:$0xff]
        %v2438 = vld [vmem:[%s4 + $0x50] sm:$0xff]
        %v2439 = vld [vmem:[%s4 + $0x58] sm:$0xff]
        %v2440 = vld [vmem:[%s4 + $0x60] sm:$0xff]
        %v2441 = vld [vmem:[%s4 + $0x68] sm:$0xff]
        %v2442 = vld [vmem:[%s4 + $0x70] sm:$0xff]
        %v2443 = vld [vmem:[%s4 + $0x78] sm:$0xff]
        %v2444 = vld [vmem:[%s5] sm:$0x1]
        %v2446 = vlaneseq
        %v2447 = vshrl.u32 %v2446, 7
        %v2448 = vsub.s32 0, %v2447
        %v2449 = vrot.slane %v2444, %v2448
        %2451 = vmatprep.subr.mxu0 0.0
        %v2452 = vand.u32 %v2428, 4294901760
        %2453 = vmatpush1.msra.mxu0 %v2452
        %2454 = vmatprep.subr.mxu0 0.0
        %v2455 = vand.u32 %v2429, 4294901760
        %2456 = vmatpush1.msra.mxu0 %v2455
        %2457 = vmatprep.subr.mxu0 0.0
        %v2458 = vand.u32 %v2430, 4294901760
        %2459 = vmatpush1.msra.mxu0 %v2458
        %2460 = vmatprep.subr.mxu0 0.0
        %v2461 = vand.u32 %v2431, 4294901760
        %2462 = vmatpush1.msra.mxu0 %v2461
        %2463 = vmatprep.subr.mxu0 0.0
        %v2464 = vand.u32 %v2432, 4294901760
        %2465 = vmatpush1.msra.mxu0 %v2464
        %2466 = vmatprep.subr.mxu0 0.0
        %v2467 = vand.u32 %v2433, 4294901760
        %2468 = vmatpush1.msra.mxu0 %v2467
        %2469 = vmatprep.subr.mxu0 0.0
        %v2470 = vand.u32 %v2434, 4294901760
        %2471 = vmatpush1.msra.mxu0 %v2470
        %2472 = vmatprep.subr.mxu0 0.0
        %v2473 = vand.u32 %v2435, 4294901760
        %2474 = vmatpush1.msra.mxu0 %v2473
        %2475 = vmatprep.subr.mxu0 0.0
        %v2476 = vand.u32 %v2436, 4294901760
        %2477 = vmatpush1.msra.mxu0 %v2476
        %2478 = vmatprep.subr.mxu0 0.0
        %v2479 = vand.u32 %v2437, 4294901760
        %2480 = vmatpush1.msra.mxu0 %v2479
        %2481 = vmatprep.subr.mxu0 0.0
        %v2482 = vand.u32 %v2438, 4294901760
        %2483 = vmatpush1.msra.mxu0 %v2482
        %2484 = vmatprep.subr.mxu0 0.0
        %v2485 = vand.u32 %v2439, 4294901760
        %2486 = vmatpush1.msra.mxu0 %v2485
        %2487 = vmatprep.subr.mxu0 0.0
        %v2488 = vand.u32 %v2440, 4294901760
        %2489 = vmatpush1.msra.mxu0 %v2488
        %2490 = vmatprep.subr.mxu0 0.0
        %v2491 = vand.u32 %v2441, 4294901760
        %2492 = vmatpush1.msra.mxu0 %v2491
        %2493 = vmatprep.subr.mxu0 0.0
        %v2494 = vand.u32 %v2442, 4294901760
        %2495 = vmatpush1.msra.mxu0 %v2494
        %2496 = vmatprep.subr.mxu0 0.0
        %v2497 = vand.u32 %v2443, 4294901760
        %2498 = vmatpush1.msra.mxu0 %v2497
        %2499 = vmatprep.subr.mxu0 0.0
        %2500 = vmatpush1.msra.mxu0 0.0
        %2501 = vmatprep.subr.mxu0 0.0
        %2502 = vmatpush1.msra.mxu0 0.0
        %2503 = vmatprep.subr.mxu0 0.0
        %2504 = vmatpush1.msra.mxu0 0.0
        %2505 = vmatprep.subr.mxu0 0.0
        %2506 = vmatpush1.msra.mxu0 0.0
        %2507 = vmatprep.subr.mxu0 0.0
        %2508 = vmatpush1.msra.mxu0 0.0
        %2509 = vmatprep.subr.mxu0 0.0
        %2510 = vmatpush1.msra.mxu0 0.0
        %2511 = vmatprep.subr.mxu0 0.0
        %2512 = vmatpush1.msra.mxu0 0.0
        %2513 = vmatprep.subr.mxu0 0.0
        %2514 = vmatpush1.msra.mxu0 0.0
        %2515 = vmatprep.subr.mxu0 0.0
        %2516 = vmatpush1.msra.mxu0 0.0
        %2517 = vmatprep.subr.mxu0 0.0
        %2518 = vmatpush1.msra.mxu0 0.0
        %2519 = vmatprep.subr.mxu0 0.0
        %2520 = vmatpush1.msra.mxu0 0.0
        %2521 = vmatprep.subr.mxu0 0.0
        %2522 = vmatpush1.msra.mxu0 0.0
        %2523 = vmatprep.subr.mxu0 0.0
        %2524 = vmatpush1.msra.mxu0 0.0
        %2525 = vmatprep.subr.mxu0 0.0
        %2526 = vmatpush1.msra.mxu0 0.0
        %2527 = vmatprep.subr.mxu0 0.0
        %2528 = vmatpush1.msra.mxu0 0.0
        %2529 = vmatprep.subr.mxu0 0.0
        %2530 = vmatpush1.msra.mxu0 0.0
        %2531 = vmatprep.mubr.f32.mxu0 0.0
        %v2532 = vand.u32 %v2412, 4294901760
        %v2533 = vsub.f32 %v2412, %v2532
        %v2534 = vand.u32 %v2533, 4294901760
        %v2535 = vsub.f32 %v2533, %v2534
        %v2536 = vand.u32 %v2535, 4294901760
        %2537 = vmatmul.mubr.f32.gmra.mrb[0].mxu0 %v2536
        %v2538 = vpop.f32.mrb[0].mxu0
        %v2539 = vadd.f32 %v2449, %v2538
        %v2540 = vpop.f32.mrb[0].mxu0
        %2541 = vmatprep.mubr.f32.mxu0 0.0
        %v2542 = vand.u32 %v2413, 4294901760
        %v2543 = vsub.f32 %v2413, %v2542
        %v2544 = vand.u32 %v2543, 4294901760
        %v2545 = vsub.f32 %v2543, %v2544
        %v2546 = vand.u32 %v2545, 4294901760
        %2547 = vmatmul.mubr.f32.gmra.mrb[0].mxu0 %v2546
        %v2548 = vpop.f32.mrb[0].mxu0
        %v2549 = vadd.f32 %v2449, %v2548
        %v2550 = vpop.f32.mrb[0].mxu0
        %2551 = vmatprep.mubr.f32.mxu0 0.0
        %v2552 = vand.u32 %v2414, 4294901760
        %v2553 = vsub.f32 %v2414, %v2552
        %v2554 = vand.u32 %v2553, 4294901760
        %v2555 = vsub.f32 %v2553, %v2554
        %v2556 = vand.u32 %v2555, 4294901760
        %2557 = vmatmul.mubr.f32.gmra.mrb[0].mxu0 %v2556
        %v2558 = vpop.f32.mrb[0].mxu0
        %v2559 = vadd.f32 %v2449, %v2558
        %v2560 = vpop.f32.mrb[0].mxu0
        %2561 = vmatprep.mubr.f32.mxu0 0.0
        %v2562 = vand.u32 %v2415, 4294901760
        %v2563 = vsub.f32 %v2415, %v2562
        %v2564 = vand.u32 %v2563, 4294901760
        %v2565 = vsub.f32 %v2563, %v2564
        %v2566 = vand.u32 %v2565, 4294901760
        %2567 = vmatmul.mubr.f32.gmra.mrb[0].mxu0 %v2566
        %v2568 = vpop.f32.mrb[0].mxu0
        %v2569 = vadd.f32 %v2449, %v2568
        %v2570 = vpop.f32.mrb[0].mxu0
        %2571 = vmatprep.mubr.f32.mxu0 0.0
        %v2572 = vand.u32 %v2416, 4294901760
        %v2573 = vsub.f32 %v2416, %v2572
        %v2574 = vand.u32 %v2573, 4294901760
        %v2575 = vsub.f32 %v2573, %v2574
        %v2576 = vand.u32 %v2575, 4294901760
        %2577 = vmatmul.mubr.f32.gmra.mrb[0].mxu0 %v2576
        %v2578 = vpop.f32.mrb[0].mxu0
        %v2579 = vadd.f32 %v2449, %v2578
        %v2580 = vpop.f32.mrb[0].mxu0
        %2581 = vmatprep.mubr.f32.mxu0 0.0
        %v2582 = vand.u32 %v2417, 4294901760
        %v2583 = vsub.f32 %v2417, %v2582
        %v2584 = vand.u32 %v2583, 4294901760
        %v2585 = vsub.f32 %v2583, %v2584
        %v2586 = vand.u32 %v2585, 4294901760
        %2587 = vmatmul.mubr.f32.gmra.mrb[0].mxu0 %v2586
        %v2588 = vpop.f32.mrb[0].mxu0
        %v2589 = vadd.f32 %v2449, %v2588
        %v2590 = vpop.f32.mrb[0].mxu0
        %2591 = vmatprep.mubr.f32.mxu0 0.0
        %v2592 = vand.u32 %v2418, 4294901760
        %v2593 = vsub.f32 %v2418, %v2592
        %v2594 = vand.u32 %v2593, 4294901760
        %v2595 = vsub.f32 %v2593, %v2594
        %v2596 = vand.u32 %v2595, 4294901760
        %2597 = vmatmul.mubr.f32.gmra.mrb[0].mxu0 %v2596
        %v2598 = vpop.f32.mrb[0].mxu0
        %v2599 = vadd.f32 %v2449, %v2598
        %v2600 = vpop.f32.mrb[0].mxu0
        %2601 = vmatprep.mubr.f32.mxu0 0.0
        %v2602 = vand.u32 %v2419, 4294901760
        %v2603 = vsub.f32 %v2419, %v2602
        %v2604 = vand.u32 %v2603, 4294901760
        %v2605 = vsub.f32 %v2603, %v2604
        %v2606 = vand.u32 %v2605, 4294901760
        %2607 = vmatmul.mubr.f32.gmra.mrb[0].mxu0 %v2606
        %v2608 = vpop.f32.mrb[0].mxu0
        %v2609 = vadd.f32 %v2449, %v2608
        %v2610 = vpop.f32.mrb[0].mxu0
        %2611 = vmatprep.mubr.f32.mxu0 0.0
        %v2612 = vand.u32 %v2420, 4294901760
        %v2613 = vsub.f32 %v2420, %v2612
        %v2614 = vand.u32 %v2613, 4294901760
        %v2615 = vsub.f32 %v2613, %v2614
        %v2616 = vand.u32 %v2615, 4294901760
        %2617 = vmatmul.mubr.f32.gmra.mrb[0].mxu0 %v2616
        %v2618 = vpop.f32.mrb[0].mxu0
        %v2619 = vadd.f32 %v2449, %v2618
        %v2620 = vpop.f32.mrb[0].mxu0
        %2621 = vmatprep.mubr.f32.mxu0 0.0
        %v2622 = vand.u32 %v2421, 4294901760
        %v2623 = vsub.f32 %v2421, %v2622
        %v2624 = vand.u32 %v2623, 4294901760
        %v2625 = vsub.f32 %v2623, %v2624
        %v2626 = vand.u32 %v2625, 4294901760
        %2627 = vmatmul.mubr.f32.gmra.mrb[0].mxu0 %v2626
        %v2628 = vpop.f32.mrb[0].mxu0
        %v2629 = vadd.f32 %v2449, %v2628
        %v2630 = vpop.f32.mrb[0].mxu0
        %2631 = vmatprep.mubr.f32.mxu0 0.0
        %v2632 = vand.u32 %v2422, 4294901760
        %v2633 = vsub.f32 %v2422, %v2632
        %v2634 = vand.u32 %v2633, 4294901760
        %v2635 = vsub.f32 %v2633, %v2634
        %v2636 = vand.u32 %v2635, 4294901760
        %2637 = vmatmul.mubr.f32.gmra.mrb[0].mxu0 %v2636
        %v2638 = vpop.f32.mrb[0].mxu0
        %v2639 = vadd.f32 %v2449, %v2638
        %v2640 = vpop.f32.mrb[0].mxu0
        %2641 = vmatprep.mubr.f32.mxu0 0.0
        %v2642 = vand.u32 %v2423, 4294901760
        %v2643 = vsub.f32 %v2423, %v2642
        %v2644 = vand.u32 %v2643, 4294901760
        %v2645 = vsub.f32 %v2643, %v2644
        %v2646 = vand.u32 %v2645, 4294901760
        %2647 = vmatmul.mubr.f32.gmra.mrb[0].mxu0 %v2646
        %v2648 = vpop.f32.mrb[0].mxu0
        %v2649 = vadd.f32 %v2449, %v2648
        %v2650 = vpop.f32.mrb[0].mxu0
        %2651 = vmatprep.mubr.f32.mxu0 0.0
        %v2652 = vand.u32 %v2424, 4294901760
        %v2653 = vsub.f32 %v2424, %v2652
        %v2654 = vand.u32 %v2653, 4294901760
        %v2655 = vsub.f32 %v2653, %v2654
        %v2656 = vand.u32 %v2655, 4294901760
        %2657 = vmatmul.mubr.f32.gmra.mrb[0].mxu0 %v2656
        %v2658 = vpop.f32.mrb[0].mxu0
        %v2659 = vadd.f32 %v2449, %v2658
        %v2660 = vpop.f32.mrb[0].mxu0
        %2661 = vmatprep.mubr.f32.mxu0 0.0
        %v2662 = vand.u32 %v2425, 4294901760
        %v2663 = vsub.f32 %v2425, %v2662
        %v2664 = vand.u32 %v2663, 4294901760
        %v2665 = vsub.f32 %v2663, %v2664
        %v2666 = vand.u32 %v2665, 4294901760
        %2667 = vmatmul.mubr.f32.gmra.mrb[0].mxu0 %v2666
        %v2668 = vpop.f32.mrb[0].mxu0
        %v2669 = vadd.f32 %v2449, %v2668
        %v2670 = vpop.f32.mrb[0].mxu0
        %2671 = vmatprep.mubr.f32.mxu0 0.0
        %v2672 = vand.u32 %v2426, 4294901760
        %v2673 = vsub.f32 %v2426, %v2672
        %v2674 = vand.u32 %v2673, 4294901760
        %v2675 = vsub.f32 %v2673, %v2674
        %v2676 = vand.u32 %v2675, 4294901760
        %2677 = vmatmul.mubr.f32.gmra.mrb[0].mxu0 %v2676
        %v2678 = vpop.f32.mrb[0].mxu0
        %v2679 = vadd.f32 %v2449, %v2678
        %v2680 = vpop.f32.mrb[0].mxu0
        %2681 = vmatprep.mubr.f32.mxu0 0.0
        %v2682 = vand.u32 %v2427, 4294901760
        %v2683 = vsub.f32 %v2427, %v2682
        %v2684 = vand.u32 %v2683, 4294901760
        %v2685 = vsub.f32 %v2683, %v2684
        %v2686 = vand.u32 %v2685, 4294901760
        %2687 = vmatmul.mubr.f32.gmra.mrb[0].mxu0 %v2686
        %v2688 = vpop.f32.mrb[0].mxu0
        %v2689 = vadd.f32 %v2449, %v2688
        %v2690 = vpop.f32.mrb[0].mxu0
        %2691 = vdwg.mxu0
        %2692 = vmatprep.subr.mxu0 0.0
        %v2693 = vand.u32 %v2428, 4294901760
        %v2694 = vsub.f32 %v2428, %v2693
        %v2695 = vand.u32 %v2694, 4294901760
        %v2696 = vsub.f32 %v2694, %v2695
        %v2697 = vand.u32 %v2696, 4294901760
        %2698 = vmatpush1.msra.mxu0 %v2697
        %2699 = vmatprep.subr.mxu0 0.0
        %v2700 = vand.u32 %v2429, 4294901760
        %v2701 = vsub.f32 %v2429, %v2700
        %v2702 = vand.u32 %v2701, 4294901760
        %v2703 = vsub.f32 %v2701, %v2702
        %v2704 = vand.u32 %v2703, 4294901760
        %2705 = vmatpush1.msra.mxu0 %v2704
        %2706 = vmatprep.subr.mxu0 0.0
        %v2707 = vand.u32 %v2430, 4294901760
        %v2708 = vsub.f32 %v2430, %v2707
        %v2709 = vand.u32 %v2708, 4294901760
        %v2710 = vsub.f32 %v2708, %v2709
        %v2711 = vand.u32 %v2710, 4294901760
        %2712 = vmatpush1.msra.mxu0 %v2711
        %2713 = vmatprep.subr.mxu0 0.0
        %v2714 = vand.u32 %v2431, 4294901760
        %v2715 = vsub.f32 %v2431, %v2714
        %v2716 = vand.u32 %v2715, 4294901760
        %v2717 = vsub.f32 %v2715, %v2716
        %v2718 = vand.u32 %v2717, 4294901760
        %2719 = vmatpush1.msra.mxu0 %v2718
        %2720 = vmatprep.subr.mxu0 0.0
        %v2721 = vand.u32 %v2432, 4294901760
        %v2722 = vsub.f32 %v2432, %v2721
        %v2723 = vand.u32 %v2722, 4294901760
        %v2724 = vsub.f32 %v2722, %v2723
        %v2725 = vand.u32 %v2724, 4294901760
        %2726 = vmatpush1.msra.mxu0 %v2725
        %2727 = vmatprep.subr.mxu0 0.0
        %v2728 = vand.u32 %v2433, 4294901760
        %v2729 = vsub.f32 %v2433, %v2728
        %v2730 = vand.u32 %v2729, 4294901760
        %v2731 = vsub.f32 %v2729, %v2730
        %v2732 = vand.u32 %v2731, 4294901760
        %2733 = vmatpush1.msra.mxu0 %v2732
        %2734 = vmatprep.subr.mxu0 0.0
        %v2735 = vand.u32 %v2434, 4294901760
        %v2736 = vsub.f32 %v2434, %v2735
        %v2737 = vand.u32 %v2736, 4294901760
        %v2738 = vsub.f32 %v2736, %v2737
        %v2739 = vand.u32 %v2738, 4294901760
        %2740 = vmatpush1.msra.mxu0 %v2739
        %2741 = vmatprep.subr.mxu0 0.0
        %v2742 = vand.u32 %v2435, 4294901760
        %v2743 = vsub.f32 %v2435, %v2742
        %v2744 = vand.u32 %v2743, 4294901760
        %v2745 = vsub.f32 %v2743, %v2744
        %v2746 = vand.u32 %v2745, 4294901760
        %2747 = vmatpush1.msra.mxu0 %v2746
        %2748 = vmatprep.subr.mxu0 0.0
        %v2749 = vand.u32 %v2436, 4294901760
        %v2750 = vsub.f32 %v2436, %v2749
        %v2751 = vand.u32 %v2750, 4294901760
        %v2752 = vsub.f32 %v2750, %v2751
        %v2753 = vand.u32 %v2752, 4294901760
        %2754 = vmatpush1.msra.mxu0 %v2753
        %2755 = vmatprep.subr.mxu0 0.0
        %v2756 = vand.u32 %v2437, 4294901760
        %v2757 = vsub.f32 %v2437, %v2756
        %v2758 = vand.u32 %v2757, 4294901760
        %v2759 = vsub.f32 %v2757, %v2758
        %v2760 = vand.u32 %v2759, 4294901760
        %2761 = vmatpush1.msra.mxu0 %v2760
        %2762 = vmatprep.subr.mxu0 0.0
        %v2763 = vand.u32 %v2438, 4294901760
        %v2764 = vsub.f32 %v2438, %v2763
        %v2765 = vand.u32 %v2764, 4294901760
        %v2766 = vsub.f32 %v2764, %v2765
        %v2767 = vand.u32 %v2766, 4294901760
        %2768 = vmatpush1.msra.mxu0 %v2767
        %2769 = vmatprep.subr.mxu0 0.0
        %v2770 = vand.u32 %v2439, 4294901760
        %v2771 = vsub.f32 %v2439, %v2770
        %v2772 = vand.u32 %v2771, 4294901760
        %v2773 = vsub.f32 %v2771, %v2772
        %v2774 = vand.u32 %v2773, 4294901760
        %2775 = vmatpush1.msra.mxu0 %v2774
        %2776 = vmatprep.subr.mxu0 0.0
        %v2777 = vand.u32 %v2440, 4294901760
        %v2778 = vsub.f32 %v2440, %v2777
        %v2779 = vand.u32 %v2778, 4294901760
        %v2780 = vsub.f32 %v2778, %v2779
        %v2781 = vand.u32 %v2780, 4294901760
        %2782 = vmatpush1.msra.mxu0 %v2781
        %2783 = vmatprep.subr.mxu0 0.0
        %v2784 = vand.u32 %v2441, 4294901760
        %v2785 = vsub.f32 %v2441, %v2784
        %v2786 = vand.u32 %v2785, 4294901760
        %v2787 = vsub.f32 %v2785, %v2786
        %v2788 = vand.u32 %v2787, 4294901760
        %2789 = vmatpush1.msra.mxu0 %v2788
        %2790 = vmatprep.subr.mxu0 0.0
        %v2791 = vand.u32 %v2442, 4294901760
        %v2792 = vsub.f32 %v2442, %v2791
        %v2793 = vand.u32 %v2792, 4294901760
        %v2794 = vsub.f32 %v2792, %v2793
        %v2795 = vand.u32 %v2794, 4294901760
        %2796 = vmatpush1.msra.mxu0 %v2795
        %2797 = vmatprep.subr.mxu0 0.0
        %v2798 = vand.u32 %v2443, 4294901760
        %v2799 = vsub.f32 %v2443, %v2798
        %v2800 = vand.u32 %v2799, 4294901760
        %v2801 = vsub.f32 %v2799, %v2800
        %v2802 = vand.u32 %v2801, 4294901760
        %2803 = vmatpush1.msra.mxu0 %v2802
        %2804 = vmatprep.subr.mxu0 0.0
        %2805 = vmatpush1.msra.mxu0 0.0
        %2806 = vmatprep.subr.mxu0 0.0
        %2807 = vmatpush1.msra.mxu0 0.0
        %2808 = vmatprep.subr.mxu0 0.0
        %2809 = vmatpush1.msra.mxu0 0.0
        %2810 = vmatprep.subr.mxu0 0.0
        %2811 = vmatpush1.msra.mxu0 0.0
        %2812 = vmatprep.subr.mxu0 0.0
        %2813 = vmatpush1.msra.mxu0 0.0
        %2814 = vmatprep.subr.mxu0 0.0
        %2815 = vmatpush1.msra.mxu0 0.0
        %2816 = vmatprep.subr.mxu0 0.0
        %2817 = vmatpush1.msra.mxu0 0.0
        %2818 = vmatprep.subr.mxu0 0.0
        %2819 = vmatpush1.msra.mxu0 0.0
        %2820 = vmatprep.subr.mxu0 0.0
        %2821 = vmatpush1.msra.mxu0 0.0
        %2822 = vmatprep.subr.mxu0 0.0
        %2823 = vmatpush1.msra.mxu0 0.0
        %2824 = vmatprep.subr.mxu0 0.0
        %2825 = vmatpush1.msra.mxu0 0.0
        %2826 = vmatprep.subr.mxu0 0.0
        %2827 = vmatpush1.msra.mxu0 0.0
        %2828 = vmatprep.subr.mxu0 0.0
        %2829 = vmatpush1.msra.mxu0 0.0
        %2830 = vmatprep.subr.mxu0 0.0
        %2831 = vmatpush1.msra.mxu0 0.0
        %2832 = vmatprep.subr.mxu0 0.0
        %2833 = vmatpush1.msra.mxu0 0.0
        %2834 = vmatprep.subr.mxu0 0.0
        %2835 = vmatpush1.msra.mxu0 0.0
        %2836 = vmatprep.mubr.f32.mxu0 0.0
        %v2837 = vand.u32 %v2412, 4294901760
        %2838 = vmatmul.mubr.f32.gmra.mrb[0].mxu0 %v2837
        %v2839 = vpop.f32.mrb[0].mxu0
        %v2840 = vadd.f32 %v2539, %v2839
        %v2841 = vpop.f32.mrb[0].mxu0
        %2842 = vmatprep.mubr.f32.mxu0 0.0
        %v2843 = vand.u32 %v2413, 4294901760
        %2844 = vmatmul.mubr.f32.gmra.mrb[0].mxu0 %v2843
        %v2845 = vpop.f32.mrb[0].mxu0
        %v2846 = vadd.f32 %v2549, %v2845
        %v2847 = vpop.f32.mrb[0].mxu0
        %2848 = vmatprep.mubr.f32.mxu0 0.0
        %v2849 = vand.u32 %v2414, 4294901760
        %2850 = vmatmul.mubr.f32.gmra.mrb[0].mxu0 %v2849
        %v2851 = vpop.f32.mrb[0].mxu0
        %v2852 = vadd.f32 %v2559, %v2851
        %v2853 = vpop.f32.mrb[0].mxu0
        %2854 = vmatprep.mubr.f32.mxu0 0.0
        %v2855 = vand.u32 %v2415, 4294901760
        %2856 = vmatmul.mubr.f32.gmra.mrb[0].mxu0 %v2855
        %v2857 = vpop.f32.mrb[0].mxu0
        %v2858 = vadd.f32 %v2569, %v2857
        %v2859 = vpop.f32.mrb[0].mxu0
        %2860 = vmatprep.mubr.f32.mxu0 0.0
        %v2861 = vand.u32 %v2416, 4294901760
        %2862 = vmatmul.mubr.f32.gmra.mrb[0].mxu0 %v2861
        %v2863 = vpop.f32.mrb[0].mxu0
        %v2864 = vadd.f32 %v2579, %v2863
        %v2865 = vpop.f32.mrb[0].mxu0
        %2866 = vmatprep.mubr.f32.mxu0 0.0
        %v2867 = vand.u32 %v2417, 4294901760
        %2868 = vmatmul.mubr.f32.gmra.mrb[0].mxu0 %v2867
        %v2869 = vpop.f32.mrb[0].mxu0
        %v2870 = vadd.f32 %v2589, %v2869
        %v2871 = vpop.f32.mrb[0].mxu0
        %2872 = vmatprep.mubr.f32.mxu0 0.0
        %v2873 = vand.u32 %v2418, 4294901760
        %2874 = vmatmul.mubr.f32.gmra.mrb[0].mxu0 %v2873
        %v2875 = vpop.f32.mrb[0].mxu0
        %v2876 = vadd.f32 %v2599, %v2875
        %v2877 = vpop.f32.mrb[0].mxu0
        %2878 = vmatprep.mubr.f32.mxu0 0.0
        %v2879 = vand.u32 %v2419, 4294901760
        %2880 = vmatmul.mubr.f32.gmra.mrb[0].mxu0 %v2879
        %v2881 = vpop.f32.mrb[0].mxu0
        %v2882 = vadd.f32 %v2609, %v2881
        %v2883 = vpop.f32.mrb[0].mxu0
        %2884 = vmatprep.mubr.f32.mxu0 0.0
        %v2885 = vand.u32 %v2420, 4294901760
        %2886 = vmatmul.mubr.f32.gmra.mrb[0].mxu0 %v2885
        %v2887 = vpop.f32.mrb[0].mxu0
        %v2888 = vadd.f32 %v2619, %v2887
        %v2889 = vpop.f32.mrb[0].mxu0
        %2890 = vmatprep.mubr.f32.mxu0 0.0
        %v2891 = vand.u32 %v2421, 4294901760
        %2892 = vmatmul.mubr.f32.gmra.mrb[0].mxu0 %v2891
        %v2893 = vpop.f32.mrb[0].mxu0
        %v2894 = vadd.f32 %v2629, %v2893
        %v2895 = vpop.f32.mrb[0].mxu0
        %2896 = vmatprep.mubr.f32.mxu0 0.0
        %v2897 = vand.u32 %v2422, 4294901760
        %2898 = vmatmul.mubr.f32.gmra.mrb[0].mxu0 %v2897
        %v2899 = vpop.f32.mrb[0].mxu0
        %v2900 = vadd.f32 %v2639, %v2899
        %v2901 = vpop.f32.mrb[0].mxu0
        %2902 = vmatprep.mubr.f32.mxu0 0.0
        %v2903 = vand.u32 %v2423, 4294901760
        %2904 = vmatmul.mubr.f32.gmra.mrb[0].mxu0 %v2903
        %v2905 = vpop.f32.mrb[0].mxu0
        %v2906 = vadd.f32 %v2649, %v2905
        %v2907 = vpop.f32.mrb[0].mxu0
        %2908 = vmatprep.mubr.f32.mxu0 0.0
        %v2909 = vand.u32 %v2424, 4294901760
        %2910 = vmatmul.mubr.f32.gmra.mrb[0].mxu0 %v2909
        %v2911 = vpop.f32.mrb[0].mxu0
        %v2912 = vadd.f32 %v2659, %v2911
        %v2913 = vpop.f32.mrb[0].mxu0
        %2914 = vmatprep.mubr.f32.mxu0 0.0
        %v2915 = vand.u32 %v2425, 4294901760
        %2916 = vmatmul.mubr.f32.gmra.mrb[0].mxu0 %v2915
        %v2917 = vpop.f32.mrb[0].mxu0
        %v2918 = vadd.f32 %v2669, %v2917
        %v2919 = vpop.f32.mrb[0].mxu0
        %2920 = vmatprep.mubr.f32.mxu0 0.0
        %v2921 = vand.u32 %v2426, 4294901760
        %2922 = vmatmul.mubr.f32.gmra.mrb[0].mxu0 %v2921
        %v2923 = vpop.f32.mrb[0].mxu0
        %v2924 = vadd.f32 %v2679, %v2923
        %v2925 = vpop.f32.mrb[0].mxu0
        %2926 = vmatprep.mubr.f32.mxu0 0.0
        %v2927 = vand.u32 %v2427, 4294901760
        %2928 = vmatmul.mubr.f32.gmra.mrb[0].mxu0 %v2927
        %v2929 = vpop.f32.mrb[0].mxu0
        %v2930 = vadd.f32 %v2689, %v2929
        %v2931 = vpop.f32.mrb[0].mxu0
        %2932 = vdwg.mxu0
        %2933 = vmatprep.subr.mxu0 0.0
        %v2934 = vand.u32 %v2428, 4294901760
        %v2935 = vsub.f32 %v2428, %v2934
        %2936 = vmatpush1.msra.mxu0 %v2935
        %2937 = vmatprep.subr.mxu0 0.0
        %v2938 = vand.u32 %v2429, 4294901760
        %v2939 = vsub.f32 %v2429, %v2938
        %2940 = vmatpush1.msra.mxu0 %v2939
        %2941 = vmatprep.subr.mxu0 0.0
        %v2942 = vand.u32 %v2430, 4294901760
        %v2943 = vsub.f32 %v2430, %v2942
        %2944 = vmatpush1.msra.mxu0 %v2943
        %2945 = vmatprep.subr.mxu0 0.0
        %v2946 = vand.u32 %v2431, 4294901760
        %v2947 = vsub.f32 %v2431, %v2946
        %2948 = vmatpush1.msra.mxu0 %v2947
        %2949 = vmatprep.subr.mxu0 0.0
        %v2950 = vand.u32 %v2432, 4294901760
        %v2951 = vsub.f32 %v2432, %v2950
        %2952 = vmatpush1.msra.mxu0 %v2951
        %2953 = vmatprep.subr.mxu0 0.0
        %v2954 = vand.u32 %v2433, 4294901760
        %v2955 = vsub.f32 %v2433, %v2954
        %2956 = vmatpush1.msra.mxu0 %v2955
        %2957 = vmatprep.subr.mxu0 0.0
        %v2958 = vand.u32 %v2434, 4294901760
        %v2959 = vsub.f32 %v2434, %v2958
        %2960 = vmatpush1.msra.mxu0 %v2959
        %2961 = vmatprep.subr.mxu0 0.0
        %v2962 = vand.u32 %v2435, 4294901760
        %v2963 = vsub.f32 %v2435, %v2962
        %2964 = vmatpush1.msra.mxu0 %v2963
        %2965 = vmatprep.subr.mxu0 0.0
        %v2966 = vand.u32 %v2436, 4294901760
        %v2967 = vsub.f32 %v2436, %v2966
        %2968 = vmatpush1.msra.mxu0 %v2967
        %2969 = vmatprep.subr.mxu0 0.0
        %v2970 = vand.u32 %v2437, 4294901760
        %v2971 = vsub.f32 %v2437, %v2970
        %2972 = vmatpush1.msra.mxu0 %v2971
        %2973 = vmatprep.subr.mxu0 0.0
        %v2974 = vand.u32 %v2438, 4294901760
        %v2975 = vsub.f32 %v2438, %v2974
        %2976 = vmatpush1.msra.mxu0 %v2975
        %2977 = vmatprep.subr.mxu0 0.0
        %v2978 = vand.u32 %v2439, 4294901760
        %v2979 = vsub.f32 %v2439, %v2978
        %2980 = vmatpush1.msra.mxu0 %v2979
        %2981 = vmatprep.subr.mxu0 0.0
        %v2982 = vand.u32 %v2440, 4294901760
        %v2983 = vsub.f32 %v2440, %v2982
        %2984 = vmatpush1.msra.mxu0 %v2983
        %2985 = vmatprep.subr.mxu0 0.0
        %v2986 = vand.u32 %v2441, 4294901760
        %v2987 = vsub.f32 %v2441, %v2986
        %2988 = vmatpush1.msra.mxu0 %v2987
        %2989 = vmatprep.subr.mxu0 0.0
        %v2990 = vand.u32 %v2442, 4294901760
        %v2991 = vsub.f32 %v2442, %v2990
        %2992 = vmatpush1.msra.mxu0 %v2991
        %2993 = vmatprep.subr.mxu0 0.0
        %v2994 = vand.u32 %v2443, 4294901760
        %v2995 = vsub.f32 %v2443, %v2994
        %2996 = vmatpush1.msra.mxu0 %v2995
        %2997 = vmatprep.subr.mxu0 0.0
        %2998 = vmatpush1.msra.mxu0 0.0
        %2999 = vmatprep.subr.mxu0 0.0
        %3000 = vmatpush1.msra.mxu0 0.0
        %3001 = vmatprep.subr.mxu0 0.0
        %3002 = vmatpush1.msra.mxu0 0.0
        %3003 = vmatprep.subr.mxu0 0.0
        %3004 = vmatpush1.msra.mxu0 0.0
        %3005 = vmatprep.subr.mxu0 0.0
        %3006 = vmatpush1.msra.mxu0 0.0
        %3007 = vmatprep.subr.mxu0 0.0
        %3008 = vmatpush1.msra.mxu0 0.0
        %3009 = vmatprep.subr.mxu0 0.0
        %3010 = vmatpush1.msra.mxu0 0.0
        %3011 = vmatprep.subr.mxu0 0.0
        %3012 = vmatpush1.msra.mxu0 0.0
        %3013 = vmatprep.subr.mxu0 0.0
        %3014 = vmatpush1.msra.mxu0 0.0
        %3015 = vmatprep.subr.mxu0 0.0
        %3016 = vmatpush1.msra.mxu0 0.0
        %3017 = vmatprep.subr.mxu0 0.0
        %3018 = vmatpush1.msra.mxu0 0.0
        %3019 = vmatprep.subr.mxu0 0.0
        %3020 = vmatpush1.msra.mxu0 0.0
        %3021 = vmatprep.subr.mxu0 0.0
        %3022 = vmatpush1.msra.mxu0 0.0
        %3023 = vmatprep.subr.mxu0 0.0
        %3024 = vmatpush1.msra.mxu0 0.0
        %3025 = vmatprep.subr.mxu0 0.0
        %3026 = vmatpush1.msra.mxu0 0.0
        %3027 = vmatprep.subr.mxu0 0.0
        %3028 = vmatpush1.msra.mxu0 0.0
        %3029 = vmatprep.mubr.f32.mxu0 0.0
        %v3030 = vand.u32 %v2412, 4294901760
        %v3031 = vsub.f32 %v2412, %v3030
        %3032 = vmatmul.mubr.f32.gmra.mrb[0].mxu0 %v3031
        %v3033 = vpop.f32.mrb[0].mxu0
        %v3034 = vadd.f32 %v2840, %v3033
        %v3035 = vpop.f32.mrb[0].mxu0
        %3036 = vmatprep.mubr.f32.mxu0 0.0
        %v3037 = vand.u32 %v2413, 4294901760
        %v3038 = vsub.f32 %v2413, %v3037
        %3039 = vmatmul.mubr.f32.gmra.mrb[0].mxu0 %v3038
        %v3040 = vpop.f32.mrb[0].mxu0
        %v3041 = vadd.f32 %v2846, %v3040
        %v3042 = vpop.f32.mrb[0].mxu0
        %3043 = vmatprep.mubr.f32.mxu0 0.0
        %v3044 = vand.u32 %v2414, 4294901760
        %v3045 = vsub.f32 %v2414, %v3044
        %3046 = vmatmul.mubr.f32.gmra.mrb[0].mxu0 %v3045
        %v3047 = vpop.f32.mrb[0].mxu0
        %v3048 = vadd.f32 %v2852, %v3047
        %v3049 = vpop.f32.mrb[0].mxu0
        %3050 = vmatprep.mubr.f32.mxu0 0.0
        %v3051 = vand.u32 %v2415, 4294901760
        %v3052 = vsub.f32 %v2415, %v3051
        %3053 = vmatmul.mubr.f32.gmra.mrb[0].mxu0 %v3052
        %v3054 = vpop.f32.mrb[0].mxu0
        %v3055 = vadd.f32 %v2858, %v3054
        %v3056 = vpop.f32.mrb[0].mxu0
        %3057 = vmatprep.mubr.f32.mxu0 0.0
        %v3058 = vand.u32 %v2416, 4294901760
        %v3059 = vsub.f32 %v2416, %v3058
        %3060 = vmatmul.mubr.f32.gmra.mrb[0].mxu0 %v3059
        %v3061 = vpop.f32.mrb[0].mxu0
        %v3062 = vadd.f32 %v2864, %v3061
        %v3063 = vpop.f32.mrb[0].mxu0
        %3064 = vmatprep.mubr.f32.mxu0 0.0
        %v3065 = vand.u32 %v2417, 4294901760
        %v3066 = vsub.f32 %v2417, %v3065
        %3067 = vmatmul.mubr.f32.gmra.mrb[0].mxu0 %v3066
        %v3068 = vpop.f32.mrb[0].mxu0
        %v3069 = vadd.f32 %v2870, %v3068
        %v3070 = vpop.f32.mrb[0].mxu0
        %3071 = vmatprep.mubr.f32.mxu0 0.0
        %v3072 = vand.u32 %v2418, 4294901760
        %v3073 = vsub.f32 %v2418, %v3072
        %3074 = vmatmul.mubr.f32.gmra.mrb[0].mxu0 %v3073
        %v3075 = vpop.f32.mrb[0].mxu0
        %v3076 = vadd.f32 %v2876, %v3075
        %v3077 = vpop.f32.mrb[0].mxu0
        %3078 = vmatprep.mubr.f32.mxu0 0.0
        %v3079 = vand.u32 %v2419, 4294901760
        %v3080 = vsub.f32 %v2419, %v3079
        %3081 = vmatmul.mubr.f32.gmra.mrb[0].mxu0 %v3080
        %v3082 = vpop.f32.mrb[0].mxu0
        %v3083 = vadd.f32 %v2882, %v3082
        %v3084 = vpop.f32.mrb[0].mxu0
        %3085 = vmatprep.mubr.f32.mxu0 0.0
        %v3086 = vand.u32 %v2420, 4294901760
        %v3087 = vsub.f32 %v2420, %v3086
        %3088 = vmatmul.mubr.f32.gmra.mrb[0].mxu0 %v3087
        %v3089 = vpop.f32.mrb[0].mxu0
        %v3090 = vadd.f32 %v2888, %v3089
        %v3091 = vpop.f32.mrb[0].mxu0
        %3092 = vmatprep.mubr.f32.mxu0 0.0
        %v3093 = vand.u32 %v2421, 4294901760
        %v3094 = vsub.f32 %v2421, %v3093
        %3095 = vmatmul.mubr.f32.gmra.mrb[0].mxu0 %v3094
        %v3096 = vpop.f32.mrb[0].mxu0
        %v3097 = vadd.f32 %v2894, %v3096
        %v3098 = vpop.f32.mrb[0].mxu0
        %3099 = vmatprep.mubr.f32.mxu0 0.0
        %v3100 = vand.u32 %v2422, 4294901760
        %v3101 = vsub.f32 %v2422, %v3100
        %3102 = vmatmul.mubr.f32.gmra.mrb[0].mxu0 %v3101
        %v3103 = vpop.f32.mrb[0].mxu0
        %v3104 = vadd.f32 %v2900, %v3103
        %v3105 = vpop.f32.mrb[0].mxu0
        %3106 = vmatprep.mubr.f32.mxu0 0.0
        %v3107 = vand.u32 %v2423, 4294901760
        %v3108 = vsub.f32 %v2423, %v3107
        %3109 = vmatmul.mubr.f32.gmra.mrb[0].mxu0 %v3108
        %v3110 = vpop.f32.mrb[0].mxu0
        %v3111 = vadd.f32 %v2906, %v3110
        %v3112 = vpop.f32.mrb[0].mxu0
        %3113 = vmatprep.mubr.f32.mxu0 0.0
        %v3114 = vand.u32 %v2424, 4294901760
        %v3115 = vsub.f32 %v2424, %v3114
        %3116 = vmatmul.mubr.f32.gmra.mrb[0].mxu0 %v3115
        %v3117 = vpop.f32.mrb[0].mxu0
        %v3118 = vadd.f32 %v2912, %v3117
        %v3119 = vpop.f32.mrb[0].mxu0
        %3120 = vmatprep.mubr.f32.mxu0 0.0
        %v3121 = vand.u32 %v2425, 4294901760
        %v3122 = vsub.f32 %v2425, %v3121
        %3123 = vmatmul.mubr.f32.gmra.mrb[0].mxu0 %v3122
        %v3124 = vpop.f32.mrb[0].mxu0
        %v3125 = vadd.f32 %v2918, %v3124
        %v3126 = vpop.f32.mrb[0].mxu0
        %3127 = vmatprep.mubr.f32.mxu0 0.0
        %v3128 = vand.u32 %v2426, 4294901760
        %v3129 = vsub.f32 %v2426, %v3128
        %3130 = vmatmul.mubr.f32.gmra.mrb[0].mxu0 %v3129
        %v3131 = vpop.f32.mrb[0].mxu0
        %v3132 = vadd.f32 %v2924, %v3131
        %v3133 = vpop.f32.mrb[0].mxu0
        %3134 = vmatprep.mubr.f32.mxu0 0.0
        %v3135 = vand.u32 %v2427, 4294901760
        %v3136 = vsub.f32 %v2427, %v3135
        %3137 = vmatmul.mubr.f32.gmra.mrb[0].mxu0 %v3136
        %v3138 = vpop.f32.mrb[0].mxu0
        %v3139 = vadd.f32 %v2930, %v3138
        %v3140 = vpop.f32.mrb[0].mxu0
        %3141 = vdwg.mxu0
        %3142 = vmatprep.subr.mxu0 0.0
        %v3143 = vand.u32 %v2428, 4294901760
        %3144 = vmatpush1.msra.mxu0 %v3143
        %3145 = vmatprep.subr.mxu0 0.0
        %v3146 = vand.u32 %v2429, 4294901760
        %3147 = vmatpush1.msra.mxu0 %v3146
        %3148 = vmatprep.subr.mxu0 0.0
        %v3149 = vand.u32 %v2430, 4294901760
        %3150 = vmatpush1.msra.mxu0 %v3149
        %3151 = vmatprep.subr.mxu0 0.0
        %v3152 = vand.u32 %v2431, 4294901760
        %3153 = vmatpush1.msra.mxu0 %v3152
        %3154 = vmatprep.subr.mxu0 0.0
        %v3155 = vand.u32 %v2432, 4294901760
        %3156 = vmatpush1.msra.mxu0 %v3155
        %3157 = vmatprep.subr.mxu0 0.0
        %v3158 = vand.u32 %v2433, 4294901760
        %3159 = vmatpush1.msra.mxu0 %v3158
        %3160 = vmatprep.subr.mxu0 0.0
        %v3161 = vand.u32 %v2434, 4294901760
        %3162 = vmatpush1.msra.mxu0 %v3161
        %3163 = vmatprep.subr.mxu0 0.0
        %v3164 = vand.u32 %v2435, 4294901760
        %3165 = vmatpush1.msra.mxu0 %v3164
        %3166 = vmatprep.subr.mxu0 0.0
        %v3167 = vand.u32 %v2436, 4294901760
        %3168 = vmatpush1.msra.mxu0 %v3167
        %3169 = vmatprep.subr.mxu0 0.0
        %v3170 = vand.u32 %v2437, 4294901760
        %3171 = vmatpush1.msra.mxu0 %v3170
        %3172 = vmatprep.subr.mxu0 0.0
        %v3173 = vand.u32 %v2438, 4294901760
        %3174 = vmatpush1.msra.mxu0 %v3173
        %3175 = vmatprep.subr.mxu0 0.0
        %v3176 = vand.u32 %v2439, 4294901760
        %3177 = vmatpush1.msra.mxu0 %v3176
        %3178 = vmatprep.subr.mxu0 0.0
        %v3179 = vand.u32 %v2440, 4294901760
        %3180 = vmatpush1.msra.mxu0 %v3179
        %3181 = vmatprep.subr.mxu0 0.0
        %v3182 = vand.u32 %v2441, 4294901760
        %3183 = vmatpush1.msra.mxu0 %v3182
        %3184 = vmatprep.subr.mxu0 0.0
        %v3185 = vand.u32 %v2442, 4294901760
        %3186 = vmatpush1.msra.mxu0 %v3185
        %3187 = vmatprep.subr.mxu0 0.0
        %v3188 = vand.u32 %v2443, 4294901760
        %3189 = vmatpush1.msra.mxu0 %v3188
        %3190 = vmatprep.subr.mxu0 0.0
        %3191 = vmatpush1.msra.mxu0 0.0
        %3192 = vmatprep.subr.mxu0 0.0
        %3193 = vmatpush1.msra.mxu0 0.0
        %3194 = vmatprep.subr.mxu0 0.0
        %3195 = vmatpush1.msra.mxu0 0.0
        %3196 = vmatprep.subr.mxu0 0.0
        %3197 = vmatpush1.msra.mxu0 0.0
        %3198 = vmatprep.subr.mxu0 0.0
        %3199 = vmatpush1.msra.mxu0 0.0
        %3200 = vmatprep.subr.mxu0 0.0
        %3201 = vmatpush1.msra.mxu0 0.0
        %3202 = vmatprep.subr.mxu0 0.0
        %3203 = vmatpush1.msra.mxu0 0.0
        %3204 = vmatprep.subr.mxu0 0.0
        %3205 = vmatpush1.msra.mxu0 0.0
        %3206 = vmatprep.subr.mxu0 0.0
        %3207 = vmatpush1.msra.mxu0 0.0
        %3208 = vmatprep.subr.mxu0 0.0
        %3209 = vmatpush1.msra.mxu0 0.0
        %3210 = vmatprep.subr.mxu0 0.0
        %3211 = vmatpush1.msra.mxu0 0.0
        %3212 = vmatprep.subr.mxu0 0.0
        %3213 = vmatpush1.msra.mxu0 0.0
        %3214 = vmatprep.subr.mxu0 0.0
        %3215 = vmatpush1.msra.mxu0 0.0
        %3216 = vmatprep.subr.mxu0 0.0
        %3217 = vmatpush1.msra.mxu0 0.0
        %3218 = vmatprep.subr.mxu0 0.0
        %3219 = vmatpush1.msra.mxu0 0.0
        %3220 = vmatprep.subr.mxu0 0.0
        %3221 = vmatpush1.msra.mxu0 0.0
        %3222 = vmatprep.mubr.f32.mxu0 0.0
        %v3223 = vand.u32 %v2412, 4294901760
        %v3224 = vsub.f32 %v2412, %v3223
        %v3225 = vand.u32 %v3224, 4294901760
        %3226 = vmatmul.mubr.f32.gmra.mrb[0].mxu0 %v3225
        %v3227 = vpop.f32.mrb[0].mxu0
        %v3228 = vadd.f32 %v3034, %v3227
        %v3229 = vpop.f32.mrb[0].mxu0
        %3230 = vmatprep.mubr.f32.mxu0 0.0
        %v3231 = vand.u32 %v2413, 4294901760
        %v3232 = vsub.f32 %v2413, %v3231
        %v3233 = vand.u32 %v3232, 4294901760
        %3234 = vmatmul.mubr.f32.gmra.mrb[0].mxu0 %v3233
        %v3235 = vpop.f32.mrb[0].mxu0
        %v3236 = vadd.f32 %v3041, %v3235
        %v3237 = vpop.f32.mrb[0].mxu0
        %3238 = vmatprep.mubr.f32.mxu0 0.0
        %v3239 = vand.u32 %v2414, 4294901760
        %v3240 = vsub.f32 %v2414, %v3239
        %v3241 = vand.u32 %v3240, 4294901760
        %3242 = vmatmul.mubr.f32.gmra.mrb[0].mxu0 %v3241
        %v3243 = vpop.f32.mrb[0].mxu0
        %v3244 = vadd.f32 %v3048, %v3243
        %v3245 = vpop.f32.mrb[0].mxu0
        %3246 = vmatprep.mubr.f32.mxu0 0.0
        %v3247 = vand.u32 %v2415, 4294901760
        %v3248 = vsub.f32 %v2415, %v3247
        %v3249 = vand.u32 %v3248, 4294901760
        %3250 = vmatmul.mubr.f32.gmra.mrb[0].mxu0 %v3249
        %v3251 = vpop.f32.mrb[0].mxu0
        %v3252 = vadd.f32 %v3055, %v3251
        %v3253 = vpop.f32.mrb[0].mxu0
        %3254 = vmatprep.mubr.f32.mxu0 0.0
        %v3255 = vand.u32 %v2416, 4294901760
        %v3256 = vsub.f32 %v2416, %v3255
        %v3257 = vand.u32 %v3256, 4294901760
        %3258 = vmatmul.mubr.f32.gmra.mrb[0].mxu0 %v3257
        %v3259 = vpop.f32.mrb[0].mxu0
        %v3260 = vadd.f32 %v3062, %v3259
        %v3261 = vpop.f32.mrb[0].mxu0
        %3262 = vmatprep.mubr.f32.mxu0 0.0
        %v3263 = vand.u32 %v2417, 4294901760
        %v3264 = vsub.f32 %v2417, %v3263
        %v3265 = vand.u32 %v3264, 4294901760
        %3266 = vmatmul.mubr.f32.gmra.mrb[0].mxu0 %v3265
        %v3267 = vpop.f32.mrb[0].mxu0
        %v3268 = vadd.f32 %v3069, %v3267
        %v3269 = vpop.f32.mrb[0].mxu0
        %3270 = vmatprep.mubr.f32.mxu0 0.0
        %v3271 = vand.u32 %v2418, 4294901760
        %v3272 = vsub.f32 %v2418, %v3271
        %v3273 = vand.u32 %v3272, 4294901760
        %3274 = vmatmul.mubr.f32.gmra.mrb[0].mxu0 %v3273
        %v3275 = vpop.f32.mrb[0].mxu0
        %v3276 = vadd.f32 %v3076, %v3275
        %v3277 = vpop.f32.mrb[0].mxu0
        %3278 = vmatprep.mubr.f32.mxu0 0.0
        %v3279 = vand.u32 %v2419, 4294901760
        %v3280 = vsub.f32 %v2419, %v3279
        %v3281 = vand.u32 %v3280, 4294901760
        %3282 = vmatmul.mubr.f32.gmra.mrb[0].mxu0 %v3281
        %v3283 = vpop.f32.mrb[0].mxu0
        %v3284 = vadd.f32 %v3083, %v3283
        %v3285 = vpop.f32.mrb[0].mxu0
        %3286 = vmatprep.mubr.f32.mxu0 0.0
        %v3287 = vand.u32 %v2420, 4294901760
        %v3288 = vsub.f32 %v2420, %v3287
        %v3289 = vand.u32 %v3288, 4294901760
        %3290 = vmatmul.mubr.f32.gmra.mrb[0].mxu0 %v3289
        %v3291 = vpop.f32.mrb[0].mxu0
        %v3292 = vadd.f32 %v3090, %v3291
        %v3293 = vpop.f32.mrb[0].mxu0
        %3294 = vmatprep.mubr.f32.mxu0 0.0
        %v3295 = vand.u32 %v2421, 4294901760
        %v3296 = vsub.f32 %v2421, %v3295
        %v3297 = vand.u32 %v3296, 4294901760
        %3298 = vmatmul.mubr.f32.gmra.mrb[0].mxu0 %v3297
        %v3299 = vpop.f32.mrb[0].mxu0
        %v3300 = vadd.f32 %v3097, %v3299
        %v3301 = vpop.f32.mrb[0].mxu0
        %3302 = vmatprep.mubr.f32.mxu0 0.0
        %v3303 = vand.u32 %v2422, 4294901760
        %v3304 = vsub.f32 %v2422, %v3303
        %v3305 = vand.u32 %v3304, 4294901760
        %3306 = vmatmul.mubr.f32.gmra.mrb[0].mxu0 %v3305
        %v3307 = vpop.f32.mrb[0].mxu0
        %v3308 = vadd.f32 %v3104, %v3307
        %v3309 = vpop.f32.mrb[0].mxu0
        %3310 = vmatprep.mubr.f32.mxu0 0.0
        %v3311 = vand.u32 %v2423, 4294901760
        %v3312 = vsub.f32 %v2423, %v3311
        %v3313 = vand.u32 %v3312, 4294901760
        %3314 = vmatmul.mubr.f32.gmra.mrb[0].mxu0 %v3313
        %v3315 = vpop.f32.mrb[0].mxu0
        %v3316 = vadd.f32 %v3111, %v3315
        %v3317 = vpop.f32.mrb[0].mxu0
        %3318 = vmatprep.mubr.f32.mxu0 0.0
        %v3319 = vand.u32 %v2424, 4294901760
        %v3320 = vsub.f32 %v2424, %v3319
        %v3321 = vand.u32 %v3320, 4294901760
        %3322 = vmatmul.mubr.f32.gmra.mrb[0].mxu0 %v3321
        %v3323 = vpop.f32.mrb[0].mxu0
        %v3324 = vadd.f32 %v3118, %v3323
        %v3325 = vpop.f32.mrb[0].mxu0
        %3326 = vmatprep.mubr.f32.mxu0 0.0
        %v3327 = vand.u32 %v2425, 4294901760
        %v3328 = vsub.f32 %v2425, %v3327
        %v3329 = vand.u32 %v3328, 4294901760
        %3330 = vmatmul.mubr.f32.gmra.mrb[0].mxu0 %v3329
        %v3331 = vpop.f32.mrb[0].mxu0
        %v3332 = vadd.f32 %v3125, %v3331
        %v3333 = vpop.f32.mrb[0].mxu0
        %3334 = vmatprep.mubr.f32.mxu0 0.0
        %v3335 = vand.u32 %v2426, 4294901760
        %v3336 = vsub.f32 %v2426, %v3335
        %v3337 = vand.u32 %v3336, 4294901760
        %3338 = vmatmul.mubr.f32.gmra.mrb[0].mxu0 %v3337
        %v3339 = vpop.f32.mrb[0].mxu0
        %v3340 = vadd.f32 %v3132, %v3339
        %v3341 = vpop.f32.mrb[0].mxu0
        %3342 = vmatprep.mubr.f32.mxu0 0.0
        %v3343 = vand.u32 %v2427, 4294901760
        %v3344 = vsub.f32 %v2427, %v3343
        %v3345 = vand.u32 %v3344, 4294901760
        %3346 = vmatmul.mubr.f32.gmra.mrb[0].mxu0 %v3345
        %v3347 = vpop.f32.mrb[0].mxu0
        %v3348 = vadd.f32 %v3139, %v3347
        %v3349 = vpop.f32.mrb[0].mxu0
        %3350 = vdwg.mxu0
        %3351 = vmatprep.subr.mxu0 0.0
        %v3352 = vand.u32 %v2428, 4294901760
        %v3353 = vsub.f32 %v2428, %v3352
        %v3354 = vand.u32 %v3353, 4294901760
        %3355 = vmatpush1.msra.mxu0 %v3354
        %3356 = vmatprep.subr.mxu0 0.0
        %v3357 = vand.u32 %v2429, 4294901760
        %v3358 = vsub.f32 %v2429, %v3357
        %v3359 = vand.u32 %v3358, 4294901760
        %3360 = vmatpush1.msra.mxu0 %v3359
        %3361 = vmatprep.subr.mxu0 0.0
        %v3362 = vand.u32 %v2430, 4294901760
        %v3363 = vsub.f32 %v2430, %v3362
        %v3364 = vand.u32 %v3363, 4294901760
        %3365 = vmatpush1.msra.mxu0 %v3364
        %3366 = vmatprep.subr.mxu0 0.0
        %v3367 = vand.u32 %v2431, 4294901760
        %v3368 = vsub.f32 %v2431, %v3367
        %v3369 = vand.u32 %v3368, 4294901760
        %3370 = vmatpush1.msra.mxu0 %v3369
        %3371 = vmatprep.subr.mxu0 0.0
        %v3372 = vand.u32 %v2432, 4294901760
        %v3373 = vsub.f32 %v2432, %v3372
        %v3374 = vand.u32 %v3373, 4294901760
        %3375 = vmatpush1.msra.mxu0 %v3374
        %3376 = vmatprep.subr.mxu0 0.0
        %v3377 = vand.u32 %v2433, 4294901760
        %v3378 = vsub.f32 %v2433, %v3377
        %v3379 = vand.u32 %v3378, 4294901760
        %3380 = vmatpush1.msra.mxu0 %v3379
        %3381 = vmatprep.subr.mxu0 0.0
        %v3382 = vand.u32 %v2434, 4294901760
        %v3383 = vsub.f32 %v2434, %v3382
        %v3384 = vand.u32 %v3383, 4294901760
        %3385 = vmatpush1.msra.mxu0 %v3384
        %3386 = vmatprep.subr.mxu0 0.0
        %v3387 = vand.u32 %v2435, 4294901760
        %v3388 = vsub.f32 %v2435, %v3387
        %v3389 = vand.u32 %v3388, 4294901760
        %3390 = vmatpush1.msra.mxu0 %v3389
        %3391 = vmatprep.subr.mxu0 0.0
        %v3392 = vand.u32 %v2436, 4294901760
        %v3393 = vsub.f32 %v2436, %v3392
        %v3394 = vand.u32 %v3393, 4294901760
        %3395 = vmatpush1.msra.mxu0 %v3394
        %3396 = vmatprep.subr.mxu0 0.0
        %v3397 = vand.u32 %v2437, 4294901760
        %v3398 = vsub.f32 %v2437, %v3397
        %v3399 = vand.u32 %v3398, 4294901760
        %3400 = vmatpush1.msra.mxu0 %v3399
        %3401 = vmatprep.subr.mxu0 0.0
        %v3402 = vand.u32 %v2438, 4294901760
        %v3403 = vsub.f32 %v2438, %v3402
        %v3404 = vand.u32 %v3403, 4294901760
        %3405 = vmatpush1.msra.mxu0 %v3404
        %3406 = vmatprep.subr.mxu0 0.0
        %v3407 = vand.u32 %v2439, 4294901760
        %v3408 = vsub.f32 %v2439, %v3407
        %v3409 = vand.u32 %v3408, 4294901760
        %3410 = vmatpush1.msra.mxu0 %v3409
        %3411 = vmatprep.subr.mxu0 0.0
        %v3412 = vand.u32 %v2440, 4294901760
        %v3413 = vsub.f32 %v2440, %v3412
        %v3414 = vand.u32 %v3413, 4294901760
        %3415 = vmatpush1.msra.mxu0 %v3414
        %3416 = vmatprep.subr.mxu0 0.0
        %v3417 = vand.u32 %v2441, 4294901760
        %v3418 = vsub.f32 %v2441, %v3417
        %v3419 = vand.u32 %v3418, 4294901760
        %3420 = vmatpush1.msra.mxu0 %v3419
        %3421 = vmatprep.subr.mxu0 0.0
        %v3422 = vand.u32 %v2442, 4294901760
        %v3423 = vsub.f32 %v2442, %v3422
        %v3424 = vand.u32 %v3423, 4294901760
        %3425 = vmatpush1.msra.mxu0 %v3424
        %3426 = vmatprep.subr.mxu0 0.0
        %v3427 = vand.u32 %v2443, 4294901760
        %v3428 = vsub.f32 %v2443, %v3427
        %v3429 = vand.u32 %v3428, 4294901760
        %3430 = vmatpush1.msra.mxu0 %v3429
        %3431 = vmatprep.subr.mxu0 0.0
        %3432 = vmatpush1.msra.mxu0 0.0
        %3433 = vmatprep.subr.mxu0 0.0
        %3434 = vmatpush1.msra.mxu0 0.0
        %3435 = vmatprep.subr.mxu0 0.0
        %3436 = vmatpush1.msra.mxu0 0.0
        %3437 = vmatprep.subr.mxu0 0.0
        %3438 = vmatpush1.msra.mxu0 0.0
        %3439 = vmatprep.subr.mxu0 0.0
        %3440 = vmatpush1.msra.mxu0 0.0
        %3441 = vmatprep.subr.mxu0 0.0
        %3442 = vmatpush1.msra.mxu0 0.0
        %3443 = vmatprep.subr.mxu0 0.0
        %3444 = vmatpush1.msra.mxu0 0.0
        %3445 = vmatprep.subr.mxu0 0.0
        %3446 = vmatpush1.msra.mxu0 0.0
        %3447 = vmatprep.subr.mxu0 0.0
        %3448 = vmatpush1.msra.mxu0 0.0
        %3449 = vmatprep.subr.mxu0 0.0
        %3450 = vmatpush1.msra.mxu0 0.0
        %3451 = vmatprep.subr.mxu0 0.0
        %3452 = vmatpush1.msra.mxu0 0.0
        %3453 = vmatprep.subr.mxu0 0.0
        %3454 = vmatpush1.msra.mxu0 0.0
        %3455 = vmatprep.subr.mxu0 0.0
        %3456 = vmatpush1.msra.mxu0 0.0
        %3457 = vmatprep.subr.mxu0 0.0
        %3458 = vmatpush1.msra.mxu0 0.0
        %3459 = vmatprep.subr.mxu0 0.0
        %3460 = vmatpush1.msra.mxu0 0.0
        %3461 = vmatprep.subr.mxu0 0.0
        %3462 = vmatpush1.msra.mxu0 0.0
        %3463 = vmatprep.mubr.f32.mxu0 0.0
        %v3464 = vand.u32 %v2412, 4294901760
        %3465 = vmatmul.mubr.f32.gmra.mrb[0].mxu0 %v3464
        %v3466 = vpop.f32.mrb[0].mxu0
        %v3467 = vadd.f32 %v3228, %v3466
        %v3468 = vpop.f32.mrb[0].mxu0
        %3469 = vmatprep.mubr.f32.mxu0 0.0
        %v3470 = vand.u32 %v2413, 4294901760
        %3471 = vmatmul.mubr.f32.gmra.mrb[0].mxu0 %v3470
        %v3472 = vpop.f32.mrb[0].mxu0
        %v3473 = vadd.f32 %v3236, %v3472
        %v3474 = vpop.f32.mrb[0].mxu0
        %3475 = vmatprep.mubr.f32.mxu0 0.0
        %v3476 = vand.u32 %v2414, 4294901760
        %3477 = vmatmul.mubr.f32.gmra.mrb[0].mxu0 %v3476
        %v3478 = vpop.f32.mrb[0].mxu0
        %v3479 = vadd.f32 %v3244, %v3478
        %v3480 = vpop.f32.mrb[0].mxu0
        %3481 = vmatprep.mubr.f32.mxu0 0.0
        %v3482 = vand.u32 %v2415, 4294901760
        %3483 = vmatmul.mubr.f32.gmra.mrb[0].mxu0 %v3482
        %v3484 = vpop.f32.mrb[0].mxu0
        %v3485 = vadd.f32 %v3252, %v3484
        %v3486 = vpop.f32.mrb[0].mxu0
        %3487 = vmatprep.mubr.f32.mxu0 0.0
        %v3488 = vand.u32 %v2416, 4294901760
        %3489 = vmatmul.mubr.f32.gmra.mrb[0].mxu0 %v3488
        %v3490 = vpop.f32.mrb[0].mxu0
        %v3491 = vadd.f32 %v3260, %v3490
        %v3492 = vpop.f32.mrb[0].mxu0
        %3493 = vmatprep.mubr.f32.mxu0 0.0
        %v3494 = vand.u32 %v2417, 4294901760
        %3495 = vmatmul.mubr.f32.gmra.mrb[0].mxu0 %v3494
        %v3496 = vpop.f32.mrb[0].mxu0
        %v3497 = vadd.f32 %v3268, %v3496
        %v3498 = vpop.f32.mrb[0].mxu0
        %3499 = vmatprep.mubr.f32.mxu0 0.0
        %v3500 = vand.u32 %v2418, 4294901760
        %3501 = vmatmul.mubr.f32.gmra.mrb[0].mxu0 %v3500
        %v3502 = vpop.f32.mrb[0].mxu0
        %v3503 = vadd.f32 %v3276, %v3502
        %v3504 = vpop.f32.mrb[0].mxu0
        %3505 = vmatprep.mubr.f32.mxu0 0.0
        %v3506 = vand.u32 %v2419, 4294901760
        %3507 = vmatmul.mubr.f32.gmra.mrb[0].mxu0 %v3506
        %v3508 = vpop.f32.mrb[0].mxu0
        %v3509 = vadd.f32 %v3284, %v3508
        %v3510 = vpop.f32.mrb[0].mxu0
        %3511 = vmatprep.mubr.f32.mxu0 0.0
        %v3512 = vand.u32 %v2420, 4294901760
        %3513 = vmatmul.mubr.f32.gmra.mrb[0].mxu0 %v3512
        %v3514 = vpop.f32.mrb[0].mxu0
        %v3515 = vadd.f32 %v3292, %v3514
        %v3516 = vpop.f32.mrb[0].mxu0
        %3517 = vmatprep.mubr.f32.mxu0 0.0
        %v3518 = vand.u32 %v2421, 4294901760
        %3519 = vmatmul.mubr.f32.gmra.mrb[0].mxu0 %v3518
        %v3520 = vpop.f32.mrb[0].mxu0
        %v3521 = vadd.f32 %v3300, %v3520
        %v3522 = vpop.f32.mrb[0].mxu0
        %3523 = vmatprep.mubr.f32.mxu0 0.0
        %v3524 = vand.u32 %v2422, 4294901760
        %3525 = vmatmul.mubr.f32.gmra.mrb[0].mxu0 %v3524
        %v3526 = vpop.f32.mrb[0].mxu0
        %v3527 = vadd.f32 %v3308, %v3526
        %v3528 = vpop.f32.mrb[0].mxu0
        %3529 = vmatprep.mubr.f32.mxu0 0.0
        %v3530 = vand.u32 %v2423, 4294901760
        %3531 = vmatmul.mubr.f32.gmra.mrb[0].mxu0 %v3530
        %v3532 = vpop.f32.mrb[0].mxu0
        %v3533 = vadd.f32 %v3316, %v3532
        %v3534 = vpop.f32.mrb[0].mxu0
        %3535 = vmatprep.mubr.f32.mxu0 0.0
        %v3536 = vand.u32 %v2424, 4294901760
        %3537 = vmatmul.mubr.f32.gmra.mrb[0].mxu0 %v3536
        %v3538 = vpop.f32.mrb[0].mxu0
        %v3539 = vadd.f32 %v3324, %v3538
        %v3540 = vpop.f32.mrb[0].mxu0
        %3541 = vmatprep.mubr.f32.mxu0 0.0
        %v3542 = vand.u32 %v2425, 4294901760
        %3543 = vmatmul.mubr.f32.gmra.mrb[0].mxu0 %v3542
        %v3544 = vpop.f32.mrb[0].mxu0
        %v3545 = vadd.f32 %v3332, %v3544
        %v3546 = vpop.f32.mrb[0].mxu0
        %3547 = vmatprep.mubr.f32.mxu0 0.0
        %v3548 = vand.u32 %v2426, 4294901760
        %3549 = vmatmul.mubr.f32.gmra.mrb[0].mxu0 %v3548
        %v3550 = vpop.f32.mrb[0].mxu0
        %v3551 = vadd.f32 %v3340, %v3550
        %v3552 = vpop.f32.mrb[0].mxu0
        %3553 = vmatprep.mubr.f32.mxu0 0.0
        %v3554 = vand.u32 %v2427, 4294901760
        %3555 = vmatmul.mubr.f32.gmra.mrb[0].mxu0 %v3554
        %v3556 = vpop.f32.mrb[0].mxu0
        %v3557 = vadd.f32 %v3348, %v3556
        %v3558 = vpop.f32.mrb[0].mxu0
        %3559 = vdwg.mxu0
        %3560 = vmatprep.subr.mxu0 0.0
        %v3561 = vand.u32 %v2428, 4294901760
        %3562 = vmatpush1.msra.mxu0 %v3561
        %3563 = vmatprep.subr.mxu0 0.0
        %v3564 = vand.u32 %v2429, 4294901760
        %3565 = vmatpush1.msra.mxu0 %v3564
        %3566 = vmatprep.subr.mxu0 0.0
        %v3567 = vand.u32 %v2430, 4294901760
        %3568 = vmatpush1.msra.mxu0 %v3567
        %3569 = vmatprep.subr.mxu0 0.0
        %v3570 = vand.u32 %v2431, 4294901760
        %3571 = vmatpush1.msra.mxu0 %v3570
        %3572 = vmatprep.subr.mxu0 0.0
        %v3573 = vand.u32 %v2432, 4294901760
        %3574 = vmatpush1.msra.mxu0 %v3573
        %3575 = vmatprep.subr.mxu0 0.0
        %v3576 = vand.u32 %v2433, 4294901760
        %3577 = vmatpush1.msra.mxu0 %v3576
        %3578 = vmatprep.subr.mxu0 0.0
        %v3579 = vand.u32 %v2434, 4294901760
        %3580 = vmatpush1.msra.mxu0 %v3579
        %3581 = vmatprep.subr.mxu0 0.0
        %v3582 = vand.u32 %v2435, 4294901760
        %3583 = vmatpush1.msra.mxu0 %v3582
        %3584 = vmatprep.subr.mxu0 0.0
        %v3585 = vand.u32 %v2436, 4294901760
        %3586 = vmatpush1.msra.mxu0 %v3585
        %3587 = vmatprep.subr.mxu0 0.0
        %v3588 = vand.u32 %v2437, 4294901760
        %3589 = vmatpush1.msra.mxu0 %v3588
        %3590 = vmatprep.subr.mxu0 0.0
        %v3591 = vand.u32 %v2438, 4294901760
        %3592 = vmatpush1.msra.mxu0 %v3591
        %3593 = vmatprep.subr.mxu0 0.0
        %v3594 = vand.u32 %v2439, 4294901760
        %3595 = vmatpush1.msra.mxu0 %v3594
        %3596 = vmatprep.subr.mxu0 0.0
        %v3597 = vand.u32 %v2440, 4294901760
        %3598 = vmatpush1.msra.mxu0 %v3597
        %3599 = vmatprep.subr.mxu0 0.0
        %v3600 = vand.u32 %v2441, 4294901760
        %3601 = vmatpush1.msra.mxu0 %v3600
        %3602 = vmatprep.subr.mxu0 0.0
        %v3603 = vand.u32 %v2442, 4294901760
        %3604 = vmatpush1.msra.mxu0 %v3603
        %3605 = vmatprep.subr.mxu0 0.0
        %v3606 = vand.u32 %v2443, 4294901760
        %3607 = vmatpush1.msra.mxu0 %v3606
        %3608 = vmatprep.subr.mxu0 0.0
        %3609 = vmatpush1.msra.mxu0 0.0
        %3610 = vmatprep.subr.mxu0 0.0
        %3611 = vmatpush1.msra.mxu0 0.0
        %3612 = vmatprep.subr.mxu0 0.0
        %3613 = vmatpush1.msra.mxu0 0.0
        %3614 = vmatprep.subr.mxu0 0.0
        %3615 = vmatpush1.msra.mxu0 0.0
        %3616 = vmatprep.subr.mxu0 0.0
        %3617 = vmatpush1.msra.mxu0 0.0
        %3618 = vmatprep.subr.mxu0 0.0
        %3619 = vmatpush1.msra.mxu0 0.0
        %3620 = vmatprep.subr.mxu0 0.0
        %3621 = vmatpush1.msra.mxu0 0.0
        %3622 = vmatprep.subr.mxu0 0.0
        %3623 = vmatpush1.msra.mxu0 0.0
        %3624 = vmatprep.subr.mxu0 0.0
        %3625 = vmatpush1.msra.mxu0 0.0
        %3626 = vmatprep.subr.mxu0 0.0
        %3627 = vmatpush1.msra.mxu0 0.0
        %3628 = vmatprep.subr.mxu0 0.0
        %3629 = vmatpush1.msra.mxu0 0.0
        %3630 = vmatprep.subr.mxu0 0.0
        %3631 = vmatpush1.msra.mxu0 0.0
        %3632 = vmatprep.subr.mxu0 0.0
        %3633 = vmatpush1.msra.mxu0 0.0
        %3634 = vmatprep.subr.mxu0 0.0
        %3635 = vmatpush1.msra.mxu0 0.0
        %3636 = vmatprep.subr.mxu0 0.0
        %3637 = vmatpush1.msra.mxu0 0.0
        %3638 = vmatprep.subr.mxu0 0.0
        %3639 = vmatpush1.msra.mxu0 0.0
        %3640 = vmatprep.mubr.f32.mxu0 0.0
        %v3641 = vand.u32 %v2412, 4294901760
        %3642 = vmatmul.mubr.f32.gmra.mrb[0].mxu0 %v3641
        %v3643 = vpop.f32.mrb[0].mxu0
        %v3644 = vadd.f32 %v3467, %v3643
        %v3645 = vpop.f32.mrb[0].mxu0
        %3646 = vmatprep.mubr.f32.mxu0 0.0
        %v3647 = vand.u32 %v2413, 4294901760
        %3648 = vmatmul.mubr.f32.gmra.mrb[0].mxu0 %v3647
        %v3649 = vpop.f32.mrb[0].mxu0
        %v3650 = vadd.f32 %v3473, %v3649
        %v3651 = vpop.f32.mrb[0].mxu0
        %3652 = vmatprep.mubr.f32.mxu0 0.0
        %v3653 = vand.u32 %v2414, 4294901760
        %3654 = vmatmul.mubr.f32.gmra.mrb[0].mxu0 %v3653
        %v3655 = vpop.f32.mrb[0].mxu0
        %v3656 = vadd.f32 %v3479, %v3655
        %v3657 = vpop.f32.mrb[0].mxu0
        %3658 = vmatprep.mubr.f32.mxu0 0.0
        %v3659 = vand.u32 %v2415, 4294901760
        %3660 = vmatmul.mubr.f32.gmra.mrb[0].mxu0 %v3659
        %v3661 = vpop.f32.mrb[0].mxu0
        %v3662 = vadd.f32 %v3485, %v3661
        %v3663 = vpop.f32.mrb[0].mxu0
        %3664 = vmatprep.mubr.f32.mxu0 0.0
        %v3665 = vand.u32 %v2416, 4294901760
        %3666 = vmatmul.mubr.f32.gmra.mrb[0].mxu0 %v3665
        %v3667 = vpop.f32.mrb[0].mxu0
        %v3668 = vadd.f32 %v3491, %v3667
        %v3669 = vpop.f32.mrb[0].mxu0
        %3670 = vmatprep.mubr.f32.mxu0 0.0
        %v3671 = vand.u32 %v2417, 4294901760
        %3672 = vmatmul.mubr.f32.gmra.mrb[0].mxu0 %v3671
        %v3673 = vpop.f32.mrb[0].mxu0
        %v3674 = vadd.f32 %v3497, %v3673
        %v3675 = vpop.f32.mrb[0].mxu0
        %3676 = vmatprep.mubr.f32.mxu0 0.0
        %v3677 = vand.u32 %v2418, 4294901760
        %3678 = vmatmul.mubr.f32.gmra.mrb[0].mxu0 %v3677
        %v3679 = vpop.f32.mrb[0].mxu0
        %v3680 = vadd.f32 %v3503, %v3679
        %v3681 = vpop.f32.mrb[0].mxu0
        %3682 = vmatprep.mubr.f32.mxu0 0.0
        %v3683 = vand.u32 %v2419, 4294901760
        %3684 = vmatmul.mubr.f32.gmra.mrb[0].mxu0 %v3683
        %v3685 = vpop.f32.mrb[0].mxu0
        %v3686 = vadd.f32 %v3509, %v3685
        %v3687 = vpop.f32.mrb[0].mxu0
        %3688 = vmatprep.mubr.f32.mxu0 0.0
        %v3689 = vand.u32 %v2420, 4294901760
        %3690 = vmatmul.mubr.f32.gmra.mrb[0].mxu0 %v3689
        %v3691 = vpop.f32.mrb[0].mxu0
        %v3692 = vadd.f32 %v3515, %v3691
        %v3693 = vpop.f32.mrb[0].mxu0
        %3694 = vmatprep.mubr.f32.mxu0 0.0
        %v3695 = vand.u32 %v2421, 4294901760
        %3696 = vmatmul.mubr.f32.gmra.mrb[0].mxu0 %v3695
        %v3697 = vpop.f32.mrb[0].mxu0
        %v3698 = vadd.f32 %v3521, %v3697
        %v3699 = vpop.f32.mrb[0].mxu0
        %3700 = vmatprep.mubr.f32.mxu0 0.0
        %v3701 = vand.u32 %v2422, 4294901760
        %3702 = vmatmul.mubr.f32.gmra.mrb[0].mxu0 %v3701
        %v3703 = vpop.f32.mrb[0].mxu0
        %v3704 = vadd.f32 %v3527, %v3703
        %v3705 = vpop.f32.mrb[0].mxu0
        %3706 = vmatprep.mubr.f32.mxu0 0.0
        %v3707 = vand.u32 %v2423, 4294901760
        %3708 = vmatmul.mubr.f32.gmra.mrb[0].mxu0 %v3707
        %v3709 = vpop.f32.mrb[0].mxu0
        %v3710 = vadd.f32 %v3533, %v3709
        %v3711 = vpop.f32.mrb[0].mxu0
        %3712 = vmatprep.mubr.f32.mxu0 0.0
        %v3713 = vand.u32 %v2424, 4294901760
        %3714 = vmatmul.mubr.f32.gmra.mrb[0].mxu0 %v3713
        %v3715 = vpop.f32.mrb[0].mxu0
        %v3716 = vadd.f32 %v3539, %v3715
        %v3717 = vpop.f32.mrb[0].mxu0
        %3718 = vmatprep.mubr.f32.mxu0 0.0
        %v3719 = vand.u32 %v2425, 4294901760
        %3720 = vmatmul.mubr.f32.gmra.mrb[0].mxu0 %v3719
        %v3721 = vpop.f32.mrb[0].mxu0
        %v3722 = vadd.f32 %v3545, %v3721
        %v3723 = vpop.f32.mrb[0].mxu0
        %3724 = vmatprep.mubr.f32.mxu0 0.0
        %v3725 = vand.u32 %v2426, 4294901760
        %3726 = vmatmul.mubr.f32.gmra.mrb[0].mxu0 %v3725
        %v3727 = vpop.f32.mrb[0].mxu0
        %v3728 = vadd.f32 %v3551, %v3727
        %v3729 = vpop.f32.mrb[0].mxu0
        %3730 = vmatprep.mubr.f32.mxu0 0.0
        %v3731 = vand.u32 %v2427, 4294901760
        %3732 = vmatmul.mubr.f32.gmra.mrb[0].mxu0 %v3731
        %v3733 = vpop.f32.mrb[0].mxu0
        %v3734 = vadd.f32 %v3557, %v3733
        %v3735 = vpop.f32.mrb[0].mxu0
        %3736 = vdwg.mxu0
        %v3737 = vxor.u32 %v3644, 2147483648
        %v3738 = vxor.u32 %v3650, 2147483648
        %v3739 = vxor.u32 %v3656, 2147483648
        %v3740 = vxor.u32 %v3662, 2147483648
        %v3741 = vxor.u32 %v3668, 2147483648
        %v3742 = vxor.u32 %v3674, 2147483648
        %v3743 = vxor.u32 %v3680, 2147483648
        %v3744 = vxor.u32 %v3686, 2147483648
        %v3745 = vxor.u32 %v3692, 2147483648
        %v3746 = vxor.u32 %v3698, 2147483648
        %v3747 = vxor.u32 %v3704, 2147483648
        %v3748 = vxor.u32 %v3710, 2147483648
        %v3749 = vxor.u32 %v3716, 2147483648
        %v3750 = vxor.u32 %v3722, 2147483648
        %v3751 = vxor.u32 %v3728, 2147483648
        %v3752 = vxor.u32 %v3734, 2147483648
        %v3753 = vmul.f32 %v3737, 1.442695
        %v3754 = vpow.pop %v3753
        %v3755 = vmul.f32 %v3738, 1.442695
        %v3756 = vpow.pop %v3755
        %v3757 = vmul.f32 %v3739, 1.442695
        %v3758 = vpow.pop %v3757
        %v3759 = vmul.f32 %v3740, 1.442695
        %v3760 = vpow.pop %v3759
        %v3761 = vmul.f32 %v3741, 1.442695
        %v3762 = vpow.pop %v3761
        %v3763 = vmul.f32 %v3742, 1.442695
        %v3764 = vpow.pop %v3763
        %v3765 = vmul.f32 %v3743, 1.442695
        %v3766 = vpow.pop %v3765
        %v3767 = vmul.f32 %v3744, 1.442695
        %v3768 = vpow.pop %v3767
        %v3769 = vmul.f32 %v3745, 1.442695
        %v3770 = vpow.pop %v3769
        %v3771 = vmul.f32 %v3746, 1.442695
        %v3772 = vpow.pop %v3771
        %v3773 = vmul.f32 %v3747, 1.442695
        %v3774 = vpow.pop %v3773
        %v3775 = vmul.f32 %v3748, 1.442695
        %v3776 = vpow.pop %v3775
        %v3777 = vmul.f32 %v3749, 1.442695
        %v3778 = vpow.pop %v3777
        %v3779 = vmul.f32 %v3750, 1.442695
        %v3780 = vpow.pop %v3779
        %v3781 = vmul.f32 %v3751, 1.442695
        %v3782 = vpow.pop %v3781
        %v3783 = vmul.f32 %v3752, 1.442695
        %v3784 = vpow.pop %v3783
        %v3785 = vadd.f32 %v3754, 1.0
        %v3786 = vadd.f32 %v3756, 1.0
        %v3787 = vadd.f32 %v3758, 1.0
        %v3788 = vadd.f32 %v3760, 1.0
        %v3789 = vadd.f32 %v3762, 1.0
        %v3790 = vadd.f32 %v3764, 1.0
        %v3791 = vadd.f32 %v3766, 1.0
        %v3792 = vadd.f32 %v3768, 1.0
        %v3793 = vadd.f32 %v3770, 1.0
        %v3794 = vadd.f32 %v3772, 1.0
        %v3795 = vadd.f32 %v3774, 1.0
        %v3796 = vadd.f32 %v3776, 1.0
        %v3797 = vadd.f32 %v3778, 1.0
        %v3798 = vadd.f32 %v3780, 1.0
        %v3799 = vadd.f32 %v3782, 1.0
        %v3800 = vadd.f32 %v3784, 1.0
        %v3801 = vrcp.pop %v3785
        %v3802 = vmul.f32 1.0, %v3801
        %v3803 = vrcp.pop %v3786
        %v3804 = vmul.f32 1.0, %v3803
        %v3805 = vrcp.pop %v3787
        %v3806 = vmul.f32 1.0, %v3805
        %v3807 = vrcp.pop %v3788
        %v3808 = vmul.f32 1.0, %v3807
        %v3809 = vrcp.pop %v3789
        %v3810 = vmul.f32 1.0, %v3809
        %v3811 = vrcp.pop %v3790
        %v3812 = vmul.f32 1.0, %v3811
        %v3813 = vrcp.pop %v3791
        %v3814 = vmul.f32 1.0, %v3813
        %v3815 = vrcp.pop %v3792
        %v3816 = vmul.f32 1.0, %v3815
        %v3817 = vrcp.pop %v3793
        %v3818 = vmul.f32 1.0, %v3817
        %v3819 = vrcp.pop %v3794
        %v3820 = vmul.f32 1.0, %v3819
        %v3821 = vrcp.pop %v3795
        %v3822 = vmul.f32 1.0, %v3821
        %v3823 = vrcp.pop %v3796
        %v3824 = vmul.f32 1.0, %v3823
        %v3825 = vrcp.pop %v3797
        %v3826 = vmul.f32 1.0, %v3825
        %v3827 = vrcp.pop %v3798
        %v3828 = vmul.f32 1.0, %v3827
        %v3829 = vrcp.pop %v3799
        %v3830 = vmul.f32 1.0, %v3829
        %v3831 = vrcp.pop %v3800
        %v3832 = vmul.f32 1.0, %v3831
        %v3833 = vmul.f32 %v3644, %v3802
        %v3834 = vmul.f32 %v3650, %v3804
        %v3835 = vmul.f32 %v3656, %v3806
        %v3836 = vmul.f32 %v3662, %v3808
        %v3837 = vmul.f32 %v3668, %v3810
        %v3838 = vmul.f32 %v3674, %v3812
        %v3839 = vmul.f32 %v3680, %v3814
        %v3840 = vmul.f32 %v3686, %v3816
        %v3841 = vmul.f32 %v3692, %v3818
        %v3842 = vmul.f32 %v3698, %v3820
        %v3843 = vmul.f32 %v3704, %v3822
        %v3844 = vmul.f32 %v3710, %v3824
        %v3845 = vmul.f32 %v3716, %v3826
        %v3846 = vmul.f32 %v3722, %v3828
        %v3847 = vmul.f32 %v3728, %v3830
        %v3848 = vmul.f32 %v3734, %v3832
        %v3849 = vld [vmem:[%s6] sm:$0xff]
        %v3850 = vld [vmem:[%s6 + $0x8] sm:$0xff]
        %v3851 = vld [vmem:[%s6 + $0x10] sm:$0xff]
        %v3852 = vld [vmem:[%s6 + $0x18] sm:$0xff]
        %v3853 = vld [vmem:[%s6 + $0x20] sm:$0xff]
        %v3854 = vld [vmem:[%s6 + $0x28] sm:$0xff]
        %v3855 = vld [vmem:[%s6 + $0x30] sm:$0xff]
        %v3856 = vld [vmem:[%s6 + $0x38] sm:$0xff]
        %v3857 = vld [vmem:[%s6 + $0x40] sm:$0xff]
        %v3858 = vld [vmem:[%s6 + $0x48] sm:$0xff]
        %v3859 = vld [vmem:[%s6 + $0x50] sm:$0xff]
        %v3860 = vld [vmem:[%s6 + $0x58] sm:$0xff]
        %v3861 = vld [vmem:[%s6 + $0x60] sm:$0xff]
        %v3862 = vld [vmem:[%s6 + $0x68] sm:$0xff]
        %v3863 = vld [vmem:[%s6 + $0x70] sm:$0xff]
        %v3864 = vld [vmem:[%s6 + $0x78] sm:$0xff]
        %v3865 = vld [vmem:[#allocation3] sm:$0x1]
        %v3867 = vlaneseq
        %v3868 = vshrl.u32 %v3867, 7
        %v3869 = vsub.s32 0, %v3868
        %v3870 = vrot.slane %v3865, %v3869
        %3872 = vmatprep.subr.mxu0 0.0
        %v3873 = vand.u32 %v3849, 4294901760
        %3874 = vmatpush1.msra.mxu0 %v3873
        %3875 = vmatprep.subr.mxu0 0.0
        %v3876 = vand.u32 %v3850, 4294901760
        %3877 = vmatpush1.msra.mxu0 %v3876
        %3878 = vmatprep.subr.mxu0 0.0
        %v3879 = vand.u32 %v3851, 4294901760
        %3880 = vmatpush1.msra.mxu0 %v3879
        %3881 = vmatprep.subr.mxu0 0.0
        %v3882 = vand.u32 %v3852, 4294901760
        %3883 = vmatpush1.msra.mxu0 %v3882
        %3884 = vmatprep.subr.mxu0 0.0
        %v3885 = vand.u32 %v3853, 4294901760
        %3886 = vmatpush1.msra.mxu0 %v3885
        %3887 = vmatprep.subr.mxu0 0.0
        %v3888 = vand.u32 %v3854, 4294901760
        %3889 = vmatpush1.msra.mxu0 %v3888
        %3890 = vmatprep.subr.mxu0 0.0
        %v3891 = vand.u32 %v3855, 4294901760
        %3892 = vmatpush1.msra.mxu0 %v3891
        %3893 = vmatprep.subr.mxu0 0.0
        %v3894 = vand.u32 %v3856, 4294901760
        %3895 = vmatpush1.msra.mxu0 %v3894
        %3896 = vmatprep.subr.mxu0 0.0
        %v3897 = vand.u32 %v3857, 4294901760
        %3898 = vmatpush1.msra.mxu0 %v3897
        %3899 = vmatprep.subr.mxu0 0.0
        %v3900 = vand.u32 %v3858, 4294901760
        %3901 = vmatpush1.msra.mxu0 %v3900
        %3902 = vmatprep.subr.mxu0 0.0
        %v3903 = vand.u32 %v3859, 4294901760
        %3904 = vmatpush1.msra.mxu0 %v3903
        %3905 = vmatprep.subr.mxu0 0.0
        %v3906 = vand.u32 %v3860, 4294901760
        %3907 = vmatpush1.msra.mxu0 %v3906
        %3908 = vmatprep.subr.mxu0 0.0
        %v3909 = vand.u32 %v3861, 4294901760
        %3910 = vmatpush1.msra.mxu0 %v3909
        %3911 = vmatprep.subr.mxu0 0.0
        %v3912 = vand.u32 %v3862, 4294901760
        %3913 = vmatpush1.msra.mxu0 %v3912
        %3914 = vmatprep.subr.mxu0 0.0
        %v3915 = vand.u32 %v3863, 4294901760
        %3916 = vmatpush1.msra.mxu0 %v3915
        %3917 = vmatprep.subr.mxu0 0.0
        %v3918 = vand.u32 %v3864, 4294901760
        %3919 = vmatpush1.msra.mxu0 %v3918
        %3920 = vmatprep.subr.mxu0 0.0
        %3921 = vmatpush1.msra.mxu0 0.0
        %3922 = vmatprep.subr.mxu0 0.0
        %3923 = vmatpush1.msra.mxu0 0.0
        %3924 = vmatprep.subr.mxu0 0.0
        %3925 = vmatpush1.msra.mxu0 0.0
        %3926 = vmatprep.subr.mxu0 0.0
        %3927 = vmatpush1.msra.mxu0 0.0
        %3928 = vmatprep.subr.mxu0 0.0
        %3929 = vmatpush1.msra.mxu0 0.0
        %3930 = vmatprep.subr.mxu0 0.0
        %3931 = vmatpush1.msra.mxu0 0.0
        %3932 = vmatprep.subr.mxu0 0.0
        %3933 = vmatpush1.msra.mxu0 0.0
        %3934 = vmatprep.subr.mxu0 0.0
        %3935 = vmatpush1.msra.mxu0 0.0
        %3936 = vmatprep.subr.mxu0 0.0
        %3937 = vmatpush1.msra.mxu0 0.0
        %3938 = vmatprep.subr.mxu0 0.0
        %3939 = vmatpush1.msra.mxu0 0.0
        %3940 = vmatprep.subr.mxu0 0.0
        %3941 = vmatpush1.msra.mxu0 0.0
        %3942 = vmatprep.subr.mxu0 0.0
        %3943 = vmatpush1.msra.mxu0 0.0
        %3944 = vmatprep.subr.mxu0 0.0
        %3945 = vmatpush1.msra.mxu0 0.0
        %3946 = vmatprep.subr.mxu0 0.0
        %3947 = vmatpush1.msra.mxu0 0.0
        %3948 = vmatprep.subr.mxu0 0.0
        %3949 = vmatpush1.msra.mxu0 0.0
        %3950 = vmatprep.subr.mxu0 0.0
        %3951 = vmatpush1.msra.mxu0 0.0
        %3952 = vmatprep.mubr.f32.mxu0 0.0
        %v3953 = vand.u32 %v3833, 4294901760
        %v3954 = vsub.f32 %v3833, %v3953
        %v3955 = vand.u32 %v3954, 4294901760
        %v3956 = vsub.f32 %v3954, %v3955
        %v3957 = vand.u32 %v3956, 4294901760
        %3958 = vmatmul.mubr.f32.gmra.mrb[0].mxu0 %v3957
        %v3959 = vpop.f32.mrb[0].mxu0
        %v3960 = vadd.f32 %v3870, %v3959
        %v3961 = vpop.f32.mrb[0].mxu0
        %3962 = vmatprep.mubr.f32.mxu0 0.0
        %v3963 = vand.u32 %v3834, 4294901760
        %v3964 = vsub.f32 %v3834, %v3963
        %v3965 = vand.u32 %v3964, 4294901760
        %v3966 = vsub.f32 %v3964, %v3965
        %v3967 = vand.u32 %v3966, 4294901760
        %3968 = vmatmul.mubr.f32.gmra.mrb[0].mxu0 %v3967
        %v3969 = vpop.f32.mrb[0].mxu0
        %v3970 = vadd.f32 %v3870, %v3969
        %v3971 = vpop.f32.mrb[0].mxu0
        %3972 = vmatprep.mubr.f32.mxu0 0.0
        %v3973 = vand.u32 %v3835, 4294901760
        %v3974 = vsub.f32 %v3835, %v3973
        %v3975 = vand.u32 %v3974, 4294901760
        %v3976 = vsub.f32 %v3974, %v3975
        %v3977 = vand.u32 %v3976, 4294901760
        %3978 = vmatmul.mubr.f32.gmra.mrb[0].mxu0 %v3977
        %v3979 = vpop.f32.mrb[0].mxu0
        %v3980 = vadd.f32 %v3870, %v3979
        %v3981 = vpop.f32.mrb[0].mxu0
        %3982 = vmatprep.mubr.f32.mxu0 0.0
        %v3983 = vand.u32 %v3836, 4294901760
        %v3984 = vsub.f32 %v3836, %v3983
        %v3985 = vand.u32 %v3984, 4294901760
        %v3986 = vsub.f32 %v3984, %v3985
        %v3987 = vand.u32 %v3986, 4294901760
        %3988 = vmatmul.mubr.f32.gmra.mrb[0].mxu0 %v3987
        %v3989 = vpop.f32.mrb[0].mxu0
        %v3990 = vadd.f32 %v3870, %v3989
        %v3991 = vpop.f32.mrb[0].mxu0
        %3992 = vmatprep.mubr.f32.mxu0 0.0
        %v3993 = vand.u32 %v3837, 4294901760
        %v3994 = vsub.f32 %v3837, %v3993
        %v3995 = vand.u32 %v3994, 4294901760
        %v3996 = vsub.f32 %v3994, %v3995
        %v3997 = vand.u32 %v3996, 4294901760
        %3998 = vmatmul.mubr.f32.gmra.mrb[0].mxu0 %v3997
        %v3999 = vpop.f32.mrb[0].mxu0
        %v4000 = vadd.f32 %v3870, %v3999
        %v4001 = vpop.f32.mrb[0].mxu0
        %4002 = vmatprep.mubr.f32.mxu0 0.0
        %v4003 = vand.u32 %v3838, 4294901760
        %v4004 = vsub.f32 %v3838, %v4003
        %v4005 = vand.u32 %v4004, 4294901760
        %v4006 = vsub.f32 %v4004, %v4005
        %v4007 = vand.u32 %v4006, 4294901760
        %4008 = vmatmul.mubr.f32.gmra.mrb[0].mxu0 %v4007
        %v4009 = vpop.f32.mrb[0].mxu0
        %v4010 = vadd.f32 %v3870, %v4009
        %v4011 = vpop.f32.mrb[0].mxu0
        %4012 = vmatprep.mubr.f32.mxu0 0.0
        %v4013 = vand.u32 %v3839, 4294901760
        %v4014 = vsub.f32 %v3839, %v4013
        %v4015 = vand.u32 %v4014, 4294901760
        %v4016 = vsub.f32 %v4014, %v4015
        %v4017 = vand.u32 %v4016, 4294901760
        %4018 = vmatmul.mubr.f32.gmra.mrb[0].mxu0 %v4017
        %v4019 = vpop.f32.mrb[0].mxu0
        %v4020 = vadd.f32 %v3870, %v4019
        %v4021 = vpop.f32.mrb[0].mxu0
        %4022 = vmatprep.mubr.f32.mxu0 0.0
        %v4023 = vand.u32 %v3840, 4294901760
        %v4024 = vsub.f32 %v3840, %v4023
        %v4025 = vand.u32 %v4024, 4294901760
        %v4026 = vsub.f32 %v4024, %v4025
        %v4027 = vand.u32 %v4026, 4294901760
        %4028 = vmatmul.mubr.f32.gmra.mrb[0].mxu0 %v4027
        %v4029 = vpop.f32.mrb[0].mxu0
        %v4030 = vadd.f32 %v3870, %v4029
        %v4031 = vpop.f32.mrb[0].mxu0
        %4032 = vmatprep.mubr.f32.mxu0 0.0
        %v4033 = vand.u32 %v3841, 4294901760
        %v4034 = vsub.f32 %v3841, %v4033
        %v4035 = vand.u32 %v4034, 4294901760
        %v4036 = vsub.f32 %v4034, %v4035
        %v4037 = vand.u32 %v4036, 4294901760
        %4038 = vmatmul.mubr.f32.gmra.mrb[0].mxu0 %v4037
        %v4039 = vpop.f32.mrb[0].mxu0
        %v4040 = vadd.f32 %v3870, %v4039
        %v4041 = vpop.f32.mrb[0].mxu0
        %4042 = vmatprep.mubr.f32.mxu0 0.0
        %v4043 = vand.u32 %v3842, 4294901760
        %v4044 = vsub.f32 %v3842, %v4043
        %v4045 = vand.u32 %v4044, 4294901760
        %v4046 = vsub.f32 %v4044, %v4045
        %v4047 = vand.u32 %v4046, 4294901760
        %4048 = vmatmul.mubr.f32.gmra.mrb[0].mxu0 %v4047
        %v4049 = vpop.f32.mrb[0].mxu0
        %v4050 = vadd.f32 %v3870, %v4049
        %v4051 = vpop.f32.mrb[0].mxu0
        %4052 = vmatprep.mubr.f32.mxu0 0.0
        %v4053 = vand.u32 %v3843, 4294901760
        %v4054 = vsub.f32 %v3843, %v4053
        %v4055 = vand.u32 %v4054, 4294901760
        %v4056 = vsub.f32 %v4054, %v4055
        %v4057 = vand.u32 %v4056, 4294901760
        %4058 = vmatmul.mubr.f32.gmra.mrb[0].mxu0 %v4057
        %v4059 = vpop.f32.mrb[0].mxu0
        %v4060 = vadd.f32 %v3870, %v4059
        %v4061 = vpop.f32.mrb[0].mxu0
        %4062 = vmatprep.mubr.f32.mxu0 0.0
        %v4063 = vand.u32 %v3844, 4294901760
        %v4064 = vsub.f32 %v3844, %v4063
        %v4065 = vand.u32 %v4064, 4294901760
        %v4066 = vsub.f32 %v4064, %v4065
        %v4067 = vand.u32 %v4066, 4294901760
        %4068 = vmatmul.mubr.f32.gmra.mrb[0].mxu0 %v4067
        %v4069 = vpop.f32.mrb[0].mxu0
        %v4070 = vadd.f32 %v3870, %v4069
        %v4071 = vpop.f32.mrb[0].mxu0
        %4072 = vmatprep.mubr.f32.mxu0 0.0
        %v4073 = vand.u32 %v3845, 4294901760
        %v4074 = vsub.f32 %v3845, %v4073
        %v4075 = vand.u32 %v4074, 4294901760
        %v4076 = vsub.f32 %v4074, %v4075
        %v4077 = vand.u32 %v4076, 4294901760
        %4078 = vmatmul.mubr.f32.gmra.mrb[0].mxu0 %v4077
        %v4079 = vpop.f32.mrb[0].mxu0
        %v4080 = vadd.f32 %v3870, %v4079
        %v4081 = vpop.f32.mrb[0].mxu0
        %4082 = vmatprep.mubr.f32.mxu0 0.0
        %v4083 = vand.u32 %v3846, 4294901760
        %v4084 = vsub.f32 %v3846, %v4083
        %v4085 = vand.u32 %v4084, 4294901760
        %v4086 = vsub.f32 %v4084, %v4085
        %v4087 = vand.u32 %v4086, 4294901760
        %4088 = vmatmul.mubr.f32.gmra.mrb[0].mxu0 %v4087
        %v4089 = vpop.f32.mrb[0].mxu0
        %v4090 = vadd.f32 %v3870, %v4089
        %v4091 = vpop.f32.mrb[0].mxu0
        %4092 = vmatprep.mubr.f32.mxu0 0.0
        %v4093 = vand.u32 %v3847, 4294901760
        %v4094 = vsub.f32 %v3847, %v4093
        %v4095 = vand.u32 %v4094, 4294901760
        %v4096 = vsub.f32 %v4094, %v4095
        %v4097 = vand.u32 %v4096, 4294901760
        %4098 = vmatmul.mubr.f32.gmra.mrb[0].mxu0 %v4097
        %v4099 = vpop.f32.mrb[0].mxu0
        %v4100 = vadd.f32 %v3870, %v4099
        %v4101 = vpop.f32.mrb[0].mxu0
        %4102 = vmatprep.mubr.f32.mxu0 0.0
        %v4103 = vand.u32 %v3848, 4294901760
        %v4104 = vsub.f32 %v3848, %v4103
        %v4105 = vand.u32 %v4104, 4294901760
        %v4106 = vsub.f32 %v4104, %v4105
        %v4107 = vand.u32 %v4106, 4294901760
        %4108 = vmatmul.mubr.f32.gmra.mrb[0].mxu0 %v4107
        %v4109 = vpop.f32.mrb[0].mxu0
        %v4110 = vadd.f32 %v3870, %v4109
        %v4111 = vpop.f32.mrb[0].mxu0
        %4112 = vdwg.mxu0
        %4113 = vmatprep.subr.mxu0 0.0
        %v4114 = vand.u32 %v3849, 4294901760
        %v4115 = vsub.f32 %v3849, %v4114
        %v4116 = vand.u32 %v4115, 4294901760
        %v4117 = vsub.f32 %v4115, %v4116
        %v4118 = vand.u32 %v4117, 4294901760
        %4119 = vmatpush1.msra.mxu0 %v4118
        %4120 = vmatprep.subr.mxu0 0.0
        %v4121 = vand.u32 %v3850, 4294901760
        %v4122 = vsub.f32 %v3850, %v4121
        %v4123 = vand.u32 %v4122, 4294901760
        %v4124 = vsub.f32 %v4122, %v4123
        %v4125 = vand.u32 %v4124, 4294901760
        %4126 = vmatpush1.msra.mxu0 %v4125
        %4127 = vmatprep.subr.mxu0 0.0
        %v4128 = vand.u32 %v3851, 4294901760
        %v4129 = vsub.f32 %v3851, %v4128
        %v4130 = vand.u32 %v4129, 4294901760
        %v4131 = vsub.f32 %v4129, %v4130
        %v4132 = vand.u32 %v4131, 4294901760
        %4133 = vmatpush1.msra.mxu0 %v4132
        %4134 = vmatprep.subr.mxu0 0.0
        %v4135 = vand.u32 %v3852, 4294901760
        %v4136 = vsub.f32 %v3852, %v4135
        %v4137 = vand.u32 %v4136, 4294901760
        %v4138 = vsub.f32 %v4136, %v4137
        %v4139 = vand.u32 %v4138, 4294901760
        %4140 = vmatpush1.msra.mxu0 %v4139
        %4141 = vmatprep.subr.mxu0 0.0
        %v4142 = vand.u32 %v3853, 4294901760
        %v4143 = vsub.f32 %v3853, %v4142
        %v4144 = vand.u32 %v4143, 4294901760
        %v4145 = vsub.f32 %v4143, %v4144
        %v4146 = vand.u32 %v4145, 4294901760
        %4147 = vmatpush1.msra.mxu0 %v4146
        %4148 = vmatprep.subr.mxu0 0.0
        %v4149 = vand.u32 %v3854, 4294901760
        %v4150 = vsub.f32 %v3854, %v4149
        %v4151 = vand.u32 %v4150, 4294901760
        %v4152 = vsub.f32 %v4150, %v4151
        %v4153 = vand.u32 %v4152, 4294901760
        %4154 = vmatpush1.msra.mxu0 %v4153
        %4155 = vmatprep.subr.mxu0 0.0
        %v4156 = vand.u32 %v3855, 4294901760
        %v4157 = vsub.f32 %v3855, %v4156
        %v4158 = vand.u32 %v4157, 4294901760
        %v4159 = vsub.f32 %v4157, %v4158
        %v4160 = vand.u32 %v4159, 4294901760
        %4161 = vmatpush1.msra.mxu0 %v4160
        %4162 = vmatprep.subr.mxu0 0.0
        %v4163 = vand.u32 %v3856, 4294901760
        %v4164 = vsub.f32 %v3856, %v4163
        %v4165 = vand.u32 %v4164, 4294901760
        %v4166 = vsub.f32 %v4164, %v4165
        %v4167 = vand.u32 %v4166, 4294901760
        %4168 = vmatpush1.msra.mxu0 %v4167
        %4169 = vmatprep.subr.mxu0 0.0
        %v4170 = vand.u32 %v3857, 4294901760
        %v4171 = vsub.f32 %v3857, %v4170
        %v4172 = vand.u32 %v4171, 4294901760
        %v4173 = vsub.f32 %v4171, %v4172
        %v4174 = vand.u32 %v4173, 4294901760
        %4175 = vmatpush1.msra.mxu0 %v4174
        %4176 = vmatprep.subr.mxu0 0.0
        %v4177 = vand.u32 %v3858, 4294901760
        %v4178 = vsub.f32 %v3858, %v4177
        %v4179 = vand.u32 %v4178, 4294901760
        %v4180 = vsub.f32 %v4178, %v4179
        %v4181 = vand.u32 %v4180, 4294901760
        %4182 = vmatpush1.msra.mxu0 %v4181
        %4183 = vmatprep.subr.mxu0 0.0
        %v4184 = vand.u32 %v3859, 4294901760
        %v4185 = vsub.f32 %v3859, %v4184
        %v4186 = vand.u32 %v4185, 4294901760
        %v4187 = vsub.f32 %v4185, %v4186
        %v4188 = vand.u32 %v4187, 4294901760
        %4189 = vmatpush1.msra.mxu0 %v4188
        %4190 = vmatprep.subr.mxu0 0.0
        %v4191 = vand.u32 %v3860, 4294901760
        %v4192 = vsub.f32 %v3860, %v4191
        %v4193 = vand.u32 %v4192, 4294901760
        %v4194 = vsub.f32 %v4192, %v4193
        %v4195 = vand.u32 %v4194, 4294901760
        %4196 = vmatpush1.msra.mxu0 %v4195
        %4197 = vmatprep.subr.mxu0 0.0
        %v4198 = vand.u32 %v3861, 4294901760
        %v4199 = vsub.f32 %v3861, %v4198
        %v4200 = vand.u32 %v4199, 4294901760
        %v4201 = vsub.f32 %v4199, %v4200
        %v4202 = vand.u32 %v4201, 4294901760
        %4203 = vmatpush1.msra.mxu0 %v4202
        %4204 = vmatprep.subr.mxu0 0.0
        %v4205 = vand.u32 %v3862, 4294901760
        %v4206 = vsub.f32 %v3862, %v4205
        %v4207 = vand.u32 %v4206, 4294901760
        %v4208 = vsub.f32 %v4206, %v4207
        %v4209 = vand.u32 %v4208, 4294901760
        %4210 = vmatpush1.msra.mxu0 %v4209
        %4211 = vmatprep.subr.mxu0 0.0
        %v4212 = vand.u32 %v3863, 4294901760
        %v4213 = vsub.f32 %v3863, %v4212
        %v4214 = vand.u32 %v4213, 4294901760
        %v4215 = vsub.f32 %v4213, %v4214
        %v4216 = vand.u32 %v4215, 4294901760
        %4217 = vmatpush1.msra.mxu0 %v4216
        %4218 = vmatprep.subr.mxu0 0.0
        %v4219 = vand.u32 %v3864, 4294901760
        %v4220 = vsub.f32 %v3864, %v4219
        %v4221 = vand.u32 %v4220, 4294901760
        %v4222 = vsub.f32 %v4220, %v4221
        %v4223 = vand.u32 %v4222, 4294901760
        %4224 = vmatpush1.msra.mxu0 %v4223
        %4225 = vmatprep.subr.mxu0 0.0
        %4226 = vmatpush1.msra.mxu0 0.0
        %4227 = vmatprep.subr.mxu0 0.0
        %4228 = vmatpush1.msra.mxu0 0.0
        %4229 = vmatprep.subr.mxu0 0.0
        %4230 = vmatpush1.msra.mxu0 0.0
        %4231 = vmatprep.subr.mxu0 0.0
        %4232 = vmatpush1.msra.mxu0 0.0
        %4233 = vmatprep.subr.mxu0 0.0
        %4234 = vmatpush1.msra.mxu0 0.0
        %4235 = vmatprep.subr.mxu0 0.0
        %4236 = vmatpush1.msra.mxu0 0.0
        %4237 = vmatprep.subr.mxu0 0.0
        %4238 = vmatpush1.msra.mxu0 0.0
        %4239 = vmatprep.subr.mxu0 0.0
        %4240 = vmatpush1.msra.mxu0 0.0
        %4241 = vmatprep.subr.mxu0 0.0
        %4242 = vmatpush1.msra.mxu0 0.0
        %4243 = vmatprep.subr.mxu0 0.0
        %4244 = vmatpush1.msra.mxu0 0.0
        %4245 = vmatprep.subr.mxu0 0.0
        %4246 = vmatpush1.msra.mxu0 0.0
        %4247 = vmatprep.subr.mxu0 0.0
        %4248 = vmatpush1.msra.mxu0 0.0
        %4249 = vmatprep.subr.mxu0 0.0
        %4250 = vmatpush1.msra.mxu0 0.0
        %4251 = vmatprep.subr.mxu0 0.0
        %4252 = vmatpush1.msra.mxu0 0.0
        %4253 = vmatprep.subr.mxu0 0.0
        %4254 = vmatpush1.msra.mxu0 0.0
        %4255 = vmatprep.subr.mxu0 0.0
        %4256 = vmatpush1.msra.mxu0 0.0
        %4257 = vmatprep.mubr.f32.mxu0 0.0
        %v4258 = vand.u32 %v3833, 4294901760
        %4259 = vmatmul.mubr.f32.gmra.mrb[0].mxu0 %v4258
        %v4260 = vpop.f32.mrb[0].mxu0
        %v4261 = vadd.f32 %v3960, %v4260
        %v4262 = vpop.f32.mrb[0].mxu0
        %4263 = vmatprep.mubr.f32.mxu0 0.0
        %v4264 = vand.u32 %v3834, 4294901760
        %4265 = vmatmul.mubr.f32.gmra.mrb[0].mxu0 %v4264
        %v4266 = vpop.f32.mrb[0].mxu0
        %v4267 = vadd.f32 %v3970, %v4266
        %v4268 = vpop.f32.mrb[0].mxu0
        %4269 = vmatprep.mubr.f32.mxu0 0.0
        %v4270 = vand.u32 %v3835, 4294901760
        %4271 = vmatmul.mubr.f32.gmra.mrb[0].mxu0 %v4270
        %v4272 = vpop.f32.mrb[0].mxu0
        %v4273 = vadd.f32 %v3980, %v4272
        %v4274 = vpop.f32.mrb[0].mxu0
        %4275 = vmatprep.mubr.f32.mxu0 0.0
        %v4276 = vand.u32 %v3836, 4294901760
        %4277 = vmatmul.mubr.f32.gmra.mrb[0].mxu0 %v4276
        %v4278 = vpop.f32.mrb[0].mxu0
        %v4279 = vadd.f32 %v3990, %v4278
        %v4280 = vpop.f32.mrb[0].mxu0
        %4281 = vmatprep.mubr.f32.mxu0 0.0
        %v4282 = vand.u32 %v3837, 4294901760
        %4283 = vmatmul.mubr.f32.gmra.mrb[0].mxu0 %v4282
        %v4284 = vpop.f32.mrb[0].mxu0
        %v4285 = vadd.f32 %v4000, %v4284
        %v4286 = vpop.f32.mrb[0].mxu0
        %4287 = vmatprep.mubr.f32.mxu0 0.0
        %v4288 = vand.u32 %v3838, 4294901760
        %4289 = vmatmul.mubr.f32.gmra.mrb[0].mxu0 %v4288
        %v4290 = vpop.f32.mrb[0].mxu0
        %v4291 = vadd.f32 %v4010, %v4290
        %v4292 = vpop.f32.mrb[0].mxu0
        %4293 = vmatprep.mubr.f32.mxu0 0.0
        %v4294 = vand.u32 %v3839, 4294901760
        %4295 = vmatmul.mubr.f32.gmra.mrb[0].mxu0 %v4294
        %v4296 = vpop.f32.mrb[0].mxu0
        %v4297 = vadd.f32 %v4020, %v4296
        %v4298 = vpop.f32.mrb[0].mxu0
        %4299 = vmatprep.mubr.f32.mxu0 0.0
        %v4300 = vand.u32 %v3840, 4294901760
        %4301 = vmatmul.mubr.f32.gmra.mrb[0].mxu0 %v4300
        %v4302 = vpop.f32.mrb[0].mxu0
        %v4303 = vadd.f32 %v4030, %v4302
        %v4304 = vpop.f32.mrb[0].mxu0
        %4305 = vmatprep.mubr.f32.mxu0 0.0
        %v4306 = vand.u32 %v3841, 4294901760
        %4307 = vmatmul.mubr.f32.gmra.mrb[0].mxu0 %v4306
        %v4308 = vpop.f32.mrb[0].mxu0
        %v4309 = vadd.f32 %v4040, %v4308
        %v4310 = vpop.f32.mrb[0].mxu0
        %4311 = vmatprep.mubr.f32.mxu0 0.0
        %v4312 = vand.u32 %v3842, 4294901760
        %4313 = vmatmul.mubr.f32.gmra.mrb[0].mxu0 %v4312
        %v4314 = vpop.f32.mrb[0].mxu0
        %v4315 = vadd.f32 %v4050, %v4314
        %v4316 = vpop.f32.mrb[0].mxu0
        %4317 = vmatprep.mubr.f32.mxu0 0.0
        %v4318 = vand.u32 %v3843, 4294901760
        %4319 = vmatmul.mubr.f32.gmra.mrb[0].mxu0 %v4318
        %v4320 = vpop.f32.mrb[0].mxu0
        %v4321 = vadd.f32 %v4060, %v4320
        %v4322 = vpop.f32.mrb[0].mxu0
        %4323 = vmatprep.mubr.f32.mxu0 0.0
        %v4324 = vand.u32 %v3844, 4294901760
        %4325 = vmatmul.mubr.f32.gmra.mrb[0].mxu0 %v4324
        %v4326 = vpop.f32.mrb[0].mxu0
        %v4327 = vadd.f32 %v4070, %v4326
        %v4328 = vpop.f32.mrb[0].mxu0
        %4329 = vmatprep.mubr.f32.mxu0 0.0
        %v4330 = vand.u32 %v3845, 4294901760
        %4331 = vmatmul.mubr.f32.gmra.mrb[0].mxu0 %v4330
        %v4332 = vpop.f32.mrb[0].mxu0
        %v4333 = vadd.f32 %v4080, %v4332
        %v4334 = vpop.f32.mrb[0].mxu0
        %4335 = vmatprep.mubr.f32.mxu0 0.0
        %v4336 = vand.u32 %v3846, 4294901760
        %4337 = vmatmul.mubr.f32.gmra.mrb[0].mxu0 %v4336
        %v4338 = vpop.f32.mrb[0].mxu0
        %v4339 = vadd.f32 %v4090, %v4338
        %v4340 = vpop.f32.mrb[0].mxu0
        %4341 = vmatprep.mubr.f32.mxu0 0.0
        %v4342 = vand.u32 %v3847, 4294901760
        %4343 = vmatmul.mubr.f32.gmra.mrb[0].mxu0 %v4342
        %v4344 = vpop.f32.mrb[0].mxu0
        %v4345 = vadd.f32 %v4100, %v4344
        %v4346 = vpop.f32.mrb[0].mxu0
        %4347 = vmatprep.mubr.f32.mxu0 0.0
        %v4348 = vand.u32 %v3848, 4294901760
        %4349 = vmatmul.mubr.f32.gmra.mrb[0].mxu0 %v4348
        %v4350 = vpop.f32.mrb[0].mxu0
        %v4351 = vadd.f32 %v4110, %v4350
        %v4352 = vpop.f32.mrb[0].mxu0
        %4353 = vdwg.mxu0
        %4354 = vmatprep.subr.mxu0 0.0
        %v4355 = vand.u32 %v3849, 4294901760
        %v4356 = vsub.f32 %v3849, %v4355
        %4357 = vmatpush1.msra.mxu0 %v4356
        %4358 = vmatprep.subr.mxu0 0.0
        %v4359 = vand.u32 %v3850, 4294901760
        %v4360 = vsub.f32 %v3850, %v4359
        %4361 = vmatpush1.msra.mxu0 %v4360
        %4362 = vmatprep.subr.mxu0 0.0
        %v4363 = vand.u32 %v3851, 4294901760
        %v4364 = vsub.f32 %v3851, %v4363
        %4365 = vmatpush1.msra.mxu0 %v4364
        %4366 = vmatprep.subr.mxu0 0.0
        %v4367 = vand.u32 %v3852, 4294901760
        %v4368 = vsub.f32 %v3852, %v4367
        %4369 = vmatpush1.msra.mxu0 %v4368
        %4370 = vmatprep.subr.mxu0 0.0
        %v4371 = vand.u32 %v3853, 4294901760
        %v4372 = vsub.f32 %v3853, %v4371
        %4373 = vmatpush1.msra.mxu0 %v4372
        %4374 = vmatprep.subr.mxu0 0.0
        %v4375 = vand.u32 %v3854, 4294901760
        %v4376 = vsub.f32 %v3854, %v4375
        %4377 = vmatpush1.msra.mxu0 %v4376
        %4378 = vmatprep.subr.mxu0 0.0
        %v4379 = vand.u32 %v3855, 4294901760
        %v4380 = vsub.f32 %v3855, %v4379
        %4381 = vmatpush1.msra.mxu0 %v4380
        %4382 = vmatprep.subr.mxu0 0.0
        %v4383 = vand.u32 %v3856, 4294901760
        %v4384 = vsub.f32 %v3856, %v4383
        %4385 = vmatpush1.msra.mxu0 %v4384
        %4386 = vmatprep.subr.mxu0 0.0
        %v4387 = vand.u32 %v3857, 4294901760
        %v4388 = vsub.f32 %v3857, %v4387
        %4389 = vmatpush1.msra.mxu0 %v4388
        %4390 = vmatprep.subr.mxu0 0.0
        %v4391 = vand.u32 %v3858, 4294901760
        %v4392 = vsub.f32 %v3858, %v4391
        %4393 = vmatpush1.msra.mxu0 %v4392
        %4394 = vmatprep.subr.mxu0 0.0
        %v4395 = vand.u32 %v3859, 4294901760
        %v4396 = vsub.f32 %v3859, %v4395
        %4397 = vmatpush1.msra.mxu0 %v4396
        %4398 = vmatprep.subr.mxu0 0.0
        %v4399 = vand.u32 %v3860, 4294901760
        %v4400 = vsub.f32 %v3860, %v4399
        %4401 = vmatpush1.msra.mxu0 %v4400
        %4402 = vmatprep.subr.mxu0 0.0
        %v4403 = vand.u32 %v3861, 4294901760
        %v4404 = vsub.f32 %v3861, %v4403
        %4405 = vmatpush1.msra.mxu0 %v4404
        %4406 = vmatprep.subr.mxu0 0.0
        %v4407 = vand.u32 %v3862, 4294901760
        %v4408 = vsub.f32 %v3862, %v4407
        %4409 = vmatpush1.msra.mxu0 %v4408
        %4410 = vmatprep.subr.mxu0 0.0
        %v4411 = vand.u32 %v3863, 4294901760
        %v4412 = vsub.f32 %v3863, %v4411
        %4413 = vmatpush1.msra.mxu0 %v4412
        %4414 = vmatprep.subr.mxu0 0.0
        %v4415 = vand.u32 %v3864, 4294901760
        %v4416 = vsub.f32 %v3864, %v4415
        %4417 = vmatpush1.msra.mxu0 %v4416
        %4418 = vmatprep.subr.mxu0 0.0
        %4419 = vmatpush1.msra.mxu0 0.0
        %4420 = vmatprep.subr.mxu0 0.0
        %4421 = vmatpush1.msra.mxu0 0.0
        %4422 = vmatprep.subr.mxu0 0.0
        %4423 = vmatpush1.msra.mxu0 0.0
        %4424 = vmatprep.subr.mxu0 0.0
        %4425 = vmatpush1.msra.mxu0 0.0
        %4426 = vmatprep.subr.mxu0 0.0
        %4427 = vmatpush1.msra.mxu0 0.0
        %4428 = vmatprep.subr.mxu0 0.0
        %4429 = vmatpush1.msra.mxu0 0.0
        %4430 = vmatprep.subr.mxu0 0.0
        %4431 = vmatpush1.msra.mxu0 0.0
        %4432 = vmatprep.subr.mxu0 0.0
        %4433 = vmatpush1.msra.mxu0 0.0
        %4434 = vmatprep.subr.mxu0 0.0
        %4435 = vmatpush1.msra.mxu0 0.0
        %4436 = vmatprep.subr.mxu0 0.0
        %4437 = vmatpush1.msra.mxu0 0.0
        %4438 = vmatprep.subr.mxu0 0.0
        %4439 = vmatpush1.msra.mxu0 0.0
        %4440 = vmatprep.subr.mxu0 0.0
        %4441 = vmatpush1.msra.mxu0 0.0
        %4442 = vmatprep.subr.mxu0 0.0
        %4443 = vmatpush1.msra.mxu0 0.0
        %4444 = vmatprep.subr.mxu0 0.0
        %4445 = vmatpush1.msra.mxu0 0.0
        %4446 = vmatprep.subr.mxu0 0.0
        %4447 = vmatpush1.msra.mxu0 0.0
        %4448 = vmatprep.subr.mxu0 0.0
        %4449 = vmatpush1.msra.mxu0 0.0
        %4450 = vmatprep.mubr.f32.mxu0 0.0
        %v4451 = vand.u32 %v3833, 4294901760
        %v4452 = vsub.f32 %v3833, %v4451
        %4453 = vmatmul.mubr.f32.gmra.mrb[0].mxu0 %v4452
        %v4454 = vpop.f32.mrb[0].mxu0
        %v4455 = vadd.f32 %v4261, %v4454
        %v4456 = vpop.f32.mrb[0].mxu0
        %4457 = vmatprep.mubr.f32.mxu0 0.0
        %v4458 = vand.u32 %v3834, 4294901760
        %v4459 = vsub.f32 %v3834, %v4458
        %4460 = vmatmul.mubr.f32.gmra.mrb[0].mxu0 %v4459
        %v4461 = vpop.f32.mrb[0].mxu0
        %v4462 = vadd.f32 %v4267, %v4461
        %v4463 = vpop.f32.mrb[0].mxu0
        %4464 = vmatprep.mubr.f32.mxu0 0.0
        %v4465 = vand.u32 %v3835, 4294901760
        %v4466 = vsub.f32 %v3835, %v4465
        %4467 = vmatmul.mubr.f32.gmra.mrb[0].mxu0 %v4466
        %v4468 = vpop.f32.mrb[0].mxu0
        %v4469 = vadd.f32 %v4273, %v4468
        %v4470 = vpop.f32.mrb[0].mxu0
        %4471 = vmatprep.mubr.f32.mxu0 0.0
        %v4472 = vand.u32 %v3836, 4294901760
        %v4473 = vsub.f32 %v3836, %v4472
        %4474 = vmatmul.mubr.f32.gmra.mrb[0].mxu0 %v4473
        %v4475 = vpop.f32.mrb[0].mxu0
        %v4476 = vadd.f32 %v4279, %v4475
        %v4477 = vpop.f32.mrb[0].mxu0
        %4478 = vmatprep.mubr.f32.mxu0 0.0
        %v4479 = vand.u32 %v3837, 4294901760
        %v4480 = vsub.f32 %v3837, %v4479
        %4481 = vmatmul.mubr.f32.gmra.mrb[0].mxu0 %v4480
        %v4482 = vpop.f32.mrb[0].mxu0
        %v4483 = vadd.f32 %v4285, %v4482
        %v4484 = vpop.f32.mrb[0].mxu0
        %4485 = vmatprep.mubr.f32.mxu0 0.0
        %v4486 = vand.u32 %v3838, 4294901760
        %v4487 = vsub.f32 %v3838, %v4486
        %4488 = vmatmul.mubr.f32.gmra.mrb[0].mxu0 %v4487
        %v4489 = vpop.f32.mrb[0].mxu0
        %v4490 = vadd.f32 %v4291, %v4489
        %v4491 = vpop.f32.mrb[0].mxu0
        %4492 = vmatprep.mubr.f32.mxu0 0.0
        %v4493 = vand.u32 %v3839, 4294901760
        %v4494 = vsub.f32 %v3839, %v4493
        %4495 = vmatmul.mubr.f32.gmra.mrb[0].mxu0 %v4494
        %v4496 = vpop.f32.mrb[0].mxu0
        %v4497 = vadd.f32 %v4297, %v4496
        %v4498 = vpop.f32.mrb[0].mxu0
        %4499 = vmatprep.mubr.f32.mxu0 0.0
        %v4500 = vand.u32 %v3840, 4294901760
        %v4501 = vsub.f32 %v3840, %v4500
        %4502 = vmatmul.mubr.f32.gmra.mrb[0].mxu0 %v4501
        %v4503 = vpop.f32.mrb[0].mxu0
        %v4504 = vadd.f32 %v4303, %v4503
        %v4505 = vpop.f32.mrb[0].mxu0
        %4506 = vmatprep.mubr.f32.mxu0 0.0
        %v4507 = vand.u32 %v3841, 4294901760
        %v4508 = vsub.f32 %v3841, %v4507
        %4509 = vmatmul.mubr.f32.gmra.mrb[0].mxu0 %v4508
        %v4510 = vpop.f32.mrb[0].mxu0
        %v4511 = vadd.f32 %v4309, %v4510
        %v4512 = vpop.f32.mrb[0].mxu0
        %4513 = vmatprep.mubr.f32.mxu0 0.0
        %v4514 = vand.u32 %v3842, 4294901760
        %v4515 = vsub.f32 %v3842, %v4514
        %4516 = vmatmul.mubr.f32.gmra.mrb[0].mxu0 %v4515
        %v4517 = vpop.f32.mrb[0].mxu0
        %v4518 = vadd.f32 %v4315, %v4517
        %v4519 = vpop.f32.mrb[0].mxu0
        %4520 = vmatprep.mubr.f32.mxu0 0.0
        %v4521 = vand.u32 %v3843, 4294901760
        %v4522 = vsub.f32 %v3843, %v4521
        %4523 = vmatmul.mubr.f32.gmra.mrb[0].mxu0 %v4522
        %v4524 = vpop.f32.mrb[0].mxu0
        %v4525 = vadd.f32 %v4321, %v4524
        %v4526 = vpop.f32.mrb[0].mxu0
        %4527 = vmatprep.mubr.f32.mxu0 0.0
        %v4528 = vand.u32 %v3844, 4294901760
        %v4529 = vsub.f32 %v3844, %v4528
        %4530 = vmatmul.mubr.f32.gmra.mrb[0].mxu0 %v4529
        %v4531 = vpop.f32.mrb[0].mxu0
        %v4532 = vadd.f32 %v4327, %v4531
        %v4533 = vpop.f32.mrb[0].mxu0
        %4534 = vmatprep.mubr.f32.mxu0 0.0
        %v4535 = vand.u32 %v3845, 4294901760
        %v4536 = vsub.f32 %v3845, %v4535
        %4537 = vmatmul.mubr.f32.gmra.mrb[0].mxu0 %v4536
        %v4538 = vpop.f32.mrb[0].mxu0
        %v4539 = vadd.f32 %v4333, %v4538
        %v4540 = vpop.f32.mrb[0].mxu0
        %4541 = vmatprep.mubr.f32.mxu0 0.0
        %v4542 = vand.u32 %v3846, 4294901760
        %v4543 = vsub.f32 %v3846, %v4542
        %4544 = vmatmul.mubr.f32.gmra.mrb[0].mxu0 %v4543
        %v4545 = vpop.f32.mrb[0].mxu0
        %v4546 = vadd.f32 %v4339, %v4545
        %v4547 = vpop.f32.mrb[0].mxu0
        %4548 = vmatprep.mubr.f32.mxu0 0.0
        %v4549 = vand.u32 %v3847, 4294901760
        %v4550 = vsub.f32 %v3847, %v4549
        %4551 = vmatmul.mubr.f32.gmra.mrb[0].mxu0 %v4550
        %v4552 = vpop.f32.mrb[0].mxu0
        %v4553 = vadd.f32 %v4345, %v4552
        %v4554 = vpop.f32.mrb[0].mxu0
        %4555 = vmatprep.mubr.f32.mxu0 0.0
        %v4556 = vand.u32 %v3848, 4294901760
        %v4557 = vsub.f32 %v3848, %v4556
        %4558 = vmatmul.mubr.f32.gmra.mrb[0].mxu0 %v4557
        %v4559 = vpop.f32.mrb[0].mxu0
        %v4560 = vadd.f32 %v4351, %v4559
        %v4561 = vpop.f32.mrb[0].mxu0
        %4562 = vdwg.mxu0
        %4563 = vmatprep.subr.mxu0 0.0
        %v4564 = vand.u32 %v3849, 4294901760
        %4565 = vmatpush1.msra.mxu0 %v4564
        %4566 = vmatprep.subr.mxu0 0.0
        %v4567 = vand.u32 %v3850, 4294901760
        %4568 = vmatpush1.msra.mxu0 %v4567
        %4569 = vmatprep.subr.mxu0 0.0
        %v4570 = vand.u32 %v3851, 4294901760
        %4571 = vmatpush1.msra.mxu0 %v4570
        %4572 = vmatprep.subr.mxu0 0.0
        %v4573 = vand.u32 %v3852, 4294901760
        %4574 = vmatpush1.msra.mxu0 %v4573
        %4575 = vmatprep.subr.mxu0 0.0
        %v4576 = vand.u32 %v3853, 4294901760
        %4577 = vmatpush1.msra.mxu0 %v4576
        %4578 = vmatprep.subr.mxu0 0.0
        %v4579 = vand.u32 %v3854, 4294901760
        %4580 = vmatpush1.msra.mxu0 %v4579
        %4581 = vmatprep.subr.mxu0 0.0
        %v4582 = vand.u32 %v3855, 4294901760
        %4583 = vmatpush1.msra.mxu0 %v4582
        %4584 = vmatprep.subr.mxu0 0.0
        %v4585 = vand.u32 %v3856, 4294901760
        %4586 = vmatpush1.msra.mxu0 %v4585
        %4587 = vmatprep.subr.mxu0 0.0
        %v4588 = vand.u32 %v3857, 4294901760
        %4589 = vmatpush1.msra.mxu0 %v4588
        %4590 = vmatprep.subr.mxu0 0.0
        %v4591 = vand.u32 %v3858, 4294901760
        %4592 = vmatpush1.msra.mxu0 %v4591
        %4593 = vmatprep.subr.mxu0 0.0
        %v4594 = vand.u32 %v3859, 4294901760
        %4595 = vmatpush1.msra.mxu0 %v4594
        %4596 = vmatprep.subr.mxu0 0.0
        %v4597 = vand.u32 %v3860, 4294901760
        %4598 = vmatpush1.msra.mxu0 %v4597
        %4599 = vmatprep.subr.mxu0 0.0
        %v4600 = vand.u32 %v3861, 4294901760
        %4601 = vmatpush1.msra.mxu0 %v4600
        %4602 = vmatprep.subr.mxu0 0.0
        %v4603 = vand.u32 %v3862, 4294901760
        %4604 = vmatpush1.msra.mxu0 %v4603
        %4605 = vmatprep.subr.mxu0 0.0
        %v4606 = vand.u32 %v3863, 4294901760
        %4607 = vmatpush1.msra.mxu0 %v4606
        %4608 = vmatprep.subr.mxu0 0.0
        %v4609 = vand.u32 %v3864, 4294901760
        %4610 = vmatpush1.msra.mxu0 %v4609
        %4611 = vmatprep.subr.mxu0 0.0
        %4612 = vmatpush1.msra.mxu0 0.0
        %4613 = vmatprep.subr.mxu0 0.0
        %4614 = vmatpush1.msra.mxu0 0.0
        %4615 = vmatprep.subr.mxu0 0.0
        %4616 = vmatpush1.msra.mxu0 0.0
        %4617 = vmatprep.subr.mxu0 0.0
        %4618 = vmatpush1.msra.mxu0 0.0
        %4619 = vmatprep.subr.mxu0 0.0
        %4620 = vmatpush1.msra.mxu0 0.0
        %4621 = vmatprep.subr.mxu0 0.0
        %4622 = vmatpush1.msra.mxu0 0.0
        %4623 = vmatprep.subr.mxu0 0.0
        %4624 = vmatpush1.msra.mxu0 0.0
        %4625 = vmatprep.subr.mxu0 0.0
        %4626 = vmatpush1.msra.mxu0 0.0
        %4627 = vmatprep.subr.mxu0 0.0
        %4628 = vmatpush1.msra.mxu0 0.0
        %4629 = vmatprep.subr.mxu0 0.0
        %4630 = vmatpush1.msra.mxu0 0.0
        %4631 = vmatprep.subr.mxu0 0.0
        %4632 = vmatpush1.msra.mxu0 0.0
        %4633 = vmatprep.subr.mxu0 0.0
        %4634 = vmatpush1.msra.mxu0 0.0
        %4635 = vmatprep.subr.mxu0 0.0
        %4636 = vmatpush1.msra.mxu0 0.0
        %4637 = vmatprep.subr.mxu0 0.0
        %4638 = vmatpush1.msra.mxu0 0.0
        %4639 = vmatprep.subr.mxu0 0.0
        %4640 = vmatpush1.msra.mxu0 0.0
        %4641 = vmatprep.subr.mxu0 0.0
        %4642 = vmatpush1.msra.mxu0 0.0
        %4643 = vmatprep.mubr.f32.mxu0 0.0
        %v4644 = vand.u32 %v3833, 4294901760
        %v4645 = vsub.f32 %v3833, %v4644
        %v4646 = vand.u32 %v4645, 4294901760
        %4647 = vmatmul.mubr.f32.gmra.mrb[0].mxu0 %v4646
        %v4648 = vpop.f32.mrb[0].mxu0
        %v4649 = vadd.f32 %v4455, %v4648
        %v4650 = vpop.f32.mrb[0].mxu0
        %4651 = vmatprep.mubr.f32.mxu0 0.0
        %v4652 = vand.u32 %v3834, 4294901760
        %v4653 = vsub.f32 %v3834, %v4652
        %v4654 = vand.u32 %v4653, 4294901760
        %4655 = vmatmul.mubr.f32.gmra.mrb[0].mxu0 %v4654
        %v4656 = vpop.f32.mrb[0].mxu0
        %v4657 = vadd.f32 %v4462, %v4656
        %v4658 = vpop.f32.mrb[0].mxu0
        %4659 = vmatprep.mubr.f32.mxu0 0.0
        %v4660 = vand.u32 %v3835, 4294901760
        %v4661 = vsub.f32 %v3835, %v4660
        %v4662 = vand.u32 %v4661, 4294901760
        %4663 = vmatmul.mubr.f32.gmra.mrb[0].mxu0 %v4662
        %v4664 = vpop.f32.mrb[0].mxu0
        %v4665 = vadd.f32 %v4469, %v4664
        %v4666 = vpop.f32.mrb[0].mxu0
        %4667 = vmatprep.mubr.f32.mxu0 0.0
        %v4668 = vand.u32 %v3836, 4294901760
        %v4669 = vsub.f32 %v3836, %v4668
        %v4670 = vand.u32 %v4669, 4294901760
        %4671 = vmatmul.mubr.f32.gmra.mrb[0].mxu0 %v4670
        %v4672 = vpop.f32.mrb[0].mxu0
        %v4673 = vadd.f32 %v4476, %v4672
        %v4674 = vpop.f32.mrb[0].mxu0
        %4675 = vmatprep.mubr.f32.mxu0 0.0
        %v4676 = vand.u32 %v3837, 4294901760
        %v4677 = vsub.f32 %v3837, %v4676
        %v4678 = vand.u32 %v4677, 4294901760
        %4679 = vmatmul.mubr.f32.gmra.mrb[0].mxu0 %v4678
        %v4680 = vpop.f32.mrb[0].mxu0
        %v4681 = vadd.f32 %v4483, %v4680
        %v4682 = vpop.f32.mrb[0].mxu0
        %4683 = vmatprep.mubr.f32.mxu0 0.0
        %v4684 = vand.u32 %v3838, 4294901760
        %v4685 = vsub.f32 %v3838, %v4684
        %v4686 = vand.u32 %v4685, 4294901760
        %4687 = vmatmul.mubr.f32.gmra.mrb[0].mxu0 %v4686
        %v4688 = vpop.f32.mrb[0].mxu0
        %v4689 = vadd.f32 %v4490, %v4688
        %v4690 = vpop.f32.mrb[0].mxu0
        %4691 = vmatprep.mubr.f32.mxu0 0.0
        %v4692 = vand.u32 %v3839, 4294901760
        %v4693 = vsub.f32 %v3839, %v4692
        %v4694 = vand.u32 %v4693, 4294901760
        %4695 = vmatmul.mubr.f32.gmra.mrb[0].mxu0 %v4694
        %v4696 = vpop.f32.mrb[0].mxu0
        %v4697 = vadd.f32 %v4497, %v4696
        %v4698 = vpop.f32.mrb[0].mxu0
        %4699 = vmatprep.mubr.f32.mxu0 0.0
        %v4700 = vand.u32 %v3840, 4294901760
        %v4701 = vsub.f32 %v3840, %v4700
        %v4702 = vand.u32 %v4701, 4294901760
        %4703 = vmatmul.mubr.f32.gmra.mrb[0].mxu0 %v4702
        %v4704 = vpop.f32.mrb[0].mxu0
        %v4705 = vadd.f32 %v4504, %v4704
        %v4706 = vpop.f32.mrb[0].mxu0
        %4707 = vmatprep.mubr.f32.mxu0 0.0
        %v4708 = vand.u32 %v3841, 4294901760
        %v4709 = vsub.f32 %v3841, %v4708
        %v4710 = vand.u32 %v4709, 4294901760
        %4711 = vmatmul.mubr.f32.gmra.mrb[0].mxu0 %v4710
        %v4712 = vpop.f32.mrb[0].mxu0
        %v4713 = vadd.f32 %v4511, %v4712
        %v4714 = vpop.f32.mrb[0].mxu0
        %4715 = vmatprep.mubr.f32.mxu0 0.0
        %v4716 = vand.u32 %v3842, 4294901760
        %v4717 = vsub.f32 %v3842, %v4716
        %v4718 = vand.u32 %v4717, 4294901760
        %4719 = vmatmul.mubr.f32.gmra.mrb[0].mxu0 %v4718
        %v4720 = vpop.f32.mrb[0].mxu0
        %v4721 = vadd.f32 %v4518, %v4720
        %v4722 = vpop.f32.mrb[0].mxu0
        %4723 = vmatprep.mubr.f32.mxu0 0.0
        %v4724 = vand.u32 %v3843, 4294901760
        %v4725 = vsub.f32 %v3843, %v4724
        %v4726 = vand.u32 %v4725, 4294901760
        %4727 = vmatmul.mubr.f32.gmra.mrb[0].mxu0 %v4726
        %v4728 = vpop.f32.mrb[0].mxu0
        %v4729 = vadd.f32 %v4525, %v4728
        %v4730 = vpop.f32.mrb[0].mxu0
        %4731 = vmatprep.mubr.f32.mxu0 0.0
        %v4732 = vand.u32 %v3844, 4294901760
        %v4733 = vsub.f32 %v3844, %v4732
        %v4734 = vand.u32 %v4733, 4294901760
        %4735 = vmatmul.mubr.f32.gmra.mrb[0].mxu0 %v4734
        %v4736 = vpop.f32.mrb[0].mxu0
        %v4737 = vadd.f32 %v4532, %v4736
        %v4738 = vpop.f32.mrb[0].mxu0
        %4739 = vmatprep.mubr.f32.mxu0 0.0
        %v4740 = vand.u32 %v3845, 4294901760
        %v4741 = vsub.f32 %v3845, %v4740
        %v4742 = vand.u32 %v4741, 4294901760
        %4743 = vmatmul.mubr.f32.gmra.mrb[0].mxu0 %v4742
        %v4744 = vpop.f32.mrb[0].mxu0
        %v4745 = vadd.f32 %v4539, %v4744
        %v4746 = vpop.f32.mrb[0].mxu0
        %4747 = vmatprep.mubr.f32.mxu0 0.0
        %v4748 = vand.u32 %v3846, 4294901760
        %v4749 = vsub.f32 %v3846, %v4748
        %v4750 = vand.u32 %v4749, 4294901760
        %4751 = vmatmul.mubr.f32.gmra.mrb[0].mxu0 %v4750
        %v4752 = vpop.f32.mrb[0].mxu0
        %v4753 = vadd.f32 %v4546, %v4752
        %v4754 = vpop.f32.mrb[0].mxu0
        %4755 = vmatprep.mubr.f32.mxu0 0.0
        %v4756 = vand.u32 %v3847, 4294901760
        %v4757 = vsub.f32 %v3847, %v4756
        %v4758 = vand.u32 %v4757, 4294901760
        %4759 = vmatmul.mubr.f32.gmra.mrb[0].mxu0 %v4758
        %v4760 = vpop.f32.mrb[0].mxu0
        %v4761 = vadd.f32 %v4553, %v4760
        %v4762 = vpop.f32.mrb[0].mxu0
        %4763 = vmatprep.mubr.f32.mxu0 0.0
        %v4764 = vand.u32 %v3848, 4294901760
        %v4765 = vsub.f32 %v3848, %v4764
        %v4766 = vand.u32 %v4765, 4294901760
        %4767 = vmatmul.mubr.f32.gmra.mrb[0].mxu0 %v4766
        %v4768 = vpop.f32.mrb[0].mxu0
        %v4769 = vadd.f32 %v4560, %v4768
        %v4770 = vpop.f32.mrb[0].mxu0
        %4771 = vdwg.mxu0
        %4772 = vmatprep.subr.mxu0 0.0
        %v4773 = vand.u32 %v3849, 4294901760
        %v4774 = vsub.f32 %v3849, %v4773
        %v4775 = vand.u32 %v4774, 4294901760
        %4776 = vmatpush1.msra.mxu0 %v4775
        %4777 = vmatprep.subr.mxu0 0.0
        %v4778 = vand.u32 %v3850, 4294901760
        %v4779 = vsub.f32 %v3850, %v4778
        %v4780 = vand.u32 %v4779, 4294901760
        %4781 = vmatpush1.msra.mxu0 %v4780
        %4782 = vmatprep.subr.mxu0 0.0
        %v4783 = vand.u32 %v3851, 4294901760
        %v4784 = vsub.f32 %v3851, %v4783
        %v4785 = vand.u32 %v4784, 4294901760
        %4786 = vmatpush1.msra.mxu0 %v4785
        %4787 = vmatprep.subr.mxu0 0.0
        %v4788 = vand.u32 %v3852, 4294901760
        %v4789 = vsub.f32 %v3852, %v4788
        %v4790 = vand.u32 %v4789, 4294901760
        %4791 = vmatpush1.msra.mxu0 %v4790
        %4792 = vmatprep.subr.mxu0 0.0
        %v4793 = vand.u32 %v3853, 4294901760
        %v4794 = vsub.f32 %v3853, %v4793
        %v4795 = vand.u32 %v4794, 4294901760
        %4796 = vmatpush1.msra.mxu0 %v4795
        %4797 = vmatprep.subr.mxu0 0.0
        %v4798 = vand.u32 %v3854, 4294901760
        %v4799 = vsub.f32 %v3854, %v4798
        %v4800 = vand.u32 %v4799, 4294901760
        %4801 = vmatpush1.msra.mxu0 %v4800
        %4802 = vmatprep.subr.mxu0 0.0
        %v4803 = vand.u32 %v3855, 4294901760
        %v4804 = vsub.f32 %v3855, %v4803
        %v4805 = vand.u32 %v4804, 4294901760
        %4806 = vmatpush1.msra.mxu0 %v4805
        %4807 = vmatprep.subr.mxu0 0.0
        %v4808 = vand.u32 %v3856, 4294901760
        %v4809 = vsub.f32 %v3856, %v4808
        %v4810 = vand.u32 %v4809, 4294901760
        %4811 = vmatpush1.msra.mxu0 %v4810
        %4812 = vmatprep.subr.mxu0 0.0
        %v4813 = vand.u32 %v3857, 4294901760
        %v4814 = vsub.f32 %v3857, %v4813
        %v4815 = vand.u32 %v4814, 4294901760
        %4816 = vmatpush1.msra.mxu0 %v4815
        %4817 = vmatprep.subr.mxu0 0.0
        %v4818 = vand.u32 %v3858, 4294901760
        %v4819 = vsub.f32 %v3858, %v4818
        %v4820 = vand.u32 %v4819, 4294901760
        %4821 = vmatpush1.msra.mxu0 %v4820
        %4822 = vmatprep.subr.mxu0 0.0
        %v4823 = vand.u32 %v3859, 4294901760
        %v4824 = vsub.f32 %v3859, %v4823
        %v4825 = vand.u32 %v4824, 4294901760
        %4826 = vmatpush1.msra.mxu0 %v4825
        %4827 = vmatprep.subr.mxu0 0.0
        %v4828 = vand.u32 %v3860, 4294901760
        %v4829 = vsub.f32 %v3860, %v4828
        %v4830 = vand.u32 %v4829, 4294901760
        %4831 = vmatpush1.msra.mxu0 %v4830
        %4832 = vmatprep.subr.mxu0 0.0
        %v4833 = vand.u32 %v3861, 4294901760
        %v4834 = vsub.f32 %v3861, %v4833
        %v4835 = vand.u32 %v4834, 4294901760
        %4836 = vmatpush1.msra.mxu0 %v4835
        %4837 = vmatprep.subr.mxu0 0.0
        %v4838 = vand.u32 %v3862, 4294901760
        %v4839 = vsub.f32 %v3862, %v4838
        %v4840 = vand.u32 %v4839, 4294901760
        %4841 = vmatpush1.msra.mxu0 %v4840
        %4842 = vmatprep.subr.mxu0 0.0
        %v4843 = vand.u32 %v3863, 4294901760
        %v4844 = vsub.f32 %v3863, %v4843
        %v4845 = vand.u32 %v4844, 4294901760
        %4846 = vmatpush1.msra.mxu0 %v4845
        %4847 = vmatprep.subr.mxu0 0.0
        %v4848 = vand.u32 %v3864, 4294901760
        %v4849 = vsub.f32 %v3864, %v4848
        %v4850 = vand.u32 %v4849, 4294901760
        %4851 = vmatpush1.msra.mxu0 %v4850
        %4852 = vmatprep.subr.mxu0 0.0
        %4853 = vmatpush1.msra.mxu0 0.0
        %4854 = vmatprep.subr.mxu0 0.0
        %4855 = vmatpush1.msra.mxu0 0.0
        %4856 = vmatprep.subr.mxu0 0.0
        %4857 = vmatpush1.msra.mxu0 0.0
        %4858 = vmatprep.subr.mxu0 0.0
        %4859 = vmatpush1.msra.mxu0 0.0
        %4860 = vmatprep.subr.mxu0 0.0
        %4861 = vmatpush1.msra.mxu0 0.0
        %4862 = vmatprep.subr.mxu0 0.0
        %4863 = vmatpush1.msra.mxu0 0.0
        %4864 = vmatprep.subr.mxu0 0.0
        %4865 = vmatpush1.msra.mxu0 0.0
        %4866 = vmatprep.subr.mxu0 0.0
        %4867 = vmatpush1.msra.mxu0 0.0
        %4868 = vmatprep.subr.mxu0 0.0
        %4869 = vmatpush1.msra.mxu0 0.0
        %4870 = vmatprep.subr.mxu0 0.0
        %4871 = vmatpush1.msra.mxu0 0.0
        %4872 = vmatprep.subr.mxu0 0.0
        %4873 = vmatpush1.msra.mxu0 0.0
        %4874 = vmatprep.subr.mxu0 0.0
        %4875 = vmatpush1.msra.mxu0 0.0
        %4876 = vmatprep.subr.mxu0 0.0
        %4877 = vmatpush1.msra.mxu0 0.0
        %4878 = vmatprep.subr.mxu0 0.0
        %4879 = vmatpush1.msra.mxu0 0.0
        %4880 = vmatprep.subr.mxu0 0.0
        %4881 = vmatpush1.msra.mxu0 0.0
        %4882 = vmatprep.subr.mxu0 0.0
        %4883 = vmatpush1.msra.mxu0 0.0
        %4884 = vmatprep.mubr.f32.mxu0 0.0
        %v4885 = vand.u32 %v3833, 4294901760
        %4886 = vmatmul.mubr.f32.gmra.mrb[0].mxu0 %v4885
        %v4887 = vpop.f32.mrb[0].mxu0
        %v4888 = vadd.f32 %v4649, %v4887
        %v4889 = vpop.f32.mrb[0].mxu0
        %4890 = vmatprep.mubr.f32.mxu0 0.0
        %v4891 = vand.u32 %v3834, 4294901760
        %4892 = vmatmul.mubr.f32.gmra.mrb[0].mxu0 %v4891
        %v4893 = vpop.f32.mrb[0].mxu0
        %v4894 = vadd.f32 %v4657, %v4893
        %v4895 = vpop.f32.mrb[0].mxu0
        %4896 = vmatprep.mubr.f32.mxu0 0.0
        %v4897 = vand.u32 %v3835, 4294901760
        %4898 = vmatmul.mubr.f32.gmra.mrb[0].mxu0 %v4897
        %v4899 = vpop.f32.mrb[0].mxu0
        %v4900 = vadd.f32 %v4665, %v4899
        %v4901 = vpop.f32.mrb[0].mxu0
        %4902 = vmatprep.mubr.f32.mxu0 0.0
        %v4903 = vand.u32 %v3836, 4294901760
        %4904 = vmatmul.mubr.f32.gmra.mrb[0].mxu0 %v4903
        %v4905 = vpop.f32.mrb[0].mxu0
        %v4906 = vadd.f32 %v4673, %v4905
        %v4907 = vpop.f32.mrb[0].mxu0
        %4908 = vmatprep.mubr.f32.mxu0 0.0
        %v4909 = vand.u32 %v3837, 4294901760
        %4910 = vmatmul.mubr.f32.gmra.mrb[0].mxu0 %v4909
        %v4911 = vpop.f32.mrb[0].mxu0
        %v4912 = vadd.f32 %v4681, %v4911
        %v4913 = vpop.f32.mrb[0].mxu0
        %4914 = vmatprep.mubr.f32.mxu0 0.0
        %v4915 = vand.u32 %v3838, 4294901760
        %4916 = vmatmul.mubr.f32.gmra.mrb[0].mxu0 %v4915
        %v4917 = vpop.f32.mrb[0].mxu0
        %v4918 = vadd.f32 %v4689, %v4917
        %v4919 = vpop.f32.mrb[0].mxu0
        %4920 = vmatprep.mubr.f32.mxu0 0.0
        %v4921 = vand.u32 %v3839, 4294901760
        %4922 = vmatmul.mubr.f32.gmra.mrb[0].mxu0 %v4921
        %v4923 = vpop.f32.mrb[0].mxu0
        %v4924 = vadd.f32 %v4697, %v4923
        %v4925 = vpop.f32.mrb[0].mxu0
        %4926 = vmatprep.mubr.f32.mxu0 0.0
        %v4927 = vand.u32 %v3840, 4294901760
        %4928 = vmatmul.mubr.f32.gmra.mrb[0].mxu0 %v4927
        %v4929 = vpop.f32.mrb[0].mxu0
        %v4930 = vadd.f32 %v4705, %v4929
        %v4931 = vpop.f32.mrb[0].mxu0
        %4932 = vmatprep.mubr.f32.mxu0 0.0
        %v4933 = vand.u32 %v3841, 4294901760
        %4934 = vmatmul.mubr.f32.gmra.mrb[0].mxu0 %v4933
        %v4935 = vpop.f32.mrb[0].mxu0
        %v4936 = vadd.f32 %v4713, %v4935
        %v4937 = vpop.f32.mrb[0].mxu0
        %4938 = vmatprep.mubr.f32.mxu0 0.0
        %v4939 = vand.u32 %v3842, 4294901760
        %4940 = vmatmul.mubr.f32.gmra.mrb[0].mxu0 %v4939
        %v4941 = vpop.f32.mrb[0].mxu0
        %v4942 = vadd.f32 %v4721, %v4941
        %v4943 = vpop.f32.mrb[0].mxu0
        %4944 = vmatprep.mubr.f32.mxu0 0.0
        %v4945 = vand.u32 %v3843, 4294901760
        %4946 = vmatmul.mubr.f32.gmra.mrb[0].mxu0 %v4945
        %v4947 = vpop.f32.mrb[0].mxu0
        %v4948 = vadd.f32 %v4729, %v4947
        %v4949 = vpop.f32.mrb[0].mxu0
        %4950 = vmatprep.mubr.f32.mxu0 0.0
        %v4951 = vand.u32 %v3844, 4294901760
        %4952 = vmatmul.mubr.f32.gmra.mrb[0].mxu0 %v4951
        %v4953 = vpop.f32.mrb[0].mxu0
        %v4954 = vadd.f32 %v4737, %v4953
        %v4955 = vpop.f32.mrb[0].mxu0
        %4956 = vmatprep.mubr.f32.mxu0 0.0
        %v4957 = vand.u32 %v3845, 4294901760
        %4958 = vmatmul.mubr.f32.gmra.mrb[0].mxu0 %v4957
        %v4959 = vpop.f32.mrb[0].mxu0
        %v4960 = vadd.f32 %v4745, %v4959
        %v4961 = vpop.f32.mrb[0].mxu0
        %4962 = vmatprep.mubr.f32.mxu0 0.0
        %v4963 = vand.u32 %v3846, 4294901760
        %4964 = vmatmul.mubr.f32.gmra.mrb[0].mxu0 %v4963
        %v4965 = vpop.f32.mrb[0].mxu0
        %v4966 = vadd.f32 %v4753, %v4965
        %v4967 = vpop.f32.mrb[0].mxu0
        %4968 = vmatprep.mubr.f32.mxu0 0.0
        %v4969 = vand.u32 %v3847, 4294901760
        %4970 = vmatmul.mubr.f32.gmra.mrb[0].mxu0 %v4969
        %v4971 = vpop.f32.mrb[0].mxu0
        %v4972 = vadd.f32 %v4761, %v4971
        %v4973 = vpop.f32.mrb[0].mxu0
        %4974 = vmatprep.mubr.f32.mxu0 0.0
        %v4975 = vand.u32 %v3848, 4294901760
        %4976 = vmatmul.mubr.f32.gmra.mrb[0].mxu0 %v4975
        %v4977 = vpop.f32.mrb[0].mxu0
        %v4978 = vadd.f32 %v4769, %v4977
        %v4979 = vpop.f32.mrb[0].mxu0
        %4980 = vdwg.mxu0
        %4981 = vmatprep.subr.mxu0 0.0
        %v4982 = vand.u32 %v3849, 4294901760
        %4983 = vmatpush1.msra.mxu0 %v4982
        %4984 = vmatprep.subr.mxu0 0.0
        %v4985 = vand.u32 %v3850, 4294901760
        %4986 = vmatpush1.msra.mxu0 %v4985
        %4987 = vmatprep.subr.mxu0 0.0
        %v4988 = vand.u32 %v3851, 4294901760
        %4989 = vmatpush1.msra.mxu0 %v4988
        %4990 = vmatprep.subr.mxu0 0.0
        %v4991 = vand.u32 %v3852, 4294901760
        %4992 = vmatpush1.msra.mxu0 %v4991
        %4993 = vmatprep.subr.mxu0 0.0
        %v4994 = vand.u32 %v3853, 4294901760
        %4995 = vmatpush1.msra.mxu0 %v4994
        %4996 = vmatprep.subr.mxu0 0.0
        %v4997 = vand.u32 %v3854, 4294901760
        %4998 = vmatpush1.msra.mxu0 %v4997
        %4999 = vmatprep.subr.mxu0 0.0
        %v5000 = vand.u32 %v3855, 4294901760
        %5001 = vmatpush1.msra.mxu0 %v5000
        %5002 = vmatprep.subr.mxu0 0.0
        %v5003 = vand.u32 %v3856, 4294901760
        %5004 = vmatpush1.msra.mxu0 %v5003
        %5005 = vmatprep.subr.mxu0 0.0
        %v5006 = vand.u32 %v3857, 4294901760
        %5007 = vmatpush1.msra.mxu0 %v5006
        %5008 = vmatprep.subr.mxu0 0.0
        %v5009 = vand.u32 %v3858, 4294901760
        %5010 = vmatpush1.msra.mxu0 %v5009
        %5011 = vmatprep.subr.mxu0 0.0
        %v5012 = vand.u32 %v3859, 4294901760
        %5013 = vmatpush1.msra.mxu0 %v5012
        %5014 = vmatprep.subr.mxu0 0.0
        %v5015 = vand.u32 %v3860, 4294901760
        %5016 = vmatpush1.msra.mxu0 %v5015
        %5017 = vmatprep.subr.mxu0 0.0
        %v5018 = vand.u32 %v3861, 4294901760
        %5019 = vmatpush1.msra.mxu0 %v5018
        %5020 = vmatprep.subr.mxu0 0.0
        %v5021 = vand.u32 %v3862, 4294901760
        %5022 = vmatpush1.msra.mxu0 %v5021
        %5023 = vmatprep.subr.mxu0 0.0
        %v5024 = vand.u32 %v3863, 4294901760
        %5025 = vmatpush1.msra.mxu0 %v5024
        %5026 = vmatprep.subr.mxu0 0.0
        %v5027 = vand.u32 %v3864, 4294901760
        %5028 = vmatpush1.msra.mxu0 %v5027
        %5029 = vmatprep.subr.mxu0 0.0
        %5030 = vmatpush1.msra.mxu0 0.0
        %5031 = vmatprep.subr.mxu0 0.0
        %5032 = vmatpush1.msra.mxu0 0.0
        %5033 = vmatprep.subr.mxu0 0.0
        %5034 = vmatpush1.msra.mxu0 0.0
        %5035 = vmatprep.subr.mxu0 0.0
        %5036 = vmatpush1.msra.mxu0 0.0
        %5037 = vmatprep.subr.mxu0 0.0
        %5038 = vmatpush1.msra.mxu0 0.0
        %5039 = vmatprep.subr.mxu0 0.0
        %5040 = vmatpush1.msra.mxu0 0.0
        %5041 = vmatprep.subr.mxu0 0.0
        %5042 = vmatpush1.msra.mxu0 0.0
        %5043 = vmatprep.subr.mxu0 0.0
        %5044 = vmatpush1.msra.mxu0 0.0
        %5045 = vmatprep.subr.mxu0 0.0
        %5046 = vmatpush1.msra.mxu0 0.0
        %5047 = vmatprep.subr.mxu0 0.0
        %5048 = vmatpush1.msra.mxu0 0.0
        %5049 = vmatprep.subr.mxu0 0.0
        %5050 = vmatpush1.msra.mxu0 0.0
        %5051 = vmatprep.subr.mxu0 0.0
        %5052 = vmatpush1.msra.mxu0 0.0
        %5053 = vmatprep.subr.mxu0 0.0
        %5054 = vmatpush1.msra.mxu0 0.0
        %5055 = vmatprep.subr.mxu0 0.0
        %5056 = vmatpush1.msra.mxu0 0.0
        %5057 = vmatprep.subr.mxu0 0.0
        %5058 = vmatpush1.msra.mxu0 0.0
        %5059 = vmatprep.subr.mxu0 0.0
        %5060 = vmatpush1.msra.mxu0 0.0
        %5061 = vmatprep.mubr.f32.mxu0 0.0
        %v5062 = vand.u32 %v3833, 4294901760
        %5063 = vmatmul.mubr.f32.gmra.mrb[0].mxu0 %v5062
        %v5064 = vpop.f32.mrb[0].mxu0
        %v5065 = vadd.f32 %v4888, %v5064
        %v5066 = vpop.f32.mrb[0].mxu0
        %5067 = vmatprep.mubr.f32.mxu0 0.0
        %v5068 = vand.u32 %v3834, 4294901760
        %5069 = vmatmul.mubr.f32.gmra.mrb[0].mxu0 %v5068
        %v5070 = vpop.f32.mrb[0].mxu0
        %v5071 = vadd.f32 %v4894, %v5070
        %v5072 = vpop.f32.mrb[0].mxu0
        %5073 = vmatprep.mubr.f32.mxu0 0.0
        %v5074 = vand.u32 %v3835, 4294901760
        %5075 = vmatmul.mubr.f32.gmra.mrb[0].mxu0 %v5074
        %v5076 = vpop.f32.mrb[0].mxu0
        %v5077 = vadd.f32 %v4900, %v5076
        %v5078 = vpop.f32.mrb[0].mxu0
        %5079 = vmatprep.mubr.f32.mxu0 0.0
        %v5080 = vand.u32 %v3836, 4294901760
        %5081 = vmatmul.mubr.f32.gmra.mrb[0].mxu0 %v5080
        %v5082 = vpop.f32.mrb[0].mxu0
        %v5083 = vadd.f32 %v4906, %v5082
        %v5084 = vpop.f32.mrb[0].mxu0
        %5085 = vmatprep.mubr.f32.mxu0 0.0
        %v5086 = vand.u32 %v3837, 4294901760
        %5087 = vmatmul.mubr.f32.gmra.mrb[0].mxu0 %v5086
        %v5088 = vpop.f32.mrb[0].mxu0
        %v5089 = vadd.f32 %v4912, %v5088
        %v5090 = vpop.f32.mrb[0].mxu0
        %5091 = vmatprep.mubr.f32.mxu0 0.0
        %v5092 = vand.u32 %v3838, 4294901760
        %5093 = vmatmul.mubr.f32.gmra.mrb[0].mxu0 %v5092
        %v5094 = vpop.f32.mrb[0].mxu0
        %v5095 = vadd.f32 %v4918, %v5094
        %v5096 = vpop.f32.mrb[0].mxu0
        %5097 = vmatprep.mubr.f32.mxu0 0.0
        %v5098 = vand.u32 %v3839, 4294901760
        %5099 = vmatmul.mubr.f32.gmra.mrb[0].mxu0 %v5098
        %v5100 = vpop.f32.mrb[0].mxu0
        %v5101 = vadd.f32 %v4924, %v5100
        %v5102 = vpop.f32.mrb[0].mxu0
        %5103 = vmatprep.mubr.f32.mxu0 0.0
        %v5104 = vand.u32 %v3840, 4294901760
        %5105 = vmatmul.mubr.f32.gmra.mrb[0].mxu0 %v5104
        %v5106 = vpop.f32.mrb[0].mxu0
        %v5107 = vadd.f32 %v4930, %v5106
        %v5108 = vpop.f32.mrb[0].mxu0
        %5109 = vmatprep.mubr.f32.mxu0 0.0
        %v5110 = vand.u32 %v3841, 4294901760
        %5111 = vmatmul.mubr.f32.gmra.mrb[0].mxu0 %v5110
        %v5112 = vpop.f32.mrb[0].mxu0
        %v5113 = vadd.f32 %v4936, %v5112
        %v5114 = vpop.f32.mrb[0].mxu0
        %5115 = vmatprep.mubr.f32.mxu0 0.0
        %v5116 = vand.u32 %v3842, 4294901760
        %5117 = vmatmul.mubr.f32.gmra.mrb[0].mxu0 %v5116
        %v5118 = vpop.f32.mrb[0].mxu0
        %v5119 = vadd.f32 %v4942, %v5118
        %v5120 = vpop.f32.mrb[0].mxu0
        %5121 = vmatprep.mubr.f32.mxu0 0.0
        %v5122 = vand.u32 %v3843, 4294901760
        %5123 = vmatmul.mubr.f32.gmra.mrb[0].mxu0 %v5122
        %v5124 = vpop.f32.mrb[0].mxu0
        %v5125 = vadd.f32 %v4948, %v5124
        %v5126 = vpop.f32.mrb[0].mxu0
        %5127 = vmatprep.mubr.f32.mxu0 0.0
        %v5128 = vand.u32 %v3844, 4294901760
        %5129 = vmatmul.mubr.f32.gmra.mrb[0].mxu0 %v5128
        %v5130 = vpop.f32.mrb[0].mxu0
        %v5131 = vadd.f32 %v4954, %v5130
        %v5132 = vpop.f32.mrb[0].mxu0
        %5133 = vmatprep.mubr.f32.mxu0 0.0
        %v5134 = vand.u32 %v3845, 4294901760
        %5135 = vmatmul.mubr.f32.gmra.mrb[0].mxu0 %v5134
        %v5136 = vpop.f32.mrb[0].mxu0
        %v5137 = vadd.f32 %v4960, %v5136
        %v5138 = vpop.f32.mrb[0].mxu0
        %5139 = vmatprep.mubr.f32.mxu0 0.0
        %v5140 = vand.u32 %v3846, 4294901760
        %5141 = vmatmul.mubr.f32.gmra.mrb[0].mxu0 %v5140
        %v5142 = vpop.f32.mrb[0].mxu0
        %v5143 = vadd.f32 %v4966, %v5142
        %v5144 = vpop.f32.mrb[0].mxu0
        %5145 = vmatprep.mubr.f32.mxu0 0.0
        %v5146 = vand.u32 %v3847, 4294901760
        %5147 = vmatmul.mubr.f32.gmra.mrb[0].mxu0 %v5146
        %v5148 = vpop.f32.mrb[0].mxu0
        %v5149 = vadd.f32 %v4972, %v5148
        %v5150 = vpop.f32.mrb[0].mxu0
        %5151 = vmatprep.mubr.f32.mxu0 0.0
        %v5152 = vand.u32 %v3848, 4294901760
        %5153 = vmatmul.mubr.f32.gmra.mrb[0].mxu0 %v5152
        %v5154 = vpop.f32.mrb[0].mxu0
        %v5155 = vadd.f32 %v4978, %v5154
        %v5156 = vpop.f32.mrb[0].mxu0
        %5157 = vdwg.mxu0
        %v5158 = vld [vmem:[%s8] sm:$0x1]
        %v5160 = vlaneseq
        %v5161 = vshrl.u32 %v5160, 7
        %v5162 = vsub.s32 0, %v5161
        %v5163 = vrot.slane %v5158, %v5162
        %v5165 = vmul.f32 %v376, %v5163
        %v5166 = vmul.f32 %v377, %v5163
        %v5167 = vmul.f32 %v378, %v5163
        %v5168 = vmul.f32 %v379, %v5163
        %v5169 = vmul.f32 %v380, %v5163
        %v5170 = vmul.f32 %v381, %v5163
        %v5171 = vmul.f32 %v382, %v5163
        %v5172 = vmul.f32 %v383, %v5163
        %v5173 = vmul.f32 %v384, %v5163
        %v5174 = vmul.f32 %v385, %v5163
        %v5175 = vmul.f32 %v386, %v5163
        %v5176 = vmul.f32 %v387, %v5163
        %v5177 = vmul.f32 %v388, %v5163
        %v5178 = vmul.f32 %v389, %v5163
        %v5179 = vmul.f32 %v390, %v5163
        %v5180 = vmul.f32 %v391, %v5163
        %v5181 = vmul.f32 %v392, %v5163
        %v5182 = vmul.f32 %v393, %v5163
        %v5183 = vmul.f32 %v394, %v5163
        %v5184 = vmul.f32 %v395, %v5163
        %v5185 = vmul.f32 %v396, %v5163
        %v5186 = vmul.f32 %v397, %v5163
        %v5187 = vmul.f32 %v398, %v5163
        %v5188 = vmul.f32 %v399, %v5163
        %v5189 = vmul.f32 %v400, %v5163
        %v5190 = vmul.f32 %v401, %v5163
        %v5191 = vmul.f32 %v402, %v5163
        %v5192 = vmul.f32 %v403, %v5163
        %v5193 = vmul.f32 %v404, %v5163
        %v5194 = vmul.f32 %v405, %v5163
        %v5195 = vmul.f32 %v406, %v5163
        %v5196 = vmul.f32 %v407, %v5163
        %v5197 = vmul.f32 %v408, %v5163
        %v5198 = vmul.f32 %v409, %v5163
        %v5199 = vmul.f32 %v410, %v5163
        %v5200 = vmul.f32 %v411, %v5163
        %v5201 = vmul.f32 %v412, %v5163
        %v5202 = vmul.f32 %v413, %v5163
        %v5203 = vmul.f32 %v414, %v5163
        %v5204 = vmul.f32 %v415, %v5163
        %v5205 = vmul.f32 %v416, %v5163
        %v5206 = vmul.f32 %v417, %v5163
        %v5207 = vmul.f32 %v418, %v5163
        %v5208 = vmul.f32 %v419, %v5163
        %v5209 = vmul.f32 %v420, %v5163
        %v5210 = vmul.f32 %v421, %v5163
        %v5211 = vmul.f32 %v422, %v5163
        %v5212 = vmul.f32 %v423, %v5163
        %v5213 = vmul.f32 %v424, %v5163
        %v5214 = vmul.f32 %v425, %v5163
        %v5215 = vmul.f32 %v426, %v5163
        %v5216 = vmul.f32 %v427, %v5163
        %v5217 = vmul.f32 %v428, %v5163
        %v5218 = vmul.f32 %v429, %v5163
        %v5219 = vmul.f32 %v430, %v5163
        %v5220 = vmul.f32 %v431, %v5163
        %v5221 = vmul.f32 %v432, %v5163
        %v5222 = vmul.f32 %v433, %v5163
        %v5223 = vmul.f32 %v434, %v5163
        %v5224 = vmul.f32 %v435, %v5163
        %v5225 = vmul.f32 %v436, %v5163
        %v5226 = vmul.f32 %v437, %v5163
        %v5227 = vmul.f32 %v438, %v5163
        %v5228 = vmul.f32 %v439, %v5163
        %v5229 = vmul.f32 %v440, %v5163
        %v5230 = vmul.f32 %v441, %v5163
        %v5231 = vmul.f32 %v442, %v5163
        %v5232 = vmul.f32 %v443, %v5163
        %v5233 = vmul.f32 %v444, %v5163
        %v5234 = vmul.f32 %v445, %v5163
        %v5235 = vmul.f32 %v446, %v5163
        %v5236 = vmul.f32 %v447, %v5163
        %v5237 = vmul.f32 %v448, %v5163
        %v5238 = vmul.f32 %v449, %v5163
        %v5239 = vmul.f32 %v450, %v5163
        %v5240 = vmul.f32 %v451, %v5163
        %v5241 = vmul.f32 %v452, %v5163
        %v5242 = vmul.f32 %v453, %v5163
        %v5243 = vmul.f32 %v454, %v5163
        %v5244 = vmul.f32 %v455, %v5163
        %v5245 = vmul.f32 %v456, %v5163
        %v5246 = vmul.f32 %v457, %v5163
        %v5247 = vmul.f32 %v458, %v5163
        %v5248 = vmul.f32 %v459, %v5163
        %v5249 = vmul.f32 %v460, %v5163
        %v5250 = vmul.f32 %v461, %v5163
        %v5251 = vmul.f32 %v462, %v5163
        %v5252 = vmul.f32 %v463, %v5163
        %v5253 = vmul.f32 %v464, %v5163
        %v5254 = vmul.f32 %v465, %v5163
        %v5255 = vmul.f32 %v466, %v5163
        %v5256 = vmul.f32 %v467, %v5163
        %v5257 = vmul.f32 %v468, %v5163
        %v5258 = vmul.f32 %v469, %v5163
        %v5259 = vmul.f32 %v470, %v5163
        %v5260 = vmul.f32 %v471, %v5163
        %v5261 = vmul.f32 %v472, %v5163
        %v5262 = vmul.f32 %v473, %v5163
        %v5263 = vmul.f32 %v474, %v5163
        %v5264 = vmul.f32 %v475, %v5163
        %v5265 = vmul.f32 %v476, %v5163
        %v5266 = vmul.f32 %v477, %v5163
        %v5267 = vmul.f32 %v478, %v5163
        %v5268 = vmul.f32 %v479, %v5163
        %v5269 = vmul.f32 %v480, %v5163
        %v5270 = vmul.f32 %v481, %v5163
        %v5271 = vmul.f32 %v482, %v5163
        %v5272 = vmul.f32 %v483, %v5163
        %v5273 = vmul.f32 %v484, %v5163
        %v5274 = vmul.f32 %v485, %v5163
        %v5275 = vmul.f32 %v486, %v5163
        %v5276 = vmul.f32 %v487, %v5163
        %v5277 = vmul.f32 %v488, %v5163
        %v5278 = vmul.f32 %v489, %v5163
        %v5279 = vmul.f32 %v490, %v5163
        %v5280 = vmul.f32 %v491, %v5163
        %v5281 = vmul.f32 %v492, %v5163
        %v5282 = vmul.f32 %v493, %v5163
        %v5283 = vmul.f32 %v494, %v5163
        %v5284 = vmul.f32 %v495, %v5163
        %v5285 = vmul.f32 %v496, %v5163
        %v5286 = vmul.f32 %v497, %v5163
        %v5287 = vmul.f32 %v498, %v5163
        %v5288 = vmul.f32 %v499, %v5163
        %v5289 = vmul.f32 %v500, %v5163
        %v5290 = vmul.f32 %v501, %v5163
        %v5291 = vmul.f32 %v502, %v5163
        %v5292 = vmul.f32 %v503, %v5163
        %v5293 = vmul.f32 %v504, %v5163
        %v5294 = vmul.f32 %v505, %v5163
        %v5295 = vmul.f32 %v506, %v5163
        %v5296 = vmul.f32 %v507, %v5163
        %v5297 = vmul.f32 %v508, %v5163
        %v5298 = vmul.f32 %v509, %v5163
        %v5299 = vmul.f32 %v510, %v5163
        %v5300 = vmul.f32 %v511, %v5163
        %v5301 = vmul.f32 %v512, %v5163
        %v5302 = vmul.f32 %v513, %v5163
        %v5303 = vmul.f32 %v514, %v5163
        %v5304 = vmul.f32 %v515, %v5163
        %v5305 = vmul.f32 %v516, %v5163
        %v5306 = vmul.f32 %v517, %v5163
        %v5307 = vmul.f32 %v518, %v5163
        %v5308 = vmul.f32 %v519, %v5163
        %v5309 = vmul.f32 %v520, %v5163
        %v5310 = vmul.f32 %v521, %v5163
        %v5311 = vmul.f32 %v522, %v5163
        %v5312 = vmul.f32 %v523, %v5163
        %v5313 = vmul.f32 %v524, %v5163
        %v5314 = vmul.f32 %v525, %v5163
        %v5315 = vmul.f32 %v526, %v5163
        %v5316 = vmul.f32 %v527, %v5163
        %v5317 = vmul.f32 %v528, %v5163
        %v5318 = vmul.f32 %v529, %v5163
        %v5319 = vmul.f32 %v530, %v5163
        %v5320 = vmul.f32 %v531, %v5163
        %v5321 = vmul.f32 %v532, %v5163
        %v5322 = vmul.f32 %v533, %v5163
        %v5323 = vmul.f32 %v534, %v5163
        %v5324 = vmul.f32 %v535, %v5163
        %v5325 = vmul.f32 %v536, %v5163
        %v5326 = vmul.f32 %v537, %v5163
        %v5327 = vmul.f32 %v538, %v5163
        %v5328 = vmul.f32 %v539, %v5163
        %v5329 = vmul.f32 %v540, %v5163
        %v5330 = vmul.f32 %v541, %v5163
        %v5331 = vmul.f32 %v542, %v5163
        %v5332 = vmul.f32 %v543, %v5163
        %v5333 = vmul.f32 %v544, %v5163
        %v5334 = vmul.f32 %v545, %v5163
        %v5335 = vmul.f32 %v546, %v5163
        %v5336 = vmul.f32 %v547, %v5163
        %v5337 = vmul.f32 %v548, %v5163
        %v5338 = vmul.f32 %v549, %v5163
        %v5339 = vmul.f32 %v550, %v5163
        %v5340 = vmul.f32 %v551, %v5163
        %v5341 = vmul.f32 %v552, %v5163
        %v5342 = vmul.f32 %v553, %v5163
        %v5343 = vmul.f32 %v554, %v5163
        %v5344 = vmul.f32 %v555, %v5163
        %v5345 = vmul.f32 %v556, %v5163
        %v5346 = vmul.f32 %v557, %v5163
        %v5347 = vmul.f32 %v558, %v5163
        %v5348 = vmul.f32 %v559, %v5163
        %v5349 = vmul.f32 %v560, %v5163
        %v5350 = vmul.f32 %v561, %v5163
        %v5351 = vmul.f32 %v562, %v5163
        %v5352 = vmul.f32 %v563, %v5163
        %v5353 = vmul.f32 %v564, %v5163
        %v5354 = vmul.f32 %v565, %v5163
        %v5355 = vmul.f32 %v566, %v5163
        %v5356 = vmul.f32 %v567, %v5163
        %v5357 = vmul.f32 %v568, %v5163
        %v5358 = vmul.f32 %v569, %v5163
        %v5359 = vmul.f32 %v570, %v5163
        %v5360 = vmul.f32 %v571, %v5163
        %v5361 = vmul.f32 %v572, %v5163
        %v5362 = vmul.f32 %v573, %v5163
        %v5363 = vmul.f32 %v574, %v5163
        %v5364 = vmul.f32 %v575, %v5163
        %v5365 = vmul.f32 %v576, %v5163
        %v5366 = vmul.f32 %v577, %v5163
        %v5367 = vmul.f32 %v578, %v5163
        %v5368 = vmul.f32 %v579, %v5163
        %v5369 = vmul.f32 %v580, %v5163
        %v5370 = vmul.f32 %v581, %v5163
        %v5371 = vmul.f32 %v582, %v5163
        %v5372 = vmul.f32 %v583, %v5163
        %v5373 = vmul.f32 %v584, %v5163
        %v5374 = vmul.f32 %v585, %v5163
        %v5375 = vmul.f32 %v586, %v5163
        %v5376 = vmul.f32 %v587, %v5163
        %v5377 = vmul.f32 %v588, %v5163
        %v5378 = vmul.f32 %v589, %v5163
        %v5379 = vmul.f32 %v590, %v5163
        %v5380 = vmul.f32 %v591, %v5163
        %v5381 = vmul.f32 %v592, %v5163
        %v5382 = vmul.f32 %v593, %v5163
        %v5383 = vmul.f32 %v594, %v5163
        %v5384 = vmul.f32 %v595, %v5163
        %v5385 = vmul.f32 %v596, %v5163
        %v5386 = vmul.f32 %v597, %v5163
        %v5387 = vmul.f32 %v598, %v5163
        %v5388 = vmul.f32 %v599, %v5163
        %v5389 = vmul.f32 %v600, %v5163
        %v5390 = vmul.f32 %v601, %v5163
        %v5391 = vmul.f32 %v602, %v5163
        %v5392 = vmul.f32 %v603, %v5163
        %v5393 = vmul.f32 %v604, %v5163
        %v5394 = vmul.f32 %v605, %v5163
        %v5395 = vmul.f32 %v606, %v5163
        %v5396 = vmul.f32 %v607, %v5163
        %v5397 = vmul.f32 %v608, %v5163
        %v5398 = vmul.f32 %v609, %v5163
        %v5399 = vmul.f32 %v610, %v5163
        %v5400 = vmul.f32 %v611, %v5163
        %v5401 = vmul.f32 %v612, %v5163
        %v5402 = vmul.f32 %v613, %v5163
        %v5403 = vmul.f32 %v614, %v5163
        %v5404 = vmul.f32 %v615, %v5163
        %v5405 = vmul.f32 %v616, %v5163
        %v5406 = vmul.f32 %v617, %v5163
        %v5407 = vmul.f32 %v618, %v5163
        %v5408 = vmul.f32 %v619, %v5163
        %v5409 = vmul.f32 %v620, %v5163
        %v5410 = vmul.f32 %v621, %v5163
        %v5411 = vmul.f32 %v622, %v5163
        %v5412 = vmul.f32 %v623, %v5163
        %v5413 = vmul.f32 %v624, %v5163
        %v5414 = vmul.f32 %v625, %v5163
        %v5415 = vmul.f32 %v626, %v5163
        %v5416 = vmul.f32 %v627, %v5163
        %v5417 = vmul.f32 %v628, %v5163
        %v5418 = vmul.f32 %v629, %v5163
        %v5419 = vmul.f32 %v630, %v5163
        %v5420 = vmul.f32 %v631, %v5163
        %vm5421 = vcmask 1047556
        %v5422 = vsel %vm5421, %v5165, 0.0
        %5423 = vadd.xlane.f32.xlu0 %v5422
        %v5424 = vpop.xlane.xlu0 %5423
        %vm5425 = vcmask 1040384
        %v5426 = vsel %vm5425, %v5166, 0.0
        %5427 = vadd.xlane.f32.xlu0 %v5426
        %v5428 = vpop.xlane.xlu0 %5427
        %v5429 = vsel %vm5421, %v5167, 0.0
        %5430 = vadd.xlane.f32.xlu0 %v5429
        %v5431 = vpop.xlane.xlu0 %5430
        %v5432 = vsel %vm5425, %v5168, 0.0
        %5433 = vadd.xlane.f32.xlu0 %v5432
        %v5434 = vpop.xlane.xlu0 %5433
        %v5435 = vsel %vm5421, %v5169, 0.0
        %5436 = vadd.xlane.f32.xlu0 %v5435
        %v5437 = vpop.xlane.xlu0 %5436
        %v5438 = vsel %vm5425, %v5170, 0.0
        %5439 = vadd.xlane.f32.xlu0 %v5438
        %v5440 = vpop.xlane.xlu0 %5439
        %v5441 = vsel %vm5421, %v5171, 0.0
        %5442 = vadd.xlane.f32.xlu0 %v5441
        %v5443 = vpop.xlane.xlu0 %5442
        %v5444 = vsel %vm5425, %v5172, 0.0
        %5445 = vadd.xlane.f32.xlu0 %v5444
        %v5446 = vpop.xlane.xlu0 %5445
        %v5447 = vsel %vm5421, %v5173, 0.0
        %5448 = vadd.xlane.f32.xlu0 %v5447
        %v5449 = vpop.xlane.xlu0 %5448
        %v5450 = vsel %vm5425, %v5174, 0.0
        %5451 = vadd.xlane.f32.xlu0 %v5450
        %v5452 = vpop.xlane.xlu0 %5451
        %v5453 = vsel %vm5421, %v5175, 0.0
        %5454 = vadd.xlane.f32.xlu0 %v5453
        %v5455 = vpop.xlane.xlu0 %5454
        %v5456 = vsel %vm5425, %v5176, 0.0
        %5457 = vadd.xlane.f32.xlu0 %v5456
        %v5458 = vpop.xlane.xlu0 %5457
        %v5459 = vsel %vm5421, %v5177, 0.0
        %5460 = vadd.xlane.f32.xlu0 %v5459
        %v5461 = vpop.xlane.xlu0 %5460
        %v5462 = vsel %vm5425, %v5178, 0.0
        %5463 = vadd.xlane.f32.xlu0 %v5462
        %v5464 = vpop.xlane.xlu0 %5463
        %v5465 = vsel %vm5421, %v5179, 0.0
        %5466 = vadd.xlane.f32.xlu0 %v5465
        %v5467 = vpop.xlane.xlu0 %5466
        %v5468 = vsel %vm5425, %v5180, 0.0
        %5469 = vadd.xlane.f32.xlu0 %v5468
        %v5470 = vpop.xlane.xlu0 %5469
        %v5471 = vsel %vm5421, %v5181, 0.0
        %5472 = vadd.xlane.f32.xlu0 %v5471
        %v5473 = vpop.xlane.xlu0 %5472
        %v5474 = vsel %vm5425, %v5182, 0.0
        %5475 = vadd.xlane.f32.xlu0 %v5474
        %v5476 = vpop.xlane.xlu0 %5475
        %v5477 = vsel %vm5421, %v5183, 0.0
        %5478 = vadd.xlane.f32.xlu0 %v5477
        %v5479 = vpop.xlane.xlu0 %5478
        %v5480 = vsel %vm5425, %v5184, 0.0
        %5481 = vadd.xlane.f32.xlu0 %v5480
        %v5482 = vpop.xlane.xlu0 %5481
        %v5483 = vsel %vm5421, %v5185, 0.0
        %5484 = vadd.xlane.f32.xlu0 %v5483
        %v5485 = vpop.xlane.xlu0 %5484
        %v5486 = vsel %vm5425, %v5186, 0.0
        %5487 = vadd.xlane.f32.xlu0 %v5486
        %v5488 = vpop.xlane.xlu0 %5487
        %v5489 = vsel %vm5421, %v5187, 0.0
        %5490 = vadd.xlane.f32.xlu0 %v5489
        %v5491 = vpop.xlane.xlu0 %5490
        %v5492 = vsel %vm5425, %v5188, 0.0
        %5493 = vadd.xlane.f32.xlu0 %v5492
        %v5494 = vpop.xlane.xlu0 %5493
        %v5495 = vsel %vm5421, %v5189, 0.0
        %5496 = vadd.xlane.f32.xlu0 %v5495
        %v5497 = vpop.xlane.xlu0 %5496
        %v5498 = vsel %vm5425, %v5190, 0.0
        %5499 = vadd.xlane.f32.xlu0 %v5498
        %v5500 = vpop.xlane.xlu0 %5499
        %v5501 = vsel %vm5421, %v5191, 0.0
        %5502 = vadd.xlane.f32.xlu0 %v5501
        %v5503 = vpop.xlane.xlu0 %5502
        %v5504 = vsel %vm5425, %v5192, 0.0
        %5505 = vadd.xlane.f32.xlu0 %v5504
        %v5506 = vpop.xlane.xlu0 %5505
        %v5507 = vsel %vm5421, %v5193, 0.0
        %5508 = vadd.xlane.f32.xlu0 %v5507
        %v5509 = vpop.xlane.xlu0 %5508
        %v5510 = vsel %vm5425, %v5194, 0.0
        %5511 = vadd.xlane.f32.xlu0 %v5510
        %v5512 = vpop.xlane.xlu0 %5511
        %v5513 = vsel %vm5421, %v5195, 0.0
        %5514 = vadd.xlane.f32.xlu0 %v5513
        %v5515 = vpop.xlane.xlu0 %5514
        %v5516 = vsel %vm5425, %v5196, 0.0
        %5517 = vadd.xlane.f32.xlu0 %v5516
        %v5518 = vpop.xlane.xlu0 %5517
        %v5519 = vsel %vm5421, %v5197, 0.0
        %5520 = vadd.xlane.f32.xlu0 %v5519
        %v5521 = vpop.xlane.xlu0 %5520
        %v5522 = vsel %vm5425, %v5198, 0.0
        %5523 = vadd.xlane.f32.xlu0 %v5522
        %v5524 = vpop.xlane.xlu0 %5523
        %v5525 = vsel %vm5421, %v5199, 0.0
        %5526 = vadd.xlane.f32.xlu0 %v5525
        %v5527 = vpop.xlane.xlu0 %5526
        %v5528 = vsel %vm5425, %v5200, 0.0
        %5529 = vadd.xlane.f32.xlu0 %v5528
        %v5530 = vpop.xlane.xlu0 %5529
        %v5531 = vsel %vm5421, %v5201, 0.0
        %5532 = vadd.xlane.f32.xlu0 %v5531
        %v5533 = vpop.xlane.xlu0 %5532
        %v5534 = vsel %vm5425, %v5202, 0.0
        %5535 = vadd.xlane.f32.xlu0 %v5534
        %v5536 = vpop.xlane.xlu0 %5535
        %v5537 = vsel %vm5421, %v5203, 0.0
        %5538 = vadd.xlane.f32.xlu0 %v5537
        %v5539 = vpop.xlane.xlu0 %5538
        %v5540 = vsel %vm5425, %v5204, 0.0
        %5541 = vadd.xlane.f32.xlu0 %v5540
        %v5542 = vpop.xlane.xlu0 %5541
        %v5543 = vsel %vm5421, %v5205, 0.0
        %5544 = vadd.xlane.f32.xlu0 %v5543
        %v5545 = vpop.xlane.xlu0 %5544
        %v5546 = vsel %vm5425, %v5206, 0.0
        %5547 = vadd.xlane.f32.xlu0 %v5546
        %v5548 = vpop.xlane.xlu0 %5547
        %v5549 = vsel %vm5421, %v5207, 0.0
        %5550 = vadd.xlane.f32.xlu0 %v5549
        %v5551 = vpop.xlane.xlu0 %5550
        %v5552 = vsel %vm5425, %v5208, 0.0
        %5553 = vadd.xlane.f32.xlu0 %v5552
        %v5554 = vpop.xlane.xlu0 %5553
        %v5555 = vsel %vm5421, %v5209, 0.0
        %5556 = vadd.xlane.f32.xlu0 %v5555
        %v5557 = vpop.xlane.xlu0 %5556
        %v5558 = vsel %vm5425, %v5210, 0.0
        %5559 = vadd.xlane.f32.xlu0 %v5558
        %v5560 = vpop.xlane.xlu0 %5559
        %v5561 = vsel %vm5421, %v5211, 0.0
        %5562 = vadd.xlane.f32.xlu0 %v5561
        %v5563 = vpop.xlane.xlu0 %5562
        %v5564 = vsel %vm5425, %v5212, 0.0
        %5565 = vadd.xlane.f32.xlu0 %v5564
        %v5566 = vpop.xlane.xlu0 %5565
        %v5567 = vsel %vm5421, %v5213, 0.0
        %5568 = vadd.xlane.f32.xlu0 %v5567
        %v5569 = vpop.xlane.xlu0 %5568
        %v5570 = vsel %vm5425, %v5214, 0.0
        %5571 = vadd.xlane.f32.xlu0 %v5570
        %v5572 = vpop.xlane.xlu0 %5571
        %v5573 = vsel %vm5421, %v5215, 0.0
        %5574 = vadd.xlane.f32.xlu0 %v5573
        %v5575 = vpop.xlane.xlu0 %5574
        %v5576 = vsel %vm5425, %v5216, 0.0
        %5577 = vadd.xlane.f32.xlu0 %v5576
        %v5578 = vpop.xlane.xlu0 %5577
        %v5579 = vsel %vm5421, %v5217, 0.0
        %5580 = vadd.xlane.f32.xlu0 %v5579
        %v5581 = vpop.xlane.xlu0 %5580
        %v5582 = vsel %vm5425, %v5218, 0.0
        %5583 = vadd.xlane.f32.xlu0 %v5582
        %v5584 = vpop.xlane.xlu0 %5583
        %v5585 = vsel %vm5421, %v5219, 0.0
        %5586 = vadd.xlane.f32.xlu0 %v5585
        %v5587 = vpop.xlane.xlu0 %5586
        %v5588 = vsel %vm5425, %v5220, 0.0
        %5589 = vadd.xlane.f32.xlu0 %v5588
        %v5590 = vpop.xlane.xlu0 %5589
        %v5591 = vsel %vm5421, %v5221, 0.0
        %5592 = vadd.xlane.f32.xlu0 %v5591
        %v5593 = vpop.xlane.xlu0 %5592
        %v5594 = vsel %vm5425, %v5222, 0.0
        %5595 = vadd.xlane.f32.xlu0 %v5594
        %v5596 = vpop.xlane.xlu0 %5595
        %v5597 = vsel %vm5421, %v5223, 0.0
        %5598 = vadd.xlane.f32.xlu0 %v5597
        %v5599 = vpop.xlane.xlu0 %5598
        %v5600 = vsel %vm5425, %v5224, 0.0
        %5601 = vadd.xlane.f32.xlu0 %v5600
        %v5602 = vpop.xlane.xlu0 %5601
        %v5603 = vsel %vm5421, %v5225, 0.0
        %5604 = vadd.xlane.f32.xlu0 %v5603
        %v5605 = vpop.xlane.xlu0 %5604
        %v5606 = vsel %vm5425, %v5226, 0.0
        %5607 = vadd.xlane.f32.xlu0 %v5606
        %v5608 = vpop.xlane.xlu0 %5607
        %v5609 = vsel %vm5421, %v5227, 0.0
        %5610 = vadd.xlane.f32.xlu0 %v5609
        %v5611 = vpop.xlane.xlu0 %5610
        %v5612 = vsel %vm5425, %v5228, 0.0
        %5613 = vadd.xlane.f32.xlu0 %v5612
        %v5614 = vpop.xlane.xlu0 %5613
        %v5615 = vsel %vm5421, %v5229, 0.0
        %5616 = vadd.xlane.f32.xlu0 %v5615
        %v5617 = vpop.xlane.xlu0 %5616
        %v5618 = vsel %vm5425, %v5230, 0.0
        %5619 = vadd.xlane.f32.xlu0 %v5618
        %v5620 = vpop.xlane.xlu0 %5619
        %v5621 = vsel %vm5421, %v5231, 0.0
        %5622 = vadd.xlane.f32.xlu0 %v5621
        %v5623 = vpop.xlane.xlu0 %5622
        %v5624 = vsel %vm5425, %v5232, 0.0
        %5625 = vadd.xlane.f32.xlu0 %v5624
        %v5626 = vpop.xlane.xlu0 %5625
        %v5627 = vsel %vm5421, %v5233, 0.0
        %5628 = vadd.xlane.f32.xlu0 %v5627
        %v5629 = vpop.xlane.xlu0 %5628
        %v5630 = vsel %vm5425, %v5234, 0.0
        %5631 = vadd.xlane.f32.xlu0 %v5630
        %v5632 = vpop.xlane.xlu0 %5631
        %v5633 = vsel %vm5421, %v5235, 0.0
        %5634 = vadd.xlane.f32.xlu0 %v5633
        %v5635 = vpop.xlane.xlu0 %5634
        %v5636 = vsel %vm5425, %v5236, 0.0
        %5637 = vadd.xlane.f32.xlu0 %v5636
        %v5638 = vpop.xlane.xlu0 %5637
        %v5639 = vsel %vm5421, %v5237, 0.0
        %5640 = vadd.xlane.f32.xlu0 %v5639
        %v5641 = vpop.xlane.xlu0 %5640
        %v5642 = vsel %vm5425, %v5238, 0.0
        %5643 = vadd.xlane.f32.xlu0 %v5642
        %v5644 = vpop.xlane.xlu0 %5643
        %v5645 = vsel %vm5421, %v5239, 0.0
        %5646 = vadd.xlane.f32.xlu0 %v5645
        %v5647 = vpop.xlane.xlu0 %5646
        %v5648 = vsel %vm5425, %v5240, 0.0
        %5649 = vadd.xlane.f32.xlu0 %v5648
        %v5650 = vpop.xlane.xlu0 %5649
        %v5651 = vsel %vm5421, %v5241, 0.0
        %5652 = vadd.xlane.f32.xlu0 %v5651
        %v5653 = vpop.xlane.xlu0 %5652
        %v5654 = vsel %vm5425, %v5242, 0.0
        %5655 = vadd.xlane.f32.xlu0 %v5654
        %v5656 = vpop.xlane.xlu0 %5655
        %v5657 = vsel %vm5421, %v5243, 0.0
        %5658 = vadd.xlane.f32.xlu0 %v5657
        %v5659 = vpop.xlane.xlu0 %5658
        %v5660 = vsel %vm5425, %v5244, 0.0
        %5661 = vadd.xlane.f32.xlu0 %v5660
        %v5662 = vpop.xlane.xlu0 %5661
        %v5663 = vsel %vm5421, %v5245, 0.0
        %5664 = vadd.xlane.f32.xlu0 %v5663
        %v5665 = vpop.xlane.xlu0 %5664
        %v5666 = vsel %vm5425, %v5246, 0.0
        %5667 = vadd.xlane.f32.xlu0 %v5666
        %v5668 = vpop.xlane.xlu0 %5667
        %v5669 = vsel %vm5421, %v5247, 0.0
        %5670 = vadd.xlane.f32.xlu0 %v5669
        %v5671 = vpop.xlane.xlu0 %5670
        %v5672 = vsel %vm5425, %v5248, 0.0
        %5673 = vadd.xlane.f32.xlu0 %v5672
        %v5674 = vpop.xlane.xlu0 %5673
        %v5675 = vsel %vm5421, %v5249, 0.0
        %5676 = vadd.xlane.f32.xlu0 %v5675
        %v5677 = vpop.xlane.xlu0 %5676
        %v5678 = vsel %vm5425, %v5250, 0.0
        %5679 = vadd.xlane.f32.xlu0 %v5678
        %v5680 = vpop.xlane.xlu0 %5679
        %v5681 = vsel %vm5421, %v5251, 0.0
        %5682 = vadd.xlane.f32.xlu0 %v5681
        %v5683 = vpop.xlane.xlu0 %5682
        %v5684 = vsel %vm5425, %v5252, 0.0
        %5685 = vadd.xlane.f32.xlu0 %v5684
        %v5686 = vpop.xlane.xlu0 %5685
        %v5687 = vsel %vm5421, %v5253, 0.0
        %5688 = vadd.xlane.f32.xlu0 %v5687
        %v5689 = vpop.xlane.xlu0 %5688
        %v5690 = vsel %vm5425, %v5254, 0.0
        %5691 = vadd.xlane.f32.xlu0 %v5690
        %v5692 = vpop.xlane.xlu0 %5691
        %v5693 = vsel %vm5421, %v5255, 0.0
        %5694 = vadd.xlane.f32.xlu0 %v5693
        %v5695 = vpop.xlane.xlu0 %5694
        %v5696 = vsel %vm5425, %v5256, 0.0
        %5697 = vadd.xlane.f32.xlu0 %v5696
        %v5698 = vpop.xlane.xlu0 %5697
        %v5699 = vsel %vm5421, %v5257, 0.0
        %5700 = vadd.xlane.f32.xlu0 %v5699
        %v5701 = vpop.xlane.xlu0 %5700
        %v5702 = vsel %vm5425, %v5258, 0.0
        %5703 = vadd.xlane.f32.xlu0 %v5702
        %v5704 = vpop.xlane.xlu0 %5703
        %v5705 = vsel %vm5421, %v5259, 0.0
        %5706 = vadd.xlane.f32.xlu0 %v5705
        %v5707 = vpop.xlane.xlu0 %5706
        %v5708 = vsel %vm5425, %v5260, 0.0
        %5709 = vadd.xlane.f32.xlu0 %v5708
        %v5710 = vpop.xlane.xlu0 %5709
        %v5711 = vsel %vm5421, %v5261, 0.0
        %5712 = vadd.xlane.f32.xlu0 %v5711
        %v5713 = vpop.xlane.xlu0 %5712
        %v5714 = vsel %vm5425, %v5262, 0.0
        %5715 = vadd.xlane.f32.xlu0 %v5714
        %v5716 = vpop.xlane.xlu0 %5715
        %v5717 = vsel %vm5421, %v5263, 0.0
        %5718 = vadd.xlane.f32.xlu0 %v5717
        %v5719 = vpop.xlane.xlu0 %5718
        %v5720 = vsel %vm5425, %v5264, 0.0
        %5721 = vadd.xlane.f32.xlu0 %v5720
        %v5722 = vpop.xlane.xlu0 %5721
        %v5723 = vsel %vm5421, %v5265, 0.0
        %5724 = vadd.xlane.f32.xlu0 %v5723
        %v5725 = vpop.xlane.xlu0 %5724
        %v5726 = vsel %vm5425, %v5266, 0.0
        %5727 = vadd.xlane.f32.xlu0 %v5726
        %v5728 = vpop.xlane.xlu0 %5727
        %v5729 = vsel %vm5421, %v5267, 0.0
        %5730 = vadd.xlane.f32.xlu0 %v5729
        %v5731 = vpop.xlane.xlu0 %5730
        %v5732 = vsel %vm5425, %v5268, 0.0
        %5733 = vadd.xlane.f32.xlu0 %v5732
        %v5734 = vpop.xlane.xlu0 %5733
        %v5735 = vsel %vm5421, %v5269, 0.0
        %5736 = vadd.xlane.f32.xlu0 %v5735
        %v5737 = vpop.xlane.xlu0 %5736
        %v5738 = vsel %vm5425, %v5270, 0.0
        %5739 = vadd.xlane.f32.xlu0 %v5738
        %v5740 = vpop.xlane.xlu0 %5739
        %v5741 = vsel %vm5421, %v5271, 0.0
        %5742 = vadd.xlane.f32.xlu0 %v5741
        %v5743 = vpop.xlane.xlu0 %5742
        %v5744 = vsel %vm5425, %v5272, 0.0
        %5745 = vadd.xlane.f32.xlu0 %v5744
        %v5746 = vpop.xlane.xlu0 %5745
        %v5747 = vsel %vm5421, %v5273, 0.0
        %5748 = vadd.xlane.f32.xlu0 %v5747
        %v5749 = vpop.xlane.xlu0 %5748
        %v5750 = vsel %vm5425, %v5274, 0.0
        %5751 = vadd.xlane.f32.xlu0 %v5750
        %v5752 = vpop.xlane.xlu0 %5751
        %v5753 = vsel %vm5421, %v5275, 0.0
        %5754 = vadd.xlane.f32.xlu0 %v5753
        %v5755 = vpop.xlane.xlu0 %5754
        %v5756 = vsel %vm5425, %v5276, 0.0
        %5757 = vadd.xlane.f32.xlu0 %v5756
        %v5758 = vpop.xlane.xlu0 %5757
        %v5759 = vsel %vm5421, %v5277, 0.0
        %5760 = vadd.xlane.f32.xlu0 %v5759
        %v5761 = vpop.xlane.xlu0 %5760
        %v5762 = vsel %vm5425, %v5278, 0.0
        %5763 = vadd.xlane.f32.xlu0 %v5762
        %v5764 = vpop.xlane.xlu0 %5763
        %v5765 = vsel %vm5421, %v5279, 0.0
        %5766 = vadd.xlane.f32.xlu0 %v5765
        %v5767 = vpop.xlane.xlu0 %5766
        %v5768 = vsel %vm5425, %v5280, 0.0
        %5769 = vadd.xlane.f32.xlu0 %v5768
        %v5770 = vpop.xlane.xlu0 %5769
        %v5771 = vsel %vm5421, %v5281, 0.0
        %5772 = vadd.xlane.f32.xlu0 %v5771
        %v5773 = vpop.xlane.xlu0 %5772
        %v5774 = vsel %vm5425, %v5282, 0.0
        %5775 = vadd.xlane.f32.xlu0 %v5774
        %v5776 = vpop.xlane.xlu0 %5775
        %v5777 = vsel %vm5421, %v5283, 0.0
        %5778 = vadd.xlane.f32.xlu0 %v5777
        %v5779 = vpop.xlane.xlu0 %5778
        %v5780 = vsel %vm5425, %v5284, 0.0
        %5781 = vadd.xlane.f32.xlu0 %v5780
        %v5782 = vpop.xlane.xlu0 %5781
        %v5783 = vsel %vm5421, %v5285, 0.0
        %5784 = vadd.xlane.f32.xlu0 %v5783
        %v5785 = vpop.xlane.xlu0 %5784
        %v5786 = vsel %vm5425, %v5286, 0.0
        %5787 = vadd.xlane.f32.xlu0 %v5786
        %v5788 = vpop.xlane.xlu0 %5787
        %v5789 = vsel %vm5421, %v5287, 0.0
        %5790 = vadd.xlane.f32.xlu0 %v5789
        %v5791 = vpop.xlane.xlu0 %5790
        %v5792 = vsel %vm5425, %v5288, 0.0
        %5793 = vadd.xlane.f32.xlu0 %v5792
        %v5794 = vpop.xlane.xlu0 %5793
        %v5795 = vsel %vm5421, %v5289, 0.0
        %5796 = vadd.xlane.f32.xlu0 %v5795
        %v5797 = vpop.xlane.xlu0 %5796
        %v5798 = vsel %vm5425, %v5290, 0.0
        %5799 = vadd.xlane.f32.xlu0 %v5798
        %v5800 = vpop.xlane.xlu0 %5799
        %v5801 = vsel %vm5421, %v5291, 0.0
        %5802 = vadd.xlane.f32.xlu0 %v5801
        %v5803 = vpop.xlane.xlu0 %5802
        %v5804 = vsel %vm5425, %v5292, 0.0
        %5805 = vadd.xlane.f32.xlu0 %v5804
        %v5806 = vpop.xlane.xlu0 %5805
        %v5807 = vsel %vm5421, %v5293, 0.0
        %5808 = vadd.xlane.f32.xlu0 %v5807
        %v5809 = vpop.xlane.xlu0 %5808
        %v5810 = vsel %vm5425, %v5294, 0.0
        %5811 = vadd.xlane.f32.xlu0 %v5810
        %v5812 = vpop.xlane.xlu0 %5811
        %v5813 = vsel %vm5421, %v5295, 0.0
        %5814 = vadd.xlane.f32.xlu0 %v5813
        %v5815 = vpop.xlane.xlu0 %5814
        %v5816 = vsel %vm5425, %v5296, 0.0
        %5817 = vadd.xlane.f32.xlu0 %v5816
        %v5818 = vpop.xlane.xlu0 %5817
        %v5819 = vsel %vm5421, %v5297, 0.0
        %5820 = vadd.xlane.f32.xlu0 %v5819
        %v5821 = vpop.xlane.xlu0 %5820
        %v5822 = vsel %vm5425, %v5298, 0.0
        %5823 = vadd.xlane.f32.xlu0 %v5822
        %v5824 = vpop.xlane.xlu0 %5823
        %v5825 = vsel %vm5421, %v5299, 0.0
        %5826 = vadd.xlane.f32.xlu0 %v5825
        %v5827 = vpop.xlane.xlu0 %5826
        %v5828 = vsel %vm5425, %v5300, 0.0
        %5829 = vadd.xlane.f32.xlu0 %v5828
        %v5830 = vpop.xlane.xlu0 %5829
        %v5831 = vsel %vm5421, %v5301, 0.0
        %5832 = vadd.xlane.f32.xlu0 %v5831
        %v5833 = vpop.xlane.xlu0 %5832
        %v5834 = vsel %vm5425, %v5302, 0.0
        %5835 = vadd.xlane.f32.xlu0 %v5834
        %v5836 = vpop.xlane.xlu0 %5835
        %v5837 = vsel %vm5421, %v5303, 0.0
        %5838 = vadd.xlane.f32.xlu0 %v5837
        %v5839 = vpop.xlane.xlu0 %5838
        %v5840 = vsel %vm5425, %v5304, 0.0
        %5841 = vadd.xlane.f32.xlu0 %v5840
        %v5842 = vpop.xlane.xlu0 %5841
        %v5843 = vsel %vm5421, %v5305, 0.0
        %5844 = vadd.xlane.f32.xlu0 %v5843
        %v5845 = vpop.xlane.xlu0 %5844
        %v5846 = vsel %vm5425, %v5306, 0.0
        %5847 = vadd.xlane.f32.xlu0 %v5846
        %v5848 = vpop.xlane.xlu0 %5847
        %v5849 = vsel %vm5421, %v5307, 0.0
        %5850 = vadd.xlane.f32.xlu0 %v5849
        %v5851 = vpop.xlane.xlu0 %5850
        %v5852 = vsel %vm5425, %v5308, 0.0
        %5853 = vadd.xlane.f32.xlu0 %v5852
        %v5854 = vpop.xlane.xlu0 %5853
        %v5855 = vsel %vm5421, %v5309, 0.0
        %5856 = vadd.xlane.f32.xlu0 %v5855
        %v5857 = vpop.xlane.xlu0 %5856
        %v5858 = vsel %vm5425, %v5310, 0.0
        %5859 = vadd.xlane.f32.xlu0 %v5858
        %v5860 = vpop.xlane.xlu0 %5859
        %v5861 = vsel %vm5421, %v5311, 0.0
        %5862 = vadd.xlane.f32.xlu0 %v5861
        %v5863 = vpop.xlane.xlu0 %5862
        %v5864 = vsel %vm5425, %v5312, 0.0
        %5865 = vadd.xlane.f32.xlu0 %v5864
        %v5866 = vpop.xlane.xlu0 %5865
        %v5867 = vsel %vm5421, %v5313, 0.0
        %5868 = vadd.xlane.f32.xlu0 %v5867
        %v5869 = vpop.xlane.xlu0 %5868
        %v5870 = vsel %vm5425, %v5314, 0.0
        %5871 = vadd.xlane.f32.xlu0 %v5870
        %v5872 = vpop.xlane.xlu0 %5871
        %v5873 = vsel %vm5421, %v5315, 0.0
        %5874 = vadd.xlane.f32.xlu0 %v5873
        %v5875 = vpop.xlane.xlu0 %5874
        %v5876 = vsel %vm5425, %v5316, 0.0
        %5877 = vadd.xlane.f32.xlu0 %v5876
        %v5878 = vpop.xlane.xlu0 %5877
        %v5879 = vsel %vm5421, %v5317, 0.0
        %5880 = vadd.xlane.f32.xlu0 %v5879
        %v5881 = vpop.xlane.xlu0 %5880
        %v5882 = vsel %vm5425, %v5318, 0.0
        %5883 = vadd.xlane.f32.xlu0 %v5882
        %v5884 = vpop.xlane.xlu0 %5883
        %v5885 = vsel %vm5421, %v5319, 0.0
        %5886 = vadd.xlane.f32.xlu0 %v5885
        %v5887 = vpop.xlane.xlu0 %5886
        %v5888 = vsel %vm5425, %v5320, 0.0
        %5889 = vadd.xlane.f32.xlu0 %v5888
        %v5890 = vpop.xlane.xlu0 %5889
        %v5891 = vsel %vm5421, %v5321, 0.0
        %5892 = vadd.xlane.f32.xlu0 %v5891
        %v5893 = vpop.xlane.xlu0 %5892
        %v5894 = vsel %vm5425, %v5322, 0.0
        %5895 = vadd.xlane.f32.xlu0 %v5894
        %v5896 = vpop.xlane.xlu0 %5895
        %v5897 = vsel %vm5421, %v5323, 0.0
        %5898 = vadd.xlane.f32.xlu0 %v5897
        %v5899 = vpop.xlane.xlu0 %5898
        %v5900 = vsel %vm5425, %v5324, 0.0
        %5901 = vadd.xlane.f32.xlu0 %v5900
        %v5902 = vpop.xlane.xlu0 %5901
        %v5903 = vsel %vm5421, %v5325, 0.0
        %5904 = vadd.xlane.f32.xlu0 %v5903
        %v5905 = vpop.xlane.xlu0 %5904
        %v5906 = vsel %vm5425, %v5326, 0.0
        %5907 = vadd.xlane.f32.xlu0 %v5906
        %v5908 = vpop.xlane.xlu0 %5907
        %v5909 = vsel %vm5421, %v5327, 0.0
        %5910 = vadd.xlane.f32.xlu0 %v5909
        %v5911 = vpop.xlane.xlu0 %5910
        %v5912 = vsel %vm5425, %v5328, 0.0
        %5913 = vadd.xlane.f32.xlu0 %v5912
        %v5914 = vpop.xlane.xlu0 %5913
        %v5915 = vsel %vm5421, %v5329, 0.0
        %5916 = vadd.xlane.f32.xlu0 %v5915
        %v5917 = vpop.xlane.xlu0 %5916
        %v5918 = vsel %vm5425, %v5330, 0.0
        %5919 = vadd.xlane.f32.xlu0 %v5918
        %v5920 = vpop.xlane.xlu0 %5919
        %v5921 = vsel %vm5421, %v5331, 0.0
        %5922 = vadd.xlane.f32.xlu0 %v5921
        %v5923 = vpop.xlane.xlu0 %5922
        %v5924 = vsel %vm5425, %v5332, 0.0
        %5925 = vadd.xlane.f32.xlu0 %v5924
        %v5926 = vpop.xlane.xlu0 %5925
        %v5927 = vsel %vm5421, %v5333, 0.0
        %5928 = vadd.xlane.f32.xlu0 %v5927
        %v5929 = vpop.xlane.xlu0 %5928
        %v5930 = vsel %vm5425, %v5334, 0.0
        %5931 = vadd.xlane.f32.xlu0 %v5930
        %v5932 = vpop.xlane.xlu0 %5931
        %v5933 = vsel %vm5421, %v5335, 0.0
        %5934 = vadd.xlane.f32.xlu0 %v5933
        %v5935 = vpop.xlane.xlu0 %5934
        %v5936 = vsel %vm5425, %v5336, 0.0
        %5937 = vadd.xlane.f32.xlu0 %v5936
        %v5938 = vpop.xlane.xlu0 %5937
        %v5939 = vsel %vm5421, %v5337, 0.0
        %5940 = vadd.xlane.f32.xlu0 %v5939
        %v5941 = vpop.xlane.xlu0 %5940
        %v5942 = vsel %vm5425, %v5338, 0.0
        %5943 = vadd.xlane.f32.xlu0 %v5942
        %v5944 = vpop.xlane.xlu0 %5943
        %v5945 = vsel %vm5421, %v5339, 0.0
        %5946 = vadd.xlane.f32.xlu0 %v5945
        %v5947 = vpop.xlane.xlu0 %5946
        %v5948 = vsel %vm5425, %v5340, 0.0
        %5949 = vadd.xlane.f32.xlu0 %v5948
        %v5950 = vpop.xlane.xlu0 %5949
        %v5951 = vsel %vm5421, %v5341, 0.0
        %5952 = vadd.xlane.f32.xlu0 %v5951
        %v5953 = vpop.xlane.xlu0 %5952
        %v5954 = vsel %vm5425, %v5342, 0.0
        %5955 = vadd.xlane.f32.xlu0 %v5954
        %v5956 = vpop.xlane.xlu0 %5955
        %v5957 = vsel %vm5421, %v5343, 0.0
        %5958 = vadd.xlane.f32.xlu0 %v5957
        %v5959 = vpop.xlane.xlu0 %5958
        %v5960 = vsel %vm5425, %v5344, 0.0
        %5961 = vadd.xlane.f32.xlu0 %v5960
        %v5962 = vpop.xlane.xlu0 %5961
        %v5963 = vsel %vm5421, %v5345, 0.0
        %5964 = vadd.xlane.f32.xlu0 %v5963
        %v5965 = vpop.xlane.xlu0 %5964
        %v5966 = vsel %vm5425, %v5346, 0.0
        %5967 = vadd.xlane.f32.xlu0 %v5966
        %v5968 = vpop.xlane.xlu0 %5967
        %v5969 = vsel %vm5421, %v5347, 0.0
        %5970 = vadd.xlane.f32.xlu0 %v5969
        %v5971 = vpop.xlane.xlu0 %5970
        %v5972 = vsel %vm5425, %v5348, 0.0
        %5973 = vadd.xlane.f32.xlu0 %v5972
        %v5974 = vpop.xlane.xlu0 %5973
        %v5975 = vsel %vm5421, %v5349, 0.0
        %5976 = vadd.xlane.f32.xlu0 %v5975
        %v5977 = vpop.xlane.xlu0 %5976
        %v5978 = vsel %vm5425, %v5350, 0.0
        %5979 = vadd.xlane.f32.xlu0 %v5978
        %v5980 = vpop.xlane.xlu0 %5979
        %v5981 = vsel %vm5421, %v5351, 0.0
        %5982 = vadd.xlane.f32.xlu0 %v5981
        %v5983 = vpop.xlane.xlu0 %5982
        %v5984 = vsel %vm5425, %v5352, 0.0
        %5985 = vadd.xlane.f32.xlu0 %v5984
        %v5986 = vpop.xlane.xlu0 %5985
        %v5987 = vsel %vm5421, %v5353, 0.0
        %5988 = vadd.xlane.f32.xlu0 %v5987
        %v5989 = vpop.xlane.xlu0 %5988
        %v5990 = vsel %vm5425, %v5354, 0.0
        %5991 = vadd.xlane.f32.xlu0 %v5990
        %v5992 = vpop.xlane.xlu0 %5991
        %v5993 = vsel %vm5421, %v5355, 0.0
        %5994 = vadd.xlane.f32.xlu0 %v5993
        %v5995 = vpop.xlane.xlu0 %5994
        %v5996 = vsel %vm5425, %v5356, 0.0
        %5997 = vadd.xlane.f32.xlu0 %v5996
        %v5998 = vpop.xlane.xlu0 %5997
        %v5999 = vsel %vm5421, %v5357, 0.0
        %6000 = vadd.xlane.f32.xlu0 %v5999
        %v6001 = vpop.xlane.xlu0 %6000
        %v6002 = vsel %vm5425, %v5358, 0.0
        %6003 = vadd.xlane.f32.xlu0 %v6002
        %v6004 = vpop.xlane.xlu0 %6003
        %v6005 = vsel %vm5421, %v5359, 0.0
        %6006 = vadd.xlane.f32.xlu0 %v6005
        %v6007 = vpop.xlane.xlu0 %6006
        %v6008 = vsel %vm5425, %v5360, 0.0
        %6009 = vadd.xlane.f32.xlu0 %v6008
        %v6010 = vpop.xlane.xlu0 %6009
        %v6011 = vsel %vm5421, %v5361, 0.0
        %6012 = vadd.xlane.f32.xlu0 %v6011
        %v6013 = vpop.xlane.xlu0 %6012
        %v6014 = vsel %vm5425, %v5362, 0.0
        %6015 = vadd.xlane.f32.xlu0 %v6014
        %v6016 = vpop.xlane.xlu0 %6015
        %v6017 = vsel %vm5421, %v5363, 0.0
        %6018 = vadd.xlane.f32.xlu0 %v6017
        %v6019 = vpop.xlane.xlu0 %6018
        %v6020 = vsel %vm5425, %v5364, 0.0
        %6021 = vadd.xlane.f32.xlu0 %v6020
        %v6022 = vpop.xlane.xlu0 %6021
        %v6023 = vsel %vm5421, %v5365, 0.0
        %6024 = vadd.xlane.f32.xlu0 %v6023
        %v6025 = vpop.xlane.xlu0 %6024
        %v6026 = vsel %vm5425, %v5366, 0.0
        %6027 = vadd.xlane.f32.xlu0 %v6026
        %v6028 = vpop.xlane.xlu0 %6027
        %v6029 = vsel %vm5421, %v5367, 0.0
        %6030 = vadd.xlane.f32.xlu0 %v6029
        %v6031 = vpop.xlane.xlu0 %6030
        %v6032 = vsel %vm5425, %v5368, 0.0
        %6033 = vadd.xlane.f32.xlu0 %v6032
        %v6034 = vpop.xlane.xlu0 %6033
        %v6035 = vsel %vm5421, %v5369, 0.0
        %6036 = vadd.xlane.f32.xlu0 %v6035
        %v6037 = vpop.xlane.xlu0 %6036
        %v6038 = vsel %vm5425, %v5370, 0.0
        %6039 = vadd.xlane.f32.xlu0 %v6038
        %v6040 = vpop.xlane.xlu0 %6039
        %v6041 = vsel %vm5421, %v5371, 0.0
        %6042 = vadd.xlane.f32.xlu0 %v6041
        %v6043 = vpop.xlane.xlu0 %6042
        %v6044 = vsel %vm5425, %v5372, 0.0
        %6045 = vadd.xlane.f32.xlu0 %v6044
        %v6046 = vpop.xlane.xlu0 %6045
        %v6047 = vsel %vm5421, %v5373, 0.0
        %6048 = vadd.xlane.f32.xlu0 %v6047
        %v6049 = vpop.xlane.xlu0 %6048
        %v6050 = vsel %vm5425, %v5374, 0.0
        %6051 = vadd.xlane.f32.xlu0 %v6050
        %v6052 = vpop.xlane.xlu0 %6051
        %v6053 = vsel %vm5421, %v5375, 0.0
        %6054 = vadd.xlane.f32.xlu0 %v6053
        %v6055 = vpop.xlane.xlu0 %6054
        %v6056 = vsel %vm5425, %v5376, 0.0
        %6057 = vadd.xlane.f32.xlu0 %v6056
        %v6058 = vpop.xlane.xlu0 %6057
        %v6059 = vsel %vm5421, %v5377, 0.0
        %6060 = vadd.xlane.f32.xlu0 %v6059
        %v6061 = vpop.xlane.xlu0 %6060
        %v6062 = vsel %vm5425, %v5378, 0.0
        %6063 = vadd.xlane.f32.xlu0 %v6062
        %v6064 = vpop.xlane.xlu0 %6063
        %v6065 = vsel %vm5421, %v5379, 0.0
        %6066 = vadd.xlane.f32.xlu0 %v6065
        %v6067 = vpop.xlane.xlu0 %6066
        %v6068 = vsel %vm5425, %v5380, 0.0
        %6069 = vadd.xlane.f32.xlu0 %v6068
        %v6070 = vpop.xlane.xlu0 %6069
        %v6071 = vsel %vm5421, %v5381, 0.0
        %6072 = vadd.xlane.f32.xlu0 %v6071
        %v6073 = vpop.xlane.xlu0 %6072
        %v6074 = vsel %vm5425, %v5382, 0.0
        %6075 = vadd.xlane.f32.xlu0 %v6074
        %v6076 = vpop.xlane.xlu0 %6075
        %v6077 = vsel %vm5421, %v5383, 0.0
        %6078 = vadd.xlane.f32.xlu0 %v6077
        %v6079 = vpop.xlane.xlu0 %6078
        %v6080 = vsel %vm5425, %v5384, 0.0
        %6081 = vadd.xlane.f32.xlu0 %v6080
        %v6082 = vpop.xlane.xlu0 %6081
        %v6083 = vsel %vm5421, %v5385, 0.0
        %6084 = vadd.xlane.f32.xlu0 %v6083
        %v6085 = vpop.xlane.xlu0 %6084
        %v6086 = vsel %vm5425, %v5386, 0.0
        %6087 = vadd.xlane.f32.xlu0 %v6086
        %v6088 = vpop.xlane.xlu0 %6087
        %v6089 = vsel %vm5421, %v5387, 0.0
        %6090 = vadd.xlane.f32.xlu0 %v6089
        %v6091 = vpop.xlane.xlu0 %6090
        %v6092 = vsel %vm5425, %v5388, 0.0
        %6093 = vadd.xlane.f32.xlu0 %v6092
        %v6094 = vpop.xlane.xlu0 %6093
        %v6095 = vsel %vm5421, %v5389, 0.0
        %6096 = vadd.xlane.f32.xlu0 %v6095
        %v6097 = vpop.xlane.xlu0 %6096
        %v6098 = vsel %vm5425, %v5390, 0.0
        %6099 = vadd.xlane.f32.xlu0 %v6098
        %v6100 = vpop.xlane.xlu0 %6099
        %v6101 = vsel %vm5421, %v5391, 0.0
        %6102 = vadd.xlane.f32.xlu0 %v6101
        %v6103 = vpop.xlane.xlu0 %6102
        %v6104 = vsel %vm5425, %v5392, 0.0
        %6105 = vadd.xlane.f32.xlu0 %v6104
        %v6106 = vpop.xlane.xlu0 %6105
        %v6107 = vsel %vm5421, %v5393, 0.0
        %6108 = vadd.xlane.f32.xlu0 %v6107
        %v6109 = vpop.xlane.xlu0 %6108
        %v6110 = vsel %vm5425, %v5394, 0.0
        %6111 = vadd.xlane.f32.xlu0 %v6110
        %v6112 = vpop.xlane.xlu0 %6111
        %v6113 = vsel %vm5421, %v5395, 0.0
        %6114 = vadd.xlane.f32.xlu0 %v6113
        %v6115 = vpop.xlane.xlu0 %6114
        %v6116 = vsel %vm5425, %v5396, 0.0
        %6117 = vadd.xlane.f32.xlu0 %v6116
        %v6118 = vpop.xlane.xlu0 %6117
        %v6119 = vsel %vm5421, %v5397, 0.0
        %6120 = vadd.xlane.f32.xlu0 %v6119
        %v6121 = vpop.xlane.xlu0 %6120
        %v6122 = vsel %vm5425, %v5398, 0.0
        %6123 = vadd.xlane.f32.xlu0 %v6122
        %v6124 = vpop.xlane.xlu0 %6123
        %v6125 = vsel %vm5421, %v5399, 0.0
        %6126 = vadd.xlane.f32.xlu0 %v6125
        %v6127 = vpop.xlane.xlu0 %6126
        %v6128 = vsel %vm5425, %v5400, 0.0
        %6129 = vadd.xlane.f32.xlu0 %v6128
        %v6130 = vpop.xlane.xlu0 %6129
        %v6131 = vsel %vm5421, %v5401, 0.0
        %6132 = vadd.xlane.f32.xlu0 %v6131
        %v6133 = vpop.xlane.xlu0 %6132
        %v6134 = vsel %vm5425, %v5402, 0.0
        %6135 = vadd.xlane.f32.xlu0 %v6134
        %v6136 = vpop.xlane.xlu0 %6135
        %v6137 = vsel %vm5421, %v5403, 0.0
        %6138 = vadd.xlane.f32.xlu0 %v6137
        %v6139 = vpop.xlane.xlu0 %6138
        %v6140 = vsel %vm5425, %v5404, 0.0
        %6141 = vadd.xlane.f32.xlu0 %v6140
        %v6142 = vpop.xlane.xlu0 %6141
        %v6143 = vsel %vm5421, %v5405, 0.0
        %6144 = vadd.xlane.f32.xlu0 %v6143
        %v6145 = vpop.xlane.xlu0 %6144
        %v6146 = vsel %vm5425, %v5406, 0.0
        %6147 = vadd.xlane.f32.xlu0 %v6146
        %v6148 = vpop.xlane.xlu0 %6147
        %v6149 = vsel %vm5421, %v5407, 0.0
        %6150 = vadd.xlane.f32.xlu0 %v6149
        %v6151 = vpop.xlane.xlu0 %6150
        %v6152 = vsel %vm5425, %v5408, 0.0
        %6153 = vadd.xlane.f32.xlu0 %v6152
        %v6154 = vpop.xlane.xlu0 %6153
        %v6155 = vsel %vm5421, %v5409, 0.0
        %6156 = vadd.xlane.f32.xlu0 %v6155
        %v6157 = vpop.xlane.xlu0 %6156
        %v6158 = vsel %vm5425, %v5410, 0.0
        %6159 = vadd.xlane.f32.xlu0 %v6158
        %v6160 = vpop.xlane.xlu0 %6159
        %v6161 = vsel %vm5421, %v5411, 0.0
        %6162 = vadd.xlane.f32.xlu0 %v6161
        %v6163 = vpop.xlane.xlu0 %6162
        %v6164 = vsel %vm5425, %v5412, 0.0
        %6165 = vadd.xlane.f32.xlu0 %v6164
        %v6166 = vpop.xlane.xlu0 %6165
        %v6167 = vsel %vm5421, %v5413, 0.0
        %6168 = vadd.xlane.f32.xlu0 %v6167
        %v6169 = vpop.xlane.xlu0 %6168
        %v6170 = vsel %vm5425, %v5414, 0.0
        %6171 = vadd.xlane.f32.xlu0 %v6170
        %v6172 = vpop.xlane.xlu0 %6171
        %v6173 = vsel %vm5421, %v5415, 0.0
        %6174 = vadd.xlane.f32.xlu0 %v6173
        %v6175 = vpop.xlane.xlu0 %6174
        %v6176 = vsel %vm5425, %v5416, 0.0
        %6177 = vadd.xlane.f32.xlu0 %v6176
        %v6178 = vpop.xlane.xlu0 %6177
        %v6179 = vsel %vm5421, %v5417, 0.0
        %6180 = vadd.xlane.f32.xlu0 %v6179
        %v6181 = vpop.xlane.xlu0 %6180
        %v6182 = vsel %vm5425, %v5418, 0.0
        %6183 = vadd.xlane.f32.xlu0 %v6182
        %v6184 = vpop.xlane.xlu0 %6183
        %v6185 = vsel %vm5421, %v5419, 0.0
        %6186 = vadd.xlane.f32.xlu0 %v6185
        %v6187 = vpop.xlane.xlu0 %6186
        %v6188 = vsel %vm5425, %v5420, 0.0
        %6189 = vadd.xlane.f32.xlu0 %v6188
        %v6190 = vpop.xlane.xlu0 %6189
        %v6191 = vld [vmem:[%s369] sm:$0x3]
        %v6192 = vld [vmem:[#allocation2] sm:$0x3]
        %6193 = vmatprep.subr.mxu0 0.0
        %v6194 = vand.u32 %v5065, 4294901760
        %6195 = vmatpush1.msra.mxu0 %v6194
        %6196 = vmatprep.subr.mxu0 0.0
        %v6197 = vand.u32 %v5071, 4294901760
        %6198 = vmatpush1.msra.mxu0 %v6197
        %6199 = vmatprep.subr.mxu0 0.0
        %v6200 = vand.u32 %v5077, 4294901760
        %6201 = vmatpush1.msra.mxu0 %v6200
        %6202 = vmatprep.subr.mxu0 0.0
        %v6203 = vand.u32 %v5083, 4294901760
        %6204 = vmatpush1.msra.mxu0 %v6203
        %6205 = vmatprep.subr.mxu0 0.0
        %v6206 = vand.u32 %v5089, 4294901760
        %6207 = vmatpush1.msra.mxu0 %v6206
        %6208 = vmatprep.subr.mxu0 0.0
        %v6209 = vand.u32 %v5095, 4294901760
        %6210 = vmatpush1.msra.mxu0 %v6209
        %6211 = vmatprep.subr.mxu0 0.0
        %v6212 = vand.u32 %v5101, 4294901760
        %6213 = vmatpush1.msra.mxu0 %v6212
        %6214 = vmatprep.subr.mxu0 0.0
        %v6215 = vand.u32 %v5107, 4294901760
        %6216 = vmatpush1.msra.mxu0 %v6215
        %6217 = vmatprep.subr.mxu0 0.0
        %v6218 = vand.u32 %v5113, 4294901760
        %6219 = vmatpush1.msra.mxu0 %v6218
        %6220 = vmatprep.subr.mxu0 0.0
        %v6221 = vand.u32 %v5119, 4294901760
        %6222 = vmatpush1.msra.mxu0 %v6221
        %6223 = vmatprep.subr.mxu0 0.0
        %v6224 = vand.u32 %v5125, 4294901760
        %6225 = vmatpush1.msra.mxu0 %v6224
        %6226 = vmatprep.subr.mxu0 0.0
        %v6227 = vand.u32 %v5131, 4294901760
        %6228 = vmatpush1.msra.mxu0 %v6227
        %6229 = vmatprep.subr.mxu0 0.0
        %v6230 = vand.u32 %v5137, 4294901760
        %6231 = vmatpush1.msra.mxu0 %v6230
        %6232 = vmatprep.subr.mxu0 0.0
        %v6233 = vand.u32 %v5143, 4294901760
        %6234 = vmatpush1.msra.mxu0 %v6233
        %6235 = vmatprep.subr.mxu0 0.0
        %v6236 = vand.u32 %v5149, 4294901760
        %6237 = vmatpush1.msra.mxu0 %v6236
        %6238 = vmatprep.subr.mxu0 0.0
        %v6239 = vand.u32 %v5155, 4294901760
        %6240 = vmatpush1.msra.mxu0 %v6239
        %6241 = vmatprep.subr.mxu0 0.0
        %6242 = vmatpush1.msra.mxu0 0.0
        %6243 = vmatprep.subr.mxu0 0.0
        %6244 = vmatpush1.msra.mxu0 0.0
        %6245 = vmatprep.subr.mxu0 0.0
        %6246 = vmatpush1.msra.mxu0 0.0
        %6247 = vmatprep.subr.mxu0 0.0
        %6248 = vmatpush1.msra.mxu0 0.0
        %6249 = vmatprep.subr.mxu0 0.0
        %6250 = vmatpush1.msra.mxu0 0.0
        %6251 = vmatprep.subr.mxu0 0.0
        %6252 = vmatpush1.msra.mxu0 0.0
        %6253 = vmatprep.subr.mxu0 0.0
        %6254 = vmatpush1.msra.mxu0 0.0
        %6255 = vmatprep.subr.mxu0 0.0
        %6256 = vmatpush1.msra.mxu0 0.0
        %6257 = vmatprep.subr.mxu0 0.0
        %6258 = vmatpush1.msra.mxu0 0.0
        %6259 = vmatprep.subr.mxu0 0.0
        %6260 = vmatpush1.msra.mxu0 0.0
        %6261 = vmatprep.subr.mxu0 0.0
        %6262 = vmatpush1.msra.mxu0 0.0
        %6263 = vmatprep.subr.mxu0 0.0
        %6264 = vmatpush1.msra.mxu0 0.0
        %6265 = vmatprep.subr.mxu0 0.0
        %6266 = vmatpush1.msra.mxu0 0.0
        %6267 = vmatprep.subr.mxu0 0.0
        %6268 = vmatpush1.msra.mxu0 0.0
        %6269 = vmatprep.subr.mxu0 0.0
        %6270 = vmatpush1.msra.mxu0 0.0
        %6271 = vmatprep.subr.mxu0 0.0
        %6272 = vmatpush1.msra.mxu0 0.0
        %6273 = vmatprep.mubr.f32.mxu0 0.0
        %v6274 = vand.u32 %v6191, 4294901760
        %v6275 = vsub.f32 %v6191, %v6274
        %v6276 = vand.u32 %v6275, 4294901760
        %v6277 = vsub.f32 %v6275, %v6276
        %v6278 = vand.u32 %v6277, 4294901760
        %6279 = vmatmul.mubr.f32.gmra.mrb[0].mxu0 %v6278
        %v6280 = vpop.f32.mrb[0].mxu0
        %v6281 = vadd.f32 0.0, %v6280
        %v6282 = vpop.f32.mrb[0].mxu0
        %6283 = vdwg.mxu0
        %6284 = vmatprep.subr.mxu0 0.0
        %v6285 = vand.u32 %v5065, 4294901760
        %v6286 = vsub.f32 %v5065, %v6285
        %v6287 = vand.u32 %v6286, 4294901760
        %v6288 = vsub.f32 %v6286, %v6287
        %v6289 = vand.u32 %v6288, 4294901760
        %6290 = vmatpush1.msra.mxu0 %v6289
        %6291 = vmatprep.subr.mxu0 0.0
        %v6292 = vand.u32 %v5071, 4294901760
        %v6293 = vsub.f32 %v5071, %v6292
        %v6294 = vand.u32 %v6293, 4294901760
        %v6295 = vsub.f32 %v6293, %v6294
        %v6296 = vand.u32 %v6295, 4294901760
        %6297 = vmatpush1.msra.mxu0 %v6296
        %6298 = vmatprep.subr.mxu0 0.0
        %v6299 = vand.u32 %v5077, 4294901760
        %v6300 = vsub.f32 %v5077, %v6299
        %v6301 = vand.u32 %v6300, 4294901760
        %v6302 = vsub.f32 %v6300, %v6301
        %v6303 = vand.u32 %v6302, 4294901760
        %6304 = vmatpush1.msra.mxu0 %v6303
        %6305 = vmatprep.subr.mxu0 0.0
        %v6306 = vand.u32 %v5083, 4294901760
        %v6307 = vsub.f32 %v5083, %v6306
        %v6308 = vand.u32 %v6307, 4294901760
        %v6309 = vsub.f32 %v6307, %v6308
        %v6310 = vand.u32 %v6309, 4294901760
        %6311 = vmatpush1.msra.mxu0 %v6310
        %6312 = vmatprep.subr.mxu0 0.0
        %v6313 = vand.u32 %v5089, 4294901760
        %v6314 = vsub.f32 %v5089, %v6313
        %v6315 = vand.u32 %v6314, 4294901760
        %v6316 = vsub.f32 %v6314, %v6315
        %v6317 = vand.u32 %v6316, 4294901760
        %6318 = vmatpush1.msra.mxu0 %v6317
        %6319 = vmatprep.subr.mxu0 0.0
        %v6320 = vand.u32 %v5095, 4294901760
        %v6321 = vsub.f32 %v5095, %v6320
        %v6322 = vand.u32 %v6321, 4294901760
        %v6323 = vsub.f32 %v6321, %v6322
        %v6324 = vand.u32 %v6323, 4294901760
        %6325 = vmatpush1.msra.mxu0 %v6324
        %6326 = vmatprep.subr.mxu0 0.0
        %v6327 = vand.u32 %v5101, 4294901760
        %v6328 = vsub.f32 %v5101, %v6327
        %v6329 = vand.u32 %v6328, 4294901760
        %v6330 = vsub.f32 %v6328, %v6329
        %v6331 = vand.u32 %v6330, 4294901760
        %6332 = vmatpush1.msra.mxu0 %v6331
        %6333 = vmatprep.subr.mxu0 0.0
        %v6334 = vand.u32 %v5107, 4294901760
        %v6335 = vsub.f32 %v5107, %v6334
        %v6336 = vand.u32 %v6335, 4294901760
        %v6337 = vsub.f32 %v6335, %v6336
        %v6338 = vand.u32 %v6337, 4294901760
        %6339 = vmatpush1.msra.mxu0 %v6338
        %6340 = vmatprep.subr.mxu0 0.0
        %v6341 = vand.u32 %v5113, 4294901760
        %v6342 = vsub.f32 %v5113, %v6341
        %v6343 = vand.u32 %v6342, 4294901760
        %v6344 = vsub.f32 %v6342, %v6343
        %v6345 = vand.u32 %v6344, 4294901760
        %6346 = vmatpush1.msra.mxu0 %v6345
        %6347 = vmatprep.subr.mxu0 0.0
        %v6348 = vand.u32 %v5119, 4294901760
        %v6349 = vsub.f32 %v5119, %v6348
        %v6350 = vand.u32 %v6349, 4294901760
        %v6351 = vsub.f32 %v6349, %v6350
        %v6352 = vand.u32 %v6351, 4294901760
        %6353 = vmatpush1.msra.mxu0 %v6352
        %6354 = vmatprep.subr.mxu0 0.0
        %v6355 = vand.u32 %v5125, 4294901760
        %v6356 = vsub.f32 %v5125, %v6355
        %v6357 = vand.u32 %v6356, 4294901760
        %v6358 = vsub.f32 %v6356, %v6357
        %v6359 = vand.u32 %v6358, 4294901760
        %6360 = vmatpush1.msra.mxu0 %v6359
        %6361 = vmatprep.subr.mxu0 0.0
        %v6362 = vand.u32 %v5131, 4294901760
        %v6363 = vsub.f32 %v5131, %v6362
        %v6364 = vand.u32 %v6363, 4294901760
        %v6365 = vsub.f32 %v6363, %v6364
        %v6366 = vand.u32 %v6365, 4294901760
        %6367 = vmatpush1.msra.mxu0 %v6366
        %6368 = vmatprep.subr.mxu0 0.0
        %v6369 = vand.u32 %v5137, 4294901760
        %v6370 = vsub.f32 %v5137, %v6369
        %v6371 = vand.u32 %v6370, 4294901760
        %v6372 = vsub.f32 %v6370, %v6371
        %v6373 = vand.u32 %v6372, 4294901760
        %6374 = vmatpush1.msra.mxu0 %v6373
        %6375 = vmatprep.subr.mxu0 0.0
        %v6376 = vand.u32 %v5143, 4294901760
        %v6377 = vsub.f32 %v5143, %v6376
        %v6378 = vand.u32 %v6377, 4294901760
        %v6379 = vsub.f32 %v6377, %v6378
        %v6380 = vand.u32 %v6379, 4294901760
        %6381 = vmatpush1.msra.mxu0 %v6380
        %6382 = vmatprep.subr.mxu0 0.0
        %v6383 = vand.u32 %v5149, 4294901760
        %v6384 = vsub.f32 %v5149, %v6383
        %v6385 = vand.u32 %v6384, 4294901760
        %v6386 = vsub.f32 %v6384, %v6385
        %v6387 = vand.u32 %v6386, 4294901760
        %6388 = vmatpush1.msra.mxu0 %v6387
        %6389 = vmatprep.subr.mxu0 0.0
        %v6390 = vand.u32 %v5155, 4294901760
        %v6391 = vsub.f32 %v5155, %v6390
        %v6392 = vand.u32 %v6391, 4294901760
        %v6393 = vsub.f32 %v6391, %v6392
        %v6394 = vand.u32 %v6393, 4294901760
        %6395 = vmatpush1.msra.mxu0 %v6394
        %6396 = vmatprep.subr.mxu0 0.0
        %6397 = vmatpush1.msra.mxu0 0.0
        %6398 = vmatprep.subr.mxu0 0.0
        %6399 = vmatpush1.msra.mxu0 0.0
        %6400 = vmatprep.subr.mxu0 0.0
        %6401 = vmatpush1.msra.mxu0 0.0
        %6402 = vmatprep.subr.mxu0 0.0
        %6403 = vmatpush1.msra.mxu0 0.0
        %6404 = vmatprep.subr.mxu0 0.0
        %6405 = vmatpush1.msra.mxu0 0.0
        %6406 = vmatprep.subr.mxu0 0.0
        %6407 = vmatpush1.msra.mxu0 0.0
        %6408 = vmatprep.subr.mxu0 0.0
        %6409 = vmatpush1.msra.mxu0 0.0
        %6410 = vmatprep.subr.mxu0 0.0
        %6411 = vmatpush1.msra.mxu0 0.0
        %6412 = vmatprep.subr.mxu0 0.0
        %6413 = vmatpush1.msra.mxu0 0.0
        %6414 = vmatprep.subr.mxu0 0.0
        %6415 = vmatpush1.msra.mxu0 0.0
        %6416 = vmatprep.subr.mxu0 0.0
        %6417 = vmatpush1.msra.mxu0 0.0
        %6418 = vmatprep.subr.mxu0 0.0
        %6419 = vmatpush1.msra.mxu0 0.0
        %6420 = vmatprep.subr.mxu0 0.0
        %6421 = vmatpush1.msra.mxu0 0.0
        %6422 = vmatprep.subr.mxu0 0.0
        %6423 = vmatpush1.msra.mxu0 0.0
        %6424 = vmatprep.subr.mxu0 0.0
        %6425 = vmatpush1.msra.mxu0 0.0
        %6426 = vmatprep.subr.mxu0 0.0
        %6427 = vmatpush1.msra.mxu0 0.0
        %6428 = vmatprep.mubr.f32.mxu0 0.0
        %v6429 = vand.u32 %v6191, 4294901760
        %6430 = vmatmul.mubr.f32.gmra.mrb[0].mxu0 %v6429
        %v6431 = vpop.f32.mrb[0].mxu0
        %v6432 = vadd.f32 %v6281, %v6431
        %v6433 = vpop.f32.mrb[0].mxu0
        %6434 = vdwg.mxu0
        %6435 = vmatprep.subr.mxu0 0.0
        %v6436 = vand.u32 %v5065, 4294901760
        %v6437 = vsub.f32 %v5065, %v6436
        %6438 = vmatpush1.msra.mxu0 %v6437
        %6439 = vmatprep.subr.mxu0 0.0
        %v6440 = vand.u32 %v5071, 4294901760
        %v6441 = vsub.f32 %v5071, %v6440
        %6442 = vmatpush1.msra.mxu0 %v6441
        %6443 = vmatprep.subr.mxu0 0.0
        %v6444 = vand.u32 %v5077, 4294901760
        %v6445 = vsub.f32 %v5077, %v6444
        %6446 = vmatpush1.msra.mxu0 %v6445
        %6447 = vmatprep.subr.mxu0 0.0
        %v6448 = vand.u32 %v5083, 4294901760
        %v6449 = vsub.f32 %v5083, %v6448
        %6450 = vmatpush1.msra.mxu0 %v6449
        %6451 = vmatprep.subr.mxu0 0.0
        %v6452 = vand.u32 %v5089, 4294901760
        %v6453 = vsub.f32 %v5089, %v6452
        %6454 = vmatpush1.msra.mxu0 %v6453
        %6455 = vmatprep.subr.mxu0 0.0
        %v6456 = vand.u32 %v5095, 4294901760
        %v6457 = vsub.f32 %v5095, %v6456
        %6458 = vmatpush1.msra.mxu0 %v6457
        %6459 = vmatprep.subr.mxu0 0.0
        %v6460 = vand.u32 %v5101, 4294901760
        %v6461 = vsub.f32 %v5101, %v6460
        %6462 = vmatpush1.msra.mxu0 %v6461
        %6463 = vmatprep.subr.mxu0 0.0
        %v6464 = vand.u32 %v5107, 4294901760
        %v6465 = vsub.f32 %v5107, %v6464
        %6466 = vmatpush1.msra.mxu0 %v6465
        %6467 = vmatprep.subr.mxu0 0.0
        %v6468 = vand.u32 %v5113, 4294901760
        %v6469 = vsub.f32 %v5113, %v6468
        %6470 = vmatpush1.msra.mxu0 %v6469
        %6471 = vmatprep.subr.mxu0 0.0
        %v6472 = vand.u32 %v5119, 4294901760
        %v6473 = vsub.f32 %v5119, %v6472
        %6474 = vmatpush1.msra.mxu0 %v6473
        %6475 = vmatprep.subr.mxu0 0.0
        %v6476 = vand.u32 %v5125, 4294901760
        %v6477 = vsub.f32 %v5125, %v6476
        %6478 = vmatpush1.msra.mxu0 %v6477
        %6479 = vmatprep.subr.mxu0 0.0
        %v6480 = vand.u32 %v5131, 4294901760
        %v6481 = vsub.f32 %v5131, %v6480
        %6482 = vmatpush1.msra.mxu0 %v6481
        %6483 = vmatprep.subr.mxu0 0.0
        %v6484 = vand.u32 %v5137, 4294901760
        %v6485 = vsub.f32 %v5137, %v6484
        %6486 = vmatpush1.msra.mxu0 %v6485
        %6487 = vmatprep.subr.mxu0 0.0
        %v6488 = vand.u32 %v5143, 4294901760
        %v6489 = vsub.f32 %v5143, %v6488
        %6490 = vmatpush1.msra.mxu0 %v6489
        %6491 = vmatprep.subr.mxu0 0.0
        %v6492 = vand.u32 %v5149, 4294901760
        %v6493 = vsub.f32 %v5149, %v6492
        %6494 = vmatpush1.msra.mxu0 %v6493
        %6495 = vmatprep.subr.mxu0 0.0
        %v6496 = vand.u32 %v5155, 4294901760
        %v6497 = vsub.f32 %v5155, %v6496
        %6498 = vmatpush1.msra.mxu0 %v6497
        %6499 = vmatprep.subr.mxu0 0.0
        %6500 = vmatpush1.msra.mxu0 0.0
        %6501 = vmatprep.subr.mxu0 0.0
        %6502 = vmatpush1.msra.mxu0 0.0
        %6503 = vmatprep.subr.mxu0 0.0
        %6504 = vmatpush1.msra.mxu0 0.0
        %6505 = vmatprep.subr.mxu0 0.0
        %6506 = vmatpush1.msra.mxu0 0.0
        %6507 = vmatprep.subr.mxu0 0.0
        %6508 = vmatpush1.msra.mxu0 0.0
        %6509 = vmatprep.subr.mxu0 0.0
        %6510 = vmatpush1.msra.mxu0 0.0
        %6511 = vmatprep.subr.mxu0 0.0
        %6512 = vmatpush1.msra.mxu0 0.0
        %6513 = vmatprep.subr.mxu0 0.0
        %6514 = vmatpush1.msra.mxu0 0.0
        %6515 = vmatprep.subr.mxu0 0.0
        %6516 = vmatpush1.msra.mxu0 0.0
        %6517 = vmatprep.subr.mxu0 0.0
        %6518 = vmatpush1.msra.mxu0 0.0
        %6519 = vmatprep.subr.mxu0 0.0
        %6520 = vmatpush1.msra.mxu0 0.0
        %6521 = vmatprep.subr.mxu0 0.0
        %6522 = vmatpush1.msra.mxu0 0.0
        %6523 = vmatprep.subr.mxu0 0.0
        %6524 = vmatpush1.msra.mxu0 0.0
        %6525 = vmatprep.subr.mxu0 0.0
        %6526 = vmatpush1.msra.mxu0 0.0
        %6527 = vmatprep.subr.mxu0 0.0
        %6528 = vmatpush1.msra.mxu0 0.0
        %6529 = vmatprep.subr.mxu0 0.0
        %6530 = vmatpush1.msra.mxu0 0.0
        %6531 = vmatprep.mubr.f32.mxu0 0.0
        %v6532 = vand.u32 %v6191, 4294901760
        %v6533 = vsub.f32 %v6191, %v6532
        %6534 = vmatmul.mubr.f32.gmra.mrb[0].mxu0 %v6533
        %v6535 = vpop.f32.mrb[0].mxu0
        %v6536 = vadd.f32 %v6432, %v6535
        %v6537 = vpop.f32.mrb[0].mxu0
        %6538 = vdwg.mxu0
        %6539 = vmatprep.subr.mxu0 0.0
        %v6540 = vand.u32 %v5065, 4294901760
        %6541 = vmatpush1.msra.mxu0 %v6540
        %6542 = vmatprep.subr.mxu0 0.0
        %v6543 = vand.u32 %v5071, 4294901760
        %6544 = vmatpush1.msra.mxu0 %v6543
        %6545 = vmatprep.subr.mxu0 0.0
        %v6546 = vand.u32 %v5077, 4294901760
        %6547 = vmatpush1.msra.mxu0 %v6546
        %6548 = vmatprep.subr.mxu0 0.0
        %v6549 = vand.u32 %v5083, 4294901760
        %6550 = vmatpush1.msra.mxu0 %v6549
        %6551 = vmatprep.subr.mxu0 0.0
        %v6552 = vand.u32 %v5089, 4294901760
        %6553 = vmatpush1.msra.mxu0 %v6552
        %6554 = vmatprep.subr.mxu0 0.0
        %v6555 = vand.u32 %v5095, 4294901760
        %6556 = vmatpush1.msra.mxu0 %v6555
        %6557 = vmatprep.subr.mxu0 0.0
        %v6558 = vand.u32 %v5101, 4294901760
        %6559 = vmatpush1.msra.mxu0 %v6558
        %6560 = vmatprep.subr.mxu0 0.0
        %v6561 = vand.u32 %v5107, 4294901760
        %6562 = vmatpush1.msra.mxu0 %v6561
        %6563 = vmatprep.subr.mxu0 0.0
        %v6564 = vand.u32 %v5113, 4294901760
        %6565 = vmatpush1.msra.mxu0 %v6564
        %6566 = vmatprep.subr.mxu0 0.0
        %v6567 = vand.u32 %v5119, 4294901760
        %6568 = vmatpush1.msra.mxu0 %v6567
        %6569 = vmatprep.subr.mxu0 0.0
        %v6570 = vand.u32 %v5125, 4294901760
        %6571 = vmatpush1.msra.mxu0 %v6570
        %6572 = vmatprep.subr.mxu0 0.0
        %v6573 = vand.u32 %v5131, 4294901760
        %6574 = vmatpush1.msra.mxu0 %v6573
        %6575 = vmatprep.subr.mxu0 0.0
        %v6576 = vand.u32 %v5137, 4294901760
        %6577 = vmatpush1.msra.mxu0 %v6576
        %6578 = vmatprep.subr.mxu0 0.0
        %v6579 = vand.u32 %v5143, 4294901760
        %6580 = vmatpush1.msra.mxu0 %v6579
        %6581 = vmatprep.subr.mxu0 0.0
        %v6582 = vand.u32 %v5149, 4294901760
        %6583 = vmatpush1.msra.mxu0 %v6582
        %6584 = vmatprep.subr.mxu0 0.0
        %v6585 = vand.u32 %v5155, 4294901760
        %6586 = vmatpush1.msra.mxu0 %v6585
        %6587 = vmatprep.subr.mxu0 0.0
        %6588 = vmatpush1.msra.mxu0 0.0
        %6589 = vmatprep.subr.mxu0 0.0
        %6590 = vmatpush1.msra.mxu0 0.0
        %6591 = vmatprep.subr.mxu0 0.0
        %6592 = vmatpush1.msra.mxu0 0.0
        %6593 = vmatprep.subr.mxu0 0.0
        %6594 = vmatpush1.msra.mxu0 0.0
        %6595 = vmatprep.subr.mxu0 0.0
        %6596 = vmatpush1.msra.mxu0 0.0
        %6597 = vmatprep.subr.mxu0 0.0
        %6598 = vmatpush1.msra.mxu0 0.0
        %6599 = vmatprep.subr.mxu0 0.0
        %6600 = vmatpush1.msra.mxu0 0.0
        %6601 = vmatprep.subr.mxu0 0.0
        %6602 = vmatpush1.msra.mxu0 0.0
        %6603 = vmatprep.subr.mxu0 0.0
        %6604 = vmatpush1.msra.mxu0 0.0
        %6605 = vmatprep.subr.mxu0 0.0
        %6606 = vmatpush1.msra.mxu0 0.0
        %6607 = vmatprep.subr.mxu0 0.0
        %6608 = vmatpush1.msra.mxu0 0.0
        %6609 = vmatprep.subr.mxu0 0.0
        %6610 = vmatpush1.msra.mxu0 0.0
        %6611 = vmatprep.subr.mxu0 0.0
        %6612 = vmatpush1.msra.mxu0 0.0
        %6613 = vmatprep.subr.mxu0 0.0
        %6614 = vmatpush1.msra.mxu0 0.0
        %6615 = vmatprep.subr.mxu0 0.0
        %6616 = vmatpush1.msra.mxu0 0.0
        %6617 = vmatprep.subr.mxu0 0.0
        %6618 = vmatpush1.msra.mxu0 0.0
        %6619 = vmatprep.mubr.f32.mxu0 0.0
        %v6620 = vand.u32 %v6191, 4294901760
        %v6621 = vsub.f32 %v6191, %v6620
        %v6622 = vand.u32 %v6621, 4294901760
        %6623 = vmatmul.mubr.f32.gmra.mrb[0].mxu0 %v6622
        %v6624 = vpop.f32.mrb[0].mxu0
        %v6625 = vadd.f32 %v6536, %v6624
        %v6626 = vpop.f32.mrb[0].mxu0
        %6627 = vdwg.mxu0
        %6628 = vmatprep.subr.mxu0 0.0
        %v6629 = vand.u32 %v5065, 4294901760
        %v6630 = vsub.f32 %v5065, %v6629
        %v6631 = vand.u32 %v6630, 4294901760
        %6632 = vmatpush1.msra.mxu0 %v6631
        %6633 = vmatprep.subr.mxu0 0.0
        %v6634 = vand.u32 %v5071, 4294901760
        %v6635 = vsub.f32 %v5071, %v6634
        %v6636 = vand.u32 %v6635, 4294901760
        %6637 = vmatpush1.msra.mxu0 %v6636
        %6638 = vmatprep.subr.mxu0 0.0
        %v6639 = vand.u32 %v5077, 4294901760
        %v6640 = vsub.f32 %v5077, %v6639
        %v6641 = vand.u32 %v6640, 4294901760
        %6642 = vmatpush1.msra.mxu0 %v6641
        %6643 = vmatprep.subr.mxu0 0.0
        %v6644 = vand.u32 %v5083, 4294901760
        %v6645 = vsub.f32 %v5083, %v6644
        %v6646 = vand.u32 %v6645, 4294901760
        %6647 = vmatpush1.msra.mxu0 %v6646
        %6648 = vmatprep.subr.mxu0 0.0
        %v6649 = vand.u32 %v5089, 4294901760
        %v6650 = vsub.f32 %v5089, %v6649
        %v6651 = vand.u32 %v6650, 4294901760
        %6652 = vmatpush1.msra.mxu0 %v6651
        %6653 = vmatprep.subr.mxu0 0.0
        %v6654 = vand.u32 %v5095, 4294901760
        %v6655 = vsub.f32 %v5095, %v6654
        %v6656 = vand.u32 %v6655, 4294901760
        %6657 = vmatpush1.msra.mxu0 %v6656
        %6658 = vmatprep.subr.mxu0 0.0
        %v6659 = vand.u32 %v5101, 4294901760
        %v6660 = vsub.f32 %v5101, %v6659
        %v6661 = vand.u32 %v6660, 4294901760
        %6662 = vmatpush1.msra.mxu0 %v6661
        %6663 = vmatprep.subr.mxu0 0.0
        %v6664 = vand.u32 %v5107, 4294901760
        %v6665 = vsub.f32 %v5107, %v6664
        %v6666 = vand.u32 %v6665, 4294901760
        %6667 = vmatpush1.msra.mxu0 %v6666
        %6668 = vmatprep.subr.mxu0 0.0
        %v6669 = vand.u32 %v5113, 4294901760
        %v6670 = vsub.f32 %v5113, %v6669
        %v6671 = vand.u32 %v6670, 4294901760
        %6672 = vmatpush1.msra.mxu0 %v6671
        %6673 = vmatprep.subr.mxu0 0.0
        %v6674 = vand.u32 %v5119, 4294901760
        %v6675 = vsub.f32 %v5119, %v6674
        %v6676 = vand.u32 %v6675, 4294901760
        %6677 = vmatpush1.msra.mxu0 %v6676
        %6678 = vmatprep.subr.mxu0 0.0
        %v6679 = vand.u32 %v5125, 4294901760
        %v6680 = vsub.f32 %v5125, %v6679
        %v6681 = vand.u32 %v6680, 4294901760
        %6682 = vmatpush1.msra.mxu0 %v6681
        %6683 = vmatprep.subr.mxu0 0.0
        %v6684 = vand.u32 %v5131, 4294901760
        %v6685 = vsub.f32 %v5131, %v6684
        %v6686 = vand.u32 %v6685, 4294901760
        %6687 = vmatpush1.msra.mxu0 %v6686
        %6688 = vmatprep.subr.mxu0 0.0
        %v6689 = vand.u32 %v5137, 4294901760
        %v6690 = vsub.f32 %v5137, %v6689
        %v6691 = vand.u32 %v6690, 4294901760
        %6692 = vmatpush1.msra.mxu0 %v6691
        %6693 = vmatprep.subr.mxu0 0.0
        %v6694 = vand.u32 %v5143, 4294901760
        %v6695 = vsub.f32 %v5143, %v6694
        %v6696 = vand.u32 %v6695, 4294901760
        %6697 = vmatpush1.msra.mxu0 %v6696
        %6698 = vmatprep.subr.mxu0 0.0
        %v6699 = vand.u32 %v5149, 4294901760
        %v6700 = vsub.f32 %v5149, %v6699
        %v6701 = vand.u32 %v6700, 4294901760
        %6702 = vmatpush1.msra.mxu0 %v6701
        %6703 = vmatprep.subr.mxu0 0.0
        %v6704 = vand.u32 %v5155, 4294901760
        %v6705 = vsub.f32 %v5155, %v6704
        %v6706 = vand.u32 %v6705, 4294901760
        %6707 = vmatpush1.msra.mxu0 %v6706
        %6708 = vmatprep.subr.mxu0 0.0
        %6709 = vmatpush1.msra.mxu0 0.0
        %6710 = vmatprep.subr.mxu0 0.0
        %6711 = vmatpush1.msra.mxu0 0.0
        %6712 = vmatprep.subr.mxu0 0.0
        %6713 = vmatpush1.msra.mxu0 0.0
        %6714 = vmatprep.subr.mxu0 0.0
        %6715 = vmatpush1.msra.mxu0 0.0
        %6716 = vmatprep.subr.mxu0 0.0
        %6717 = vmatpush1.msra.mxu0 0.0
        %6718 = vmatprep.subr.mxu0 0.0
        %6719 = vmatpush1.msra.mxu0 0.0
        %6720 = vmatprep.subr.mxu0 0.0
        %6721 = vmatpush1.msra.mxu0 0.0
        %6722 = vmatprep.subr.mxu0 0.0
        %6723 = vmatpush1.msra.mxu0 0.0
        %6724 = vmatprep.subr.mxu0 0.0
        %6725 = vmatpush1.msra.mxu0 0.0
        %6726 = vmatprep.subr.mxu0 0.0
        %6727 = vmatpush1.msra.mxu0 0.0
        %6728 = vmatprep.subr.mxu0 0.0
        %6729 = vmatpush1.msra.mxu0 0.0
        %6730 = vmatprep.subr.mxu0 0.0
        %6731 = vmatpush1.msra.mxu0 0.0
        %6732 = vmatprep.subr.mxu0 0.0
        %6733 = vmatpush1.msra.mxu0 0.0
        %6734 = vmatprep.subr.mxu0 0.0
        %6735 = vmatpush1.msra.mxu0 0.0
        %6736 = vmatprep.subr.mxu0 0.0
        %6737 = vmatpush1.msra.mxu0 0.0
        %6738 = vmatprep.subr.mxu0 0.0
        %6739 = vmatpush1.msra.mxu0 0.0
        %6740 = vmatprep.mubr.f32.mxu0 0.0
        %v6741 = vand.u32 %v6191, 4294901760
        %6742 = vmatmul.mubr.f32.gmra.mrb[0].mxu0 %v6741
        %v6743 = vpop.f32.mrb[0].mxu0
        %v6744 = vadd.f32 %v6625, %v6743
        %v6745 = vpop.f32.mrb[0].mxu0
        %6746 = vdwg.mxu0
        %6747 = vmatprep.subr.mxu0 0.0
        %v6748 = vand.u32 %v5065, 4294901760
        %6749 = vmatpush1.msra.mxu0 %v6748
        %6750 = vmatprep.subr.mxu0 0.0
        %v6751 = vand.u32 %v5071, 4294901760
        %6752 = vmatpush1.msra.mxu0 %v6751
        %6753 = vmatprep.subr.mxu0 0.0
        %v6754 = vand.u32 %v5077, 4294901760
        %6755 = vmatpush1.msra.mxu0 %v6754
        %6756 = vmatprep.subr.mxu0 0.0
        %v6757 = vand.u32 %v5083, 4294901760
        %6758 = vmatpush1.msra.mxu0 %v6757
        %6759 = vmatprep.subr.mxu0 0.0
        %v6760 = vand.u32 %v5089, 4294901760
        %6761 = vmatpush1.msra.mxu0 %v6760
        %6762 = vmatprep.subr.mxu0 0.0
        %v6763 = vand.u32 %v5095, 4294901760
        %6764 = vmatpush1.msra.mxu0 %v6763
        %6765 = vmatprep.subr.mxu0 0.0
        %v6766 = vand.u32 %v5101, 4294901760
        %6767 = vmatpush1.msra.mxu0 %v6766
        %6768 = vmatprep.subr.mxu0 0.0
        %v6769 = vand.u32 %v5107, 4294901760
        %6770 = vmatpush1.msra.mxu0 %v6769
        %6771 = vmatprep.subr.mxu0 0.0
        %v6772 = vand.u32 %v5113, 4294901760
        %6773 = vmatpush1.msra.mxu0 %v6772
        %6774 = vmatprep.subr.mxu0 0.0
        %v6775 = vand.u32 %v5119, 4294901760
        %6776 = vmatpush1.msra.mxu0 %v6775
        %6777 = vmatprep.subr.mxu0 0.0
        %v6778 = vand.u32 %v5125, 4294901760
        %6779 = vmatpush1.msra.mxu0 %v6778
        %6780 = vmatprep.subr.mxu0 0.0
        %v6781 = vand.u32 %v5131, 4294901760
        %6782 = vmatpush1.msra.mxu0 %v6781
        %6783 = vmatprep.subr.mxu0 0.0
        %v6784 = vand.u32 %v5137, 4294901760
        %6785 = vmatpush1.msra.mxu0 %v6784
        %6786 = vmatprep.subr.mxu0 0.0
        %v6787 = vand.u32 %v5143, 4294901760
        %6788 = vmatpush1.msra.mxu0 %v6787
        %6789 = vmatprep.subr.mxu0 0.0
        %v6790 = vand.u32 %v5149, 4294901760
        %6791 = vmatpush1.msra.mxu0 %v6790
        %6792 = vmatprep.subr.mxu0 0.0
        %v6793 = vand.u32 %v5155, 4294901760
        %6794 = vmatpush1.msra.mxu0 %v6793
        %6795 = vmatprep.subr.mxu0 0.0
        %6796 = vmatpush1.msra.mxu0 0.0
        %6797 = vmatprep.subr.mxu0 0.0
        %6798 = vmatpush1.msra.mxu0 0.0
        %6799 = vmatprep.subr.mxu0 0.0
        %6800 = vmatpush1.msra.mxu0 0.0
        %6801 = vmatprep.subr.mxu0 0.0
        %6802 = vmatpush1.msra.mxu0 0.0
        %6803 = vmatprep.subr.mxu0 0.0
        %6804 = vmatpush1.msra.mxu0 0.0
        %6805 = vmatprep.subr.mxu0 0.0
        %6806 = vmatpush1.msra.mxu0 0.0
        %6807 = vmatprep.subr.mxu0 0.0
        %6808 = vmatpush1.msra.mxu0 0.0
        %6809 = vmatprep.subr.mxu0 0.0
        %6810 = vmatpush1.msra.mxu0 0.0
        %6811 = vmatprep.subr.mxu0 0.0
        %6812 = vmatpush1.msra.mxu0 0.0
        %6813 = vmatprep.subr.mxu0 0.0
        %6814 = vmatpush1.msra.mxu0 0.0
        %6815 = vmatprep.subr.mxu0 0.0
        %6816 = vmatpush1.msra.mxu0 0.0
        %6817 = vmatprep.subr.mxu0 0.0
        %6818 = vmatpush1.msra.mxu0 0.0
        %6819 = vmatprep.subr.mxu0 0.0
        %6820 = vmatpush1.msra.mxu0 0.0
        %6821 = vmatprep.subr.mxu0 0.0
        %6822 = vmatpush1.msra.mxu0 0.0
        %6823 = vmatprep.subr.mxu0 0.0
        %6824 = vmatpush1.msra.mxu0 0.0
        %6825 = vmatprep.subr.mxu0 0.0
        %6826 = vmatpush1.msra.mxu0 0.0
        %6827 = vmatprep.mubr.f32.mxu0 0.0
        %v6828 = vand.u32 %v6191, 4294901760
        %6829 = vmatmul.mubr.f32.gmra.mrb[0].mxu0 %v6828
        %v6830 = vpop.f32.mrb[0].mxu0
        %v6831 = vadd.f32 %v6744, %v6830
        %v6832 = vpop.f32.mrb[0].mxu0
        %6833 = vdwg.mxu0
        %v6834 = vadd.f32 %v6192, %v6831
        %vm6835 = vcmask 1024
        %6836 = vst.msk [vmem:[#allocation2] sm:$0x3] %vm6835, %v6834
        %v6837 = vld [vmem:[#allocation2] sm:$0x3]
        %v7094 = vlaneseq
        %v7095 = vand.u32 %v7094, 127
        %v7096 = vadd.s32 %v7095, 4
        %v7097 = vlaneseq
        %v7098 = vshrl.u32 %v7097, 7
        %v7099 = vsub.s32 %v7096, %v7098
        %v7100 = vrot.slane %v5424, %v7099
        %v7101 = vadd.s32 %v7095, 4294967292
        %v7102 = vlaneseq
        %v7103 = vshrl.u32 %v7102, 7
        %v7104 = vsub.s32 %v7101, %v7103
        %v7105 = vrot.slane %v5428, %v7104
        %vm7106 = vcmask 97312
        %v7107 = vsel %vm7106, %v7105, %v7100
        %v7108 = vlaneseq
        %v7109 = vshrl.u32 %v7108, 7
        %v7110 = vsub.s32 %v7096, %v7109
        %v7111 = vrot.slane %v5431, %v7110
        %v7112 = vlaneseq
        %v7113 = vshrl.u32 %v7112, 7
        %v7114 = vsub.s32 %v7101, %v7113
        %v7115 = vrot.slane %v5434, %v7114
        %v7116 = vsel %vm7106, %v7115, %v7111
        %v7117 = vlaneseq
        %v7118 = vshrl.u32 %v7117, 7
        %v7119 = vsub.s32 %v7096, %v7118
        %v7120 = vrot.slane %v5437, %v7119
        %v7121 = vlaneseq
        %v7122 = vshrl.u32 %v7121, 7
        %v7123 = vsub.s32 %v7101, %v7122
        %v7124 = vrot.slane %v5440, %v7123
        %v7125 = vsel %vm7106, %v7124, %v7120
        %v7126 = vlaneseq
        %v7127 = vshrl.u32 %v7126, 7
        %v7128 = vsub.s32 %v7096, %v7127
        %v7129 = vrot.slane %v5443, %v7128
        %v7130 = vlaneseq
        %v7131 = vshrl.u32 %v7130, 7
        %v7132 = vsub.s32 %v7101, %v7131
        %v7133 = vrot.slane %v5446, %v7132
        %v7134 = vsel %vm7106, %v7133, %v7129
        %v7135 = vlaneseq
        %v7136 = vshrl.u32 %v7135, 7
        %v7137 = vsub.s32 %v7096, %v7136
        %v7138 = vrot.slane %v5449, %v7137
        %v7139 = vlaneseq
        %v7140 = vshrl.u32 %v7139, 7
        %v7141 = vsub.s32 %v7101, %v7140
        %v7142 = vrot.slane %v5452, %v7141
        %v7143 = vsel %vm7106, %v7142, %v7138
        %v7144 = vlaneseq
        %v7145 = vshrl.u32 %v7144, 7
        %v7146 = vsub.s32 %v7096, %v7145
        %v7147 = vrot.slane %v5455, %v7146
        %v7148 = vlaneseq
        %v7149 = vshrl.u32 %v7148, 7
        %v7150 = vsub.s32 %v7101, %v7149
        %v7151 = vrot.slane %v5458, %v7150
        %v7152 = vsel %vm7106, %v7151, %v7147
        %v7153 = vlaneseq
        %v7154 = vshrl.u32 %v7153, 7
        %v7155 = vsub.s32 %v7096, %v7154
        %v7156 = vrot.slane %v5461, %v7155
        %v7157 = vlaneseq
        %v7158 = vshrl.u32 %v7157, 7
        %v7159 = vsub.s32 %v7101, %v7158
        %v7160 = vrot.slane %v5464, %v7159
        %v7161 = vsel %vm7106, %v7160, %v7156
        %v7162 = vlaneseq
        %v7163 = vshrl.u32 %v7162, 7
        %v7164 = vsub.s32 %v7096, %v7163
        %v7165 = vrot.slane %v5467, %v7164
        %v7166 = vlaneseq
        %v7167 = vshrl.u32 %v7166, 7
        %v7168 = vsub.s32 %v7101, %v7167
        %v7169 = vrot.slane %v5470, %v7168
        %v7170 = vsel %vm7106, %v7169, %v7165
        %v7171 = vlaneseq
        %v7172 = vshrl.u32 %v7171, 7
        %v7173 = vsub.s32 %v7096, %v7172
        %v7174 = vrot.slane %v5473, %v7173
        %v7175 = vlaneseq
        %v7176 = vshrl.u32 %v7175, 7
        %v7177 = vsub.s32 %v7101, %v7176
        %v7178 = vrot.slane %v5476, %v7177
        %v7179 = vsel %vm7106, %v7178, %v7174
        %v7180 = vlaneseq
        %v7181 = vshrl.u32 %v7180, 7
        %v7182 = vsub.s32 %v7096, %v7181
        %v7183 = vrot.slane %v5479, %v7182
        %v7184 = vlaneseq
        %v7185 = vshrl.u32 %v7184, 7
        %v7186 = vsub.s32 %v7101, %v7185
        %v7187 = vrot.slane %v5482, %v7186
        %v7188 = vsel %vm7106, %v7187, %v7183
        %v7189 = vlaneseq
        %v7190 = vshrl.u32 %v7189, 7
        %v7191 = vsub.s32 %v7096, %v7190
        %v7192 = vrot.slane %v5485, %v7191
        %v7193 = vlaneseq
        %v7194 = vshrl.u32 %v7193, 7
        %v7195 = vsub.s32 %v7101, %v7194
        %v7196 = vrot.slane %v5488, %v7195
        %v7197 = vsel %vm7106, %v7196, %v7192
        %v7198 = vlaneseq
        %v7199 = vshrl.u32 %v7198, 7
        %v7200 = vsub.s32 %v7096, %v7199
        %v7201 = vrot.slane %v5491, %v7200
        %v7202 = vlaneseq
        %v7203 = vshrl.u32 %v7202, 7
        %v7204 = vsub.s32 %v7101, %v7203
        %v7205 = vrot.slane %v5494, %v7204
        %v7206 = vsel %vm7106, %v7205, %v7201
        %v7207 = vlaneseq
        %v7208 = vshrl.u32 %v7207, 7
        %v7209 = vsub.s32 %v7096, %v7208
        %v7210 = vrot.slane %v5497, %v7209
        %v7211 = vlaneseq
        %v7212 = vshrl.u32 %v7211, 7
        %v7213 = vsub.s32 %v7101, %v7212
        %v7214 = vrot.slane %v5500, %v7213
        %v7215 = vsel %vm7106, %v7214, %v7210
        %v7216 = vlaneseq
        %v7217 = vshrl.u32 %v7216, 7
        %v7218 = vsub.s32 %v7096, %v7217
        %v7219 = vrot.slane %v5503, %v7218
        %v7220 = vlaneseq
        %v7221 = vshrl.u32 %v7220, 7
        %v7222 = vsub.s32 %v7101, %v7221
        %v7223 = vrot.slane %v5506, %v7222
        %v7224 = vsel %vm7106, %v7223, %v7219
        %v7225 = vlaneseq
        %v7226 = vshrl.u32 %v7225, 7
        %v7227 = vsub.s32 %v7096, %v7226
        %v7228 = vrot.slane %v5509, %v7227
        %v7229 = vlaneseq
        %v7230 = vshrl.u32 %v7229, 7
        %v7231 = vsub.s32 %v7101, %v7230
        %v7232 = vrot.slane %v5512, %v7231
        %v7233 = vsel %vm7106, %v7232, %v7228
        %v7234 = vlaneseq
        %v7235 = vshrl.u32 %v7234, 7
        %v7236 = vsub.s32 %v7096, %v7235
        %v7237 = vrot.slane %v5515, %v7236
        %v7238 = vlaneseq
        %v7239 = vshrl.u32 %v7238, 7
        %v7240 = vsub.s32 %v7101, %v7239
        %v7241 = vrot.slane %v5518, %v7240
        %v7242 = vsel %vm7106, %v7241, %v7237
        %v7243 = vlaneseq
        %v7244 = vshrl.u32 %v7243, 7
        %v7245 = vsub.s32 %v7096, %v7244
        %v7246 = vrot.slane %v5521, %v7245
        %v7247 = vlaneseq
        %v7248 = vshrl.u32 %v7247, 7
        %v7249 = vsub.s32 %v7101, %v7248
        %v7250 = vrot.slane %v5524, %v7249
        %v7251 = vsel %vm7106, %v7250, %v7246
        %v7252 = vlaneseq
        %v7253 = vshrl.u32 %v7252, 7
        %v7254 = vsub.s32 %v7096, %v7253
        %v7255 = vrot.slane %v5527, %v7254
        %v7256 = vlaneseq
        %v7257 = vshrl.u32 %v7256, 7
        %v7258 = vsub.s32 %v7101, %v7257
        %v7259 = vrot.slane %v5530, %v7258
        %v7260 = vsel %vm7106, %v7259, %v7255
        %v7261 = vlaneseq
        %v7262 = vshrl.u32 %v7261, 7
        %v7263 = vsub.s32 %v7096, %v7262
        %v7264 = vrot.slane %v5533, %v7263
        %v7265 = vlaneseq
        %v7266 = vshrl.u32 %v7265, 7
        %v7267 = vsub.s32 %v7101, %v7266
        %v7268 = vrot.slane %v5536, %v7267
        %v7269 = vsel %vm7106, %v7268, %v7264
        %v7270 = vlaneseq
        %v7271 = vshrl.u32 %v7270, 7
        %v7272 = vsub.s32 %v7096, %v7271
        %v7273 = vrot.slane %v5539, %v7272
        %v7274 = vlaneseq
        %v7275 = vshrl.u32 %v7274, 7
        %v7276 = vsub.s32 %v7101, %v7275
        %v7277 = vrot.slane %v5542, %v7276
        %v7278 = vsel %vm7106, %v7277, %v7273
        %v7279 = vlaneseq
        %v7280 = vshrl.u32 %v7279, 7
        %v7281 = vsub.s32 %v7096, %v7280
        %v7282 = vrot.slane %v5545, %v7281
        %v7283 = vlaneseq
        %v7284 = vshrl.u32 %v7283, 7
        %v7285 = vsub.s32 %v7101, %v7284
        %v7286 = vrot.slane %v5548, %v7285
        %v7287 = vsel %vm7106, %v7286, %v7282
        %v7288 = vlaneseq
        %v7289 = vshrl.u32 %v7288, 7
        %v7290 = vsub.s32 %v7096, %v7289
        %v7291 = vrot.slane %v5551, %v7290
        %v7292 = vlaneseq
        %v7293 = vshrl.u32 %v7292, 7
        %v7294 = vsub.s32 %v7101, %v7293
        %v7295 = vrot.slane %v5554, %v7294
        %v7296 = vsel %vm7106, %v7295, %v7291
        %v7297 = vlaneseq
        %v7298 = vshrl.u32 %v7297, 7
        %v7299 = vsub.s32 %v7096, %v7298
        %v7300 = vrot.slane %v5557, %v7299
        %v7301 = vlaneseq
        %v7302 = vshrl.u32 %v7301, 7
        %v7303 = vsub.s32 %v7101, %v7302
        %v7304 = vrot.slane %v5560, %v7303
        %v7305 = vsel %vm7106, %v7304, %v7300
        %v7306 = vlaneseq
        %v7307 = vshrl.u32 %v7306, 7
        %v7308 = vsub.s32 %v7096, %v7307
        %v7309 = vrot.slane %v5563, %v7308
        %v7310 = vlaneseq
        %v7311 = vshrl.u32 %v7310, 7
        %v7312 = vsub.s32 %v7101, %v7311
        %v7313 = vrot.slane %v5566, %v7312
        %v7314 = vsel %vm7106, %v7313, %v7309
        %v7315 = vlaneseq
        %v7316 = vshrl.u32 %v7315, 7
        %v7317 = vsub.s32 %v7096, %v7316
        %v7318 = vrot.slane %v5569, %v7317
        %v7319 = vlaneseq
        %v7320 = vshrl.u32 %v7319, 7
        %v7321 = vsub.s32 %v7101, %v7320
        %v7322 = vrot.slane %v5572, %v7321
        %v7323 = vsel %vm7106, %v7322, %v7318
        %v7324 = vlaneseq
        %v7325 = vshrl.u32 %v7324, 7
        %v7326 = vsub.s32 %v7096, %v7325
        %v7327 = vrot.slane %v5575, %v7326
        %v7328 = vlaneseq
        %v7329 = vshrl.u32 %v7328, 7
        %v7330 = vsub.s32 %v7101, %v7329
        %v7331 = vrot.slane %v5578, %v7330
        %v7332 = vsel %vm7106, %v7331, %v7327
        %v7333 = vlaneseq
        %v7334 = vshrl.u32 %v7333, 7
        %v7335 = vsub.s32 %v7096, %v7334
        %v7336 = vrot.slane %v5581, %v7335
        %v7337 = vlaneseq
        %v7338 = vshrl.u32 %v7337, 7
        %v7339 = vsub.s32 %v7101, %v7338
        %v7340 = vrot.slane %v5584, %v7339
        %v7341 = vsel %vm7106, %v7340, %v7336
        %v7342 = vlaneseq
        %v7343 = vshrl.u32 %v7342, 7
        %v7344 = vsub.s32 %v7096, %v7343
        %v7345 = vrot.slane %v5587, %v7344
        %v7346 = vlaneseq
        %v7347 = vshrl.u32 %v7346, 7
        %v7348 = vsub.s32 %v7101, %v7347
        %v7349 = vrot.slane %v5590, %v7348
        %v7350 = vsel %vm7106, %v7349, %v7345
        %v7351 = vlaneseq
        %v7352 = vshrl.u32 %v7351, 7
        %v7353 = vsub.s32 %v7096, %v7352
        %v7354 = vrot.slane %v5593, %v7353
        %v7355 = vlaneseq
        %v7356 = vshrl.u32 %v7355, 7
        %v7357 = vsub.s32 %v7101, %v7356
        %v7358 = vrot.slane %v5596, %v7357
        %v7359 = vsel %vm7106, %v7358, %v7354
        %v7360 = vlaneseq
        %v7361 = vshrl.u32 %v7360, 7
        %v7362 = vsub.s32 %v7096, %v7361
        %v7363 = vrot.slane %v5599, %v7362
        %v7364 = vlaneseq
        %v7365 = vshrl.u32 %v7364, 7
        %v7366 = vsub.s32 %v7101, %v7365
        %v7367 = vrot.slane %v5602, %v7366
        %v7368 = vsel %vm7106, %v7367, %v7363
        %v7369 = vlaneseq
        %v7370 = vshrl.u32 %v7369, 7
        %v7371 = vsub.s32 %v7096, %v7370
        %v7372 = vrot.slane %v5605, %v7371
        %v7373 = vlaneseq
        %v7374 = vshrl.u32 %v7373, 7
        %v7375 = vsub.s32 %v7101, %v7374
        %v7376 = vrot.slane %v5608, %v7375
        %v7377 = vsel %vm7106, %v7376, %v7372
        %v7378 = vlaneseq
        %v7379 = vshrl.u32 %v7378, 7
        %v7380 = vsub.s32 %v7096, %v7379
        %v7381 = vrot.slane %v5611, %v7380
        %v7382 = vlaneseq
        %v7383 = vshrl.u32 %v7382, 7
        %v7384 = vsub.s32 %v7101, %v7383
        %v7385 = vrot.slane %v5614, %v7384
        %v7386 = vsel %vm7106, %v7385, %v7381
        %v7387 = vlaneseq
        %v7388 = vshrl.u32 %v7387, 7
        %v7389 = vsub.s32 %v7096, %v7388
        %v7390 = vrot.slane %v5617, %v7389
        %v7391 = vlaneseq
        %v7392 = vshrl.u32 %v7391, 7
        %v7393 = vsub.s32 %v7101, %v7392
        %v7394 = vrot.slane %v5620, %v7393
        %v7395 = vsel %vm7106, %v7394, %v7390
        %v7396 = vlaneseq
        %v7397 = vshrl.u32 %v7396, 7
        %v7398 = vsub.s32 %v7096, %v7397
        %v7399 = vrot.slane %v5623, %v7398
        %v7400 = vlaneseq
        %v7401 = vshrl.u32 %v7400, 7
        %v7402 = vsub.s32 %v7101, %v7401
        %v7403 = vrot.slane %v5626, %v7402
        %v7404 = vsel %vm7106, %v7403, %v7399
        %v7405 = vlaneseq
        %v7406 = vshrl.u32 %v7405, 7
        %v7407 = vsub.s32 %v7096, %v7406
        %v7408 = vrot.slane %v5629, %v7407
        %v7409 = vlaneseq
        %v7410 = vshrl.u32 %v7409, 7
        %v7411 = vsub.s32 %v7101, %v7410
        %v7412 = vrot.slane %v5632, %v7411
        %v7413 = vsel %vm7106, %v7412, %v7408
        %v7414 = vlaneseq
        %v7415 = vshrl.u32 %v7414, 7
        %v7416 = vsub.s32 %v7096, %v7415
        %v7417 = vrot.slane %v5635, %v7416
        %v7418 = vlaneseq
        %v7419 = vshrl.u32 %v7418, 7
        %v7420 = vsub.s32 %v7101, %v7419
        %v7421 = vrot.slane %v5638, %v7420
        %v7422 = vsel %vm7106, %v7421, %v7417
        %v7423 = vlaneseq
        %v7424 = vshrl.u32 %v7423, 7
        %v7425 = vsub.s32 %v7096, %v7424
        %v7426 = vrot.slane %v5641, %v7425
        %v7427 = vlaneseq
        %v7428 = vshrl.u32 %v7427, 7
        %v7429 = vsub.s32 %v7101, %v7428
        %v7430 = vrot.slane %v5644, %v7429
        %v7431 = vsel %vm7106, %v7430, %v7426
        %v7432 = vlaneseq
        %v7433 = vshrl.u32 %v7432, 7
        %v7434 = vsub.s32 %v7096, %v7433
        %v7435 = vrot.slane %v5647, %v7434
        %v7436 = vlaneseq
        %v7437 = vshrl.u32 %v7436, 7
        %v7438 = vsub.s32 %v7101, %v7437
        %v7439 = vrot.slane %v5650, %v7438
        %v7440 = vsel %vm7106, %v7439, %v7435
        %v7441 = vlaneseq
        %v7442 = vshrl.u32 %v7441, 7
        %v7443 = vsub.s32 %v7096, %v7442
        %v7444 = vrot.slane %v5653, %v7443
        %v7445 = vlaneseq
        %v7446 = vshrl.u32 %v7445, 7
        %v7447 = vsub.s32 %v7101, %v7446
        %v7448 = vrot.slane %v5656, %v7447
        %v7449 = vsel %vm7106, %v7448, %v7444
        %v7450 = vlaneseq
        %v7451 = vshrl.u32 %v7450, 7
        %v7452 = vsub.s32 %v7096, %v7451
        %v7453 = vrot.slane %v5659, %v7452
        %v7454 = vlaneseq
        %v7455 = vshrl.u32 %v7454, 7
        %v7456 = vsub.s32 %v7101, %v7455
        %v7457 = vrot.slane %v5662, %v7456
        %v7458 = vsel %vm7106, %v7457, %v7453
        %v7459 = vlaneseq
        %v7460 = vshrl.u32 %v7459, 7
        %v7461 = vsub.s32 %v7096, %v7460
        %v7462 = vrot.slane %v5665, %v7461
        %v7463 = vlaneseq
        %v7464 = vshrl.u32 %v7463, 7
        %v7465 = vsub.s32 %v7101, %v7464
        %v7466 = vrot.slane %v5668, %v7465
        %v7467 = vsel %vm7106, %v7466, %v7462
        %v7468 = vlaneseq
        %v7469 = vshrl.u32 %v7468, 7
        %v7470 = vsub.s32 %v7096, %v7469
        %v7471 = vrot.slane %v5671, %v7470
        %v7472 = vlaneseq
        %v7473 = vshrl.u32 %v7472, 7
        %v7474 = vsub.s32 %v7101, %v7473
        %v7475 = vrot.slane %v5674, %v7474
        %v7476 = vsel %vm7106, %v7475, %v7471
        %v7477 = vlaneseq
        %v7478 = vshrl.u32 %v7477, 7
        %v7479 = vsub.s32 %v7096, %v7478
        %v7480 = vrot.slane %v5677, %v7479
        %v7481 = vlaneseq
        %v7482 = vshrl.u32 %v7481, 7
        %v7483 = vsub.s32 %v7101, %v7482
        %v7484 = vrot.slane %v5680, %v7483
        %v7485 = vsel %vm7106, %v7484, %v7480
        %v7486 = vlaneseq
        %v7487 = vshrl.u32 %v7486, 7
        %v7488 = vsub.s32 %v7096, %v7487
        %v7489 = vrot.slane %v5683, %v7488
        %v7490 = vlaneseq
        %v7491 = vshrl.u32 %v7490, 7
        %v7492 = vsub.s32 %v7101, %v7491
        %v7493 = vrot.slane %v5686, %v7492
        %v7494 = vsel %vm7106, %v7493, %v7489
        %v7495 = vlaneseq
        %v7496 = vshrl.u32 %v7495, 7
        %v7497 = vsub.s32 %v7096, %v7496
        %v7498 = vrot.slane %v5689, %v7497
        %v7499 = vlaneseq
        %v7500 = vshrl.u32 %v7499, 7
        %v7501 = vsub.s32 %v7101, %v7500
        %v7502 = vrot.slane %v5692, %v7501
        %v7503 = vsel %vm7106, %v7502, %v7498
        %v7504 = vlaneseq
        %v7505 = vshrl.u32 %v7504, 7
        %v7506 = vsub.s32 %v7096, %v7505
        %v7507 = vrot.slane %v5695, %v7506
        %v7508 = vlaneseq
        %v7509 = vshrl.u32 %v7508, 7
        %v7510 = vsub.s32 %v7101, %v7509
        %v7511 = vrot.slane %v5698, %v7510
        %v7512 = vsel %vm7106, %v7511, %v7507
        %v7513 = vlaneseq
        %v7514 = vshrl.u32 %v7513, 7
        %v7515 = vsub.s32 %v7096, %v7514
        %v7516 = vrot.slane %v5701, %v7515
        %v7517 = vlaneseq
        %v7518 = vshrl.u32 %v7517, 7
        %v7519 = vsub.s32 %v7101, %v7518
        %v7520 = vrot.slane %v5704, %v7519
        %v7521 = vsel %vm7106, %v7520, %v7516
        %v7522 = vlaneseq
        %v7523 = vshrl.u32 %v7522, 7
        %v7524 = vsub.s32 %v7096, %v7523
        %v7525 = vrot.slane %v5707, %v7524
        %v7526 = vlaneseq
        %v7527 = vshrl.u32 %v7526, 7
        %v7528 = vsub.s32 %v7101, %v7527
        %v7529 = vrot.slane %v5710, %v7528
        %v7530 = vsel %vm7106, %v7529, %v7525
        %v7531 = vlaneseq
        %v7532 = vshrl.u32 %v7531, 7
        %v7533 = vsub.s32 %v7096, %v7532
        %v7534 = vrot.slane %v5713, %v7533
        %v7535 = vlaneseq
        %v7536 = vshrl.u32 %v7535, 7
        %v7537 = vsub.s32 %v7101, %v7536
        %v7538 = vrot.slane %v5716, %v7537
        %v7539 = vsel %vm7106, %v7538, %v7534
        %v7540 = vlaneseq
        %v7541 = vshrl.u32 %v7540, 7
        %v7542 = vsub.s32 %v7096, %v7541
        %v7543 = vrot.slane %v5719, %v7542
        %v7544 = vlaneseq
        %v7545 = vshrl.u32 %v7544, 7
        %v7546 = vsub.s32 %v7101, %v7545
        %v7547 = vrot.slane %v5722, %v7546
        %v7548 = vsel %vm7106, %v7547, %v7543
        %v7549 = vlaneseq
        %v7550 = vshrl.u32 %v7549, 7
        %v7551 = vsub.s32 %v7096, %v7550
        %v7552 = vrot.slane %v5725, %v7551
        %v7553 = vlaneseq
        %v7554 = vshrl.u32 %v7553, 7
        %v7555 = vsub.s32 %v7101, %v7554
        %v7556 = vrot.slane %v5728, %v7555
        %v7557 = vsel %vm7106, %v7556, %v7552
        %v7558 = vlaneseq
        %v7559 = vshrl.u32 %v7558, 7
        %v7560 = vsub.s32 %v7096, %v7559
        %v7561 = vrot.slane %v5731, %v7560
        %v7562 = vlaneseq
        %v7563 = vshrl.u32 %v7562, 7
        %v7564 = vsub.s32 %v7101, %v7563
        %v7565 = vrot.slane %v5734, %v7564
        %v7566 = vsel %vm7106, %v7565, %v7561
        %v7567 = vlaneseq
        %v7568 = vshrl.u32 %v7567, 7
        %v7569 = vsub.s32 %v7096, %v7568
        %v7570 = vrot.slane %v5737, %v7569
        %v7571 = vlaneseq
        %v7572 = vshrl.u32 %v7571, 7
        %v7573 = vsub.s32 %v7101, %v7572
        %v7574 = vrot.slane %v5740, %v7573
        %v7575 = vsel %vm7106, %v7574, %v7570
        %v7576 = vlaneseq
        %v7577 = vshrl.u32 %v7576, 7
        %v7578 = vsub.s32 %v7096, %v7577
        %v7579 = vrot.slane %v5743, %v7578
        %v7580 = vlaneseq
        %v7581 = vshrl.u32 %v7580, 7
        %v7582 = vsub.s32 %v7101, %v7581
        %v7583 = vrot.slane %v5746, %v7582
        %v7584 = vsel %vm7106, %v7583, %v7579
        %v7585 = vlaneseq
        %v7586 = vshrl.u32 %v7585, 7
        %v7587 = vsub.s32 %v7096, %v7586
        %v7588 = vrot.slane %v5749, %v7587
        %v7589 = vlaneseq
        %v7590 = vshrl.u32 %v7589, 7
        %v7591 = vsub.s32 %v7101, %v7590
        %v7592 = vrot.slane %v5752, %v7591
        %v7593 = vsel %vm7106, %v7592, %v7588
        %v7594 = vlaneseq
        %v7595 = vshrl.u32 %v7594, 7
        %v7596 = vsub.s32 %v7096, %v7595
        %v7597 = vrot.slane %v5755, %v7596
        %v7598 = vlaneseq
        %v7599 = vshrl.u32 %v7598, 7
        %v7600 = vsub.s32 %v7101, %v7599
        %v7601 = vrot.slane %v5758, %v7600
        %v7602 = vsel %vm7106, %v7601, %v7597
        %v7603 = vlaneseq
        %v7604 = vshrl.u32 %v7603, 7
        %v7605 = vsub.s32 %v7096, %v7604
        %v7606 = vrot.slane %v5761, %v7605
        %v7607 = vlaneseq
        %v7608 = vshrl.u32 %v7607, 7
        %v7609 = vsub.s32 %v7101, %v7608
        %v7610 = vrot.slane %v5764, %v7609
        %v7611 = vsel %vm7106, %v7610, %v7606
        %v7612 = vlaneseq
        %v7613 = vshrl.u32 %v7612, 7
        %v7614 = vsub.s32 %v7096, %v7613
        %v7615 = vrot.slane %v5767, %v7614
        %v7616 = vlaneseq
        %v7617 = vshrl.u32 %v7616, 7
        %v7618 = vsub.s32 %v7101, %v7617
        %v7619 = vrot.slane %v5770, %v7618
        %v7620 = vsel %vm7106, %v7619, %v7615
        %v7621 = vlaneseq
        %v7622 = vshrl.u32 %v7621, 7
        %v7623 = vsub.s32 %v7096, %v7622
        %v7624 = vrot.slane %v5773, %v7623
        %v7625 = vlaneseq
        %v7626 = vshrl.u32 %v7625, 7
        %v7627 = vsub.s32 %v7101, %v7626
        %v7628 = vrot.slane %v5776, %v7627
        %v7629 = vsel %vm7106, %v7628, %v7624
        %v7630 = vlaneseq
        %v7631 = vshrl.u32 %v7630, 7
        %v7632 = vsub.s32 %v7096, %v7631
        %v7633 = vrot.slane %v5779, %v7632
        %v7634 = vlaneseq
        %v7635 = vshrl.u32 %v7634, 7
        %v7636 = vsub.s32 %v7101, %v7635
        %v7637 = vrot.slane %v5782, %v7636
        %v7638 = vsel %vm7106, %v7637, %v7633
        %v7639 = vlaneseq
        %v7640 = vshrl.u32 %v7639, 7
        %v7641 = vsub.s32 %v7096, %v7640
        %v7642 = vrot.slane %v5785, %v7641
        %v7643 = vlaneseq
        %v7644 = vshrl.u32 %v7643, 7
        %v7645 = vsub.s32 %v7101, %v7644
        %v7646 = vrot.slane %v5788, %v7645
        %v7647 = vsel %vm7106, %v7646, %v7642
        %v7648 = vlaneseq
        %v7649 = vshrl.u32 %v7648, 7
        %v7650 = vsub.s32 %v7096, %v7649
        %v7651 = vrot.slane %v5791, %v7650
        %v7652 = vlaneseq
        %v7653 = vshrl.u32 %v7652, 7
        %v7654 = vsub.s32 %v7101, %v7653
        %v7655 = vrot.slane %v5794, %v7654
        %v7656 = vsel %vm7106, %v7655, %v7651
        %v7657 = vlaneseq
        %v7658 = vshrl.u32 %v7657, 7
        %v7659 = vsub.s32 %v7096, %v7658
        %v7660 = vrot.slane %v5797, %v7659
        %v7661 = vlaneseq
        %v7662 = vshrl.u32 %v7661, 7
        %v7663 = vsub.s32 %v7101, %v7662
        %v7664 = vrot.slane %v5800, %v7663
        %v7665 = vsel %vm7106, %v7664, %v7660
        %v7666 = vlaneseq
        %v7667 = vshrl.u32 %v7666, 7
        %v7668 = vsub.s32 %v7096, %v7667
        %v7669 = vrot.slane %v5803, %v7668
        %v7670 = vlaneseq
        %v7671 = vshrl.u32 %v7670, 7
        %v7672 = vsub.s32 %v7101, %v7671
        %v7673 = vrot.slane %v5806, %v7672
        %v7674 = vsel %vm7106, %v7673, %v7669
        %v7675 = vlaneseq
        %v7676 = vshrl.u32 %v7675, 7
        %v7677 = vsub.s32 %v7096, %v7676
        %v7678 = vrot.slane %v5809, %v7677
        %v7679 = vlaneseq
        %v7680 = vshrl.u32 %v7679, 7
        %v7681 = vsub.s32 %v7101, %v7680
        %v7682 = vrot.slane %v5812, %v7681
        %v7683 = vsel %vm7106, %v7682, %v7678
        %v7684 = vlaneseq
        %v7685 = vshrl.u32 %v7684, 7
        %v7686 = vsub.s32 %v7096, %v7685
        %v7687 = vrot.slane %v5815, %v7686
        %v7688 = vlaneseq
        %v7689 = vshrl.u32 %v7688, 7
        %v7690 = vsub.s32 %v7101, %v7689
        %v7691 = vrot.slane %v5818, %v7690
        %v7692 = vsel %vm7106, %v7691, %v7687
        %v7693 = vlaneseq
        %v7694 = vshrl.u32 %v7693, 7
        %v7695 = vsub.s32 %v7096, %v7694
        %v7696 = vrot.slane %v5821, %v7695
        %v7697 = vlaneseq
        %v7698 = vshrl.u32 %v7697, 7
        %v7699 = vsub.s32 %v7101, %v7698
        %v7700 = vrot.slane %v5824, %v7699
        %v7701 = vsel %vm7106, %v7700, %v7696
        %v7702 = vlaneseq
        %v7703 = vshrl.u32 %v7702, 7
        %v7704 = vsub.s32 %v7096, %v7703
        %v7705 = vrot.slane %v5827, %v7704
        %v7706 = vlaneseq
        %v7707 = vshrl.u32 %v7706, 7
        %v7708 = vsub.s32 %v7101, %v7707
        %v7709 = vrot.slane %v5830, %v7708
        %v7710 = vsel %vm7106, %v7709, %v7705
        %v7711 = vlaneseq
        %v7712 = vshrl.u32 %v7711, 7
        %v7713 = vsub.s32 %v7096, %v7712
        %v7714 = vrot.slane %v5833, %v7713
        %v7715 = vlaneseq
        %v7716 = vshrl.u32 %v7715, 7
        %v7717 = vsub.s32 %v7101, %v7716
        %v7718 = vrot.slane %v5836, %v7717
        %v7719 = vsel %vm7106, %v7718, %v7714
        %v7720 = vlaneseq
        %v7721 = vshrl.u32 %v7720, 7
        %v7722 = vsub.s32 %v7096, %v7721
        %v7723 = vrot.slane %v5839, %v7722
        %v7724 = vlaneseq
        %v7725 = vshrl.u32 %v7724, 7
        %v7726 = vsub.s32 %v7101, %v7725
        %v7727 = vrot.slane %v5842, %v7726
        %v7728 = vsel %vm7106, %v7727, %v7723
        %v7729 = vlaneseq
        %v7730 = vshrl.u32 %v7729, 7
        %v7731 = vsub.s32 %v7096, %v7730
        %v7732 = vrot.slane %v5845, %v7731
        %v7733 = vlaneseq
        %v7734 = vshrl.u32 %v7733, 7
        %v7735 = vsub.s32 %v7101, %v7734
        %v7736 = vrot.slane %v5848, %v7735
        %v7737 = vsel %vm7106, %v7736, %v7732
        %v7738 = vlaneseq
        %v7739 = vshrl.u32 %v7738, 7
        %v7740 = vsub.s32 %v7096, %v7739
        %v7741 = vrot.slane %v5851, %v7740
        %v7742 = vlaneseq
        %v7743 = vshrl.u32 %v7742, 7
        %v7744 = vsub.s32 %v7101, %v7743
        %v7745 = vrot.slane %v5854, %v7744
        %v7746 = vsel %vm7106, %v7745, %v7741
        %v7747 = vlaneseq
        %v7748 = vshrl.u32 %v7747, 7
        %v7749 = vsub.s32 %v7096, %v7748
        %v7750 = vrot.slane %v5857, %v7749
        %v7751 = vlaneseq
        %v7752 = vshrl.u32 %v7751, 7
        %v7753 = vsub.s32 %v7101, %v7752
        %v7754 = vrot.slane %v5860, %v7753
        %v7755 = vsel %vm7106, %v7754, %v7750
        %v7756 = vlaneseq
        %v7757 = vshrl.u32 %v7756, 7
        %v7758 = vsub.s32 %v7096, %v7757
        %v7759 = vrot.slane %v5863, %v7758
        %v7760 = vlaneseq
        %v7761 = vshrl.u32 %v7760, 7
        %v7762 = vsub.s32 %v7101, %v7761
        %v7763 = vrot.slane %v5866, %v7762
        %v7764 = vsel %vm7106, %v7763, %v7759
        %v7765 = vlaneseq
        %v7766 = vshrl.u32 %v7765, 7
        %v7767 = vsub.s32 %v7096, %v7766
        %v7768 = vrot.slane %v5869, %v7767
        %v7769 = vlaneseq
        %v7770 = vshrl.u32 %v7769, 7
        %v7771 = vsub.s32 %v7101, %v7770
        %v7772 = vrot.slane %v5872, %v7771
        %v7773 = vsel %vm7106, %v7772, %v7768
        %v7774 = vlaneseq
        %v7775 = vshrl.u32 %v7774, 7
        %v7776 = vsub.s32 %v7096, %v7775
        %v7777 = vrot.slane %v5875, %v7776
        %v7778 = vlaneseq
        %v7779 = vshrl.u32 %v7778, 7
        %v7780 = vsub.s32 %v7101, %v7779
        %v7781 = vrot.slane %v5878, %v7780
        %v7782 = vsel %vm7106, %v7781, %v7777
        %v7783 = vlaneseq
        %v7784 = vshrl.u32 %v7783, 7
        %v7785 = vsub.s32 %v7096, %v7784
        %v7786 = vrot.slane %v5881, %v7785
        %v7787 = vlaneseq
        %v7788 = vshrl.u32 %v7787, 7
        %v7789 = vsub.s32 %v7101, %v7788
        %v7790 = vrot.slane %v5884, %v7789
        %v7791 = vsel %vm7106, %v7790, %v7786
        %v7792 = vlaneseq
        %v7793 = vshrl.u32 %v7792, 7
        %v7794 = vsub.s32 %v7096, %v7793
        %v7795 = vrot.slane %v5887, %v7794
        %v7796 = vlaneseq
        %v7797 = vshrl.u32 %v7796, 7
        %v7798 = vsub.s32 %v7101, %v7797
        %v7799 = vrot.slane %v5890, %v7798
        %v7800 = vsel %vm7106, %v7799, %v7795
        %v7801 = vlaneseq
        %v7802 = vshrl.u32 %v7801, 7
        %v7803 = vsub.s32 %v7096, %v7802
        %v7804 = vrot.slane %v5893, %v7803
        %v7805 = vlaneseq
        %v7806 = vshrl.u32 %v7805, 7
        %v7807 = vsub.s32 %v7101, %v7806
        %v7808 = vrot.slane %v5896, %v7807
        %v7809 = vsel %vm7106, %v7808, %v7804
        %v7810 = vlaneseq
        %v7811 = vshrl.u32 %v7810, 7
        %v7812 = vsub.s32 %v7096, %v7811
        %v7813 = vrot.slane %v5899, %v7812
        %v7814 = vlaneseq
        %v7815 = vshrl.u32 %v7814, 7
        %v7816 = vsub.s32 %v7101, %v7815
        %v7817 = vrot.slane %v5902, %v7816
        %v7818 = vsel %vm7106, %v7817, %v7813
        %v7819 = vlaneseq
        %v7820 = vshrl.u32 %v7819, 7
        %v7821 = vsub.s32 %v7096, %v7820
        %v7822 = vrot.slane %v5905, %v7821
        %v7823 = vlaneseq
        %v7824 = vshrl.u32 %v7823, 7
        %v7825 = vsub.s32 %v7101, %v7824
        %v7826 = vrot.slane %v5908, %v7825
        %v7827 = vsel %vm7106, %v7826, %v7822
        %v7828 = vlaneseq
        %v7829 = vshrl.u32 %v7828, 7
        %v7830 = vsub.s32 %v7096, %v7829
        %v7831 = vrot.slane %v5911, %v7830
        %v7832 = vlaneseq
        %v7833 = vshrl.u32 %v7832, 7
        %v7834 = vsub.s32 %v7101, %v7833
        %v7835 = vrot.slane %v5914, %v7834
        %v7836 = vsel %vm7106, %v7835, %v7831
        %v7837 = vlaneseq
        %v7838 = vshrl.u32 %v7837, 7
        %v7839 = vsub.s32 %v7096, %v7838
        %v7840 = vrot.slane %v5917, %v7839
        %v7841 = vlaneseq
        %v7842 = vshrl.u32 %v7841, 7
        %v7843 = vsub.s32 %v7101, %v7842
        %v7844 = vrot.slane %v5920, %v7843
        %v7845 = vsel %vm7106, %v7844, %v7840
        %v7846 = vlaneseq
        %v7847 = vshrl.u32 %v7846, 7
        %v7848 = vsub.s32 %v7096, %v7847
        %v7849 = vrot.slane %v5923, %v7848
        %v7850 = vlaneseq
        %v7851 = vshrl.u32 %v7850, 7
        %v7852 = vsub.s32 %v7101, %v7851
        %v7853 = vrot.slane %v5926, %v7852
        %v7854 = vsel %vm7106, %v7853, %v7849
        %v7855 = vlaneseq
        %v7856 = vshrl.u32 %v7855, 7
        %v7857 = vsub.s32 %v7096, %v7856
        %v7858 = vrot.slane %v5929, %v7857
        %v7859 = vlaneseq
        %v7860 = vshrl.u32 %v7859, 7
        %v7861 = vsub.s32 %v7101, %v7860
        %v7862 = vrot.slane %v5932, %v7861
        %v7863 = vsel %vm7106, %v7862, %v7858
        %v7864 = vlaneseq
        %v7865 = vshrl.u32 %v7864, 7
        %v7866 = vsub.s32 %v7096, %v7865
        %v7867 = vrot.slane %v5935, %v7866
        %v7868 = vlaneseq
        %v7869 = vshrl.u32 %v7868, 7
        %v7870 = vsub.s32 %v7101, %v7869
        %v7871 = vrot.slane %v5938, %v7870
        %v7872 = vsel %vm7106, %v7871, %v7867
        %v7873 = vlaneseq
        %v7874 = vshrl.u32 %v7873, 7
        %v7875 = vsub.s32 %v7096, %v7874
        %v7876 = vrot.slane %v5941, %v7875
        %v7877 = vlaneseq
        %v7878 = vshrl.u32 %v7877, 7
        %v7879 = vsub.s32 %v7101, %v7878
        %v7880 = vrot.slane %v5944, %v7879
        %v7881 = vsel %vm7106, %v7880, %v7876
        %v7882 = vlaneseq
        %v7883 = vshrl.u32 %v7882, 7
        %v7884 = vsub.s32 %v7096, %v7883
        %v7885 = vrot.slane %v5947, %v7884
        %v7886 = vlaneseq
        %v7887 = vshrl.u32 %v7886, 7
        %v7888 = vsub.s32 %v7101, %v7887
        %v7889 = vrot.slane %v5950, %v7888
        %v7890 = vsel %vm7106, %v7889, %v7885
        %v7891 = vlaneseq
        %v7892 = vshrl.u32 %v7891, 7
        %v7893 = vsub.s32 %v7096, %v7892
        %v7894 = vrot.slane %v5953, %v7893
        %v7895 = vlaneseq
        %v7896 = vshrl.u32 %v7895, 7
        %v7897 = vsub.s32 %v7101, %v7896
        %v7898 = vrot.slane %v5956, %v7897
        %v7899 = vsel %vm7106, %v7898, %v7894
        %v7900 = vlaneseq
        %v7901 = vshrl.u32 %v7900, 7
        %v7902 = vsub.s32 %v7096, %v7901
        %v7903 = vrot.slane %v5959, %v7902
        %v7904 = vlaneseq
        %v7905 = vshrl.u32 %v7904, 7
        %v7906 = vsub.s32 %v7101, %v7905
        %v7907 = vrot.slane %v5962, %v7906
        %v7908 = vsel %vm7106, %v7907, %v7903
        %v7909 = vlaneseq
        %v7910 = vshrl.u32 %v7909, 7
        %v7911 = vsub.s32 %v7096, %v7910
        %v7912 = vrot.slane %v5965, %v7911
        %v7913 = vlaneseq
        %v7914 = vshrl.u32 %v7913, 7
        %v7915 = vsub.s32 %v7101, %v7914
        %v7916 = vrot.slane %v5968, %v7915
        %v7917 = vsel %vm7106, %v7916, %v7912
        %v7918 = vlaneseq
        %v7919 = vshrl.u32 %v7918, 7
        %v7920 = vsub.s32 %v7096, %v7919
        %v7921 = vrot.slane %v5971, %v7920
        %v7922 = vlaneseq
        %v7923 = vshrl.u32 %v7922, 7
        %v7924 = vsub.s32 %v7101, %v7923
        %v7925 = vrot.slane %v5974, %v7924
        %v7926 = vsel %vm7106, %v7925, %v7921
        %v7927 = vlaneseq
        %v7928 = vshrl.u32 %v7927, 7
        %v7929 = vsub.s32 %v7096, %v7928
        %v7930 = vrot.slane %v5977, %v7929
        %v7931 = vlaneseq
        %v7932 = vshrl.u32 %v7931, 7
        %v7933 = vsub.s32 %v7101, %v7932
        %v7934 = vrot.slane %v5980, %v7933
        %v7935 = vsel %vm7106, %v7934, %v7930
        %v7936 = vlaneseq
        %v7937 = vshrl.u32 %v7936, 7
        %v7938 = vsub.s32 %v7096, %v7937
        %v7939 = vrot.slane %v5983, %v7938
        %v7940 = vlaneseq
        %v7941 = vshrl.u32 %v7940, 7
        %v7942 = vsub.s32 %v7101, %v7941
        %v7943 = vrot.slane %v5986, %v7942
        %v7944 = vsel %vm7106, %v7943, %v7939
        %v7945 = vlaneseq
        %v7946 = vshrl.u32 %v7945, 7
        %v7947 = vsub.s32 %v7096, %v7946
        %v7948 = vrot.slane %v5989, %v7947
        %v7949 = vlaneseq
        %v7950 = vshrl.u32 %v7949, 7
        %v7951 = vsub.s32 %v7101, %v7950
        %v7952 = vrot.slane %v5992, %v7951
        %v7953 = vsel %vm7106, %v7952, %v7948
        %v7954 = vlaneseq
        %v7955 = vshrl.u32 %v7954, 7
        %v7956 = vsub.s32 %v7096, %v7955
        %v7957 = vrot.slane %v5995, %v7956
        %v7958 = vlaneseq
        %v7959 = vshrl.u32 %v7958, 7
        %v7960 = vsub.s32 %v7101, %v7959
        %v7961 = vrot.slane %v5998, %v7960
        %v7962 = vsel %vm7106, %v7961, %v7957
        %v7963 = vlaneseq
        %v7964 = vshrl.u32 %v7963, 7
        %v7965 = vsub.s32 %v7096, %v7964
        %v7966 = vrot.slane %v6001, %v7965
        %v7967 = vlaneseq
        %v7968 = vshrl.u32 %v7967, 7
        %v7969 = vsub.s32 %v7101, %v7968
        %v7970 = vrot.slane %v6004, %v7969
        %v7971 = vsel %vm7106, %v7970, %v7966
        %v7972 = vlaneseq
        %v7973 = vshrl.u32 %v7972, 7
        %v7974 = vsub.s32 %v7096, %v7973
        %v7975 = vrot.slane %v6007, %v7974
        %v7976 = vlaneseq
        %v7977 = vshrl.u32 %v7976, 7
        %v7978 = vsub.s32 %v7101, %v7977
        %v7979 = vrot.slane %v6010, %v7978
        %v7980 = vsel %vm7106, %v7979, %v7975
        %v7981 = vlaneseq
        %v7982 = vshrl.u32 %v7981, 7
        %v7983 = vsub.s32 %v7096, %v7982
        %v7984 = vrot.slane %v6013, %v7983
        %v7985 = vlaneseq
        %v7986 = vshrl.u32 %v7985, 7
        %v7987 = vsub.s32 %v7101, %v7986
        %v7988 = vrot.slane %v6016, %v7987
        %v7989 = vsel %vm7106, %v7988, %v7984
        %v7990 = vlaneseq
        %v7991 = vshrl.u32 %v7990, 7
        %v7992 = vsub.s32 %v7096, %v7991
        %v7993 = vrot.slane %v6019, %v7992
        %v7994 = vlaneseq
        %v7995 = vshrl.u32 %v7994, 7
        %v7996 = vsub.s32 %v7101, %v7995
        %v7997 = vrot.slane %v6022, %v7996
        %v7998 = vsel %vm7106, %v7997, %v7993
        %v7999 = vlaneseq
        %v8000 = vshrl.u32 %v7999, 7
        %v8001 = vsub.s32 %v7096, %v8000
        %v8002 = vrot.slane %v6025, %v8001
        %v8003 = vlaneseq
        %v8004 = vshrl.u32 %v8003, 7
        %v8005 = vsub.s32 %v7101, %v8004
        %v8006 = vrot.slane %v6028, %v8005
        %v8007 = vsel %vm7106, %v8006, %v8002
        %v8008 = vlaneseq
        %v8009 = vshrl.u32 %v8008, 7
        %v8010 = vsub.s32 %v7096, %v8009
        %v8011 = vrot.slane %v6031, %v8010
        %v8012 = vlaneseq
        %v8013 = vshrl.u32 %v8012, 7
        %v8014 = vsub.s32 %v7101, %v8013
        %v8015 = vrot.slane %v6034, %v8014
        %v8016 = vsel %vm7106, %v8015, %v8011
        %v8017 = vlaneseq
        %v8018 = vshrl.u32 %v8017, 7
        %v8019 = vsub.s32 %v7096, %v8018
        %v8020 = vrot.slane %v6037, %v8019
        %v8021 = vlaneseq
        %v8022 = vshrl.u32 %v8021, 7
        %v8023 = vsub.s32 %v7101, %v8022
        %v8024 = vrot.slane %v6040, %v8023
        %v8025 = vsel %vm7106, %v8024, %v8020
        %v8026 = vlaneseq
        %v8027 = vshrl.u32 %v8026, 7
        %v8028 = vsub.s32 %v7096, %v8027
        %v8029 = vrot.slane %v6043, %v8028
        %v8030 = vlaneseq
        %v8031 = vshrl.u32 %v8030, 7
        %v8032 = vsub.s32 %v7101, %v8031
        %v8033 = vrot.slane %v6046, %v8032
        %v8034 = vsel %vm7106, %v8033, %v8029
        %v8035 = vlaneseq
        %v8036 = vshrl.u32 %v8035, 7
        %v8037 = vsub.s32 %v7096, %v8036
        %v8038 = vrot.slane %v6049, %v8037
        %v8039 = vlaneseq
        %v8040 = vshrl.u32 %v8039, 7
        %v8041 = vsub.s32 %v7101, %v8040
        %v8042 = vrot.slane %v6052, %v8041
        %v8043 = vsel %vm7106, %v8042, %v8038
        %v8044 = vlaneseq
        %v8045 = vshrl.u32 %v8044, 7
        %v8046 = vsub.s32 %v7096, %v8045
        %v8047 = vrot.slane %v6055, %v8046
        %v8048 = vlaneseq
        %v8049 = vshrl.u32 %v8048, 7
        %v8050 = vsub.s32 %v7101, %v8049
        %v8051 = vrot.slane %v6058, %v8050
        %v8052 = vsel %vm7106, %v8051, %v8047
        %v8053 = vlaneseq
        %v8054 = vshrl.u32 %v8053, 7
        %v8055 = vsub.s32 %v7096, %v8054
        %v8056 = vrot.slane %v6061, %v8055
        %v8057 = vlaneseq
        %v8058 = vshrl.u32 %v8057, 7
        %v8059 = vsub.s32 %v7101, %v8058
        %v8060 = vrot.slane %v6064, %v8059
        %v8061 = vsel %vm7106, %v8060, %v8056
        %v8062 = vlaneseq
        %v8063 = vshrl.u32 %v8062, 7
        %v8064 = vsub.s32 %v7096, %v8063
        %v8065 = vrot.slane %v6067, %v8064
        %v8066 = vlaneseq
        %v8067 = vshrl.u32 %v8066, 7
        %v8068 = vsub.s32 %v7101, %v8067
        %v8069 = vrot.slane %v6070, %v8068
        %v8070 = vsel %vm7106, %v8069, %v8065
        %v8071 = vlaneseq
        %v8072 = vshrl.u32 %v8071, 7
        %v8073 = vsub.s32 %v7096, %v8072
        %v8074 = vrot.slane %v6073, %v8073
        %v8075 = vlaneseq
        %v8076 = vshrl.u32 %v8075, 7
        %v8077 = vsub.s32 %v7101, %v8076
        %v8078 = vrot.slane %v6076, %v8077
        %v8079 = vsel %vm7106, %v8078, %v8074
        %v8080 = vlaneseq
        %v8081 = vshrl.u32 %v8080, 7
        %v8082 = vsub.s32 %v7096, %v8081
        %v8083 = vrot.slane %v6079, %v8082
        %v8084 = vlaneseq
        %v8085 = vshrl.u32 %v8084, 7
        %v8086 = vsub.s32 %v7101, %v8085
        %v8087 = vrot.slane %v6082, %v8086
        %v8088 = vsel %vm7106, %v8087, %v8083
        %v8089 = vlaneseq
        %v8090 = vshrl.u32 %v8089, 7
        %v8091 = vsub.s32 %v7096, %v8090
        %v8092 = vrot.slane %v6085, %v8091
        %v8093 = vlaneseq
        %v8094 = vshrl.u32 %v8093, 7
        %v8095 = vsub.s32 %v7101, %v8094
        %v8096 = vrot.slane %v6088, %v8095
        %v8097 = vsel %vm7106, %v8096, %v8092
        %v8098 = vlaneseq
        %v8099 = vshrl.u32 %v8098, 7
        %v8100 = vsub.s32 %v7096, %v8099
        %v8101 = vrot.slane %v6091, %v8100
        %v8102 = vlaneseq
        %v8103 = vshrl.u32 %v8102, 7
        %v8104 = vsub.s32 %v7101, %v8103
        %v8105 = vrot.slane %v6094, %v8104
        %v8106 = vsel %vm7106, %v8105, %v8101
        %v8107 = vlaneseq
        %v8108 = vshrl.u32 %v8107, 7
        %v8109 = vsub.s32 %v7096, %v8108
        %v8110 = vrot.slane %v6097, %v8109
        %v8111 = vlaneseq
        %v8112 = vshrl.u32 %v8111, 7
        %v8113 = vsub.s32 %v7101, %v8112
        %v8114 = vrot.slane %v6100, %v8113
        %v8115 = vsel %vm7106, %v8114, %v8110
        %v8116 = vlaneseq
        %v8117 = vshrl.u32 %v8116, 7
        %v8118 = vsub.s32 %v7096, %v8117
        %v8119 = vrot.slane %v6103, %v8118
        %v8120 = vlaneseq
        %v8121 = vshrl.u32 %v8120, 7
        %v8122 = vsub.s32 %v7101, %v8121
        %v8123 = vrot.slane %v6106, %v8122
        %v8124 = vsel %vm7106, %v8123, %v8119
        %v8125 = vlaneseq
        %v8126 = vshrl.u32 %v8125, 7
        %v8127 = vsub.s32 %v7096, %v8126
        %v8128 = vrot.slane %v6109, %v8127
        %v8129 = vlaneseq
        %v8130 = vshrl.u32 %v8129, 7
        %v8131 = vsub.s32 %v7101, %v8130
        %v8132 = vrot.slane %v6112, %v8131
        %v8133 = vsel %vm7106, %v8132, %v8128
        %v8134 = vlaneseq
        %v8135 = vshrl.u32 %v8134, 7
        %v8136 = vsub.s32 %v7096, %v8135
        %v8137 = vrot.slane %v6115, %v8136
        %v8138 = vlaneseq
        %v8139 = vshrl.u32 %v8138, 7
        %v8140 = vsub.s32 %v7101, %v8139
        %v8141 = vrot.slane %v6118, %v8140
        %v8142 = vsel %vm7106, %v8141, %v8137
        %v8143 = vlaneseq
        %v8144 = vshrl.u32 %v8143, 7
        %v8145 = vsub.s32 %v7096, %v8144
        %v8146 = vrot.slane %v6121, %v8145
        %v8147 = vlaneseq
        %v8148 = vshrl.u32 %v8147, 7
        %v8149 = vsub.s32 %v7101, %v8148
        %v8150 = vrot.slane %v6124, %v8149
        %v8151 = vsel %vm7106, %v8150, %v8146
        %v8152 = vlaneseq
        %v8153 = vshrl.u32 %v8152, 7
        %v8154 = vsub.s32 %v7096, %v8153
        %v8155 = vrot.slane %v6127, %v8154
        %v8156 = vlaneseq
        %v8157 = vshrl.u32 %v8156, 7
        %v8158 = vsub.s32 %v7101, %v8157
        %v8159 = vrot.slane %v6130, %v8158
        %v8160 = vsel %vm7106, %v8159, %v8155
        %v8161 = vlaneseq
        %v8162 = vshrl.u32 %v8161, 7
        %v8163 = vsub.s32 %v7096, %v8162
        %v8164 = vrot.slane %v6133, %v8163
        %v8165 = vlaneseq
        %v8166 = vshrl.u32 %v8165, 7
        %v8167 = vsub.s32 %v7101, %v8166
        %v8168 = vrot.slane %v6136, %v8167
        %v8169 = vsel %vm7106, %v8168, %v8164
        %v8170 = vlaneseq
        %v8171 = vshrl.u32 %v8170, 7
        %v8172 = vsub.s32 %v7096, %v8171
        %v8173 = vrot.slane %v6139, %v8172
        %v8174 = vlaneseq
        %v8175 = vshrl.u32 %v8174, 7
        %v8176 = vsub.s32 %v7101, %v8175
        %v8177 = vrot.slane %v6142, %v8176
        %v8178 = vsel %vm7106, %v8177, %v8173
        %v8179 = vlaneseq
        %v8180 = vshrl.u32 %v8179, 7
        %v8181 = vsub.s32 %v7096, %v8180
        %v8182 = vrot.slane %v6145, %v8181
        %v8183 = vlaneseq
        %v8184 = vshrl.u32 %v8183, 7
        %v8185 = vsub.s32 %v7101, %v8184
        %v8186 = vrot.slane %v6148, %v8185
        %v8187 = vsel %vm7106, %v8186, %v8182
        %v8188 = vlaneseq
        %v8189 = vshrl.u32 %v8188, 7
        %v8190 = vsub.s32 %v7096, %v8189
        %v8191 = vrot.slane %v6151, %v8190
        %v8192 = vlaneseq
        %v8193 = vshrl.u32 %v8192, 7
        %v8194 = vsub.s32 %v7101, %v8193
        %v8195 = vrot.slane %v6154, %v8194
        %v8196 = vsel %vm7106, %v8195, %v8191
        %v8197 = vlaneseq
        %v8198 = vshrl.u32 %v8197, 7
        %v8199 = vsub.s32 %v7096, %v8198
        %v8200 = vrot.slane %v6157, %v8199
        %v8201 = vlaneseq
        %v8202 = vshrl.u32 %v8201, 7
        %v8203 = vsub.s32 %v7101, %v8202
        %v8204 = vrot.slane %v6160, %v8203
        %v8205 = vsel %vm7106, %v8204, %v8200
        %v8206 = vlaneseq
        %v8207 = vshrl.u32 %v8206, 7
        %v8208 = vsub.s32 %v7096, %v8207
        %v8209 = vrot.slane %v6163, %v8208
        %v8210 = vlaneseq
        %v8211 = vshrl.u32 %v8210, 7
        %v8212 = vsub.s32 %v7101, %v8211
        %v8213 = vrot.slane %v6166, %v8212
        %v8214 = vsel %vm7106, %v8213, %v8209
        %v8215 = vlaneseq
        %v8216 = vshrl.u32 %v8215, 7
        %v8217 = vsub.s32 %v7096, %v8216
        %v8218 = vrot.slane %v6169, %v8217
        %v8219 = vlaneseq
        %v8220 = vshrl.u32 %v8219, 7
        %v8221 = vsub.s32 %v7101, %v8220
        %v8222 = vrot.slane %v6172, %v8221
        %v8223 = vsel %vm7106, %v8222, %v8218
        %v8224 = vlaneseq
        %v8225 = vshrl.u32 %v8224, 7
        %v8226 = vsub.s32 %v7096, %v8225
        %v8227 = vrot.slane %v6175, %v8226
        %v8228 = vlaneseq
        %v8229 = vshrl.u32 %v8228, 7
        %v8230 = vsub.s32 %v7101, %v8229
        %v8231 = vrot.slane %v6178, %v8230
        %v8232 = vsel %vm7106, %v8231, %v8227
        %v8233 = vlaneseq
        %v8234 = vshrl.u32 %v8233, 7
        %v8235 = vsub.s32 %v7096, %v8234
        %v8236 = vrot.slane %v6181, %v8235
        %v8237 = vlaneseq
        %v8238 = vshrl.u32 %v8237, 7
        %v8239 = vsub.s32 %v7101, %v8238
        %v8240 = vrot.slane %v6184, %v8239
        %v8241 = vsel %vm7106, %v8240, %v8236
        %v8242 = vlaneseq
        %v8243 = vshrl.u32 %v8242, 7
        %v8244 = vsub.s32 %v7096, %v8243
        %v8245 = vrot.slane %v6187, %v8244
        %v8246 = vlaneseq
        %v8247 = vshrl.u32 %v8246, 7
        %v8248 = vsub.s32 %v7101, %v8247
        %v8249 = vrot.slane %v6190, %v8248
        %v8250 = vsel %vm7106, %v8249, %v8245
        %v8251 = vsel %vm784, %v7116, %v7107
        %v8252 = vsel %vm787, %v7125, %v8251
        %v8253 = vsel %vm790, %v7134, %v8252
        %v8254 = vsel %vm793, %v7143, %v8253
        %v8255 = vsel %vm796, %v7152, %v8254
        %v8256 = vsel %vm799, %v7161, %v8255
        %v8257 = vsel %vm802, %v7170, %v8256
        %v8258 = vsel %vm784, %v7188, %v7179
        %v8259 = vsel %vm787, %v7197, %v8258
        %v8260 = vsel %vm790, %v7206, %v8259
        %v8261 = vsel %vm793, %v7215, %v8260
        %v8262 = vsel %vm796, %v7224, %v8261
        %v8263 = vsel %vm799, %v7233, %v8262
        %v8264 = vsel %vm802, %v7242, %v8263
        %v8265 = vsel %vm784, %v7260, %v7251
        %v8266 = vsel %vm787, %v7269, %v8265
        %v8267 = vsel %vm790, %v7278, %v8266
        %v8268 = vsel %vm793, %v7287, %v8267
        %v8269 = vsel %vm796, %v7296, %v8268
        %v8270 = vsel %vm799, %v7305, %v8269
        %v8271 = vsel %vm802, %v7314, %v8270
        %v8272 = vsel %vm784, %v7332, %v7323
        %v8273 = vsel %vm787, %v7341, %v8272
        %v8274 = vsel %vm790, %v7350, %v8273
        %v8275 = vsel %vm793, %v7359, %v8274
        %v8276 = vsel %vm796, %v7368, %v8275
        %v8277 = vsel %vm799, %v7377, %v8276
        %v8278 = vsel %vm802, %v7386, %v8277
        %v8279 = vsel %vm784, %v7404, %v7395
        %v8280 = vsel %vm787, %v7413, %v8279
        %v8281 = vsel %vm790, %v7422, %v8280
        %v8282 = vsel %vm793, %v7431, %v8281
        %v8283 = vsel %vm796, %v7440, %v8282
        %v8284 = vsel %vm799, %v7449, %v8283
        %v8285 = vsel %vm802, %v7458, %v8284
        %v8286 = vsel %vm784, %v7476, %v7467
        %v8287 = vsel %vm787, %v7485, %v8286
        %v8288 = vsel %vm790, %v7494, %v8287
        %v8289 = vsel %vm793, %v7503, %v8288
        %v8290 = vsel %vm796, %v7512, %v8289
        %v8291 = vsel %vm799, %v7521, %v8290
        %v8292 = vsel %vm802, %v7530, %v8291
        %v8293 = vsel %vm784, %v7548, %v7539
        %v8294 = vsel %vm787, %v7557, %v8293
        %v8295 = vsel %vm790, %v7566, %v8294
        %v8296 = vsel %vm793, %v7575, %v8295
        %v8297 = vsel %vm796, %v7584, %v8296
        %v8298 = vsel %vm799, %v7593, %v8297
        %v8299 = vsel %vm802, %v7602, %v8298
        %v8300 = vsel %vm784, %v7620, %v7611
        %v8301 = vsel %vm787, %v7629, %v8300
        %v8302 = vsel %vm790, %v7638, %v8301
        %v8303 = vsel %vm793, %v7647, %v8302
        %v8304 = vsel %vm796, %v7656, %v8303
        %v8305 = vsel %vm799, %v7665, %v8304
        %v8306 = vsel %vm802, %v7674, %v8305
        %v8307 = vsel %vm784, %v7692, %v7683
        %v8308 = vsel %vm787, %v7701, %v8307
        %v8309 = vsel %vm790, %v7710, %v8308
        %v8310 = vsel %vm793, %v7719, %v8309
        %v8311 = vsel %vm796, %v7728, %v8310
        %v8312 = vsel %vm799, %v7737, %v8311
        %v8313 = vsel %vm802, %v7746, %v8312
        %v8314 = vsel %vm784, %v7764, %v7755
        %v8315 = vsel %vm787, %v7773, %v8314
        %v8316 = vsel %vm790, %v7782, %v8315
        %v8317 = vsel %vm793, %v7791, %v8316
        %v8318 = vsel %vm796, %v7800, %v8317
        %v8319 = vsel %vm799, %v7809, %v8318
        %v8320 = vsel %vm802, %v7818, %v8319
        %v8321 = vsel %vm784, %v7836, %v7827
        %v8322 = vsel %vm787, %v7845, %v8321
        %v8323 = vsel %vm790, %v7854, %v8322
        %v8324 = vsel %vm793, %v7863, %v8323
        %v8325 = vsel %vm796, %v7872, %v8324
        %v8326 = vsel %vm799, %v7881, %v8325
        %v8327 = vsel %vm802, %v7890, %v8326
        %v8328 = vsel %vm784, %v7908, %v7899
        %v8329 = vsel %vm787, %v7917, %v8328
        %v8330 = vsel %vm790, %v7926, %v8329
        %v8331 = vsel %vm793, %v7935, %v8330
        %v8332 = vsel %vm796, %v7944, %v8331
        %v8333 = vsel %vm799, %v7953, %v8332
        %v8334 = vsel %vm802, %v7962, %v8333
        %v8335 = vsel %vm784, %v7980, %v7971
        %v8336 = vsel %vm787, %v7989, %v8335
        %v8337 = vsel %vm790, %v7998, %v8336
        %v8338 = vsel %vm793, %v8007, %v8337
        %v8339 = vsel %vm796, %v8016, %v8338
        %v8340 = vsel %vm799, %v8025, %v8339
        %v8341 = vsel %vm802, %v8034, %v8340
        %v8342 = vsel %vm784, %v8052, %v8043
        %v8343 = vsel %vm787, %v8061, %v8342
        %v8344 = vsel %vm790, %v8070, %v8343
        %v8345 = vsel %vm793, %v8079, %v8344
        %v8346 = vsel %vm796, %v8088, %v8345
        %v8347 = vsel %vm799, %v8097, %v8346
        %v8348 = vsel %vm802, %v8106, %v8347
        %v8349 = vsel %vm784, %v8124, %v8115
        %v8350 = vsel %vm787, %v8133, %v8349
        %v8351 = vsel %vm790, %v8142, %v8350
        %v8352 = vsel %vm793, %v8151, %v8351
        %v8353 = vsel %vm796, %v8160, %v8352
        %v8354 = vsel %vm799, %v8169, %v8353
        %v8355 = vsel %vm802, %v8178, %v8354
        %v8356 = vsel %vm784, %v8196, %v8187
        %v8357 = vsel %vm787, %v8205, %v8356
        %v8358 = vsel %vm790, %v8214, %v8357
        %v8359 = vsel %vm793, %v8223, %v8358
        %v8360 = vsel %vm796, %v8232, %v8359
        %v8361 = vsel %vm799, %v8241, %v8360
        %v8362 = vsel %vm802, %v8250, %v8361
        %8379 = vmatprep.subr.mxu0 0.0
        %v8380 = vand.u32 %v8257, 4294901760
        %8381 = vmatpush1.msra.mxu0 %v8380
        %8382 = vmatprep.subr.mxu0 0.0
        %v8383 = vand.u32 %v8264, 4294901760
        %8384 = vmatpush1.msra.mxu0 %v8383
        %8385 = vmatprep.subr.mxu0 0.0
        %v8386 = vand.u32 %v8271, 4294901760
        %8387 = vmatpush1.msra.mxu0 %v8386
        %8388 = vmatprep.subr.mxu0 0.0
        %v8389 = vand.u32 %v8278, 4294901760
        %8390 = vmatpush1.msra.mxu0 %v8389
        %8391 = vmatprep.subr.mxu0 0.0
        %v8392 = vand.u32 %v8285, 4294901760
        %8393 = vmatpush1.msra.mxu0 %v8392
        %8394 = vmatprep.subr.mxu0 0.0
        %v8395 = vand.u32 %v8292, 4294901760
        %8396 = vmatpush1.msra.mxu0 %v8395
        %8397 = vmatprep.subr.mxu0 0.0
        %v8398 = vand.u32 %v8299, 4294901760
        %8399 = vmatpush1.msra.mxu0 %v8398
        %8400 = vmatprep.subr.mxu0 0.0
        %v8401 = vand.u32 %v8306, 4294901760
        %8402 = vmatpush1.msra.mxu0 %v8401
        %8403 = vmatprep.subr.mxu0 0.0
        %v8404 = vand.u32 %v8313, 4294901760
        %8405 = vmatpush1.msra.mxu0 %v8404
        %8406 = vmatprep.subr.mxu0 0.0
        %v8407 = vand.u32 %v8320, 4294901760
        %8408 = vmatpush1.msra.mxu0 %v8407
        %8409 = vmatprep.subr.mxu0 0.0
        %v8410 = vand.u32 %v8327, 4294901760
        %8411 = vmatpush1.msra.mxu0 %v8410
        %8412 = vmatprep.subr.mxu0 0.0
        %v8413 = vand.u32 %v8334, 4294901760
        %8414 = vmatpush1.msra.mxu0 %v8413
        %8415 = vmatprep.subr.mxu0 0.0
        %v8416 = vand.u32 %v8341, 4294901760
        %8417 = vmatpush1.msra.mxu0 %v8416
        %8418 = vmatprep.subr.mxu0 0.0
        %v8419 = vand.u32 %v8348, 4294901760
        %8420 = vmatpush1.msra.mxu0 %v8419
        %8421 = vmatprep.subr.mxu0 0.0
        %v8422 = vand.u32 %v8355, 4294901760
        %8423 = vmatpush1.msra.mxu0 %v8422
        %8424 = vmatprep.subr.mxu0 0.0
        %v8425 = vand.u32 %v8362, 4294901760
        %8426 = vmatpush1.msra.mxu0 %v8425
        %8427 = vmatprep.subr.mxu0 0.0
        %8428 = vmatpush1.msra.mxu0 0.0
        %8429 = vmatprep.subr.mxu0 0.0
        %8430 = vmatpush1.msra.mxu0 0.0
        %8431 = vmatprep.subr.mxu0 0.0
        %8432 = vmatpush1.msra.mxu0 0.0
        %8433 = vmatprep.subr.mxu0 0.0
        %8434 = vmatpush1.msra.mxu0 0.0
        %8435 = vmatprep.subr.mxu0 0.0
        %8436 = vmatpush1.msra.mxu0 0.0
        %8437 = vmatprep.subr.mxu0 0.0
        %8438 = vmatpush1.msra.mxu0 0.0
        %8439 = vmatprep.subr.mxu0 0.0
        %8440 = vmatpush1.msra.mxu0 0.0
        %8441 = vmatprep.subr.mxu0 0.0
        %8442 = vmatpush1.msra.mxu0 0.0
        %8443 = vmatprep.subr.mxu0 0.0
        %8444 = vmatpush1.msra.mxu0 0.0
        %8445 = vmatprep.subr.mxu0 0.0
        %8446 = vmatpush1.msra.mxu0 0.0
        %8447 = vmatprep.subr.mxu0 0.0
        %8448 = vmatpush1.msra.mxu0 0.0
        %8449 = vmatprep.subr.mxu0 0.0
        %8450 = vmatpush1.msra.mxu0 0.0
        %8451 = vmatprep.subr.mxu0 0.0
        %8452 = vmatpush1.msra.mxu0 0.0
        %8453 = vmatprep.subr.mxu0 0.0
        %8454 = vmatpush1.msra.mxu0 0.0
        %8455 = vmatprep.subr.mxu0 0.0
        %8456 = vmatpush1.msra.mxu0 0.0
        %8457 = vmatprep.subr.mxu0 0.0
        %8458 = vmatpush1.msra.mxu0 0.0
        %8459 = vmatprep.mubr.f32.mxu0 0.0
        %v8460 = vand.u32 %v6191, 4294901760
        %v8461 = vsub.f32 %v6191, %v8460
        %v8462 = vand.u32 %v8461, 4294901760
        %v8463 = vsub.f32 %v8461, %v8462
        %v8464 = vand.u32 %v8463, 4294901760
        %8465 = vmatmul.mubr.f32.gmra.mrb[0].mxu0 %v8464
        %v8466 = vpop.f32.mrb[0].mxu0
        %v8467 = vadd.f32 0.0, %v8466
        %v8468 = vpop.f32.mrb[0].mxu0
        %8469 = vdwg.mxu0
        %8470 = vmatprep.subr.mxu0 0.0
        %v8471 = vand.u32 %v8257, 4294901760
        %v8472 = vsub.f32 %v8257, %v8471
        %v8473 = vand.u32 %v8472, 4294901760
        %v8474 = vsub.f32 %v8472, %v8473
        %v8475 = vand.u32 %v8474, 4294901760
        %8476 = vmatpush1.msra.mxu0 %v8475
        %8477 = vmatprep.subr.mxu0 0.0
        %v8478 = vand.u32 %v8264, 4294901760
        %v8479 = vsub.f32 %v8264, %v8478
        %v8480 = vand.u32 %v8479, 4294901760
        %v8481 = vsub.f32 %v8479, %v8480
        %v8482 = vand.u32 %v8481, 4294901760
        %8483 = vmatpush1.msra.mxu0 %v8482
        %8484 = vmatprep.subr.mxu0 0.0
        %v8485 = vand.u32 %v8271, 4294901760
        %v8486 = vsub.f32 %v8271, %v8485
        %v8487 = vand.u32 %v8486, 4294901760
        %v8488 = vsub.f32 %v8486, %v8487
        %v8489 = vand.u32 %v8488, 4294901760
        %8490 = vmatpush1.msra.mxu0 %v8489
        %8491 = vmatprep.subr.mxu0 0.0
        %v8492 = vand.u32 %v8278, 4294901760
        %v8493 = vsub.f32 %v8278, %v8492
        %v8494 = vand.u32 %v8493, 4294901760
        %v8495 = vsub.f32 %v8493, %v8494
        %v8496 = vand.u32 %v8495, 4294901760
        %8497 = vmatpush1.msra.mxu0 %v8496
        %8498 = vmatprep.subr.mxu0 0.0
        %v8499 = vand.u32 %v8285, 4294901760
        %v8500 = vsub.f32 %v8285, %v8499
        %v8501 = vand.u32 %v8500, 4294901760
        %v8502 = vsub.f32 %v8500, %v8501
        %v8503 = vand.u32 %v8502, 4294901760
        %8504 = vmatpush1.msra.mxu0 %v8503
        %8505 = vmatprep.subr.mxu0 0.0
        %v8506 = vand.u32 %v8292, 4294901760
        %v8507 = vsub.f32 %v8292, %v8506
        %v8508 = vand.u32 %v8507, 4294901760
        %v8509 = vsub.f32 %v8507, %v8508
        %v8510 = vand.u32 %v8509, 4294901760
        %8511 = vmatpush1.msra.mxu0 %v8510
        %8512 = vmatprep.subr.mxu0 0.0
        %v8513 = vand.u32 %v8299, 4294901760
        %v8514 = vsub.f32 %v8299, %v8513
        %v8515 = vand.u32 %v8514, 4294901760
        %v8516 = vsub.f32 %v8514, %v8515
        %v8517 = vand.u32 %v8516, 4294901760
        %8518 = vmatpush1.msra.mxu0 %v8517
        %8519 = vmatprep.subr.mxu0 0.0
        %v8520 = vand.u32 %v8306, 4294901760
        %v8521 = vsub.f32 %v8306, %v8520
        %v8522 = vand.u32 %v8521, 4294901760
        %v8523 = vsub.f32 %v8521, %v8522
        %v8524 = vand.u32 %v8523, 4294901760
        %8525 = vmatpush1.msra.mxu0 %v8524
        %8526 = vmatprep.subr.mxu0 0.0
        %v8527 = vand.u32 %v8313, 4294901760
        %v8528 = vsub.f32 %v8313, %v8527
        %v8529 = vand.u32 %v8528, 4294901760
        %v8530 = vsub.f32 %v8528, %v8529
        %v8531 = vand.u32 %v8530, 4294901760
        %8532 = vmatpush1.msra.mxu0 %v8531
        %8533 = vmatprep.subr.mxu0 0.0
        %v8534 = vand.u32 %v8320, 4294901760
        %v8535 = vsub.f32 %v8320, %v8534
        %v8536 = vand.u32 %v8535, 4294901760
        %v8537 = vsub.f32 %v8535, %v8536
        %v8538 = vand.u32 %v8537, 4294901760
        %8539 = vmatpush1.msra.mxu0 %v8538
        %8540 = vmatprep.subr.mxu0 0.0
        %v8541 = vand.u32 %v8327, 4294901760
        %v8542 = vsub.f32 %v8327, %v8541
        %v8543 = vand.u32 %v8542, 4294901760
        %v8544 = vsub.f32 %v8542, %v8543
        %v8545 = vand.u32 %v8544, 4294901760
        %8546 = vmatpush1.msra.mxu0 %v8545
        %8547 = vmatprep.subr.mxu0 0.0
        %v8548 = vand.u32 %v8334, 4294901760
        %v8549 = vsub.f32 %v8334, %v8548
        %v8550 = vand.u32 %v8549, 4294901760
        %v8551 = vsub.f32 %v8549, %v8550
        %v8552 = vand.u32 %v8551, 4294901760
        %8553 = vmatpush1.msra.mxu0 %v8552
        %8554 = vmatprep.subr.mxu0 0.0
        %v8555 = vand.u32 %v8341, 4294901760
        %v8556 = vsub.f32 %v8341, %v8555
        %v8557 = vand.u32 %v8556, 4294901760
        %v8558 = vsub.f32 %v8556, %v8557
        %v8559 = vand.u32 %v8558, 4294901760
        %8560 = vmatpush1.msra.mxu0 %v8559
        %8561 = vmatprep.subr.mxu0 0.0
        %v8562 = vand.u32 %v8348, 4294901760
        %v8563 = vsub.f32 %v8348, %v8562
        %v8564 = vand.u32 %v8563, 4294901760
        %v8565 = vsub.f32 %v8563, %v8564
        %v8566 = vand.u32 %v8565, 4294901760
        %8567 = vmatpush1.msra.mxu0 %v8566
        %8568 = vmatprep.subr.mxu0 0.0
        %v8569 = vand.u32 %v8355, 4294901760
        %v8570 = vsub.f32 %v8355, %v8569
        %v8571 = vand.u32 %v8570, 4294901760
        %v8572 = vsub.f32 %v8570, %v8571
        %v8573 = vand.u32 %v8572, 4294901760
        %8574 = vmatpush1.msra.mxu0 %v8573
        %8575 = vmatprep.subr.mxu0 0.0
        %v8576 = vand.u32 %v8362, 4294901760
        %v8577 = vsub.f32 %v8362, %v8576
        %v8578 = vand.u32 %v8577, 4294901760
        %v8579 = vsub.f32 %v8577, %v8578
        %v8580 = vand.u32 %v8579, 4294901760
        %8581 = vmatpush1.msra.mxu0 %v8580
        %8582 = vmatprep.subr.mxu0 0.0
        %8583 = vmatpush1.msra.mxu0 0.0
        %8584 = vmatprep.subr.mxu0 0.0
        %8585 = vmatpush1.msra.mxu0 0.0
        %8586 = vmatprep.subr.mxu0 0.0
        %8587 = vmatpush1.msra.mxu0 0.0
        %8588 = vmatprep.subr.mxu0 0.0
        %8589 = vmatpush1.msra.mxu0 0.0
        %8590 = vmatprep.subr.mxu0 0.0
        %8591 = vmatpush1.msra.mxu0 0.0
        %8592 = vmatprep.subr.mxu0 0.0
        %8593 = vmatpush1.msra.mxu0 0.0
        %8594 = vmatprep.subr.mxu0 0.0
        %8595 = vmatpush1.msra.mxu0 0.0
        %8596 = vmatprep.subr.mxu0 0.0
        %8597 = vmatpush1.msra.mxu0 0.0
        %8598 = vmatprep.subr.mxu0 0.0
        %8599 = vmatpush1.msra.mxu0 0.0
        %8600 = vmatprep.subr.mxu0 0.0
        %8601 = vmatpush1.msra.mxu0 0.0
        %8602 = vmatprep.subr.mxu0 0.0
        %8603 = vmatpush1.msra.mxu0 0.0
        %8604 = vmatprep.subr.mxu0 0.0
        %8605 = vmatpush1.msra.mxu0 0.0
        %8606 = vmatprep.subr.mxu0 0.0
        %8607 = vmatpush1.msra.mxu0 0.0
        %8608 = vmatprep.subr.mxu0 0.0
        %8609 = vmatpush1.msra.mxu0 0.0
        %8610 = vmatprep.subr.mxu0 0.0
        %8611 = vmatpush1.msra.mxu0 0.0
        %8612 = vmatprep.subr.mxu0 0.0
        %8613 = vmatpush1.msra.mxu0 0.0
        %8614 = vmatprep.mubr.f32.mxu0 0.0
        %v8615 = vand.u32 %v6191, 4294901760
        %8616 = vmatmul.mubr.f32.gmra.mrb[0].mxu0 %v8615
        %v8617 = vpop.f32.mrb[0].mxu0
        %v8618 = vadd.f32 %v8467, %v8617
        %v8619 = vpop.f32.mrb[0].mxu0
        %8620 = vdwg.mxu0
        %8621 = vmatprep.subr.mxu0 0.0
        %v8622 = vand.u32 %v8257, 4294901760
        %v8623 = vsub.f32 %v8257, %v8622
        %8624 = vmatpush1.msra.mxu0 %v8623
        %8625 = vmatprep.subr.mxu0 0.0
        %v8626 = vand.u32 %v8264, 4294901760
        %v8627 = vsub.f32 %v8264, %v8626
        %8628 = vmatpush1.msra.mxu0 %v8627
        %8629 = vmatprep.subr.mxu0 0.0
        %v8630 = vand.u32 %v8271, 4294901760
        %v8631 = vsub.f32 %v8271, %v8630
        %8632 = vmatpush1.msra.mxu0 %v8631
        %8633 = vmatprep.subr.mxu0 0.0
        %v8634 = vand.u32 %v8278, 4294901760
        %v8635 = vsub.f32 %v8278, %v8634
        %8636 = vmatpush1.msra.mxu0 %v8635
        %8637 = vmatprep.subr.mxu0 0.0
        %v8638 = vand.u32 %v8285, 4294901760
        %v8639 = vsub.f32 %v8285, %v8638
        %8640 = vmatpush1.msra.mxu0 %v8639
        %8641 = vmatprep.subr.mxu0 0.0
        %v8642 = vand.u32 %v8292, 4294901760
        %v8643 = vsub.f32 %v8292, %v8642
        %8644 = vmatpush1.msra.mxu0 %v8643
        %8645 = vmatprep.subr.mxu0 0.0
        %v8646 = vand.u32 %v8299, 4294901760
        %v8647 = vsub.f32 %v8299, %v8646
        %8648 = vmatpush1.msra.mxu0 %v8647
        %8649 = vmatprep.subr.mxu0 0.0
        %v8650 = vand.u32 %v8306, 4294901760
        %v8651 = vsub.f32 %v8306, %v8650
        %8652 = vmatpush1.msra.mxu0 %v8651
        %8653 = vmatprep.subr.mxu0 0.0
        %v8654 = vand.u32 %v8313, 4294901760
        %v8655 = vsub.f32 %v8313, %v8654
        %8656 = vmatpush1.msra.mxu0 %v8655
        %8657 = vmatprep.subr.mxu0 0.0
        %v8658 = vand.u32 %v8320, 4294901760
        %v8659 = vsub.f32 %v8320, %v8658
        %8660 = vmatpush1.msra.mxu0 %v8659
        %8661 = vmatprep.subr.mxu0 0.0
        %v8662 = vand.u32 %v8327, 4294901760
        %v8663 = vsub.f32 %v8327, %v8662
        %8664 = vmatpush1.msra.mxu0 %v8663
        %8665 = vmatprep.subr.mxu0 0.0
        %v8666 = vand.u32 %v8334, 4294901760
        %v8667 = vsub.f32 %v8334, %v8666
        %8668 = vmatpush1.msra.mxu0 %v8667
        %8669 = vmatprep.subr.mxu0 0.0
        %v8670 = vand.u32 %v8341, 4294901760
        %v8671 = vsub.f32 %v8341, %v8670
        %8672 = vmatpush1.msra.mxu0 %v8671
        %8673 = vmatprep.subr.mxu0 0.0
        %v8674 = vand.u32 %v8348, 4294901760
        %v8675 = vsub.f32 %v8348, %v8674
        %8676 = vmatpush1.msra.mxu0 %v8675
        %8677 = vmatprep.subr.mxu0 0.0
        %v8678 = vand.u32 %v8355, 4294901760
        %v8679 = vsub.f32 %v8355, %v8678
        %8680 = vmatpush1.msra.mxu0 %v8679
        %8681 = vmatprep.subr.mxu0 0.0
        %v8682 = vand.u32 %v8362, 4294901760
        %v8683 = vsub.f32 %v8362, %v8682
        %8684 = vmatpush1.msra.mxu0 %v8683
        %8685 = vmatprep.subr.mxu0 0.0
        %8686 = vmatpush1.msra.mxu0 0.0
        %8687 = vmatprep.subr.mxu0 0.0
        %8688 = vmatpush1.msra.mxu0 0.0
        %8689 = vmatprep.subr.mxu0 0.0
        %8690 = vmatpush1.msra.mxu0 0.0
        %8691 = vmatprep.subr.mxu0 0.0
        %8692 = vmatpush1.msra.mxu0 0.0
        %8693 = vmatprep.subr.mxu0 0.0
        %8694 = vmatpush1.msra.mxu0 0.0
        %8695 = vmatprep.subr.mxu0 0.0
        %8696 = vmatpush1.msra.mxu0 0.0
        %8697 = vmatprep.subr.mxu0 0.0
        %8698 = vmatpush1.msra.mxu0 0.0
        %8699 = vmatprep.subr.mxu0 0.0
        %8700 = vmatpush1.msra.mxu0 0.0
        %8701 = vmatprep.subr.mxu0 0.0
        %8702 = vmatpush1.msra.mxu0 0.0
        %8703 = vmatprep.subr.mxu0 0.0
        %8704 = vmatpush1.msra.mxu0 0.0
        %8705 = vmatprep.subr.mxu0 0.0
        %8706 = vmatpush1.msra.mxu0 0.0
        %8707 = vmatprep.subr.mxu0 0.0
        %8708 = vmatpush1.msra.mxu0 0.0
        %8709 = vmatprep.subr.mxu0 0.0
        %8710 = vmatpush1.msra.mxu0 0.0
        %8711 = vmatprep.subr.mxu0 0.0
        %8712 = vmatpush1.msra.mxu0 0.0
        %8713 = vmatprep.subr.mxu0 0.0
        %8714 = vmatpush1.msra.mxu0 0.0
        %8715 = vmatprep.subr.mxu0 0.0
        %8716 = vmatpush1.msra.mxu0 0.0
        %8717 = vmatprep.mubr.f32.mxu0 0.0
        %v8718 = vand.u32 %v6191, 4294901760
        %v8719 = vsub.f32 %v6191, %v8718
        %8720 = vmatmul.mubr.f32.gmra.mrb[0].mxu0 %v8719
        %v8721 = vpop.f32.mrb[0].mxu0
        %v8722 = vadd.f32 %v8618, %v8721
        %v8723 = vpop.f32.mrb[0].mxu0
        %8724 = vdwg.mxu0
        %8725 = vmatprep.subr.mxu0 0.0
        %v8726 = vand.u32 %v8257, 4294901760
        %8727 = vmatpush1.msra.mxu0 %v8726
        %8728 = vmatprep.subr.mxu0 0.0
        %v8729 = vand.u32 %v8264, 4294901760
        %8730 = vmatpush1.msra.mxu0 %v8729
        %8731 = vmatprep.subr.mxu0 0.0
        %v8732 = vand.u32 %v8271, 4294901760
        %8733 = vmatpush1.msra.mxu0 %v8732
        %8734 = vmatprep.subr.mxu0 0.0
        %v8735 = vand.u32 %v8278, 4294901760
        %8736 = vmatpush1.msra.mxu0 %v8735
        %8737 = vmatprep.subr.mxu0 0.0
        %v8738 = vand.u32 %v8285, 4294901760
        %8739 = vmatpush1.msra.mxu0 %v8738
        %8740 = vmatprep.subr.mxu0 0.0
        %v8741 = vand.u32 %v8292, 4294901760
        %8742 = vmatpush1.msra.mxu0 %v8741
        %8743 = vmatprep.subr.mxu0 0.0
        %v8744 = vand.u32 %v8299, 4294901760
        %8745 = vmatpush1.msra.mxu0 %v8744
        %8746 = vmatprep.subr.mxu0 0.0
        %v8747 = vand.u32 %v8306, 4294901760
        %8748 = vmatpush1.msra.mxu0 %v8747
        %8749 = vmatprep.subr.mxu0 0.0
        %v8750 = vand.u32 %v8313, 4294901760
        %8751 = vmatpush1.msra.mxu0 %v8750
        %8752 = vmatprep.subr.mxu0 0.0
        %v8753 = vand.u32 %v8320, 4294901760
        %8754 = vmatpush1.msra.mxu0 %v8753
        %8755 = vmatprep.subr.mxu0 0.0
        %v8756 = vand.u32 %v8327, 4294901760
        %8757 = vmatpush1.msra.mxu0 %v8756
        %8758 = vmatprep.subr.mxu0 0.0
        %v8759 = vand.u32 %v8334, 4294901760
        %8760 = vmatpush1.msra.mxu0 %v8759
        %8761 = vmatprep.subr.mxu0 0.0
        %v8762 = vand.u32 %v8341, 4294901760
        %8763 = vmatpush1.msra.mxu0 %v8762
        %8764 = vmatprep.subr.mxu0 0.0
        %v8765 = vand.u32 %v8348, 4294901760
        %8766 = vmatpush1.msra.mxu0 %v8765
        %8767 = vmatprep.subr.mxu0 0.0
        %v8768 = vand.u32 %v8355, 4294901760
        %8769 = vmatpush1.msra.mxu0 %v8768
        %8770 = vmatprep.subr.mxu0 0.0
        %v8771 = vand.u32 %v8362, 4294901760
        %8772 = vmatpush1.msra.mxu0 %v8771
        %8773 = vmatprep.subr.mxu0 0.0
        %8774 = vmatpush1.msra.mxu0 0.0
        %8775 = vmatprep.subr.mxu0 0.0
        %8776 = vmatpush1.msra.mxu0 0.0
        %8777 = vmatprep.subr.mxu0 0.0
        %8778 = vmatpush1.msra.mxu0 0.0
        %8779 = vmatprep.subr.mxu0 0.0
        %8780 = vmatpush1.msra.mxu0 0.0
        %8781 = vmatprep.subr.mxu0 0.0
        %8782 = vmatpush1.msra.mxu0 0.0
        %8783 = vmatprep.subr.mxu0 0.0
        %8784 = vmatpush1.msra.mxu0 0.0
        %8785 = vmatprep.subr.mxu0 0.0
        %8786 = vmatpush1.msra.mxu0 0.0
        %8787 = vmatprep.subr.mxu0 0.0
        %8788 = vmatpush1.msra.mxu0 0.0
        %8789 = vmatprep.subr.mxu0 0.0
        %8790 = vmatpush1.msra.mxu0 0.0
        %8791 = vmatprep.subr.mxu0 0.0
        %8792 = vmatpush1.msra.mxu0 0.0
        %8793 = vmatprep.subr.mxu0 0.0
        %8794 = vmatpush1.msra.mxu0 0.0
        %8795 = vmatprep.subr.mxu0 0.0
        %8796 = vmatpush1.msra.mxu0 0.0
        %8797 = vmatprep.subr.mxu0 0.0
        %8798 = vmatpush1.msra.mxu0 0.0
        %8799 = vmatprep.subr.mxu0 0.0
        %8800 = vmatpush1.msra.mxu0 0.0
        %8801 = vmatprep.subr.mxu0 0.0
        %8802 = vmatpush1.msra.mxu0 0.0
        %8803 = vmatprep.subr.mxu0 0.0
        %8804 = vmatpush1.msra.mxu0 0.0
        %8805 = vmatprep.mubr.f32.mxu0 0.0
        %v8806 = vand.u32 %v6191, 4294901760
        %v8807 = vsub.f32 %v6191, %v8806
        %v8808 = vand.u32 %v8807, 4294901760
        %8809 = vmatmul.mubr.f32.gmra.mrb[0].mxu0 %v8808
        %v8810 = vpop.f32.mrb[0].mxu0
        %v8811 = vadd.f32 %v8722, %v8810
        %v8812 = vpop.f32.mrb[0].mxu0
        %8813 = vdwg.mxu0
        %8814 = vmatprep.subr.mxu0 0.0
        %v8815 = vand.u32 %v8257, 4294901760
        %v8816 = vsub.f32 %v8257, %v8815
        %v8817 = vand.u32 %v8816, 4294901760
        %8818 = vmatpush1.msra.mxu0 %v8817
        %8819 = vmatprep.subr.mxu0 0.0
        %v8820 = vand.u32 %v8264, 4294901760
        %v8821 = vsub.f32 %v8264, %v8820
        %v8822 = vand.u32 %v8821, 4294901760
        %8823 = vmatpush1.msra.mxu0 %v8822
        %8824 = vmatprep.subr.mxu0 0.0
        %v8825 = vand.u32 %v8271, 4294901760
        %v8826 = vsub.f32 %v8271, %v8825
        %v8827 = vand.u32 %v8826, 4294901760
        %8828 = vmatpush1.msra.mxu0 %v8827
        %8829 = vmatprep.subr.mxu0 0.0
        %v8830 = vand.u32 %v8278, 4294901760
        %v8831 = vsub.f32 %v8278, %v8830
        %v8832 = vand.u32 %v8831, 4294901760
        %8833 = vmatpush1.msra.mxu0 %v8832
        %8834 = vmatprep.subr.mxu0 0.0
        %v8835 = vand.u32 %v8285, 4294901760
        %v8836 = vsub.f32 %v8285, %v8835
        %v8837 = vand.u32 %v8836, 4294901760
        %8838 = vmatpush1.msra.mxu0 %v8837
        %8839 = vmatprep.subr.mxu0 0.0
        %v8840 = vand.u32 %v8292, 4294901760
        %v8841 = vsub.f32 %v8292, %v8840
        %v8842 = vand.u32 %v8841, 4294901760
        %8843 = vmatpush1.msra.mxu0 %v8842
        %8844 = vmatprep.subr.mxu0 0.0
        %v8845 = vand.u32 %v8299, 4294901760
        %v8846 = vsub.f32 %v8299, %v8845
        %v8847 = vand.u32 %v8846, 4294901760
        %8848 = vmatpush1.msra.mxu0 %v8847
        %8849 = vmatprep.subr.mxu0 0.0
        %v8850 = vand.u32 %v8306, 4294901760
        %v8851 = vsub.f32 %v8306, %v8850
        %v8852 = vand.u32 %v8851, 4294901760
        %8853 = vmatpush1.msra.mxu0 %v8852
        %8854 = vmatprep.subr.mxu0 0.0
        %v8855 = vand.u32 %v8313, 4294901760
        %v8856 = vsub.f32 %v8313, %v8855
        %v8857 = vand.u32 %v8856, 4294901760
        %8858 = vmatpush1.msra.mxu0 %v8857
        %8859 = vmatprep.subr.mxu0 0.0
        %v8860 = vand.u32 %v8320, 4294901760
        %v8861 = vsub.f32 %v8320, %v8860
        %v8862 = vand.u32 %v8861, 4294901760
        %8863 = vmatpush1.msra.mxu0 %v8862
        %8864 = vmatprep.subr.mxu0 0.0
        %v8865 = vand.u32 %v8327, 4294901760
        %v8866 = vsub.f32 %v8327, %v8865
        %v8867 = vand.u32 %v8866, 4294901760
        %8868 = vmatpush1.msra.mxu0 %v8867
        %8869 = vmatprep.subr.mxu0 0.0
        %v8870 = vand.u32 %v8334, 4294901760
        %v8871 = vsub.f32 %v8334, %v8870
        %v8872 = vand.u32 %v8871, 4294901760
        %8873 = vmatpush1.msra.mxu0 %v8872
        %8874 = vmatprep.subr.mxu0 0.0
        %v8875 = vand.u32 %v8341, 4294901760
        %v8876 = vsub.f32 %v8341, %v8875
        %v8877 = vand.u32 %v8876, 4294901760
        %8878 = vmatpush1.msra.mxu0 %v8877
        %8879 = vmatprep.subr.mxu0 0.0
        %v8880 = vand.u32 %v8348, 4294901760
        %v8881 = vsub.f32 %v8348, %v8880
        %v8882 = vand.u32 %v8881, 4294901760
        %8883 = vmatpush1.msra.mxu0 %v8882
        %8884 = vmatprep.subr.mxu0 0.0
        %v8885 = vand.u32 %v8355, 4294901760
        %v8886 = vsub.f32 %v8355, %v8885
        %v8887 = vand.u32 %v8886, 4294901760
        %8888 = vmatpush1.msra.mxu0 %v8887
        %8889 = vmatprep.subr.mxu0 0.0
        %v8890 = vand.u32 %v8362, 4294901760
        %v8891 = vsub.f32 %v8362, %v8890
        %v8892 = vand.u32 %v8891, 4294901760
        %8893 = vmatpush1.msra.mxu0 %v8892
        %8894 = vmatprep.subr.mxu0 0.0
        %8895 = vmatpush1.msra.mxu0 0.0
        %8896 = vmatprep.subr.mxu0 0.0
        %8897 = vmatpush1.msra.mxu0 0.0
        %8898 = vmatprep.subr.mxu0 0.0
        %8899 = vmatpush1.msra.mxu0 0.0
        %8900 = vmatprep.subr.mxu0 0.0
        %8901 = vmatpush1.msra.mxu0 0.0
        %8902 = vmatprep.subr.mxu0 0.0
        %8903 = vmatpush1.msra.mxu0 0.0
        %8904 = vmatprep.subr.mxu0 0.0
        %8905 = vmatpush1.msra.mxu0 0.0
        %8906 = vmatprep.subr.mxu0 0.0
        %8907 = vmatpush1.msra.mxu0 0.0
        %8908 = vmatprep.subr.mxu0 0.0
        %8909 = vmatpush1.msra.mxu0 0.0
        %8910 = vmatprep.subr.mxu0 0.0
        %8911 = vmatpush1.msra.mxu0 0.0
        %8912 = vmatprep.subr.mxu0 0.0
        %8913 = vmatpush1.msra.mxu0 0.0
        %8914 = vmatprep.subr.mxu0 0.0
        %8915 = vmatpush1.msra.mxu0 0.0
        %8916 = vmatprep.subr.mxu0 0.0
        %8917 = vmatpush1.msra.mxu0 0.0
        %8918 = vmatprep.subr.mxu0 0.0
        %8919 = vmatpush1.msra.mxu0 0.0
        %8920 = vmatprep.subr.mxu0 0.0
        %8921 = vmatpush1.msra.mxu0 0.0
        %8922 = vmatprep.subr.mxu0 0.0
        %8923 = vmatpush1.msra.mxu0 0.0
        %8924 = vmatprep.subr.mxu0 0.0
        %8925 = vmatpush1.msra.mxu0 0.0
        %8926 = vmatprep.mubr.f32.mxu0 0.0
        %v8927 = vand.u32 %v6191, 4294901760
        %8928 = vmatmul.mubr.f32.gmra.mrb[0].mxu0 %v8927
        %v8929 = vpop.f32.mrb[0].mxu0
        %v8930 = vadd.f32 %v8811, %v8929
        %v8931 = vpop.f32.mrb[0].mxu0
        %8932 = vdwg.mxu0
        %8933 = vmatprep.subr.mxu0 0.0
        %v8934 = vand.u32 %v8257, 4294901760
        %8935 = vmatpush1.msra.mxu0 %v8934
        %8936 = vmatprep.subr.mxu0 0.0
        %v8937 = vand.u32 %v8264, 4294901760
        %8938 = vmatpush1.msra.mxu0 %v8937
        %8939 = vmatprep.subr.mxu0 0.0
        %v8940 = vand.u32 %v8271, 4294901760
        %8941 = vmatpush1.msra.mxu0 %v8940
        %8942 = vmatprep.subr.mxu0 0.0
        %v8943 = vand.u32 %v8278, 4294901760
        %8944 = vmatpush1.msra.mxu0 %v8943
        %8945 = vmatprep.subr.mxu0 0.0
        %v8946 = vand.u32 %v8285, 4294901760
        %8947 = vmatpush1.msra.mxu0 %v8946
        %8948 = vmatprep.subr.mxu0 0.0
        %v8949 = vand.u32 %v8292, 4294901760
        %8950 = vmatpush1.msra.mxu0 %v8949
        %8951 = vmatprep.subr.mxu0 0.0
        %v8952 = vand.u32 %v8299, 4294901760
        %8953 = vmatpush1.msra.mxu0 %v8952
        %8954 = vmatprep.subr.mxu0 0.0
        %v8955 = vand.u32 %v8306, 4294901760
        %8956 = vmatpush1.msra.mxu0 %v8955
        %8957 = vmatprep.subr.mxu0 0.0
        %v8958 = vand.u32 %v8313, 4294901760
        %8959 = vmatpush1.msra.mxu0 %v8958
        %8960 = vmatprep.subr.mxu0 0.0
        %v8961 = vand.u32 %v8320, 4294901760
        %8962 = vmatpush1.msra.mxu0 %v8961
        %8963 = vmatprep.subr.mxu0 0.0
        %v8964 = vand.u32 %v8327, 4294901760
        %8965 = vmatpush1.msra.mxu0 %v8964
        %8966 = vmatprep.subr.mxu0 0.0
        %v8967 = vand.u32 %v8334, 4294901760
        %8968 = vmatpush1.msra.mxu0 %v8967
        %8969 = vmatprep.subr.mxu0 0.0
        %v8970 = vand.u32 %v8341, 4294901760
        %8971 = vmatpush1.msra.mxu0 %v8970
        %8972 = vmatprep.subr.mxu0 0.0
        %v8973 = vand.u32 %v8348, 4294901760
        %8974 = vmatpush1.msra.mxu0 %v8973
        %8975 = vmatprep.subr.mxu0 0.0
        %v8976 = vand.u32 %v8355, 4294901760
        %8977 = vmatpush1.msra.mxu0 %v8976
        %8978 = vmatprep.subr.mxu0 0.0
        %v8979 = vand.u32 %v8362, 4294901760
        %8980 = vmatpush1.msra.mxu0 %v8979
        %8981 = vmatprep.subr.mxu0 0.0
        %8982 = vmatpush1.msra.mxu0 0.0
        %8983 = vmatprep.subr.mxu0 0.0
        %8984 = vmatpush1.msra.mxu0 0.0
        %8985 = vmatprep.subr.mxu0 0.0
        %8986 = vmatpush1.msra.mxu0 0.0
        %8987 = vmatprep.subr.mxu0 0.0
        %8988 = vmatpush1.msra.mxu0 0.0
        %8989 = vmatprep.subr.mxu0 0.0
        %8990 = vmatpush1.msra.mxu0 0.0
        %8991 = vmatprep.subr.mxu0 0.0
        %8992 = vmatpush1.msra.mxu0 0.0
        %8993 = vmatprep.subr.mxu0 0.0
        %8994 = vmatpush1.msra.mxu0 0.0
        %8995 = vmatprep.subr.mxu0 0.0
        %8996 = vmatpush1.msra.mxu0 0.0
        %8997 = vmatprep.subr.mxu0 0.0
        %8998 = vmatpush1.msra.mxu0 0.0
        %8999 = vmatprep.subr.mxu0 0.0
        %9000 = vmatpush1.msra.mxu0 0.0
        %9001 = vmatprep.subr.mxu0 0.0
        %9002 = vmatpush1.msra.mxu0 0.0
        %9003 = vmatprep.subr.mxu0 0.0
        %9004 = vmatpush1.msra.mxu0 0.0
        %9005 = vmatprep.subr.mxu0 0.0
        %9006 = vmatpush1.msra.mxu0 0.0
        %9007 = vmatprep.subr.mxu0 0.0
        %9008 = vmatpush1.msra.mxu0 0.0
        %9009 = vmatprep.subr.mxu0 0.0
        %9010 = vmatpush1.msra.mxu0 0.0
        %9011 = vmatprep.subr.mxu0 0.0
        %9012 = vmatpush1.msra.mxu0 0.0
        %9013 = vmatprep.mubr.f32.mxu0 0.0
        %v9014 = vand.u32 %v6191, 4294901760
        %9015 = vmatmul.mubr.f32.gmra.mrb[0].mxu0 %v9014
        %v9016 = vpop.f32.mrb[0].mxu0
        %v9017 = vadd.f32 %v8930, %v9016
        %v9018 = vpop.f32.mrb[0].mxu0
        %9019 = vdwg.mxu0
        %9021 = vrot.lane.b32.xlu0 %v9017, 4
        %v9022 = vpop.permute.xlu0 %9021
        %v9024 = vadd.f32 %v6837, %v9022
        %vm9025 = vcmask 66592
        %9026 = vst.msk [vmem:[#allocation2] sm:$0x3] %vm9025, %v9024
        %v9027 = vld [vmem:[#allocation2] sm:$0x3]
        %v9028 = vld [vmem:[%s9] sm:$0xff]
        %v9029 = vld [vmem:[%s9 + $0x8] sm:$0x1]
        %vm9030 = vcmask 72704
        %v9032 = vsel %vm9030, %v9027, 0
        %v9035 = vsel %vm5425, %v9029, 0
        %9037 = vmatprep.subr.mxu0 0.0
        %v9038 = vand.u32 %v9028, 4294901760
        %9039 = vmatpush1.msra.mxu0 %v9038
        %9040 = vmatprep.subr.mxu0 0.0
        %v9041 = vand.u32 %v9035, 4294901760
        %9042 = vmatpush1.msra.mxu0 %v9041
        %9043 = vmatprep.subr.mxu0 0.0
        %9044 = vmatpush1.msra.mxu0 0.0
        %9045 = vmatprep.subr.mxu0 0.0
        %9046 = vmatpush1.msra.mxu0 0.0
        %9047 = vmatprep.subr.mxu0 0.0
        %9048 = vmatpush1.msra.mxu0 0.0
        %9049 = vmatprep.subr.mxu0 0.0
        %9050 = vmatpush1.msra.mxu0 0.0
        %9051 = vmatprep.subr.mxu0 0.0
        %9052 = vmatpush1.msra.mxu0 0.0
        %9053 = vmatprep.subr.mxu0 0.0
        %9054 = vmatpush1.msra.mxu0 0.0
        %9055 = vmatprep.subr.mxu0 0.0
        %9056 = vmatpush1.msra.mxu0 0.0
        %9057 = vmatprep.subr.mxu0 0.0
        %9058 = vmatpush1.msra.mxu0 0.0
        %9059 = vmatprep.subr.mxu0 0.0
        %9060 = vmatpush1.msra.mxu0 0.0
        %9061 = vmatprep.subr.mxu0 0.0
        %9062 = vmatpush1.msra.mxu0 0.0
        %9063 = vmatprep.subr.mxu0 0.0
        %9064 = vmatpush1.msra.mxu0 0.0
        %9065 = vmatprep.subr.mxu0 0.0
        %9066 = vmatpush1.msra.mxu0 0.0
        %9067 = vmatprep.subr.mxu0 0.0
        %9068 = vmatpush1.msra.mxu0 0.0
        %9069 = vmatprep.subr.mxu0 0.0
        %9070 = vmatpush1.msra.mxu0 0.0
        %9071 = vmatprep.subr.mxu0 0.0
        %9072 = vmatpush1.msra.mxu0 0.0
        %9073 = vmatprep.subr.mxu0 0.0
        %9074 = vmatpush1.msra.mxu0 0.0
        %9075 = vmatprep.subr.mxu0 0.0
        %9076 = vmatpush1.msra.mxu0 0.0
        %9077 = vmatprep.subr.mxu0 0.0
        %9078 = vmatpush1.msra.mxu0 0.0
        %9079 = vmatprep.subr.mxu0 0.0
        %9080 = vmatpush1.msra.mxu0 0.0
        %9081 = vmatprep.subr.mxu0 0.0
        %9082 = vmatpush1.msra.mxu0 0.0
        %9083 = vmatprep.subr.mxu0 0.0
        %9084 = vmatpush1.msra.mxu0 0.0
        %9085 = vmatprep.subr.mxu0 0.0
        %9086 = vmatpush1.msra.mxu0 0.0
        %9087 = vmatprep.subr.mxu0 0.0
        %9088 = vmatpush1.msra.mxu0 0.0
        %9089 = vmatprep.subr.mxu0 0.0
        %9090 = vmatpush1.msra.mxu0 0.0
        %9091 = vmatprep.subr.mxu0 0.0
        %9092 = vmatpush1.msra.mxu0 0.0
        %9093 = vmatprep.subr.mxu0 0.0
        %9094 = vmatpush1.msra.mxu0 0.0
        %9095 = vmatprep.subr.mxu0 0.0
        %9096 = vmatpush1.msra.mxu0 0.0
        %9097 = vmatprep.subr.mxu0 0.0
        %9098 = vmatpush1.msra.mxu0 0.0
        %9099 = vmatprep.subr.mxu0 0.0
        %9100 = vmatpush1.msra.mxu0 0.0
        %9101 = vmatprep.subr.mxu0 0.0
        %9102 = vmatpush1.msra.mxu0 0.0
        %9103 = vmatprep.mubr.f32.mxu0 0.0
        %v9104 = vand.u32 %v9032, 4294901760
        %v9105 = vsub.f32 %v9032, %v9104
        %v9106 = vand.u32 %v9105, 4294901760
        %v9107 = vsub.f32 %v9105, %v9106
        %v9108 = vand.u32 %v9107, 4294901760
        %9109 = vmatmul.mubr.f32.gmra.mrb[0].mxu0 %v9108
        %v9110 = vpop.f32.mrb[0].mxu0
        %v9111 = vadd.f32 0.0, %v9110
        %v9112 = vpop.f32.mrb[0].mxu0
        %9113 = vdwg.mxu0
        %9114 = vmatprep.subr.mxu0 0.0
        %v9115 = vand.u32 %v9028, 4294901760
        %v9116 = vsub.f32 %v9028, %v9115
        %v9117 = vand.u32 %v9116, 4294901760
        %v9118 = vsub.f32 %v9116, %v9117
        %v9119 = vand.u32 %v9118, 4294901760
        %9120 = vmatpush1.msra.mxu0 %v9119
        %9121 = vmatprep.subr.mxu0 0.0
        %v9122 = vand.u32 %v9035, 4294901760
        %v9123 = vsub.f32 %v9035, %v9122
        %v9124 = vand.u32 %v9123, 4294901760
        %v9125 = vsub.f32 %v9123, %v9124
        %v9126 = vand.u32 %v9125, 4294901760
        %9127 = vmatpush1.msra.mxu0 %v9126
        %9128 = vmatprep.subr.mxu0 0.0
        %9129 = vmatpush1.msra.mxu0 0.0
        %9130 = vmatprep.subr.mxu0 0.0
        %9131 = vmatpush1.msra.mxu0 0.0
        %9132 = vmatprep.subr.mxu0 0.0
        %9133 = vmatpush1.msra.mxu0 0.0
        %9134 = vmatprep.subr.mxu0 0.0
        %9135 = vmatpush1.msra.mxu0 0.0
        %9136 = vmatprep.subr.mxu0 0.0
        %9137 = vmatpush1.msra.mxu0 0.0
        %9138 = vmatprep.subr.mxu0 0.0
        %9139 = vmatpush1.msra.mxu0 0.0
        %9140 = vmatprep.subr.mxu0 0.0
        %9141 = vmatpush1.msra.mxu0 0.0
        %9142 = vmatprep.subr.mxu0 0.0
        %9143 = vmatpush1.msra.mxu0 0.0
        %9144 = vmatprep.subr.mxu0 0.0
        %9145 = vmatpush1.msra.mxu0 0.0
        %9146 = vmatprep.subr.mxu0 0.0
        %9147 = vmatpush1.msra.mxu0 0.0
        %9148 = vmatprep.subr.mxu0 0.0
        %9149 = vmatpush1.msra.mxu0 0.0
        %9150 = vmatprep.subr.mxu0 0.0
        %9151 = vmatpush1.msra.mxu0 0.0
        %9152 = vmatprep.subr.mxu0 0.0
        %9153 = vmatpush1.msra.mxu0 0.0
        %9154 = vmatprep.subr.mxu0 0.0
        %9155 = vmatpush1.msra.mxu0 0.0
        %9156 = vmatprep.subr.mxu0 0.0
        %9157 = vmatpush1.msra.mxu0 0.0
        %9158 = vmatprep.subr.mxu0 0.0
        %9159 = vmatpush1.msra.mxu0 0.0
        %9160 = vmatprep.subr.mxu0 0.0
        %9161 = vmatpush1.msra.mxu0 0.0
        %9162 = vmatprep.subr.mxu0 0.0
        %9163 = vmatpush1.msra.mxu0 0.0
        %9164 = vmatprep.subr.mxu0 0.0
        %9165 = vmatpush1.msra.mxu0 0.0
        %9166 = vmatprep.subr.mxu0 0.0
        %9167 = vmatpush1.msra.mxu0 0.0
        %9168 = vmatprep.subr.mxu0 0.0
        %9169 = vmatpush1.msra.mxu0 0.0
        %9170 = vmatprep.subr.mxu0 0.0
        %9171 = vmatpush1.msra.mxu0 0.0
        %9172 = vmatprep.subr.mxu0 0.0
        %9173 = vmatpush1.msra.mxu0 0.0
        %9174 = vmatprep.subr.mxu0 0.0
        %9175 = vmatpush1.msra.mxu0 0.0
        %9176 = vmatprep.subr.mxu0 0.0
        %9177 = vmatpush1.msra.mxu0 0.0
        %9178 = vmatprep.subr.mxu0 0.0
        %9179 = vmatpush1.msra.mxu0 0.0
        %9180 = vmatprep.subr.mxu0 0.0
        %9181 = vmatpush1.msra.mxu0 0.0
        %9182 = vmatprep.subr.mxu0 0.0
        %9183 = vmatpush1.msra.mxu0 0.0
        %9184 = vmatprep.subr.mxu0 0.0
        %9185 = vmatpush1.msra.mxu0 0.0
        %9186 = vmatprep.subr.mxu0 0.0
        %9187 = vmatpush1.msra.mxu0 0.0
        %9188 = vmatprep.mubr.f32.mxu0 0.0
        %v9189 = vand.u32 %v9032, 4294901760
        %9190 = vmatmul.mubr.f32.gmra.mrb[0].mxu0 %v9189
        %v9191 = vpop.f32.mrb[0].mxu0
        %v9192 = vadd.f32 %v9111, %v9191
        %v9193 = vpop.f32.mrb[0].mxu0
        %9194 = vdwg.mxu0
        %9195 = vmatprep.subr.mxu0 0.0
        %v9196 = vand.u32 %v9028, 4294901760
        %v9197 = vsub.f32 %v9028, %v9196
        %9198 = vmatpush1.msra.mxu0 %v9197
        %9199 = vmatprep.subr.mxu0 0.0
        %v9200 = vand.u32 %v9035, 4294901760
        %v9201 = vsub.f32 %v9035, %v9200
        %9202 = vmatpush1.msra.mxu0 %v9201
        %9203 = vmatprep.subr.mxu0 0.0
        %9204 = vmatpush1.msra.mxu0 0.0
        %9205 = vmatprep.subr.mxu0 0.0
        %9206 = vmatpush1.msra.mxu0 0.0
        %9207 = vmatprep.subr.mxu0 0.0
        %9208 = vmatpush1.msra.mxu0 0.0
        %9209 = vmatprep.subr.mxu0 0.0
        %9210 = vmatpush1.msra.mxu0 0.0
        %9211 = vmatprep.subr.mxu0 0.0
        %9212 = vmatpush1.msra.mxu0 0.0
        %9213 = vmatprep.subr.mxu0 0.0
        %9214 = vmatpush1.msra.mxu0 0.0
        %9215 = vmatprep.subr.mxu0 0.0
        %9216 = vmatpush1.msra.mxu0 0.0
        %9217 = vmatprep.subr.mxu0 0.0
        %9218 = vmatpush1.msra.mxu0 0.0
        %9219 = vmatprep.subr.mxu0 0.0
        %9220 = vmatpush1.msra.mxu0 0.0
        %9221 = vmatprep.subr.mxu0 0.0
        %9222 = vmatpush1.msra.mxu0 0.0
        %9223 = vmatprep.subr.mxu0 0.0
        %9224 = vmatpush1.msra.mxu0 0.0
        %9225 = vmatprep.subr.mxu0 0.0
        %9226 = vmatpush1.msra.mxu0 0.0
        %9227 = vmatprep.subr.mxu0 0.0
        %9228 = vmatpush1.msra.mxu0 0.0
        %9229 = vmatprep.subr.mxu0 0.0
        %9230 = vmatpush1.msra.mxu0 0.0
        %9231 = vmatprep.subr.mxu0 0.0
        %9232 = vmatpush1.msra.mxu0 0.0
        %9233 = vmatprep.subr.mxu0 0.0
        %9234 = vmatpush1.msra.mxu0 0.0
        %9235 = vmatprep.subr.mxu0 0.0
        %9236 = vmatpush1.msra.mxu0 0.0
        %9237 = vmatprep.subr.mxu0 0.0
        %9238 = vmatpush1.msra.mxu0 0.0
        %9239 = vmatprep.subr.mxu0 0.0
        %9240 = vmatpush1.msra.mxu0 0.0
        %9241 = vmatprep.subr.mxu0 0.0
        %9242 = vmatpush1.msra.mxu0 0.0
        %9243 = vmatprep.subr.mxu0 0.0
        %9244 = vmatpush1.msra.mxu0 0.0
        %9245 = vmatprep.subr.mxu0 0.0
        %9246 = vmatpush1.msra.mxu0 0.0
        %9247 = vmatprep.subr.mxu0 0.0
        %9248 = vmatpush1.msra.mxu0 0.0
        %9249 = vmatprep.subr.mxu0 0.0
        %9250 = vmatpush1.msra.mxu0 0.0
        %9251 = vmatprep.subr.mxu0 0.0
        %9252 = vmatpush1.msra.mxu0 0.0
        %9253 = vmatprep.subr.mxu0 0.0
        %9254 = vmatpush1.msra.mxu0 0.0
        %9255 = vmatprep.subr.mxu0 0.0
        %9256 = vmatpush1.msra.mxu0 0.0
        %9257 = vmatprep.subr.mxu0 0.0
        %9258 = vmatpush1.msra.mxu0 0.0
        %9259 = vmatprep.subr.mxu0 0.0
        %9260 = vmatpush1.msra.mxu0 0.0
        %9261 = vmatprep.subr.mxu0 0.0
        %9262 = vmatpush1.msra.mxu0 0.0
        %9263 = vmatprep.mubr.f32.mxu0 0.0
        %v9264 = vand.u32 %v9032, 4294901760
        %v9265 = vsub.f32 %v9032, %v9264
        %9266 = vmatmul.mubr.f32.gmra.mrb[0].mxu0 %v9265
        %v9267 = vpop.f32.mrb[0].mxu0
        %v9268 = vadd.f32 %v9192, %v9267
        %v9269 = vpop.f32.mrb[0].mxu0
        %9270 = vdwg.mxu0
        %9271 = vmatprep.subr.mxu0 0.0
        %v9272 = vand.u32 %v9028, 4294901760
        %9273 = vmatpush1.msra.mxu0 %v9272
        %9274 = vmatprep.subr.mxu0 0.0
        %v9275 = vand.u32 %v9035, 4294901760
        %9276 = vmatpush1.msra.mxu0 %v9275
        %9277 = vmatprep.subr.mxu0 0.0
        %9278 = vmatpush1.msra.mxu0 0.0
        %9279 = vmatprep.subr.mxu0 0.0
        %9280 = vmatpush1.msra.mxu0 0.0
        %9281 = vmatprep.subr.mxu0 0.0
        %9282 = vmatpush1.msra.mxu0 0.0
        %9283 = vmatprep.subr.mxu0 0.0
        %9284 = vmatpush1.msra.mxu0 0.0
        %9285 = vmatprep.subr.mxu0 0.0
        %9286 = vmatpush1.msra.mxu0 0.0
        %9287 = vmatprep.subr.mxu0 0.0
        %9288 = vmatpush1.msra.mxu0 0.0
        %9289 = vmatprep.subr.mxu0 0.0
        %9290 = vmatpush1.msra.mxu0 0.0
        %9291 = vmatprep.subr.mxu0 0.0
        %9292 = vmatpush1.msra.mxu0 0.0
        %9293 = vmatprep.subr.mxu0 0.0
        %9294 = vmatpush1.msra.mxu0 0.0
        %9295 = vmatprep.subr.mxu0 0.0
        %9296 = vmatpush1.msra.mxu0 0.0
        %9297 = vmatprep.subr.mxu0 0.0
        %9298 = vmatpush1.msra.mxu0 0.0
        %9299 = vmatprep.subr.mxu0 0.0
        %9300 = vmatpush1.msra.mxu0 0.0
        %9301 = vmatprep.subr.mxu0 0.0
        %9302 = vmatpush1.msra.mxu0 0.0
        %9303 = vmatprep.subr.mxu0 0.0
        %9304 = vmatpush1.msra.mxu0 0.0
        %9305 = vmatprep.subr.mxu0 0.0
        %9306 = vmatpush1.msra.mxu0 0.0
        %9307 = vmatprep.subr.mxu0 0.0
        %9308 = vmatpush1.msra.mxu0 0.0
        %9309 = vmatprep.subr.mxu0 0.0
        %9310 = vmatpush1.msra.mxu0 0.0
        %9311 = vmatprep.subr.mxu0 0.0
        %9312 = vmatpush1.msra.mxu0 0.0
        %9313 = vmatprep.subr.mxu0 0.0
        %9314 = vmatpush1.msra.mxu0 0.0
        %9315 = vmatprep.subr.mxu0 0.0
        %9316 = vmatpush1.msra.mxu0 0.0
        %9317 = vmatprep.subr.mxu0 0.0
        %9318 = vmatpush1.msra.mxu0 0.0
        %9319 = vmatprep.subr.mxu0 0.0
        %9320 = vmatpush1.msra.mxu0 0.0
        %9321 = vmatprep.subr.mxu0 0.0
        %9322 = vmatpush1.msra.mxu0 0.0
        %9323 = vmatprep.subr.mxu0 0.0
        %9324 = vmatpush1.msra.mxu0 0.0
        %9325 = vmatprep.subr.mxu0 0.0
        %9326 = vmatpush1.msra.mxu0 0.0
        %9327 = vmatprep.subr.mxu0 0.0
        %9328 = vmatpush1.msra.mxu0 0.0
        %9329 = vmatprep.subr.mxu0 0.0
        %9330 = vmatpush1.msra.mxu0 0.0
        %9331 = vmatprep.subr.mxu0 0.0
        %9332 = vmatpush1.msra.mxu0 0.0
        %9333 = vmatprep.subr.mxu0 0.0
        %9334 = vmatpush1.msra.mxu0 0.0
        %9335 = vmatprep.subr.mxu0 0.0
        %9336 = vmatpush1.msra.mxu0 0.0
        %9337 = vmatprep.mubr.f32.mxu0 0.0
        %v9338 = vand.u32 %v9032, 4294901760
        %v9339 = vsub.f32 %v9032, %v9338
        %v9340 = vand.u32 %v9339, 4294901760
        %9341 = vmatmul.mubr.f32.gmra.mrb[0].mxu0 %v9340
        %v9342 = vpop.f32.mrb[0].mxu0
        %v9343 = vadd.f32 %v9268, %v9342
        %v9344 = vpop.f32.mrb[0].mxu0
        %9345 = vdwg.mxu0
        %9346 = vmatprep.subr.mxu0 0.0
        %v9347 = vand.u32 %v9028, 4294901760
        %v9348 = vsub.f32 %v9028, %v9347
        %v9349 = vand.u32 %v9348, 4294901760
        %9350 = vmatpush1.msra.mxu0 %v9349
        %9351 = vmatprep.subr.mxu0 0.0
        %v9352 = vand.u32 %v9035, 4294901760
        %v9353 = vsub.f32 %v9035, %v9352
        %v9354 = vand.u32 %v9353, 4294901760
        %9355 = vmatpush1.msra.mxu0 %v9354
        %9356 = vmatprep.subr.mxu0 0.0
        %9357 = vmatpush1.msra.mxu0 0.0
        %9358 = vmatprep.subr.mxu0 0.0
        %9359 = vmatpush1.msra.mxu0 0.0
        %9360 = vmatprep.subr.mxu0 0.0
        %9361 = vmatpush1.msra.mxu0 0.0
        %9362 = vmatprep.subr.mxu0 0.0
        %9363 = vmatpush1.msra.mxu0 0.0
        %9364 = vmatprep.subr.mxu0 0.0
        %9365 = vmatpush1.msra.mxu0 0.0
        %9366 = vmatprep.subr.mxu0 0.0
        %9367 = vmatpush1.msra.mxu0 0.0
        %9368 = vmatprep.subr.mxu0 0.0
        %9369 = vmatpush1.msra.mxu0 0.0
        %9370 = vmatprep.subr.mxu0 0.0
        %9371 = vmatpush1.msra.mxu0 0.0
        %9372 = vmatprep.subr.mxu0 0.0
        %9373 = vmatpush1.msra.mxu0 0.0
        %9374 = vmatprep.subr.mxu0 0.0
        %9375 = vmatpush1.msra.mxu0 0.0
        %9376 = vmatprep.subr.mxu0 0.0
        %9377 = vmatpush1.msra.mxu0 0.0
        %9378 = vmatprep.subr.mxu0 0.0
        %9379 = vmatpush1.msra.mxu0 0.0
        %9380 = vmatprep.subr.mxu0 0.0
        %9381 = vmatpush1.msra.mxu0 0.0
        %9382 = vmatprep.subr.mxu0 0.0
        %9383 = vmatpush1.msra.mxu0 0.0
        %9384 = vmatprep.subr.mxu0 0.0
        %9385 = vmatpush1.msra.mxu0 0.0
        %9386 = vmatprep.subr.mxu0 0.0
        %9387 = vmatpush1.msra.mxu0 0.0
        %9388 = vmatprep.subr.mxu0 0.0
        %9389 = vmatpush1.msra.mxu0 0.0
        %9390 = vmatprep.subr.mxu0 0.0
        %9391 = vmatpush1.msra.mxu0 0.0
        %9392 = vmatprep.subr.mxu0 0.0
        %9393 = vmatpush1.msra.mxu0 0.0
        %9394 = vmatprep.subr.mxu0 0.0
        %9395 = vmatpush1.msra.mxu0 0.0
        %9396 = vmatprep.subr.mxu0 0.0
        %9397 = vmatpush1.msra.mxu0 0.0
        %9398 = vmatprep.subr.mxu0 0.0
        %9399 = vmatpush1.msra.mxu0 0.0
        %9400 = vmatprep.subr.mxu0 0.0
        %9401 = vmatpush1.msra.mxu0 0.0
        %9402 = vmatprep.subr.mxu0 0.0
        %9403 = vmatpush1.msra.mxu0 0.0
        %9404 = vmatprep.subr.mxu0 0.0
        %9405 = vmatpush1.msra.mxu0 0.0
        %9406 = vmatprep.subr.mxu0 0.0
        %9407 = vmatpush1.msra.mxu0 0.0
        %9408 = vmatprep.subr.mxu0 0.0
        %9409 = vmatpush1.msra.mxu0 0.0
        %9410 = vmatprep.subr.mxu0 0.0
        %9411 = vmatpush1.msra.mxu0 0.0
        %9412 = vmatprep.subr.mxu0 0.0
        %9413 = vmatpush1.msra.mxu0 0.0
        %9414 = vmatprep.subr.mxu0 0.0
        %9415 = vmatpush1.msra.mxu0 0.0
        %9416 = vmatprep.mubr.f32.mxu0 0.0
        %v9417 = vand.u32 %v9032, 4294901760
        %9418 = vmatmul.mubr.f32.gmra.mrb[0].mxu0 %v9417
        %v9419 = vpop.f32.mrb[0].mxu0
        %v9420 = vadd.f32 %v9343, %v9419
        %v9421 = vpop.f32.mrb[0].mxu0
        %9422 = vdwg.mxu0
        %9423 = vmatprep.subr.mxu0 0.0
        %v9424 = vand.u32 %v9028, 4294901760
        %9425 = vmatpush1.msra.mxu0 %v9424
        %9426 = vmatprep.subr.mxu0 0.0
        %v9427 = vand.u32 %v9035, 4294901760
        %9428 = vmatpush1.msra.mxu0 %v9427
        %9429 = vmatprep.subr.mxu0 0.0
        %9430 = vmatpush1.msra.mxu0 0.0
        %9431 = vmatprep.subr.mxu0 0.0
        %9432 = vmatpush1.msra.mxu0 0.0
        %9433 = vmatprep.subr.mxu0 0.0
        %9434 = vmatpush1.msra.mxu0 0.0
        %9435 = vmatprep.subr.mxu0 0.0
        %9436 = vmatpush1.msra.mxu0 0.0
        %9437 = vmatprep.subr.mxu0 0.0
        %9438 = vmatpush1.msra.mxu0 0.0
        %9439 = vmatprep.subr.mxu0 0.0
        %9440 = vmatpush1.msra.mxu0 0.0
        %9441 = vmatprep.subr.mxu0 0.0
        %9442 = vmatpush1.msra.mxu0 0.0
        %9443 = vmatprep.subr.mxu0 0.0
        %9444 = vmatpush1.msra.mxu0 0.0
        %9445 = vmatprep.subr.mxu0 0.0
        %9446 = vmatpush1.msra.mxu0 0.0
        %9447 = vmatprep.subr.mxu0 0.0
        %9448 = vmatpush1.msra.mxu0 0.0
        %9449 = vmatprep.subr.mxu0 0.0
        %9450 = vmatpush1.msra.mxu0 0.0
        %9451 = vmatprep.subr.mxu0 0.0
        %9452 = vmatpush1.msra.mxu0 0.0
        %9453 = vmatprep.subr.mxu0 0.0
        %9454 = vmatpush1.msra.mxu0 0.0
        %9455 = vmatprep.subr.mxu0 0.0
        %9456 = vmatpush1.msra.mxu0 0.0
        %9457 = vmatprep.subr.mxu0 0.0
        %9458 = vmatpush1.msra.mxu0 0.0
        %9459 = vmatprep.subr.mxu0 0.0
        %9460 = vmatpush1.msra.mxu0 0.0
        %9461 = vmatprep.subr.mxu0 0.0
        %9462 = vmatpush1.msra.mxu0 0.0
        %9463 = vmatprep.subr.mxu0 0.0
        %9464 = vmatpush1.msra.mxu0 0.0
        %9465 = vmatprep.subr.mxu0 0.0
        %9466 = vmatpush1.msra.mxu0 0.0
        %9467 = vmatprep.subr.mxu0 0.0
        %9468 = vmatpush1.msra.mxu0 0.0
        %9469 = vmatprep.subr.mxu0 0.0
        %9470 = vmatpush1.msra.mxu0 0.0
        %9471 = vmatprep.subr.mxu0 0.0
        %9472 = vmatpush1.msra.mxu0 0.0
        %9473 = vmatprep.subr.mxu0 0.0
        %9474 = vmatpush1.msra.mxu0 0.0
        %9475 = vmatprep.subr.mxu0 0.0
        %9476 = vmatpush1.msra.mxu0 0.0
        %9477 = vmatprep.subr.mxu0 0.0
        %9478 = vmatpush1.msra.mxu0 0.0
        %9479 = vmatprep.subr.mxu0 0.0
        %9480 = vmatpush1.msra.mxu0 0.0
        %9481 = vmatprep.subr.mxu0 0.0
        %9482 = vmatpush1.msra.mxu0 0.0
        %9483 = vmatprep.subr.mxu0 0.0
        %9484 = vmatpush1.msra.mxu0 0.0
        %9485 = vmatprep.subr.mxu0 0.0
        %9486 = vmatpush1.msra.mxu0 0.0
        %9487 = vmatprep.subr.mxu0 0.0
        %9488 = vmatpush1.msra.mxu0 0.0
        %9489 = vmatprep.mubr.f32.mxu0 0.0
        %v9490 = vand.u32 %v9032, 4294901760
        %9491 = vmatmul.mubr.f32.gmra.mrb[0].mxu0 %v9490
        %v9492 = vpop.f32.mrb[0].mxu0
        %v9493 = vadd.f32 %v9420, %v9492
        %v9494 = vpop.f32.mrb[0].mxu0
        %9495 = vdwg.mxu0
        %vm9496 = vcmask 66560
        %9497 = vst.msk [vmem:[#allocation4] sm:$0x3] %vm9496, %v9493
        // Predicated region
        $region65: #{tpu_custom_call.1} parent=59 // pred_check
          %p9498 = pneg %p257
        $region66: #{tpu_custom_call.1} parent=59 // pred_check_branch
          %9500 = sbr.rel (%p9498) target = $region68
        $region67: #{tpu_custom_call.1} parent=59 // pred_region
          %s9502 = ssub.s32 32, 32
          %9503 = vsyncadd [#allocation5], %s9502
          %s9505 = sshll.u32 [#allocation4], 4
          %s9506 = int_to_ptr.vmem [resolvable:$true] %s9505
          %9508 = dma.vmem_to_hbm [thread:$0]  %s9506, 32, %s10, [#allocation5]
        $region68: #{tpu_custom_call.1} parent=59 // pred_fallthru
          _
        // Predicated region
        $region69: #{tpu_custom_call.1} parent=59 // pred_check
          %p9509 = pneg %p257
        $region70: #{tpu_custom_call.1} parent=59 // pred_check_branch
          %9511 = sbr.rel (%p9509) target = $region72
        $region71: #{tpu_custom_call.1} parent=59 // pred_region
          %9512 = dma.done [#allocation5], 32
        $region72: #{tpu_custom_call.1} parent=59 // pred_fallthru
          _
      $region60: #{tpu_custom_call.1} parent=5 // pred_fallthru
        _
      %p9513 = scmp.le.s32.totalorder 2, %s19
      // Predicated region
      $region73: #{tpu_custom_call.1} parent=5 // pred_check
        %p9514 = pneg %p9513
      $region74: #{tpu_custom_call.1} parent=5 // pred_check_branch
        %9516 = sbr.rel (%p9514) target = $region76
      $region75: #{tpu_custom_call.1} parent=5 // pred_region
        %s9517 = ssub.s32 %s19, 2
      $region76: #{tpu_custom_call.1} parent=5 // pred_fallthru
        _
    $region6: #{tpu_custom_call.1} parent=1 // loop_footer
      %s23 = sadd.s32 1, %s19
    $region7: #{tpu_custom_call.1} parent=1 // loop_footer_branch
      %18 = sbr.rel target = $region3
    $region8: #{tpu_custom_call.1} parent=1 // loop_exit
      _
    %9518 = vsyncpa [#allocation5], 1
    %s9519 = scalar_lea.sflag [#allocation5], 1
    %9520 = vsyncpa %s9519, 1

</llo_original>
